<compile_context>
chip_gen: v7x
topology: tpu7x:2x2x1
jax: 0.10.0
libtpu: 0.0.40
codegen_flags: <defaults>
</compile_context>

<pallas_src>
import jax
import jax.numpy as jnp
from jax.experimental import pallas as pl
from jax.experimental.pallas import tpu as pltpu

# ---- tiny synthetic BERT config (scaled down from prot_bert) -------------
B = 2          # batch
S = 8          # sequence length
HIDDEN = 32    # bert_embed_dim (hidden_size)
NH = 4         # attention heads
DH = HIDDEN // NH
INTER = 64     # FFN intermediate size
LAYERS = 2     # encoder layers
VOCAB = 30
MAX_POS = 16
REPROJECT_DIM = 12
LN_EPS = 1e-12


# ============================ fused Pallas kernel ==========================

def _layernorm(h, g, b):
    mu = jnp.mean(h, axis=-1, keepdims=True)
    d = h - mu
    var = jnp.mean(d * d, axis=-1, keepdims=True)
    return d * jax.lax.rsqrt(var + LN_EPS) * g + b


def _gelu(y):
    # TODO(synk): HF prot_bert uses exact erf GELU; tanh approx (~1e-3 close).
    c = jnp.float32(0.7978845608028654)  # sqrt(2/pi)
    return 0.5 * y * (1.0 + jnp.tanh(c * (y + 0.044715 * y * y * y)))


def _bert_fused_kernel(x_ref, mask_ref,
                       qkv_w_ref, ao_w_ref, i_w_ref, o_w_ref, pool_w_ref,
                       lvec_ref, gvec_ref,
                       out_ref,
                       ctx_scr):
    """Full BERT pass (emb-LN -> LAYERS encoder layers -> pooler), both the
    wild-type and mutant passes folded into the batch rows.

      x_ref:      [2B*S, H]       pre-gathered embedding sum (f32)
      mask_ref:   [2B, S]         attention mask (1 = attend, f32)
      qkv_w_ref:  [L, H, 3H]      bf16 (1/sqrt(DH) folded into Q columns)
      ao_w_ref:   [L, H, H]       bf16
      i_w_ref:    [L, H, INTER]   bf16
      o_w_ref:    [L, INTER, H]   bf16
      pool_w_ref: [H, H]          bf16
      lvec_ref:   [L, 8, 3H]      f32 per-layer bias/LN rows
                                  (qkv_b, ao_b, ln1_g, ln1_b, i_b, o_b,
                                   ln2_g, ln2_b; each padded to 3H)
      gvec_ref:   [3, H]          f32 (emb_ln_g, emb_ln_b, pool_b)
      out_ref:    [B, 2H]         concatenated wt/mut pooler outputs
      ctx_scr:    VMEM [2B*S, H]  f32 attention-context scratch
    """
    n_bat, seq = mask_ref.shape           # 2B, S
    hidden = x_ref.shape[1]
    n_layers = qkv_w_ref.shape[0]
    dh = hidden // NH

    x = x_ref[...]                         # [2B*S, H] f32
    mask = mask_ref[...]                   # [2B, S]
    bias = (1.0 - mask) * jnp.float32(-10000.0)   # HF extended attn mask

    gvec = gvec_ref[...]                   # [3, H]
    emb_ln_g = gvec[0:1, :]
    emb_ln_b = gvec[1:2, :]
    pool_b = gvec[2:3, :]

    h = _layernorm(x, emb_ln_g, emb_ln_b)  # embedding LayerNorm (f32)

    for l in range(n_layers):
        qkv_w = qkv_w_ref[l]               # [H, 3H] bf16
        ao_w = ao_w_ref[l]                 # [H, H]  bf16
        i_w = i_w_ref[l]                   # [H, I]  bf16
        o_w = o_w_ref[l]                   # [I, H]  bf16
        lvec = lvec_ref[l]                 # [8, 3H] f32
        qkv_b = lvec[0:1, :]
        ao_b = lvec[1:2, :hidden]
        ln1_g = lvec[2:3, :hidden]
        ln1_b = lvec[3:4, :hidden]
        i_b = lvec[4:5, :INTER]
        o_b = lvec[5:6, :hidden]
        ln2_g = lvec[6:7, :hidden]
        ln2_b = lvec[7:8, :hidden]

        # Fused QKV projection: one bf16 MXU matmul, lane-dense [2B*S, 3H].
        qkv = jnp.dot(h.astype(jnp.bfloat16), qkv_w,
                      preferred_element_type=jnp.float32) + qkv_b
        q = qkv[:, 0 * hidden:1 * hidden]
        k = qkv[:, 1 * hidden:2 * hidden]
        v = qkv[:, 2 * hidden:3 * hidden]

        # Per-(batch, head) attention; each context block is written to its
        # (row, lane) offset in the VMEM scratch (no concatenates).
        for bb in range(n_bat):
            r0 = bb * seq
            bias_full = jnp.broadcast_to(bias[bb:bb + 1, :], (seq, seq))
            for hh in range(NH):
                c0 = hh * dh
                qh = q[r0:r0 + seq, c0:c0 + dh].astype(jnp.bfloat16)
                kh = k[r0:r0 + seq, c0:c0 + dh].astype(jnp.bfloat16)
                vh = v[r0:r0 + seq, c0:c0 + dh].astype(jnp.bfloat16)
                # scale already folded into qkv_w's Q columns
                s = jnp.einsum("qd,kd->qk", qh, kh,
                               preferred_element_type=jnp.float32) + bias_full
                m = jnp.max(s, axis=-1, keepdims=True)
                p = jnp.exp(s - m)
                denom = jnp.sum(p, axis=-1, keepdims=True)
                ctx_h = jnp.dot(p.astype(jnp.bfloat16), vh,
                                preferred_element_type=jnp.float32)
                # deferred softmax normalization (EUP reciprocal)
                ctx_h = ctx_h * pl.reciprocal(denom, approx=True)
                ctx_scr[r0:r0 + seq, c0:c0 + dh] = ctx_h

        ctx = ctx_scr[...].astype(jnp.bfloat16)            # [2B*S, H]
        attn_out = jnp.dot(ctx, ao_w,
                           preferred_element_type=jnp.float32) + ao_b
        h = _layernorm(attn_out + h, ln1_g, ln1_b)

        ff = _gelu(jnp.dot(h.astype(jnp.bfloat16), i_w,
                           preferred_element_type=jnp.float32) + i_b)
        ff_out = jnp.dot(ff.astype(jnp.bfloat16), o_w,
                         preferred_element_type=jnp.float32) + o_b
        h = _layernorm(ff_out + h, ln2_g, ln2_b)

    # Pooler: tanh(W @ h[CLS]) for every (pass, batch) row.
    cls = jnp.concatenate(
        [h[bb * seq:bb * seq + 1, :] for bb in range(n_bat)], axis=0)
    pooled = jnp.tanh(jnp.dot(cls.astype(jnp.bfloat16), pool_w_ref[...],
                              preferred_element_type=jnp.float32) + pool_b)

    # torch.cat([wt_feas, mut_feas], dim=1) written directly from the kernel.
    half = n_bat // 2
    out_ref[:, :hidden] = pooled[:half, :]
    out_ref[:, hidden:] = pooled[half:, :]


# ============================ kernel wrapper ===============================

def bert_fused_forward(packed, input_ids_2, attn_mask_2):
    """input_ids_2, attn_mask_2: [2, B, S].  Returns [B, 2*HIDDEN] features
    (wt pooler output ++ mut pooler output along dim=1)."""
    two, b, s = input_ids_2.shape
    rows = two * b * s

    # Embedding-table gather is glue (done in XLA); the sum + LayerNorm +
    # encoder stack + pooler + final concat all run inside ONE Pallas kernel.
    x = (packed["word_emb"][input_ids_2]
         + packed["pos_emb"][jnp.arange(s)][None, None, :, :]
         + packed["type_emb"][0][None, None, None, :])           # [2,B,S,H]
    x = x.reshape(rows, HIDDEN).astype(jnp.float32)
    mask = attn_mask_2.reshape(two * b, s).astype(jnp.float32)

    inputs = [x, mask,
              packed["qkv_w"], packed["ao_w"], packed["i_w"], packed["o_w"],
              packed["pool_w"], packed["lvec"], packed["gvec"]]

    def full_spec(a):
        nd = a.ndim
        return pl.BlockSpec(a.shape, lambda i: (0,) * nd)

    return pl.pallas_call(
        _bert_fused_kernel,
        out_shape=jax.ShapeDtypeStruct((b, 2 * HIDDEN), jnp.float32),
        grid=(1,),
        in_specs=[full_spec(a) for a in inputs],
        out_specs=pl.BlockSpec((b, 2 * HIDDEN), lambda i: (0, 0)),
        scratch_shapes=[pltpu.VMEM((rows, HIDDEN), jnp.float32)],
        compiler_params=pltpu.CompilerParams(
            dimension_semantics=("arbitrary",)),
    )(*inputs)


# ============================ CustomBert.forward ===========================

def custom_bert_forward(packed, wt_enc, mut_enc, mut_mask, att_mask):
    """Mirrors CustomBert.forward; both passes fused into one kernel call."""
    batch_size = wt_enc["input_ids"].shape[0]
    wt_ids = wt_enc["input_ids"].reshape(batch_size, -1)
    mut_ids = mut_enc["input_ids"].reshape(batch_size, -1)
    if att_mask == "one_hot":
        # Matches the PyTorch code: BOTH passes use mut_mask in this branch.
        wt_m = mut_mask.reshape(batch_size, -1)
        mut_m = mut_mask.reshape(batch_size, -1)
    else:
        wt_m = wt_enc["attention_mask"].reshape(batch_size, -1)
        mut_m = mut_enc["attention_mask"].reshape(batch_size, -1)

    ids2 = jnp.stack([wt_ids, mut_ids], axis=0)       # [2, B, S]
    mask2 = jnp.stack([wt_m, mut_m], axis=0)          # [2, B, S]
    return bert_fused_forward(packed, ids2, mask2)    # [B, 2*HIDDEN]


# ============================ parameter init / packing =====================

def init_params(key):
    keys = iter(jax.random.split(key, 256))

    def nrm(shape, scale=0.02):
        return (scale * jax.random.normal(next(keys), shape)).astype(jnp.float32)

    params = {
        "word_emb": nrm((VOCAB, HIDDEN)),
        "pos_emb": nrm((MAX_POS, HIDDEN)),
        "type_emb": nrm((2, HIDDEN)),
        "emb_ln_g": jnp.ones((1, HIDDEN), jnp.float32),
        "emb_ln_b": jnp.zeros((1, HIDDEN), jnp.float32),
        "layers": [],
        "pool_w": nrm((HIDDEN, HIDDEN)),
        "pool_b": jnp.zeros((1, HIDDEN), jnp.float32),
        # self.reproject = nn.Linear(hidden*2, reproject_dim*3): defined in
        # __init__ but NOT used in forward(); kept only for shape fidelity.
        "reproject_w": nrm((HIDDEN * 2, REPROJECT_DIM * 3)),
        "reproject_b": jnp.zeros((1, REPROJECT_DIM * 3), jnp.float32),
    }
    for _ in range(LAYERS):
        params["layers"].append({
            "qkv_w": nrm((HIDDEN, 3 * HIDDEN)),   # fused Q/K/V projection
            "qkv_b": jnp.zeros((1, 3 * HIDDEN), jnp.float32),
            "ao_w": nrm((HIDDEN, HIDDEN)),
            "ao_b": jnp.zeros((1, HIDDEN), jnp.float32),
            "ln1_g": jnp.ones((1, HIDDEN), jnp.float32),
            "ln1_b": jnp.zeros((1, HIDDEN), jnp.float32),
            "i_w": nrm((HIDDEN, INTER)),
            "i_b": jnp.zeros((1, INTER), jnp.float32),
            "o_w": nrm((INTER, HIDDEN)),
            "o_b": jnp.zeros((1, HIDDEN), jnp.float32),
            "ln2_g": jnp.ones((1, HIDDEN), jnp.float32),
            "ln2_b": jnp.zeros((1, HIDDEN), jnp.float32),
        })
    return params


def pack_params(params):
    """Pack per-layer weights into a few contiguous slabs (bf16 matrices,
    f32 bias/LN slab), folding 1/sqrt(DH) into the Q projection columns."""
    scale = jnp.float32(1.0 / (DH ** 0.5))
    vw = 3 * HIDDEN

    def row(v):
        v = v.reshape(-1).astype(jnp.float32)
        return jnp.pad(v, (0, vw - v.shape[0]))

    qkv_ws, ao_ws, i_ws, o_ws, lvecs = [], [], [], [], []
    for lp in params["layers"]:
        w = lp["qkv_w"].astype(jnp.float32)
        w = w.at[:, :HIDDEN].multiply(scale)        # fold attention scale
        qkv_ws.append(w)
        ao_ws.append(lp["ao_w"])
        i_ws.append(lp["i_w"])
        o_ws.append(lp["o_w"])
        lvecs.append(jnp.stack([row(lp["qkv_b"]), row(lp["ao_b"]),
                                row(lp["ln1_g"]), row(lp["ln1_b"]),
                                row(lp["i_b"]), row(lp["o_b"]),
                                row(lp["ln2_g"]), row(lp["ln2_b"])]))

    return {
        "word_emb": params["word_emb"],
        "pos_emb": params["pos_emb"],
        "type_emb": params["type_emb"],
        "qkv_w": jnp.stack(qkv_ws).astype(jnp.bfloat16),      # [L, H, 3H]
        "ao_w": jnp.stack(ao_ws).astype(jnp.bfloat16),        # [L, H, H]
        "i_w": jnp.stack(i_ws).astype(jnp.bfloat16),          # [L, H, I]
        "o_w": jnp.stack(o_ws).astype(jnp.bfloat16),          # [L, I, H]
        "pool_w": params["pool_w"].astype(jnp.bfloat16),      # [H, H]
        "lvec": jnp.stack(lvecs).astype(jnp.float32),         # [L, 8, 3H]
        "gvec": jnp.concatenate([params["emb_ln_g"], params["emb_ln_b"],
                                 params["pool_b"]],
                                axis=0).astype(jnp.float32),  # [3, H]
    }


# ================================ main =====================================

if __name__ == "__main__":
    key = jax.random.PRNGKey(0)
    pkey, k1, k2, k3 = jax.random.split(key, 4)
    params = init_params(pkey)
    packed = pack_params(params)

    wt_ids = jax.random.randint(k1, (B, S), 0, VOCAB, dtype=jnp.int32)
    mut_ids = jax.random.randint(k2, (B, S), 0, VOCAB, dtype=jnp.int32)
    full_mask = jnp.ones((B, S), jnp.int32)
    mut_mask = (jax.random.uniform(k3, (B, S)) > 0.2).astype(jnp.int32)
    mut_mask = mut_mask.at[:, 0].set(1)   # keep CLS position attended

    wt_enc = {"input_ids": wt_ids, "attention_mask": full_mask}
    mut_enc = {"input_ids": mut_ids, "attention_mask": full_mask}

    fwd = jax.jit(custom_bert_forward, static_argnames=("att_mask",))
    out = fwd(packed, wt_enc, mut_enc, mut_mask, att_mask="one_hot")
    out = jax.block_until_ready(out)

    assert out.shape == (B, 2 * HIDDEN), out.shape
    assert out.dtype == jnp.float32
    assert bool(jnp.all(jnp.isfinite(out)))
    print("KERNEL_OK")
</pallas_src>

<mosaic_0001>
module attributes {stable_mosaic.version = 11 : i64} {
  func.func @_bert_fused_kernel(%arg0: i32, %arg1: memref<32x32xf32, #tpu.memory_space<vmem>>, %arg2: memref<4x8xf32, #tpu.memory_space<vmem>>, %arg3: memref<2x32x96xbf16, #tpu.memory_space<vmem>>, %arg4: memref<2x32x32xbf16, #tpu.memory_space<vmem>>, %arg5: memref<2x32x64xbf16, #tpu.memory_space<vmem>>, %arg6: memref<2x64x32xbf16, #tpu.memory_space<vmem>>, %arg7: memref<32x32xbf16, #tpu.memory_space<vmem>>, %arg8: memref<2x8x96xf32, #tpu.memory_space<vmem>>, %arg9: memref<3x32xf32, #tpu.memory_space<vmem>>, %arg10: memref<2x64xf32, #tpu.memory_space<vmem>>, %arg11: memref<32x32xf32, #tpu.memory_space<vmem>>) attributes {dimension_semantics = [#tpu.dimension_semantics<arbitrary>], iteration_bounds = array<i64: 1>, scalar_prefetch = 0 : i64, scratch_operands = 1 : i64, tpu.core_type = #tpu.core_type<tc>, window_params = [{pipeline_mode = #tpu.pipeline_mode<synchronous>, transform_indices = @transform_0, window_bounds = array<i64: 32, 32>}, {pipeline_mode = #tpu.pipeline_mode<synchronous>, transform_indices = @transform_1, window_bounds = array<i64: 4, 8>}, {pipeline_mode = #tpu.pipeline_mode<synchronous>, transform_indices = @transform_2, window_bounds = array<i64: 2, 32, 96>}, {pipeline_mode = #tpu.pipeline_mode<synchronous>, transform_indices = @transform_3, window_bounds = array<i64: 2, 32, 32>}, {pipeline_mode = #tpu.pipeline_mode<synchronous>, transform_indices = @transform_4, window_bounds = array<i64: 2, 32, 64>}, {pipeline_mode = #tpu.pipeline_mode<synchronous>, transform_indices = @transform_5, window_bounds = array<i64: 2, 64, 32>}, {pipeline_mode = #tpu.pipeline_mode<synchronous>, transform_indices = @transform_6, window_bounds = array<i64: 32, 32>}, {pipeline_mode = #tpu.pipeline_mode<synchronous>, transform_indices = @transform_7, window_bounds = array<i64: 2, 8, 96>}, {pipeline_mode = #tpu.pipeline_mode<synchronous>, transform_indices = @transform_8, window_bounds = array<i64: 3, 32>}, {pipeline_mode = #tpu.pipeline_mode<synchronous>, transform_indices = @transform_9, window_bounds = array<i64: 2, 64>}]} {
    %c0 = arith.constant 0 : index
    %c0_0 = arith.constant 0 : index
    %0 = vector.load %arg1[%c0, %c0_0] : memref<32x32xf32, #tpu.memory_space<vmem>>, vector<32x32xf32>
    %c0_1 = arith.constant 0 : index
    %c0_2 = arith.constant 0 : index
    %1 = vector.load %arg2[%c0_1, %c0_2] : memref<4x8xf32, #tpu.memory_space<vmem>>, vector<4x8xf32>
    %cst = arith.constant 1.000000e+00 : f32
    %2 = vector.broadcast %cst : f32 to vector<4x8xf32>
    %3 = arith.subf %2, %1 : vector<4x8xf32>
    %cst_3 = arith.constant -1.000000e+04 : f32
    %4 = vector.broadcast %cst_3 : f32 to vector<4x8xf32>
    %5 = arith.mulf %3, %4 : vector<4x8xf32>
    %c0_4 = arith.constant 0 : index
    %c0_5 = arith.constant 0 : index
    %6 = vector.load %arg9[%c0_4, %c0_5] : memref<3x32xf32, #tpu.memory_space<vmem>>, vector<3x32xf32>
    %7 = vector.extract_strided_slice %6 {offsets = [0, 0], sizes = [1, 32], strides = [1, 1]} : vector<3x32xf32> to vector<1x32xf32>
    %8 = vector.extract_strided_slice %6 {offsets = [1, 0], sizes = [1, 32], strides = [1, 1]} : vector<3x32xf32> to vector<1x32xf32>
    %9 = vector.extract_strided_slice %6 {offsets = [2, 0], sizes = [1, 32], strides = [1, 1]} : vector<3x32xf32> to vector<1x32xf32>
    %cst_6 = arith.constant dense<0.000000e+00> : vector<32xf32>
    %10 = vector.multi_reduction <add>, %0, %cst_6 [1] : vector<32x32xf32> to vector<32xf32>
    %11 = vector.shape_cast %10 : vector<32xf32> to vector<32x1xf32>
    %cst_7 = arith.constant 3.200000e+01 : f32
    %12 = vector.broadcast %cst_7 : f32 to vector<32x1xf32>
    %13 = arith.divf %11, %12 : vector<32x1xf32>
    %14 = vector.broadcast %13 : vector<32x1xf32> to vector<32x32xf32>
    %15 = arith.subf %0, %14 : vector<32x32xf32>
    %16 = arith.mulf %15, %15 : vector<32x32xf32>
    %cst_8 = arith.constant dense<0.000000e+00> : vector<32xf32>
    %17 = vector.multi_reduction <add>, %16, %cst_8 [1] : vector<32x32xf32> to vector<32xf32>
    %18 = vector.shape_cast %17 : vector<32xf32> to vector<32x1xf32>
    %cst_9 = arith.constant 3.200000e+01 : f32
    %19 = vector.broadcast %cst_9 : f32 to vector<32x1xf32>
    %20 = arith.divf %18, %19 : vector<32x1xf32>
    %cst_10 = arith.constant 9.99999996E-13 : f32
    %21 = vector.broadcast %cst_10 : f32 to vector<32x1xf32>
    %22 = arith.addf %20, %21 : vector<32x1xf32>
    %23 = math.rsqrt %22 : vector<32x1xf32>
    %24 = vector.broadcast %23 : vector<32x1xf32> to vector<32x32xf32>
    %25 = arith.mulf %15, %24 : vector<32x32xf32>
    %26 = vector.broadcast %7 : vector<1x32xf32> to vector<32x32xf32>
    %27 = arith.mulf %25, %26 : vector<32x32xf32>
    %28 = vector.broadcast %8 : vector<1x32xf32> to vector<32x32xf32>
    %29 = arith.addf %27, %28 : vector<32x32xf32>
    %c0_11 = arith.constant 0 : index
    %c0_12 = arith.constant 0 : index
    %c0_13 = arith.constant 0 : index
    %30 = vector.load %arg3[%c0_11, %c0_12, %c0_13] : memref<2x32x96xbf16, #tpu.memory_space<vmem>>, vector<1x32x96xbf16>
    %31 = vector.shape_cast %30 : vector<1x32x96xbf16> to vector<32x96xbf16>
    %c0_14 = arith.constant 0 : index
    %c0_15 = arith.constant 0 : index
    %c0_16 = arith.constant 0 : index
    %32 = vector.load %arg4[%c0_14, %c0_15, %c0_16] : memref<2x32x32xbf16, #tpu.memory_space<vmem>>, vector<1x32x32xbf16>
    %33 = vector.shape_cast %32 : vector<1x32x32xbf16> to vector<32x32xbf16>
    %c0_17 = arith.constant 0 : index
    %c0_18 = arith.constant 0 : index
    %c0_19 = arith.constant 0 : index
    %34 = vector.load %arg5[%c0_17, %c0_18, %c0_19] : memref<2x32x64xbf16, #tpu.memory_space<vmem>>, vector<1x32x64xbf16>
    %35 = vector.shape_cast %34 : vector<1x32x64xbf16> to vector<32x64xbf16>
    %c0_20 = arith.constant 0 : index
    %c0_21 = arith.constant 0 : index
    %c0_22 = arith.constant 0 : index
    %36 = vector.load %arg6[%c0_20, %c0_21, %c0_22] : memref<2x64x32xbf16, #tpu.memory_space<vmem>>, vector<1x64x32xbf16>
    %37 = vector.shape_cast %36 : vector<1x64x32xbf16> to vector<64x32xbf16>
    %c0_23 = arith.constant 0 : index
    %c0_24 = arith.constant 0 : index
    %c0_25 = arith.constant 0 : index
    %38 = vector.load %arg8[%c0_23, %c0_24, %c0_25] : memref<2x8x96xf32, #tpu.memory_space<vmem>>, vector<1x8x96xf32>
    %39 = vector.shape_cast %38 : vector<1x8x96xf32> to vector<8x96xf32>
    %40 = vector.extract_strided_slice %39 {offsets = [0, 0], sizes = [1, 96], strides = [1, 1]} : vector<8x96xf32> to vector<1x96xf32>
    %41 = vector.extract_strided_slice %39 {offsets = [1, 0], sizes = [1, 32], strides = [1, 1]} : vector<8x96xf32> to vector<1x32xf32>
    %42 = vector.extract_strided_slice %39 {offsets = [2, 0], sizes = [1, 32], strides = [1, 1]} : vector<8x96xf32> to vector<1x32xf32>
    %43 = vector.extract_strided_slice %39 {offsets = [3, 0], sizes = [1, 32], strides = [1, 1]} : vector<8x96xf32> to vector<1x32xf32>
    %44 = vector.extract_strided_slice %39 {offsets = [4, 0], sizes = [1, 64], strides = [1, 1]} : vector<8x96xf32> to vector<1x64xf32>
    %45 = vector.extract_strided_slice %39 {offsets = [5, 0], sizes = [1, 32], strides = [1, 1]} : vector<8x96xf32> to vector<1x32xf32>
    %46 = vector.extract_strided_slice %39 {offsets = [6, 0], sizes = [1, 32], strides = [1, 1]} : vector<8x96xf32> to vector<1x32xf32>
    %47 = vector.extract_strided_slice %39 {offsets = [7, 0], sizes = [1, 32], strides = [1, 1]} : vector<8x96xf32> to vector<1x32xf32>
    %48 = arith.truncf %29 : vector<32x32xf32> to vector<32x32xbf16>
    %cst_26 = arith.constant dense<0.000000e+00> : vector<32x96xf32>
    %49 = tpu.matmul %48, %31, %cst_26 {dimension_numbers = #tpu.dot_dimension_numbers<[1], [0], [0], [1], [0, 0, 1, 1], [], []>} : vector<32x32xbf16>, vector<32x96xbf16>, vector<32x96xf32> -> vector<32x96xf32>
    %50 = vector.broadcast %40 : vector<1x96xf32> to vector<32x96xf32>
    %51 = arith.addf %49, %50 : vector<32x96xf32>
    %52 = vector.extract_strided_slice %51 {offsets = [0, 0], sizes = [32, 32], strides = [1, 1]} : vector<32x96xf32> to vector<32x32xf32>
    %53 = vector.extract_strided_slice %51 {offsets = [0, 32], sizes = [32, 32], strides = [1, 1]} : vector<32x96xf32> to vector<32x32xf32>
    %54 = vector.extract_strided_slice %51 {offsets = [0, 64], sizes = [32, 32], strides = [1, 1]} : vector<32x96xf32> to vector<32x32xf32>
    %55 = vector.extract_strided_slice %5 {offsets = [0, 0], sizes = [1, 8], strides = [1, 1]} : vector<4x8xf32> to vector<1x8xf32>
    %56 = vector.shape_cast %55 : vector<1x8xf32> to vector<1x8xf32>
    %57 = vector.broadcast %56 : vector<1x8xf32> to vector<8x8xf32>
    %58 = vector.extract_strided_slice %52 {offsets = [0, 0], sizes = [8, 8], strides = [1, 1]} : vector<32x32xf32> to vector<8x8xf32>
    %59 = arith.truncf %58 : vector<8x8xf32> to vector<8x8xbf16>
    %60 = vector.extract_strided_slice %53 {offsets = [0, 0], sizes = [8, 8], strides = [1, 1]} : vector<32x32xf32> to vector<8x8xf32>
    %61 = arith.truncf %60 : vector<8x8xf32> to vector<8x8xbf16>
    %62 = vector.extract_strided_slice %54 {offsets = [0, 0], sizes = [8, 8], strides = [1, 1]} : vector<32x32xf32> to vector<8x8xf32>
    %63 = arith.truncf %62 : vector<8x8xf32> to vector<8x8xbf16>
    "tpu.trace_start"() <{level = 10 : i32, message = "qd,kd->qk"}> : () -> ()
    %cst_27 = arith.constant dense<0.000000e+00> : vector<8x8xf32>
    %64 = tpu.matmul %59, %61, %cst_27 {dimension_numbers = #tpu.dot_dimension_numbers<[1], [1], [0], [0], [0, 0, 1, 0], [], []>} : vector<8x8xbf16>, vector<8x8xbf16>, vector<8x8xf32> -> vector<8x8xf32>
    "tpu.trace_stop"() : () -> ()
    %65 = arith.addf %64, %57 : vector<8x8xf32>
    %cst_28 = arith.constant dense<0xFF800000> : vector<8xf32>
    %66 = vector.multi_reduction <maximumf>, %65, %cst_28 [1] : vector<8x8xf32> to vector<8xf32>
    %67 = vector.shape_cast %66 : vector<8xf32> to vector<8x1xf32>
    %68 = vector.broadcast %67 : vector<8x1xf32> to vector<8x8xf32>
    %69 = arith.subf %65, %68 : vector<8x8xf32>
    %70 = math.exp %69 : vector<8x8xf32>
    %cst_29 = arith.constant dense<0.000000e+00> : vector<8xf32>
    %71 = vector.multi_reduction <add>, %70, %cst_29 [1] : vector<8x8xf32> to vector<8xf32>
    %72 = vector.shape_cast %71 : vector<8xf32> to vector<8x1xf32>
    %73 = arith.truncf %70 : vector<8x8xf32> to vector<8x8xbf16>
    %cst_30 = arith.constant dense<0.000000e+00> : vector<8x8xf32>
    %74 = tpu.matmul %73, %63, %cst_30 {dimension_numbers = #tpu.dot_dimension_numbers<[1], [0], [0], [1], [0, 0, 1, 1], [], []>} : vector<8x8xbf16>, vector<8x8xbf16>, vector<8x8xf32> -> vector<8x8xf32>
    %75 = tpu.reciprocal %72 {approx = true} : vector<8x1xf32> -> vector<8x1xf32>
    %76 = vector.broadcast %75 : vector<8x1xf32> to vector<8x8xf32>
    %77 = arith.mulf %74, %76 : vector<8x8xf32>
    %c0_31 = arith.constant 0 : index
    %c0_32 = arith.constant 0 : index
    %78 = vector.load %arg11[%c0_31, %c0_32] : memref<32x32xf32, #tpu.memory_space<vmem>>, vector<8x8xf32>
    tpu.vector_store %arg11[%c0_31, %c0_32], %77 {strides = array<i32>} : memref<32x32xf32, #tpu.memory_space<vmem>>, vector<8x8xf32>,
    %79 = vector.extract_strided_slice %52 {offsets = [0, 8], sizes = [8, 8], strides = [1, 1]} : vector<32x32xf32> to vector<8x8xf32>
    %80 = arith.truncf %79 : vector<8x8xf32> to vector<8x8xbf16>
    %81 = vector.extract_strided_slice %53 {offsets = [0, 8], sizes = [8, 8], strides = [1, 1]} : vector<32x32xf32> to vector<8x8xf32>
    %82 = arith.truncf %81 : vector<8x8xf32> to vector<8x8xbf16>
    %83 = vector.extract_strided_slice %54 {offsets = [0, 8], sizes = [8, 8], strides = [1, 1]} : vector<32x32xf32> to vector<8x8xf32>
    %84 = arith.truncf %83 : vector<8x8xf32> to vector<8x8xbf16>
    "tpu.trace_start"() <{level = 10 : i32, message = "qd,kd->qk"}> : () -> ()
    %cst_33 = arith.constant dense<0.000000e+00> : vector<8x8xf32>
    %85 = tpu.matmul %80, %82, %cst_33 {dimension_numbers = #tpu.dot_dimension_numbers<[1], [1], [0], [0], [0, 0, 1, 0], [], []>} : vector<8x8xbf16>, vector<8x8xbf16>, vector<8x8xf32> -> vector<8x8xf32>
    "tpu.trace_stop"() : () -> ()
    %86 = arith.addf %85, %57 : vector<8x8xf32>
    %cst_34 = arith.constant dense<0xFF800000> : vector<8xf32>
    %87 = vector.multi_reduction <maximumf>, %86, %cst_34 [1] : vector<8x8xf32> to vector<8xf32>
    %88 = vector.shape_cast %87 : vector<8xf32> to vector<8x1xf32>
    %89 = vector.broadcast %88 : vector<8x1xf32> to vector<8x8xf32>
    %90 = arith.subf %86, %89 : vector<8x8xf32>
    %91 = math.exp %90 : vector<8x8xf32>
    %cst_35 = arith.constant dense<0.000000e+00> : vector<8xf32>
    %92 = vector.multi_reduction <add>, %91, %cst_35 [1] : vector<8x8xf32> to vector<8xf32>
    %93 = vector.shape_cast %92 : vector<8xf32> to vector<8x1xf32>
    %94 = arith.truncf %91 : vector<8x8xf32> to vector<8x8xbf16>
    %cst_36 = arith.constant dense<0.000000e+00> : vector<8x8xf32>
    %95 = tpu.matmul %94, %84, %cst_36 {dimension_numbers = #tpu.dot_dimension_numbers<[1], [0], [0], [1], [0, 0, 1, 1], [], []>} : vector<8x8xbf16>, vector<8x8xbf16>, vector<8x8xf32> -> vector<8x8xf32>
    %96 = tpu.reciprocal %93 {approx = true} : vector<8x1xf32> -> vector<8x1xf32>
    %97 = vector.broadcast %96 : vector<8x1xf32> to vector<8x8xf32>
    %98 = arith.mulf %95, %97 : vector<8x8xf32>
    %c0_37 = arith.constant 0 : index
    %c8 = arith.constant 8 : index
    %99 = vector.load %arg11[%c0_37, %c8] : memref<32x32xf32, #tpu.memory_space<vmem>>, vector<8x8xf32>
    tpu.vector_store %arg11[%c0_37, %c8], %98 {strides = array<i32>} : memref<32x32xf32, #tpu.memory_space<vmem>>, vector<8x8xf32>,
    %100 = vector.extract_strided_slice %52 {offsets = [0, 16], sizes = [8, 8], strides = [1, 1]} : vector<32x32xf32> to vector<8x8xf32>
    %101 = arith.truncf %100 : vector<8x8xf32> to vector<8x8xbf16>
    %102 = vector.extract_strided_slice %53 {offsets = [0, 16], sizes = [8, 8], strides = [1, 1]} : vector<32x32xf32> to vector<8x8xf32>
    %103 = arith.truncf %102 : vector<8x8xf32> to vector<8x8xbf16>
    %104 = vector.extract_strided_slice %54 {offsets = [0, 16], sizes = [8, 8], strides = [1, 1]} : vector<32x32xf32> to vector<8x8xf32>
    %105 = arith.truncf %104 : vector<8x8xf32> to vector<8x8xbf16>
    "tpu.trace_start"() <{level = 10 : i32, message = "qd,kd->qk"}> : () -> ()
    %cst_38 = arith.constant dense<0.000000e+00> : vector<8x8xf32>
    %106 = tpu.matmul %101, %103, %cst_38 {dimension_numbers = #tpu.dot_dimension_numbers<[1], [1], [0], [0], [0, 0, 1, 0], [], []>} : vector<8x8xbf16>, vector<8x8xbf16>, vector<8x8xf32> -> vector<8x8xf32>
    "tpu.trace_stop"() : () -> ()
    %107 = arith.addf %106, %57 : vector<8x8xf32>
    %cst_39 = arith.constant dense<0xFF800000> : vector<8xf32>
    %108 = vector.multi_reduction <maximumf>, %107, %cst_39 [1] : vector<8x8xf32> to vector<8xf32>
    %109 = vector.shape_cast %108 : vector<8xf32> to vector<8x1xf32>
    %110 = vector.broadcast %109 : vector<8x1xf32> to vector<8x8xf32>
    %111 = arith.subf %107, %110 : vector<8x8xf32>
    %112 = math.exp %111 : vector<8x8xf32>
    %cst_40 = arith.constant dense<0.000000e+00> : vector<8xf32>
    %113 = vector.multi_reduction <add>, %112, %cst_40 [1] : vector<8x8xf32> to vector<8xf32>
    %114 = vector.shape_cast %113 : vector<8xf32> to vector<8x1xf32>
    %115 = arith.truncf %112 : vector<8x8xf32> to vector<8x8xbf16>
    %cst_41 = arith.constant dense<0.000000e+00> : vector<8x8xf32>
    %116 = tpu.matmul %115, %105, %cst_41 {dimension_numbers = #tpu.dot_dimension_numbers<[1], [0], [0], [1], [0, 0, 1, 1], [], []>} : vector<8x8xbf16>, vector<8x8xbf16>, vector<8x8xf32> -> vector<8x8xf32>
    %117 = tpu.reciprocal %114 {approx = true} : vector<8x1xf32> -> vector<8x1xf32>
    %118 = vector.broadcast %117 : vector<8x1xf32> to vector<8x8xf32>
    %119 = arith.mulf %116, %118 : vector<8x8xf32>
    %c0_42 = arith.constant 0 : index
    %c16 = arith.constant 16 : index
    %120 = vector.load %arg11[%c0_42, %c16] : memref<32x32xf32, #tpu.memory_space<vmem>>, vector<8x8xf32>
    tpu.vector_store %arg11[%c0_42, %c16], %119 {strides = array<i32>} : memref<32x32xf32, #tpu.memory_space<vmem>>, vector<8x8xf32>,
    %121 = vector.extract_strided_slice %52 {offsets = [0, 24], sizes = [8, 8], strides = [1, 1]} : vector<32x32xf32> to vector<8x8xf32>
    %122 = arith.truncf %121 : vector<8x8xf32> to vector<8x8xbf16>
    %123 = vector.extract_strided_slice %53 {offsets = [0, 24], sizes = [8, 8], strides = [1, 1]} : vector<32x32xf32> to vector<8x8xf32>
    %124 = arith.truncf %123 : vector<8x8xf32> to vector<8x8xbf16>
    %125 = vector.extract_strided_slice %54 {offsets = [0, 24], sizes = [8, 8], strides = [1, 1]} : vector<32x32xf32> to vector<8x8xf32>
    %126 = arith.truncf %125 : vector<8x8xf32> to vector<8x8xbf16>
    "tpu.trace_start"() <{level = 10 : i32, message = "qd,kd->qk"}> : () -> ()
    %cst_43 = arith.constant dense<0.000000e+00> : vector<8x8xf32>
    %127 = tpu.matmul %122, %124, %cst_43 {dimension_numbers = #tpu.dot_dimension_numbers<[1], [1], [0], [0], [0, 0, 1, 0], [], []>} : vector<8x8xbf16>, vector<8x8xbf16>, vector<8x8xf32> -> vector<8x8xf32>
    "tpu.trace_stop"() : () -> ()
    %128 = arith.addf %127, %57 : vector<8x8xf32>
    %cst_44 = arith.constant dense<0xFF800000> : vector<8xf32>
    %129 = vector.multi_reduction <maximumf>, %128, %cst_44 [1] : vector<8x8xf32> to vector<8xf32>
    %130 = vector.shape_cast %129 : vector<8xf32> to vector<8x1xf32>
    %131 = vector.broadcast %130 : vector<8x1xf32> to vector<8x8xf32>
    %132 = arith.subf %128, %131 : vector<8x8xf32>
    %133 = math.exp %132 : vector<8x8xf32>
    %cst_45 = arith.constant dense<0.000000e+00> : vector<8xf32>
    %134 = vector.multi_reduction <add>, %133, %cst_45 [1] : vector<8x8xf32> to vector<8xf32>
    %135 = vector.shape_cast %134 : vector<8xf32> to vector<8x1xf32>
    %136 = arith.truncf %133 : vector<8x8xf32> to vector<8x8xbf16>
    %cst_46 = arith.constant dense<0.000000e+00> : vector<8x8xf32>
    %137 = tpu.matmul %136, %126, %cst_46 {dimension_numbers = #tpu.dot_dimension_numbers<[1], [0], [0], [1], [0, 0, 1, 1], [], []>} : vector<8x8xbf16>, vector<8x8xbf16>, vector<8x8xf32> -> vector<8x8xf32>
    %138 = tpu.reciprocal %135 {approx = true} : vector<8x1xf32> -> vector<8x1xf32>
    %139 = vector.broadcast %138 : vector<8x1xf32> to vector<8x8xf32>
    %140 = arith.mulf %137, %139 : vector<8x8xf32>
    %c0_47 = arith.constant 0 : index
    %c24 = arith.constant 24 : index
    %141 = vector.load %arg11[%c0_47, %c24] : memref<32x32xf32, #tpu.memory_space<vmem>>, vector<8x8xf32>
    tpu.vector_store %arg11[%c0_47, %c24], %140 {strides = array<i32>} : memref<32x32xf32, #tpu.memory_space<vmem>>, vector<8x8xf32>,
    %142 = vector.extract_strided_slice %5 {offsets = [1, 0], sizes = [1, 8], strides = [1, 1]} : vector<4x8xf32> to vector<1x8xf32>
    %143 = vector.shape_cast %142 : vector<1x8xf32> to vector<1x8xf32>
    %144 = vector.broadcast %143 : vector<1x8xf32> to vector<8x8xf32>
    %145 = vector.extract_strided_slice %52 {offsets = [8, 0], sizes = [8, 8], strides = [1, 1]} : vector<32x32xf32> to vector<8x8xf32>
    %146 = arith.truncf %145 : vector<8x8xf32> to vector<8x8xbf16>
    %147 = vector.extract_strided_slice %53 {offsets = [8, 0], sizes = [8, 8], strides = [1, 1]} : vector<32x32xf32> to vector<8x8xf32>
    %148 = arith.truncf %147 : vector<8x8xf32> to vector<8x8xbf16>
    %149 = vector.extract_strided_slice %54 {offsets = [8, 0], sizes = [8, 8], strides = [1, 1]} : vector<32x32xf32> to vector<8x8xf32>
    %150 = arith.truncf %149 : vector<8x8xf32> to vector<8x8xbf16>
    "tpu.trace_start"() <{level = 10 : i32, message = "qd,kd->qk"}> : () -> ()
    %cst_48 = arith.constant dense<0.000000e+00> : vector<8x8xf32>
    %151 = tpu.matmul %146, %148, %cst_48 {dimension_numbers = #tpu.dot_dimension_numbers<[1], [1], [0], [0], [0, 0, 1, 0], [], []>} : vector<8x8xbf16>, vector<8x8xbf16>, vector<8x8xf32> -> vector<8x8xf32>
    "tpu.trace_stop"() : () -> ()
    %152 = arith.addf %151, %144 : vector<8x8xf32>
    %cst_49 = arith.constant dense<0xFF800000> : vector<8xf32>
    %153 = vector.multi_reduction <maximumf>, %152, %cst_49 [1] : vector<8x8xf32> to vector<8xf32>
    %154 = vector.shape_cast %153 : vector<8xf32> to vector<8x1xf32>
    %155 = vector.broadcast %154 : vector<8x1xf32> to vector<8x8xf32>
    %156 = arith.subf %152, %155 : vector<8x8xf32>
    %157 = math.exp %156 : vector<8x8xf32>
    %cst_50 = arith.constant dense<0.000000e+00> : vector<8xf32>
    %158 = vector.multi_reduction <add>, %157, %cst_50 [1] : vector<8x8xf32> to vector<8xf32>
    %159 = vector.shape_cast %158 : vector<8xf32> to vector<8x1xf32>
    %160 = arith.truncf %157 : vector<8x8xf32> to vector<8x8xbf16>
    %cst_51 = arith.constant dense<0.000000e+00> : vector<8x8xf32>
    %161 = tpu.matmul %160, %150, %cst_51 {dimension_numbers = #tpu.dot_dimension_numbers<[1], [0], [0], [1], [0, 0, 1, 1], [], []>} : vector<8x8xbf16>, vector<8x8xbf16>, vector<8x8xf32> -> vector<8x8xf32>
    %162 = tpu.reciprocal %159 {approx = true} : vector<8x1xf32> -> vector<8x1xf32>
    %163 = vector.broadcast %162 : vector<8x1xf32> to vector<8x8xf32>
    %164 = arith.mulf %161, %163 : vector<8x8xf32>
    %c8_52 = arith.constant 8 : index
    %c0_53 = arith.constant 0 : index
    %165 = vector.load %arg11[%c8_52, %c0_53] : memref<32x32xf32, #tpu.memory_space<vmem>>, vector<8x8xf32>
    tpu.vector_store %arg11[%c8_52, %c0_53], %164 {strides = array<i32>} : memref<32x32xf32, #tpu.memory_space<vmem>>, vector<8x8xf32>,
    %166 = vector.extract_strided_slice %52 {offsets = [8, 8], sizes = [8, 8], strides = [1, 1]} : vector<32x32xf32> to vector<8x8xf32>
    %167 = arith.truncf %166 : vector<8x8xf32> to vector<8x8xbf16>
    %168 = vector.extract_strided_slice %53 {offsets = [8, 8], sizes = [8, 8], strides = [1, 1]} : vector<32x32xf32> to vector<8x8xf32>
    %169 = arith.truncf %168 : vector<8x8xf32> to vector<8x8xbf16>
    %170 = vector.extract_strided_slice %54 {offsets = [8, 8], sizes = [8, 8], strides = [1, 1]} : vector<32x32xf32> to vector<8x8xf32>
    %171 = arith.truncf %170 : vector<8x8xf32> to vector<8x8xbf16>
    "tpu.trace_start"() <{level = 10 : i32, message = "qd,kd->qk"}> : () -> ()
    %cst_54 = arith.constant dense<0.000000e+00> : vector<8x8xf32>
    %172 = tpu.matmul %167, %169, %cst_54 {dimension_numbers = #tpu.dot_dimension_numbers<[1], [1], [0], [0], [0, 0, 1, 0], [], []>} : vector<8x8xbf16>, vector<8x8xbf16>, vector<8x8xf32> -> vector<8x8xf32>
    "tpu.trace_stop"() : () -> ()
    %173 = arith.addf %172, %144 : vector<8x8xf32>
    %cst_55 = arith.constant dense<0xFF800000> : vector<8xf32>
    %174 = vector.multi_reduction <maximumf>, %173, %cst_55 [1] : vector<8x8xf32> to vector<8xf32>
    %175 = vector.shape_cast %174 : vector<8xf32> to vector<8x1xf32>
    %176 = vector.broadcast %175 : vector<8x1xf32> to vector<8x8xf32>
    %177 = arith.subf %173, %176 : vector<8x8xf32>
    %178 = math.exp %177 : vector<8x8xf32>
    %cst_56 = arith.constant dense<0.000000e+00> : vector<8xf32>
    %179 = vector.multi_reduction <add>, %178, %cst_56 [1] : vector<8x8xf32> to vector<8xf32>
    %180 = vector.shape_cast %179 : vector<8xf32> to vector<8x1xf32>
    %181 = arith.truncf %178 : vector<8x8xf32> to vector<8x8xbf16>
    %cst_57 = arith.constant dense<0.000000e+00> : vector<8x8xf32>
    %182 = tpu.matmul %181, %171, %cst_57 {dimension_numbers = #tpu.dot_dimension_numbers<[1], [0], [0], [1], [0, 0, 1, 1], [], []>} : vector<8x8xbf16>, vector<8x8xbf16>, vector<8x8xf32> -> vector<8x8xf32>
    %183 = tpu.reciprocal %180 {approx = true} : vector<8x1xf32> -> vector<8x1xf32>
    %184 = vector.broadcast %183 : vector<8x1xf32> to vector<8x8xf32>
    %185 = arith.mulf %182, %184 : vector<8x8xf32>
    %c8_58 = arith.constant 8 : index
    %c8_59 = arith.constant 8 : index
    %186 = vector.load %arg11[%c8_58, %c8_59] : memref<32x32xf32, #tpu.memory_space<vmem>>, vector<8x8xf32>
    tpu.vector_store %arg11[%c8_58, %c8_59], %185 {strides = array<i32>} : memref<32x32xf32, #tpu.memory_space<vmem>>, vector<8x8xf32>,
    %187 = vector.extract_strided_slice %52 {offsets = [8, 16], sizes = [8, 8], strides = [1, 1]} : vector<32x32xf32> to vector<8x8xf32>
    %188 = arith.truncf %187 : vector<8x8xf32> to vector<8x8xbf16>
    %189 = vector.extract_strided_slice %53 {offsets = [8, 16], sizes = [8, 8], strides = [1, 1]} : vector<32x32xf32> to vector<8x8xf32>
    %190 = arith.truncf %189 : vector<8x8xf32> to vector<8x8xbf16>
    %191 = vector.extract_strided_slice %54 {offsets = [8, 16], sizes = [8, 8], strides = [1, 1]} : vector<32x32xf32> to vector<8x8xf32>
    %192 = arith.truncf %191 : vector<8x8xf32> to vector<8x8xbf16>
    "tpu.trace_start"() <{level = 10 : i32, message = "qd,kd->qk"}> : () -> ()
    %cst_60 = arith.constant dense<0.000000e+00> : vector<8x8xf32>
    %193 = tpu.matmul %188, %190, %cst_60 {dimension_numbers = #tpu.dot_dimension_numbers<[1], [1], [0], [0], [0, 0, 1, 0], [], []>} : vector<8x8xbf16>, vector<8x8xbf16>, vector<8x8xf32> -> vector<8x8xf32>
    "tpu.trace_stop"() : () -> ()
    %194 = arith.addf %193, %144 : vector<8x8xf32>
    %cst_61 = arith.constant dense<0xFF800000> : vector<8xf32>
    %195 = vector.multi_reduction <maximumf>, %194, %cst_61 [1] : vector<8x8xf32> to vector<8xf32>
    %196 = vector.shape_cast %195 : vector<8xf32> to vector<8x1xf32>
    %197 = vector.broadcast %196 : vector<8x1xf32> to vector<8x8xf32>
    %198 = arith.subf %194, %197 : vector<8x8xf32>
    %199 = math.exp %198 : vector<8x8xf32>
    %cst_62 = arith.constant dense<0.000000e+00> : vector<8xf32>
    %200 = vector.multi_reduction <add>, %199, %cst_62 [1] : vector<8x8xf32> to vector<8xf32>
    %201 = vector.shape_cast %200 : vector<8xf32> to vector<8x1xf32>
    %202 = arith.truncf %199 : vector<8x8xf32> to vector<8x8xbf16>
    %cst_63 = arith.constant dense<0.000000e+00> : vector<8x8xf32>
    %203 = tpu.matmul %202, %192, %cst_63 {dimension_numbers = #tpu.dot_dimension_numbers<[1], [0], [0], [1], [0, 0, 1, 1], [], []>} : vector<8x8xbf16>, vector<8x8xbf16>, vector<8x8xf32> -> vector<8x8xf32>
    %204 = tpu.reciprocal %201 {approx = true} : vector<8x1xf32> -> vector<8x1xf32>
    %205 = vector.broadcast %204 : vector<8x1xf32> to vector<8x8xf32>
    %206 = arith.mulf %203, %205 : vector<8x8xf32>
    %c8_64 = arith.constant 8 : index
    %c16_65 = arith.constant 16 : index
    %207 = vector.load %arg11[%c8_64, %c16_65] : memref<32x32xf32, #tpu.memory_space<vmem>>, vector<8x8xf32>
    tpu.vector_store %arg11[%c8_64, %c16_65], %206 {strides = array<i32>} : memref<32x32xf32, #tpu.memory_space<vmem>>, vector<8x8xf32>,
    %208 = vector.extract_strided_slice %52 {offsets = [8, 24], sizes = [8, 8], strides = [1, 1]} : vector<32x32xf32> to vector<8x8xf32>
    %209 = arith.truncf %208 : vector<8x8xf32> to vector<8x8xbf16>
    %210 = vector.extract_strided_slice %53 {offsets = [8, 24], sizes = [8, 8], strides = [1, 1]} : vector<32x32xf32> to vector<8x8xf32>
    %211 = arith.truncf %210 : vector<8x8xf32> to vector<8x8xbf16>
    %212 = vector.extract_strided_slice %54 {offsets = [8, 24], sizes = [8, 8], strides = [1, 1]} : vector<32x32xf32> to vector<8x8xf32>
    %213 = arith.truncf %212 : vector<8x8xf32> to vector<8x8xbf16>
    "tpu.trace_start"() <{level = 10 : i32, message = "qd,kd->qk"}> : () -> ()
    %cst_66 = arith.constant dense<0.000000e+00> : vector<8x8xf32>
    %214 = tpu.matmul %209, %211, %cst_66 {dimension_numbers = #tpu.dot_dimension_numbers<[1], [1], [0], [0], [0, 0, 1, 0], [], []>} : vector<8x8xbf16>, vector<8x8xbf16>, vector<8x8xf32> -> vector<8x8xf32>
    "tpu.trace_stop"() : () -> ()
    %215 = arith.addf %214, %144 : vector<8x8xf32>
    %cst_67 = arith.constant dense<0xFF800000> : vector<8xf32>
    %216 = vector.multi_reduction <maximumf>, %215, %cst_67 [1] : vector<8x8xf32> to vector<8xf32>
    %217 = vector.shape_cast %216 : vector<8xf32> to vector<8x1xf32>
    %218 = vector.broadcast %217 : vector<8x1xf32> to vector<8x8xf32>
    %219 = arith.subf %215, %218 : vector<8x8xf32>
    %220 = math.exp %219 : vector<8x8xf32>
    %cst_68 = arith.constant dense<0.000000e+00> : vector<8xf32>
    %221 = vector.multi_reduction <add>, %220, %cst_68 [1] : vector<8x8xf32> to vector<8xf32>
    %222 = vector.shape_cast %221 : vector<8xf32> to vector<8x1xf32>
    %223 = arith.truncf %220 : vector<8x8xf32> to vector<8x8xbf16>
    %cst_69 = arith.constant dense<0.000000e+00> : vector<8x8xf32>
    %224 = tpu.matmul %223, %213, %cst_69 {dimension_numbers = #tpu.dot_dimension_numbers<[1], [0], [0], [1], [0, 0, 1, 1], [], []>} : vector<8x8xbf16>, vector<8x8xbf16>, vector<8x8xf32> -> vector<8x8xf32>
    %225 = tpu.reciprocal %222 {approx = true} : vector<8x1xf32> -> vector<8x1xf32>
    %226 = vector.broadcast %225 : vector<8x1xf32> to vector<8x8xf32>
    %227 = arith.mulf %224, %226 : vector<8x8xf32>
    %c8_70 = arith.constant 8 : index
    %c24_71 = arith.constant 24 : index
    %228 = vector.load %arg11[%c8_70, %c24_71] : memref<32x32xf32, #tpu.memory_space<vmem>>, vector<8x8xf32>
    tpu.vector_store %arg11[%c8_70, %c24_71], %227 {strides = array<i32>} : memref<32x32xf32, #tpu.memory_space<vmem>>, vector<8x8xf32>,
    %229 = vector.extract_strided_slice %5 {offsets = [2, 0], sizes = [1, 8], strides = [1, 1]} : vector<4x8xf32> to vector<1x8xf32>
    %230 = vector.shape_cast %229 : vector<1x8xf32> to vector<1x8xf32>
    %231 = vector.broadcast %230 : vector<1x8xf32> to vector<8x8xf32>
    %232 = vector.extract_strided_slice %52 {offsets = [16, 0], sizes = [8, 8], strides = [1, 1]} : vector<32x32xf32> to vector<8x8xf32>
    %233 = arith.truncf %232 : vector<8x8xf32> to vector<8x8xbf16>
    %234 = vector.extract_strided_slice %53 {offsets = [16, 0], sizes = [8, 8], strides = [1, 1]} : vector<32x32xf32> to vector<8x8xf32>
    %235 = arith.truncf %234 : vector<8x8xf32> to vector<8x8xbf16>
    %236 = vector.extract_strided_slice %54 {offsets = [16, 0], sizes = [8, 8], strides = [1, 1]} : vector<32x32xf32> to vector<8x8xf32>
    %237 = arith.truncf %236 : vector<8x8xf32> to vector<8x8xbf16>
    "tpu.trace_start"() <{level = 10 : i32, message = "qd,kd->qk"}> : () -> ()
    %cst_72 = arith.constant dense<0.000000e+00> : vector<8x8xf32>
    %238 = tpu.matmul %233, %235, %cst_72 {dimension_numbers = #tpu.dot_dimension_numbers<[1], [1], [0], [0], [0, 0, 1, 0], [], []>} : vector<8x8xbf16>, vector<8x8xbf16>, vector<8x8xf32> -> vector<8x8xf32>
    "tpu.trace_stop"() : () -> ()
    %239 = arith.addf %238, %231 : vector<8x8xf32>
    %cst_73 = arith.constant dense<0xFF800000> : vector<8xf32>
    %240 = vector.multi_reduction <maximumf>, %239, %cst_73 [1] : vector<8x8xf32> to vector<8xf32>
    %241 = vector.shape_cast %240 : vector<8xf32> to vector<8x1xf32>
    %242 = vector.broadcast %241 : vector<8x1xf32> to vector<8x8xf32>
    %243 = arith.subf %239, %242 : vector<8x8xf32>
    %244 = math.exp %243 : vector<8x8xf32>
    %cst_74 = arith.constant dense<0.000000e+00> : vector<8xf32>
    %245 = vector.multi_reduction <add>, %244, %cst_74 [1] : vector<8x8xf32> to vector<8xf32>
    %246 = vector.shape_cast %245 : vector<8xf32> to vector<8x1xf32>
    %247 = arith.truncf %244 : vector<8x8xf32> to vector<8x8xbf16>
    %cst_75 = arith.constant dense<0.000000e+00> : vector<8x8xf32>
    %248 = tpu.matmul %247, %237, %cst_75 {dimension_numbers = #tpu.dot_dimension_numbers<[1], [0], [0], [1], [0, 0, 1, 1], [], []>} : vector<8x8xbf16>, vector<8x8xbf16>, vector<8x8xf32> -> vector<8x8xf32>
    %249 = tpu.reciprocal %246 {approx = true} : vector<8x1xf32> -> vector<8x1xf32>
    %250 = vector.broadcast %249 : vector<8x1xf32> to vector<8x8xf32>
    %251 = arith.mulf %248, %250 : vector<8x8xf32>
    %c16_76 = arith.constant 16 : index
    %c0_77 = arith.constant 0 : index
    %252 = vector.load %arg11[%c16_76, %c0_77] : memref<32x32xf32, #tpu.memory_space<vmem>>, vector<8x8xf32>
    tpu.vector_store %arg11[%c16_76, %c0_77], %251 {strides = array<i32>} : memref<32x32xf32, #tpu.memory_space<vmem>>, vector<8x8xf32>,
    %253 = vector.extract_strided_slice %52 {offsets = [16, 8], sizes = [8, 8], strides = [1, 1]} : vector<32x32xf32> to vector<8x8xf32>
    %254 = arith.truncf %253 : vector<8x8xf32> to vector<8x8xbf16>
    %255 = vector.extract_strided_slice %53 {offsets = [16, 8], sizes = [8, 8], strides = [1, 1]} : vector<32x32xf32> to vector<8x8xf32>
    %256 = arith.truncf %255 : vector<8x8xf32> to vector<8x8xbf16>
    %257 = vector.extract_strided_slice %54 {offsets = [16, 8], sizes = [8, 8], strides = [1, 1]} : vector<32x32xf32> to vector<8x8xf32>
    %258 = arith.truncf %257 : vector<8x8xf32> to vector<8x8xbf16>
    "tpu.trace_start"() <{level = 10 : i32, message = "qd,kd->qk"}> : () -> ()
    %cst_78 = arith.constant dense<0.000000e+00> : vector<8x8xf32>
    %259 = tpu.matmul %254, %256, %cst_78 {dimension_numbers = #tpu.dot_dimension_numbers<[1], [1], [0], [0], [0, 0, 1, 0], [], []>} : vector<8x8xbf16>, vector<8x8xbf16>, vector<8x8xf32> -> vector<8x8xf32>
    "tpu.trace_stop"() : () -> ()
    %260 = arith.addf %259, %231 : vector<8x8xf32>
    %cst_79 = arith.constant dense<0xFF800000> : vector<8xf32>
    %261 = vector.multi_reduction <maximumf>, %260, %cst_79 [1] : vector<8x8xf32> to vector<8xf32>
    %262 = vector.shape_cast %261 : vector<8xf32> to vector<8x1xf32>
    %263 = vector.broadcast %262 : vector<8x1xf32> to vector<8x8xf32>
    %264 = arith.subf %260, %263 : vector<8x8xf32>
    %265 = math.exp %264 : vector<8x8xf32>
    %cst_80 = arith.constant dense<0.000000e+00> : vector<8xf32>
    %266 = vector.multi_reduction <add>, %265, %cst_80 [1] : vector<8x8xf32> to vector<8xf32>
    %267 = vector.shape_cast %266 : vector<8xf32> to vector<8x1xf32>
    %268 = arith.truncf %265 : vector<8x8xf32> to vector<8x8xbf16>
    %cst_81 = arith.constant dense<0.000000e+00> : vector<8x8xf32>
    %269 = tpu.matmul %268, %258, %cst_81 {dimension_numbers = #tpu.dot_dimension_numbers<[1], [0], [0], [1], [0, 0, 1, 1], [], []>} : vector<8x8xbf16>, vector<8x8xbf16>, vector<8x8xf32> -> vector<8x8xf32>
    %270 = tpu.reciprocal %267 {approx = true} : vector<8x1xf32> -> vector<8x1xf32>
    %271 = vector.broadcast %270 : vector<8x1xf32> to vector<8x8xf32>
    %272 = arith.mulf %269, %271 : vector<8x8xf32>
    %c16_82 = arith.constant 16 : index
    %c8_83 = arith.constant 8 : index
    %273 = vector.load %arg11[%c16_82, %c8_83] : memref<32x32xf32, #tpu.memory_space<vmem>>, vector<8x8xf32>
    tpu.vector_store %arg11[%c16_82, %c8_83], %272 {strides = array<i32>} : memref<32x32xf32, #tpu.memory_space<vmem>>, vector<8x8xf32>,
    %274 = vector.extract_strided_slice %52 {offsets = [16, 16], sizes = [8, 8], strides = [1, 1]} : vector<32x32xf32> to vector<8x8xf32>
    %275 = arith.truncf %274 : vector<8x8xf32> to vector<8x8xbf16>
    %276 = vector.extract_strided_slice %53 {offsets = [16, 16], sizes = [8, 8], strides = [1, 1]} : vector<32x32xf32> to vector<8x8xf32>
    %277 = arith.truncf %276 : vector<8x8xf32> to vector<8x8xbf16>
    %278 = vector.extract_strided_slice %54 {offsets = [16, 16], sizes = [8, 8], strides = [1, 1]} : vector<32x32xf32> to vector<8x8xf32>
    %279 = arith.truncf %278 : vector<8x8xf32> to vector<8x8xbf16>
    "tpu.trace_start"() <{level = 10 : i32, message = "qd,kd->qk"}> : () -> ()
    %cst_84 = arith.constant dense<0.000000e+00> : vector<8x8xf32>
    %280 = tpu.matmul %275, %277, %cst_84 {dimension_numbers = #tpu.dot_dimension_numbers<[1], [1], [0], [0], [0, 0, 1, 0], [], []>} : vector<8x8xbf16>, vector<8x8xbf16>, vector<8x8xf32> -> vector<8x8xf32>
    "tpu.trace_stop"() : () -> ()
    %281 = arith.addf %280, %231 : vector<8x8xf32>
    %cst_85 = arith.constant dense<0xFF800000> : vector<8xf32>
    %282 = vector.multi_reduction <maximumf>, %281, %cst_85 [1] : vector<8x8xf32> to vector<8xf32>
    %283 = vector.shape_cast %282 : vector<8xf32> to vector<8x1xf32>
    %284 = vector.broadcast %283 : vector<8x1xf32> to vector<8x8xf32>
    %285 = arith.subf %281, %284 : vector<8x8xf32>
    %286 = math.exp %285 : vector<8x8xf32>
    %cst_86 = arith.constant dense<0.000000e+00> : vector<8xf32>
    %287 = vector.multi_reduction <add>, %286, %cst_86 [1] : vector<8x8xf32> to vector<8xf32>
    %288 = vector.shape_cast %287 : vector<8xf32> to vector<8x1xf32>
    %289 = arith.truncf %286 : vector<8x8xf32> to vector<8x8xbf16>
    %cst_87 = arith.constant dense<0.000000e+00> : vector<8x8xf32>
    %290 = tpu.matmul %289, %279, %cst_87 {dimension_numbers = #tpu.dot_dimension_numbers<[1], [0], [0], [1], [0, 0, 1, 1], [], []>} : vector<8x8xbf16>, vector<8x8xbf16>, vector<8x8xf32> -> vector<8x8xf32>
    %291 = tpu.reciprocal %288 {approx = true} : vector<8x1xf32> -> vector<8x1xf32>
    %292 = vector.broadcast %291 : vector<8x1xf32> to vector<8x8xf32>
    %293 = arith.mulf %290, %292 : vector<8x8xf32>
    %c16_88 = arith.constant 16 : index
    %c16_89 = arith.constant 16 : index
    %294 = vector.load %arg11[%c16_88, %c16_89] : memref<32x32xf32, #tpu.memory_space<vmem>>, vector<8x8xf32>
    tpu.vector_store %arg11[%c16_88, %c16_89], %293 {strides = array<i32>} : memref<32x32xf32, #tpu.memory_space<vmem>>, vector<8x8xf32>,
    %295 = vector.extract_strided_slice %52 {offsets = [16, 24], sizes = [8, 8], strides = [1, 1]} : vector<32x32xf32> to vector<8x8xf32>
    %296 = arith.truncf %295 : vector<8x8xf32> to vector<8x8xbf16>
    %297 = vector.extract_strided_slice %53 {offsets = [16, 24], sizes = [8, 8], strides = [1, 1]} : vector<32x32xf32> to vector<8x8xf32>
    %298 = arith.truncf %297 : vector<8x8xf32> to vector<8x8xbf16>
    %299 = vector.extract_strided_slice %54 {offsets = [16, 24], sizes = [8, 8], strides = [1, 1]} : vector<32x32xf32> to vector<8x8xf32>
    %300 = arith.truncf %299 : vector<8x8xf32> to vector<8x8xbf16>
    "tpu.trace_start"() <{level = 10 : i32, message = "qd,kd->qk"}> : () -> ()
    %cst_90 = arith.constant dense<0.000000e+00> : vector<8x8xf32>
    %301 = tpu.matmul %296, %298, %cst_90 {dimension_numbers = #tpu.dot_dimension_numbers<[1], [1], [0], [0], [0, 0, 1, 0], [], []>} : vector<8x8xbf16>, vector<8x8xbf16>, vector<8x8xf32> -> vector<8x8xf32>
    "tpu.trace_stop"() : () -> ()
    %302 = arith.addf %301, %231 : vector<8x8xf32>
    %cst_91 = arith.constant dense<0xFF800000> : vector<8xf32>
    %303 = vector.multi_reduction <maximumf>, %302, %cst_91 [1] : vector<8x8xf32> to vector<8xf32>
    %304 = vector.shape_cast %303 : vector<8xf32> to vector<8x1xf32>
    %305 = vector.broadcast %304 : vector<8x1xf32> to vector<8x8xf32>
    %306 = arith.subf %302, %305 : vector<8x8xf32>
    %307 = math.exp %306 : vector<8x8xf32>
    %cst_92 = arith.constant dense<0.000000e+00> : vector<8xf32>
    %308 = vector.multi_reduction <add>, %307, %cst_92 [1] : vector<8x8xf32> to vector<8xf32>
    %309 = vector.shape_cast %308 : vector<8xf32> to vector<8x1xf32>
    %310 = arith.truncf %307 : vector<8x8xf32> to vector<8x8xbf16>
    %cst_93 = arith.constant dense<0.000000e+00> : vector<8x8xf32>
    %311 = tpu.matmul %310, %300, %cst_93 {dimension_numbers = #tpu.dot_dimension_numbers<[1], [0], [0], [1], [0, 0, 1, 1], [], []>} : vector<8x8xbf16>, vector<8x8xbf16>, vector<8x8xf32> -> vector<8x8xf32>
    %312 = tpu.reciprocal %309 {approx = true} : vector<8x1xf32> -> vector<8x1xf32>
    %313 = vector.broadcast %312 : vector<8x1xf32> to vector<8x8xf32>
    %314 = arith.mulf %311, %313 : vector<8x8xf32>
    %c16_94 = arith.constant 16 : index
    %c24_95 = arith.constant 24 : index
    %315 = vector.load %arg11[%c16_94, %c24_95] : memref<32x32xf32, #tpu.memory_space<vmem>>, vector<8x8xf32>
    tpu.vector_store %arg11[%c16_94, %c24_95], %314 {strides = array<i32>} : memref<32x32xf32, #tpu.memory_space<vmem>>, vector<8x8xf32>,
    %316 = vector.extract_strided_slice %5 {offsets = [3, 0], sizes = [1, 8], strides = [1, 1]} : vector<4x8xf32> to vector<1x8xf32>
    %317 = vector.shape_cast %316 : vector<1x8xf32> to vector<1x8xf32>
    %318 = vector.broadcast %317 : vector<1x8xf32> to vector<8x8xf32>
    %319 = vector.extract_strided_slice %52 {offsets = [24, 0], sizes = [8, 8], strides = [1, 1]} : vector<32x32xf32> to vector<8x8xf32>
    %320 = arith.truncf %319 : vector<8x8xf32> to vector<8x8xbf16>
    %321 = vector.extract_strided_slice %53 {offsets = [24, 0], sizes = [8, 8], strides = [1, 1]} : vector<32x32xf32> to vector<8x8xf32>
    %322 = arith.truncf %321 : vector<8x8xf32> to vector<8x8xbf16>
    %323 = vector.extract_strided_slice %54 {offsets = [24, 0], sizes = [8, 8], strides = [1, 1]} : vector<32x32xf32> to vector<8x8xf32>
    %324 = arith.truncf %323 : vector<8x8xf32> to vector<8x8xbf16>
    "tpu.trace_start"() <{level = 10 : i32, message = "qd,kd->qk"}> : () -> ()
    %cst_96 = arith.constant dense<0.000000e+00> : vector<8x8xf32>
    %325 = tpu.matmul %320, %322, %cst_96 {dimension_numbers = #tpu.dot_dimension_numbers<[1], [1], [0], [0], [0, 0, 1, 0], [], []>} : vector<8x8xbf16>, vector<8x8xbf16>, vector<8x8xf32> -> vector<8x8xf32>
    "tpu.trace_stop"() : () -> ()
    %326 = arith.addf %325, %318 : vector<8x8xf32>
    %cst_97 = arith.constant dense<0xFF800000> : vector<8xf32>
    %327 = vector.multi_reduction <maximumf>, %326, %cst_97 [1] : vector<8x8xf32> to vector<8xf32>
    %328 = vector.shape_cast %327 : vector<8xf32> to vector<8x1xf32>
    %329 = vector.broadcast %328 : vector<8x1xf32> to vector<8x8xf32>
    %330 = arith.subf %326, %329 : vector<8x8xf32>
    %331 = math.exp %330 : vector<8x8xf32>
    %cst_98 = arith.constant dense<0.000000e+00> : vector<8xf32>
    %332 = vector.multi_reduction <add>, %331, %cst_98 [1] : vector<8x8xf32> to vector<8xf32>
    %333 = vector.shape_cast %332 : vector<8xf32> to vector<8x1xf32>
    %334 = arith.truncf %331 : vector<8x8xf32> to vector<8x8xbf16>
    %cst_99 = arith.constant dense<0.000000e+00> : vector<8x8xf32>
    %335 = tpu.matmul %334, %324, %cst_99 {dimension_numbers = #tpu.dot_dimension_numbers<[1], [0], [0], [1], [0, 0, 1, 1], [], []>} : vector<8x8xbf16>, vector<8x8xbf16>, vector<8x8xf32> -> vector<8x8xf32>
    %336 = tpu.reciprocal %333 {approx = true} : vector<8x1xf32> -> vector<8x1xf32>
    %337 = vector.broadcast %336 : vector<8x1xf32> to vector<8x8xf32>
    %338 = arith.mulf %335, %337 : vector<8x8xf32>
    %c24_100 = arith.constant 24 : index
    %c0_101 = arith.constant 0 : index
    %339 = vector.load %arg11[%c24_100, %c0_101] : memref<32x32xf32, #tpu.memory_space<vmem>>, vector<8x8xf32>
    tpu.vector_store %arg11[%c24_100, %c0_101], %338 {strides = array<i32>} : memref<32x32xf32, #tpu.memory_space<vmem>>, vector<8x8xf32>,
    %340 = vector.extract_strided_slice %52 {offsets = [24, 8], sizes = [8, 8], strides = [1, 1]} : vector<32x32xf32> to vector<8x8xf32>
    %341 = arith.truncf %340 : vector<8x8xf32> to vector<8x8xbf16>
    %342 = vector.extract_strided_slice %53 {offsets = [24, 8], sizes = [8, 8], strides = [1, 1]} : vector<32x32xf32> to vector<8x8xf32>
    %343 = arith.truncf %342 : vector<8x8xf32> to vector<8x8xbf16>
    %344 = vector.extract_strided_slice %54 {offsets = [24, 8], sizes = [8, 8], strides = [1, 1]} : vector<32x32xf32> to vector<8x8xf32>
    %345 = arith.truncf %344 : vector<8x8xf32> to vector<8x8xbf16>
    "tpu.trace_start"() <{level = 10 : i32, message = "qd,kd->qk"}> : () -> ()
    %cst_102 = arith.constant dense<0.000000e+00> : vector<8x8xf32>
    %346 = tpu.matmul %341, %343, %cst_102 {dimension_numbers = #tpu.dot_dimension_numbers<[1], [1], [0], [0], [0, 0, 1, 0], [], []>} : vector<8x8xbf16>, vector<8x8xbf16>, vector<8x8xf32> -> vector<8x8xf32>
    "tpu.trace_stop"() : () -> ()
    %347 = arith.addf %346, %318 : vector<8x8xf32>
    %cst_103 = arith.constant dense<0xFF800000> : vector<8xf32>
    %348 = vector.multi_reduction <maximumf>, %347, %cst_103 [1] : vector<8x8xf32> to vector<8xf32>
    %349 = vector.shape_cast %348 : vector<8xf32> to vector<8x1xf32>
    %350 = vector.broadcast %349 : vector<8x1xf32> to vector<8x8xf32>
    %351 = arith.subf %347, %350 : vector<8x8xf32>
    %352 = math.exp %351 : vector<8x8xf32>
    %cst_104 = arith.constant dense<0.000000e+00> : vector<8xf32>
    %353 = vector.multi_reduction <add>, %352, %cst_104 [1] : vector<8x8xf32> to vector<8xf32>
    %354 = vector.shape_cast %353 : vector<8xf32> to vector<8x1xf32>
    %355 = arith.truncf %352 : vector<8x8xf32> to vector<8x8xbf16>
    %cst_105 = arith.constant dense<0.000000e+00> : vector<8x8xf32>
    %356 = tpu.matmul %355, %345, %cst_105 {dimension_numbers = #tpu.dot_dimension_numbers<[1], [0], [0], [1], [0, 0, 1, 1], [], []>} : vector<8x8xbf16>, vector<8x8xbf16>, vector<8x8xf32> -> vector<8x8xf32>
    %357 = tpu.reciprocal %354 {approx = true} : vector<8x1xf32> -> vector<8x1xf32>
    %358 = vector.broadcast %357 : vector<8x1xf32> to vector<8x8xf32>
    %359 = arith.mulf %356, %358 : vector<8x8xf32>
    %c24_106 = arith.constant 24 : index
    %c8_107 = arith.constant 8 : index
    %360 = vector.load %arg11[%c24_106, %c8_107] : memref<32x32xf32, #tpu.memory_space<vmem>>, vector<8x8xf32>
    tpu.vector_store %arg11[%c24_106, %c8_107], %359 {strides = array<i32>} : memref<32x32xf32, #tpu.memory_space<vmem>>, vector<8x8xf32>,
    %361 = vector.extract_strided_slice %52 {offsets = [24, 16], sizes = [8, 8], strides = [1, 1]} : vector<32x32xf32> to vector<8x8xf32>
    %362 = arith.truncf %361 : vector<8x8xf32> to vector<8x8xbf16>
    %363 = vector.extract_strided_slice %53 {offsets = [24, 16], sizes = [8, 8], strides = [1, 1]} : vector<32x32xf32> to vector<8x8xf32>
    %364 = arith.truncf %363 : vector<8x8xf32> to vector<8x8xbf16>
    %365 = vector.extract_strided_slice %54 {offsets = [24, 16], sizes = [8, 8], strides = [1, 1]} : vector<32x32xf32> to vector<8x8xf32>
    %366 = arith.truncf %365 : vector<8x8xf32> to vector<8x8xbf16>
    "tpu.trace_start"() <{level = 10 : i32, message = "qd,kd->qk"}> : () -> ()
    %cst_108 = arith.constant dense<0.000000e+00> : vector<8x8xf32>
    %367 = tpu.matmul %362, %364, %cst_108 {dimension_numbers = #tpu.dot_dimension_numbers<[1], [1], [0], [0], [0, 0, 1, 0], [], []>} : vector<8x8xbf16>, vector<8x8xbf16>, vector<8x8xf32> -> vector<8x8xf32>
    "tpu.trace_stop"() : () -> ()
    %368 = arith.addf %367, %318 : vector<8x8xf32>
    %cst_109 = arith.constant dense<0xFF800000> : vector<8xf32>
    %369 = vector.multi_reduction <maximumf>, %368, %cst_109 [1] : vector<8x8xf32> to vector<8xf32>
    %370 = vector.shape_cast %369 : vector<8xf32> to vector<8x1xf32>
    %371 = vector.broadcast %370 : vector<8x1xf32> to vector<8x8xf32>
    %372 = arith.subf %368, %371 : vector<8x8xf32>
    %373 = math.exp %372 : vector<8x8xf32>
    %cst_110 = arith.constant dense<0.000000e+00> : vector<8xf32>
    %374 = vector.multi_reduction <add>, %373, %cst_110 [1] : vector<8x8xf32> to vector<8xf32>
    %375 = vector.shape_cast %374 : vector<8xf32> to vector<8x1xf32>
    %376 = arith.truncf %373 : vector<8x8xf32> to vector<8x8xbf16>
    %cst_111 = arith.constant dense<0.000000e+00> : vector<8x8xf32>
    %377 = tpu.matmul %376, %366, %cst_111 {dimension_numbers = #tpu.dot_dimension_numbers<[1], [0], [0], [1], [0, 0, 1, 1], [], []>} : vector<8x8xbf16>, vector<8x8xbf16>, vector<8x8xf32> -> vector<8x8xf32>
    %378 = tpu.reciprocal %375 {approx = true} : vector<8x1xf32> -> vector<8x1xf32>
    %379 = vector.broadcast %378 : vector<8x1xf32> to vector<8x8xf32>
    %380 = arith.mulf %377, %379 : vector<8x8xf32>
    %c24_112 = arith.constant 24 : index
    %c16_113 = arith.constant 16 : index
    %381 = vector.load %arg11[%c24_112, %c16_113] : memref<32x32xf32, #tpu.memory_space<vmem>>, vector<8x8xf32>
    tpu.vector_store %arg11[%c24_112, %c16_113], %380 {strides = array<i32>} : memref<32x32xf32, #tpu.memory_space<vmem>>, vector<8x8xf32>,
    %382 = vector.extract_strided_slice %52 {offsets = [24, 24], sizes = [8, 8], strides = [1, 1]} : vector<32x32xf32> to vector<8x8xf32>
    %383 = arith.truncf %382 : vector<8x8xf32> to vector<8x8xbf16>
    %384 = vector.extract_strided_slice %53 {offsets = [24, 24], sizes = [8, 8], strides = [1, 1]} : vector<32x32xf32> to vector<8x8xf32>
    %385 = arith.truncf %384 : vector<8x8xf32> to vector<8x8xbf16>
    %386 = vector.extract_strided_slice %54 {offsets = [24, 24], sizes = [8, 8], strides = [1, 1]} : vector<32x32xf32> to vector<8x8xf32>
    %387 = arith.truncf %386 : vector<8x8xf32> to vector<8x8xbf16>
    "tpu.trace_start"() <{level = 10 : i32, message = "qd,kd->qk"}> : () -> ()
    %cst_114 = arith.constant dense<0.000000e+00> : vector<8x8xf32>
    %388 = tpu.matmul %383, %385, %cst_114 {dimension_numbers = #tpu.dot_dimension_numbers<[1], [1], [0], [0], [0, 0, 1, 0], [], []>} : vector<8x8xbf16>, vector<8x8xbf16>, vector<8x8xf32> -> vector<8x8xf32>
    "tpu.trace_stop"() : () -> ()
    %389 = arith.addf %388, %318 : vector<8x8xf32>
    %cst_115 = arith.constant dense<0xFF800000> : vector<8xf32>
    %390 = vector.multi_reduction <maximumf>, %389, %cst_115 [1] : vector<8x8xf32> to vector<8xf32>
    %391 = vector.shape_cast %390 : vector<8xf32> to vector<8x1xf32>
    %392 = vector.broadcast %391 : vector<8x1xf32> to vector<8x8xf32>
    %393 = arith.subf %389, %392 : vector<8x8xf32>
    %394 = math.exp %393 : vector<8x8xf32>
    %cst_116 = arith.constant dense<0.000000e+00> : vector<8xf32>
    %395 = vector.multi_reduction <add>, %394, %cst_116 [1] : vector<8x8xf32> to vector<8xf32>
    %396 = vector.shape_cast %395 : vector<8xf32> to vector<8x1xf32>
    %397 = arith.truncf %394 : vector<8x8xf32> to vector<8x8xbf16>
    %cst_117 = arith.constant dense<0.000000e+00> : vector<8x8xf32>
    %398 = tpu.matmul %397, %387, %cst_117 {dimension_numbers = #tpu.dot_dimension_numbers<[1], [0], [0], [1], [0, 0, 1, 1], [], []>} : vector<8x8xbf16>, vector<8x8xbf16>, vector<8x8xf32> -> vector<8x8xf32>
    %399 = tpu.reciprocal %396 {approx = true} : vector<8x1xf32> -> vector<8x1xf32>
    %400 = vector.broadcast %399 : vector<8x1xf32> to vector<8x8xf32>
    %401 = arith.mulf %398, %400 : vector<8x8xf32>
    %c24_118 = arith.constant 24 : index
    %c24_119 = arith.constant 24 : index
    %402 = vector.load %arg11[%c24_118, %c24_119] : memref<32x32xf32, #tpu.memory_space<vmem>>, vector<8x8xf32>
    tpu.vector_store %arg11[%c24_118, %c24_119], %401 {strides = array<i32>} : memref<32x32xf32, #tpu.memory_space<vmem>>, vector<8x8xf32>,
    %c0_120 = arith.constant 0 : index
    %c0_121 = arith.constant 0 : index
    %403 = vector.load %arg11[%c0_120, %c0_121] : memref<32x32xf32, #tpu.memory_space<vmem>>, vector<32x32xf32>
    %404 = arith.truncf %403 : vector<32x32xf32> to vector<32x32xbf16>
    %cst_122 = arith.constant dense<0.000000e+00> : vector<32x32xf32>
    %405 = tpu.matmul %404, %33, %cst_122 {dimension_numbers = #tpu.dot_dimension_numbers<[1], [0], [0], [1], [0, 0, 1, 1], [], []>} : vector<32x32xbf16>, vector<32x32xbf16>, vector<32x32xf32> -> vector<32x32xf32>
    %406 = vector.broadcast %41 : vector<1x32xf32> to vector<32x32xf32>
    %407 = arith.addf %405, %406 : vector<32x32xf32>
    %408 = arith.addf %407, %29 : vector<32x32xf32>
    %cst_123 = arith.constant dense<0.000000e+00> : vector<32xf32>
    %409 = vector.multi_reduction <add>, %408, %cst_123 [1] : vector<32x32xf32> to vector<32xf32>
    %410 = vector.shape_cast %409 : vector<32xf32> to vector<32x1xf32>
    %cst_124 = arith.constant 3.200000e+01 : f32
    %411 = vector.broadcast %cst_124 : f32 to vector<32x1xf32>
    %412 = arith.divf %410, %411 : vector<32x1xf32>
    %413 = vector.broadcast %412 : vector<32x1xf32> to vector<32x32xf32>
    %414 = arith.subf %408, %413 : vector<32x32xf32>
    %415 = arith.mulf %414, %414 : vector<32x32xf32>
    %cst_125 = arith.constant dense<0.000000e+00> : vector<32xf32>
    %416 = vector.multi_reduction <add>, %415, %cst_125 [1] : vector<32x32xf32> to vector<32xf32>
    %417 = vector.shape_cast %416 : vector<32xf32> to vector<32x1xf32>
    %cst_126 = arith.constant 3.200000e+01 : f32
    %418 = vector.broadcast %cst_126 : f32 to vector<32x1xf32>
    %419 = arith.divf %417, %418 : vector<32x1xf32>
    %cst_127 = arith.constant 9.99999996E-13 : f32
    %420 = vector.broadcast %cst_127 : f32 to vector<32x1xf32>
    %421 = arith.addf %419, %420 : vector<32x1xf32>
    %422 = math.rsqrt %421 : vector<32x1xf32>
    %423 = vector.broadcast %422 : vector<32x1xf32> to vector<32x32xf32>
    %424 = arith.mulf %414, %423 : vector<32x32xf32>
    %425 = vector.broadcast %42 : vector<1x32xf32> to vector<32x32xf32>
    %426 = arith.mulf %424, %425 : vector<32x32xf32>
    %427 = vector.broadcast %43 : vector<1x32xf32> to vector<32x32xf32>
    %428 = arith.addf %426, %427 : vector<32x32xf32>
    %429 = arith.truncf %428 : vector<32x32xf32> to vector<32x32xbf16>
    %cst_128 = arith.constant dense<0.000000e+00> : vector<32x64xf32>
    %430 = tpu.matmul %429, %35, %cst_128 {dimension_numbers = #tpu.dot_dimension_numbers<[1], [0], [0], [1], [0, 0, 1, 1], [], []>} : vector<32x32xbf16>, vector<32x64xbf16>, vector<32x64xf32> -> vector<32x64xf32>
    %431 = vector.broadcast %44 : vector<1x64xf32> to vector<32x64xf32>
    %432 = arith.addf %430, %431 : vector<32x64xf32>
    %cst_129 = arith.constant 5.000000e-01 : f32
    %433 = vector.broadcast %cst_129 : f32 to vector<32x64xf32>
    %434 = arith.mulf %433, %432 : vector<32x64xf32>
    %cst_130 = arith.constant 4.471500e-02 : f32
    %435 = vector.broadcast %cst_130 : f32 to vector<32x64xf32>
    %436 = arith.mulf %435, %432 : vector<32x64xf32>
    %437 = arith.mulf %436, %432 : vector<32x64xf32>
    %438 = arith.mulf %437, %432 : vector<32x64xf32>
    %439 = arith.addf %432, %438 : vector<32x64xf32>
    %cst_131 = arith.constant 0.797884583 : f32
    %440 = vector.broadcast %cst_131 : f32 to vector<32x64xf32>
    %441 = arith.mulf %440, %439 : vector<32x64xf32>
    %442 = math.tanh %441 : vector<32x64xf32>
    %cst_132 = arith.constant 1.000000e+00 : f32
    %443 = vector.broadcast %cst_132 : f32 to vector<32x64xf32>
    %444 = arith.addf %443, %442 : vector<32x64xf32>
    %445 = arith.mulf %434, %444 : vector<32x64xf32>
    %446 = arith.truncf %445 : vector<32x64xf32> to vector<32x64xbf16>
    %cst_133 = arith.constant dense<0.000000e+00> : vector<32x32xf32>
    %447 = tpu.matmul %446, %37, %cst_133 {dimension_numbers = #tpu.dot_dimension_numbers<[1], [0], [0], [1], [0, 0, 1, 1], [], []>} : vector<32x64xbf16>, vector<64x32xbf16>, vector<32x32xf32> -> vector<32x32xf32>
    %448 = vector.broadcast %45 : vector<1x32xf32> to vector<32x32xf32>
    %449 = arith.addf %447, %448 : vector<32x32xf32>
    %450 = arith.addf %449, %428 : vector<32x32xf32>
    %cst_134 = arith.constant dense<0.000000e+00> : vector<32xf32>
    %451 = vector.multi_reduction <add>, %450, %cst_134 [1] : vector<32x32xf32> to vector<32xf32>
    %452 = vector.shape_cast %451 : vector<32xf32> to vector<32x1xf32>
    %cst_135 = arith.constant 3.200000e+01 : f32
    %453 = vector.broadcast %cst_135 : f32 to vector<32x1xf32>
    %454 = arith.divf %452, %453 : vector<32x1xf32>
    %455 = vector.broadcast %454 : vector<32x1xf32> to vector<32x32xf32>
    %456 = arith.subf %450, %455 : vector<32x32xf32>
    %457 = arith.mulf %456, %456 : vector<32x32xf32>
    %cst_136 = arith.constant dense<0.000000e+00> : vector<32xf32>
    %458 = vector.multi_reduction <add>, %457, %cst_136 [1] : vector<32x32xf32> to vector<32xf32>
    %459 = vector.shape_cast %458 : vector<32xf32> to vector<32x1xf32>
    %cst_137 = arith.constant 3.200000e+01 : f32
    %460 = vector.broadcast %cst_137 : f32 to vector<32x1xf32>
    %461 = arith.divf %459, %460 : vector<32x1xf32>
    %cst_138 = arith.constant 9.99999996E-13 : f32
    %462 = vector.broadcast %cst_138 : f32 to vector<32x1xf32>
    %463 = arith.addf %461, %462 : vector<32x1xf32>
    %464 = math.rsqrt %463 : vector<32x1xf32>
    %465 = vector.broadcast %464 : vector<32x1xf32> to vector<32x32xf32>
    %466 = arith.mulf %456, %465 : vector<32x32xf32>
    %467 = vector.broadcast %46 : vector<1x32xf32> to vector<32x32xf32>
    %468 = arith.mulf %466, %467 : vector<32x32xf32>
    %469 = vector.broadcast %47 : vector<1x32xf32> to vector<32x32xf32>
    %470 = arith.addf %468, %469 : vector<32x32xf32>
    %c1 = arith.constant 1 : index
    %c0_139 = arith.constant 0 : index
    %c0_140 = arith.constant 0 : index
    %471 = vector.load %arg3[%c1, %c0_139, %c0_140] : memref<2x32x96xbf16, #tpu.memory_space<vmem>>, vector<1x32x96xbf16>
    %472 = vector.shape_cast %471 : vector<1x32x96xbf16> to vector<32x96xbf16>
    %c1_141 = arith.constant 1 : index
    %c0_142 = arith.constant 0 : index
    %c0_143 = arith.constant 0 : index
    %473 = vector.load %arg4[%c1_141, %c0_142, %c0_143] : memref<2x32x32xbf16, #tpu.memory_space<vmem>>, vector<1x32x32xbf16>
    %474 = vector.shape_cast %473 : vector<1x32x32xbf16> to vector<32x32xbf16>
    %c1_144 = arith.constant 1 : index
    %c0_145 = arith.constant 0 : index
    %c0_146 = arith.constant 0 : index
    %475 = vector.load %arg5[%c1_144, %c0_145, %c0_146] : memref<2x32x64xbf16, #tpu.memory_space<vmem>>, vector<1x32x64xbf16>
    %476 = vector.shape_cast %475 : vector<1x32x64xbf16> to vector<32x64xbf16>
    %c1_147 = arith.constant 1 : index
    %c0_148 = arith.constant 0 : index
    %c0_149 = arith.constant 0 : index
    %477 = vector.load %arg6[%c1_147, %c0_148, %c0_149] : memref<2x64x32xbf16, #tpu.memory_space<vmem>>, vector<1x64x32xbf16>
    %478 = vector.shape_cast %477 : vector<1x64x32xbf16> to vector<64x32xbf16>
    %c1_150 = arith.constant 1 : index
    %c0_151 = arith.constant 0 : index
    %c0_152 = arith.constant 0 : index
    %479 = vector.load %arg8[%c1_150, %c0_151, %c0_152] : memref<2x8x96xf32, #tpu.memory_space<vmem>>, vector<1x8x96xf32>
    %480 = vector.shape_cast %479 : vector<1x8x96xf32> to vector<8x96xf32>
    %481 = vector.extract_strided_slice %480 {offsets = [0, 0], sizes = [1, 96], strides = [1, 1]} : vector<8x96xf32> to vector<1x96xf32>
    %482 = vector.extract_strided_slice %480 {offsets = [1, 0], sizes = [1, 32], strides = [1, 1]} : vector<8x96xf32> to vector<1x32xf32>
    %483 = vector.extract_strided_slice %480 {offsets = [2, 0], sizes = [1, 32], strides = [1, 1]} : vector<8x96xf32> to vector<1x32xf32>
    %484 = vector.extract_strided_slice %480 {offsets = [3, 0], sizes = [1, 32], strides = [1, 1]} : vector<8x96xf32> to vector<1x32xf32>
    %485 = vector.extract_strided_slice %480 {offsets = [4, 0], sizes = [1, 64], strides = [1, 1]} : vector<8x96xf32> to vector<1x64xf32>
    %486 = vector.extract_strided_slice %480 {offsets = [5, 0], sizes = [1, 32], strides = [1, 1]} : vector<8x96xf32> to vector<1x32xf32>
    %487 = vector.extract_strided_slice %480 {offsets = [6, 0], sizes = [1, 32], strides = [1, 1]} : vector<8x96xf32> to vector<1x32xf32>
    %488 = vector.extract_strided_slice %480 {offsets = [7, 0], sizes = [1, 32], strides = [1, 1]} : vector<8x96xf32> to vector<1x32xf32>
    %489 = arith.truncf %470 : vector<32x32xf32> to vector<32x32xbf16>
    %cst_153 = arith.constant dense<0.000000e+00> : vector<32x96xf32>
    %490 = tpu.matmul %489, %472, %cst_153 {dimension_numbers = #tpu.dot_dimension_numbers<[1], [0], [0], [1], [0, 0, 1, 1], [], []>} : vector<32x32xbf16>, vector<32x96xbf16>, vector<32x96xf32> -> vector<32x96xf32>
    %491 = vector.broadcast %481 : vector<1x96xf32> to vector<32x96xf32>
    %492 = arith.addf %490, %491 : vector<32x96xf32>
    %493 = vector.extract_strided_slice %492 {offsets = [0, 0], sizes = [32, 32], strides = [1, 1]} : vector<32x96xf32> to vector<32x32xf32>
    %494 = vector.extract_strided_slice %492 {offsets = [0, 32], sizes = [32, 32], strides = [1, 1]} : vector<32x96xf32> to vector<32x32xf32>
    %495 = vector.extract_strided_slice %492 {offsets = [0, 64], sizes = [32, 32], strides = [1, 1]} : vector<32x96xf32> to vector<32x32xf32>
    %496 = vector.extract_strided_slice %5 {offsets = [0, 0], sizes = [1, 8], strides = [1, 1]} : vector<4x8xf32> to vector<1x8xf32>
    %497 = vector.shape_cast %496 : vector<1x8xf32> to vector<1x8xf32>
    %498 = vector.broadcast %497 : vector<1x8xf32> to vector<8x8xf32>
    %499 = vector.extract_strided_slice %493 {offsets = [0, 0], sizes = [8, 8], strides = [1, 1]} : vector<32x32xf32> to vector<8x8xf32>
    %500 = arith.truncf %499 : vector<8x8xf32> to vector<8x8xbf16>
    %501 = vector.extract_strided_slice %494 {offsets = [0, 0], sizes = [8, 8], strides = [1, 1]} : vector<32x32xf32> to vector<8x8xf32>
    %502 = arith.truncf %501 : vector<8x8xf32> to vector<8x8xbf16>
    %503 = vector.extract_strided_slice %495 {offsets = [0, 0], sizes = [8, 8], strides = [1, 1]} : vector<32x32xf32> to vector<8x8xf32>
    %504 = arith.truncf %503 : vector<8x8xf32> to vector<8x8xbf16>
    "tpu.trace_start"() <{level = 10 : i32, message = "qd,kd->qk"}> : () -> ()
    %cst_154 = arith.constant dense<0.000000e+00> : vector<8x8xf32>
    %505 = tpu.matmul %500, %502, %cst_154 {dimension_numbers = #tpu.dot_dimension_numbers<[1], [1], [0], [0], [0, 0, 1, 0], [], []>} : vector<8x8xbf16>, vector<8x8xbf16>, vector<8x8xf32> -> vector<8x8xf32>
    "tpu.trace_stop"() : () -> ()
    %506 = arith.addf %505, %498 : vector<8x8xf32>
    %cst_155 = arith.constant dense<0xFF800000> : vector<8xf32>
    %507 = vector.multi_reduction <maximumf>, %506, %cst_155 [1] : vector<8x8xf32> to vector<8xf32>
    %508 = vector.shape_cast %507 : vector<8xf32> to vector<8x1xf32>
    %509 = vector.broadcast %508 : vector<8x1xf32> to vector<8x8xf32>
    %510 = arith.subf %506, %509 : vector<8x8xf32>
    %511 = math.exp %510 : vector<8x8xf32>
    %cst_156 = arith.constant dense<0.000000e+00> : vector<8xf32>
    %512 = vector.multi_reduction <add>, %511, %cst_156 [1] : vector<8x8xf32> to vector<8xf32>
    %513 = vector.shape_cast %512 : vector<8xf32> to vector<8x1xf32>
    %514 = arith.truncf %511 : vector<8x8xf32> to vector<8x8xbf16>
    %cst_157 = arith.constant dense<0.000000e+00> : vector<8x8xf32>
    %515 = tpu.matmul %514, %504, %cst_157 {dimension_numbers = #tpu.dot_dimension_numbers<[1], [0], [0], [1], [0, 0, 1, 1], [], []>} : vector<8x8xbf16>, vector<8x8xbf16>, vector<8x8xf32> -> vector<8x8xf32>
    %516 = tpu.reciprocal %513 {approx = true} : vector<8x1xf32> -> vector<8x1xf32>
    %517 = vector.broadcast %516 : vector<8x1xf32> to vector<8x8xf32>
    %518 = arith.mulf %515, %517 : vector<8x8xf32>
    %c0_158 = arith.constant 0 : index
    %c0_159 = arith.constant 0 : index
    %519 = vector.load %arg11[%c0_158, %c0_159] : memref<32x32xf32, #tpu.memory_space<vmem>>, vector<8x8xf32>
    tpu.vector_store %arg11[%c0_158, %c0_159], %518 {strides = array<i32>} : memref<32x32xf32, #tpu.memory_space<vmem>>, vector<8x8xf32>,
    %520 = vector.extract_strided_slice %493 {offsets = [0, 8], sizes = [8, 8], strides = [1, 1]} : vector<32x32xf32> to vector<8x8xf32>
    %521 = arith.truncf %520 : vector<8x8xf32> to vector<8x8xbf16>
    %522 = vector.extract_strided_slice %494 {offsets = [0, 8], sizes = [8, 8], strides = [1, 1]} : vector<32x32xf32> to vector<8x8xf32>
    %523 = arith.truncf %522 : vector<8x8xf32> to vector<8x8xbf16>
    %524 = vector.extract_strided_slice %495 {offsets = [0, 8], sizes = [8, 8], strides = [1, 1]} : vector<32x32xf32> to vector<8x8xf32>
    %525 = arith.truncf %524 : vector<8x8xf32> to vector<8x8xbf16>
    "tpu.trace_start"() <{level = 10 : i32, message = "qd,kd->qk"}> : () -> ()
    %cst_160 = arith.constant dense<0.000000e+00> : vector<8x8xf32>
    %526 = tpu.matmul %521, %523, %cst_160 {dimension_numbers = #tpu.dot_dimension_numbers<[1], [1], [0], [0], [0, 0, 1, 0], [], []>} : vector<8x8xbf16>, vector<8x8xbf16>, vector<8x8xf32> -> vector<8x8xf32>
    "tpu.trace_stop"() : () -> ()
    %527 = arith.addf %526, %498 : vector<8x8xf32>
    %cst_161 = arith.constant dense<0xFF800000> : vector<8xf32>
    %528 = vector.multi_reduction <maximumf>, %527, %cst_161 [1] : vector<8x8xf32> to vector<8xf32>
    %529 = vector.shape_cast %528 : vector<8xf32> to vector<8x1xf32>
    %530 = vector.broadcast %529 : vector<8x1xf32> to vector<8x8xf32>
    %531 = arith.subf %527, %530 : vector<8x8xf32>
    %532 = math.exp %531 : vector<8x8xf32>
    %cst_162 = arith.constant dense<0.000000e+00> : vector<8xf32>
    %533 = vector.multi_reduction <add>, %532, %cst_162 [1] : vector<8x8xf32> to vector<8xf32>
    %534 = vector.shape_cast %533 : vector<8xf32> to vector<8x1xf32>
    %535 = arith.truncf %532 : vector<8x8xf32> to vector<8x8xbf16>
    %cst_163 = arith.constant dense<0.000000e+00> : vector<8x8xf32>
    %536 = tpu.matmul %535, %525, %cst_163 {dimension_numbers = #tpu.dot_dimension_numbers<[1], [0], [0], [1], [0, 0, 1, 1], [], []>} : vector<8x8xbf16>, vector<8x8xbf16>, vector<8x8xf32> -> vector<8x8xf32>
    %537 = tpu.reciprocal %534 {approx = true} : vector<8x1xf32> -> vector<8x1xf32>
    %538 = vector.broadcast %537 : vector<8x1xf32> to vector<8x8xf32>
    %539 = arith.mulf %536, %538 : vector<8x8xf32>
    %c0_164 = arith.constant 0 : index
    %c8_165 = arith.constant 8 : index
    %540 = vector.load %arg11[%c0_164, %c8_165] : memref<32x32xf32, #tpu.memory_space<vmem>>, vector<8x8xf32>
    tpu.vector_store %arg11[%c0_164, %c8_165], %539 {strides = array<i32>} : memref<32x32xf32, #tpu.memory_space<vmem>>, vector<8x8xf32>,
    %541 = vector.extract_strided_slice %493 {offsets = [0, 16], sizes = [8, 8], strides = [1, 1]} : vector<32x32xf32> to vector<8x8xf32>
    %542 = arith.truncf %541 : vector<8x8xf32> to vector<8x8xbf16>
    %543 = vector.extract_strided_slice %494 {offsets = [0, 16], sizes = [8, 8], strides = [1, 1]} : vector<32x32xf32> to vector<8x8xf32>
    %544 = arith.truncf %543 : vector<8x8xf32> to vector<8x8xbf16>
    %545 = vector.extract_strided_slice %495 {offsets = [0, 16], sizes = [8, 8], strides = [1, 1]} : vector<32x32xf32> to vector<8x8xf32>
    %546 = arith.truncf %545 : vector<8x8xf32> to vector<8x8xbf16>
    "tpu.trace_start"() <{level = 10 : i32, message = "qd,kd->qk"}> : () -> ()
    %cst_166 = arith.constant dense<0.000000e+00> : vector<8x8xf32>
    %547 = tpu.matmul %542, %544, %cst_166 {dimension_numbers = #tpu.dot_dimension_numbers<[1], [1], [0], [0], [0, 0, 1, 0], [], []>} : vector<8x8xbf16>, vector<8x8xbf16>, vector<8x8xf32> -> vector<8x8xf32>
    "tpu.trace_stop"() : () -> ()
    %548 = arith.addf %547, %498 : vector<8x8xf32>
    %cst_167 = arith.constant dense<0xFF800000> : vector<8xf32>
    %549 = vector.multi_reduction <maximumf>, %548, %cst_167 [1] : vector<8x8xf32> to vector<8xf32>
    %550 = vector.shape_cast %549 : vector<8xf32> to vector<8x1xf32>
    %551 = vector.broadcast %550 : vector<8x1xf32> to vector<8x8xf32>
    %552 = arith.subf %548, %551 : vector<8x8xf32>
    %553 = math.exp %552 : vector<8x8xf32>
    %cst_168 = arith.constant dense<0.000000e+00> : vector<8xf32>
    %554 = vector.multi_reduction <add>, %553, %cst_168 [1] : vector<8x8xf32> to vector<8xf32>
    %555 = vector.shape_cast %554 : vector<8xf32> to vector<8x1xf32>
    %556 = arith.truncf %553 : vector<8x8xf32> to vector<8x8xbf16>
    %cst_169 = arith.constant dense<0.000000e+00> : vector<8x8xf32>
    %557 = tpu.matmul %556, %546, %cst_169 {dimension_numbers = #tpu.dot_dimension_numbers<[1], [0], [0], [1], [0, 0, 1, 1], [], []>} : vector<8x8xbf16>, vector<8x8xbf16>, vector<8x8xf32> -> vector<8x8xf32>
    %558 = tpu.reciprocal %555 {approx = true} : vector<8x1xf32> -> vector<8x1xf32>
    %559 = vector.broadcast %558 : vector<8x1xf32> to vector<8x8xf32>
    %560 = arith.mulf %557, %559 : vector<8x8xf32>
    %c0_170 = arith.constant 0 : index
    %c16_171 = arith.constant 16 : index
    %561 = vector.load %arg11[%c0_170, %c16_171] : memref<32x32xf32, #tpu.memory_space<vmem>>, vector<8x8xf32>
    tpu.vector_store %arg11[%c0_170, %c16_171], %560 {strides = array<i32>} : memref<32x32xf32, #tpu.memory_space<vmem>>, vector<8x8xf32>,
    %562 = vector.extract_strided_slice %493 {offsets = [0, 24], sizes = [8, 8], strides = [1, 1]} : vector<32x32xf32> to vector<8x8xf32>
    %563 = arith.truncf %562 : vector<8x8xf32> to vector<8x8xbf16>
    %564 = vector.extract_strided_slice %494 {offsets = [0, 24], sizes = [8, 8], strides = [1, 1]} : vector<32x32xf32> to vector<8x8xf32>
    %565 = arith.truncf %564 : vector<8x8xf32> to vector<8x8xbf16>
    %566 = vector.extract_strided_slice %495 {offsets = [0, 24], sizes = [8, 8], strides = [1, 1]} : vector<32x32xf32> to vector<8x8xf32>
    %567 = arith.truncf %566 : vector<8x8xf32> to vector<8x8xbf16>
    "tpu.trace_start"() <{level = 10 : i32, message = "qd,kd->qk"}> : () -> ()
    %cst_172 = arith.constant dense<0.000000e+00> : vector<8x8xf32>
    %568 = tpu.matmul %563, %565, %cst_172 {dimension_numbers = #tpu.dot_dimension_numbers<[1], [1], [0], [0], [0, 0, 1, 0], [], []>} : vector<8x8xbf16>, vector<8x8xbf16>, vector<8x8xf32> -> vector<8x8xf32>
    "tpu.trace_stop"() : () -> ()
    %569 = arith.addf %568, %498 : vector<8x8xf32>
    %cst_173 = arith.constant dense<0xFF800000> : vector<8xf32>
    %570 = vector.multi_reduction <maximumf>, %569, %cst_173 [1] : vector<8x8xf32> to vector<8xf32>
    %571 = vector.shape_cast %570 : vector<8xf32> to vector<8x1xf32>
    %572 = vector.broadcast %571 : vector<8x1xf32> to vector<8x8xf32>
    %573 = arith.subf %569, %572 : vector<8x8xf32>
    %574 = math.exp %573 : vector<8x8xf32>
    %cst_174 = arith.constant dense<0.000000e+00> : vector<8xf32>
    %575 = vector.multi_reduction <add>, %574, %cst_174 [1] : vector<8x8xf32> to vector<8xf32>
    %576 = vector.shape_cast %575 : vector<8xf32> to vector<8x1xf32>
    %577 = arith.truncf %574 : vector<8x8xf32> to vector<8x8xbf16>
    %cst_175 = arith.constant dense<0.000000e+00> : vector<8x8xf32>
    %578 = tpu.matmul %577, %567, %cst_175 {dimension_numbers = #tpu.dot_dimension_numbers<[1], [0], [0], [1], [0, 0, 1, 1], [], []>} : vector<8x8xbf16>, vector<8x8xbf16>, vector<8x8xf32> -> vector<8x8xf32>
    %579 = tpu.reciprocal %576 {approx = true} : vector<8x1xf32> -> vector<8x1xf32>
    %580 = vector.broadcast %579 : vector<8x1xf32> to vector<8x8xf32>
    %581 = arith.mulf %578, %580 : vector<8x8xf32>
    %c0_176 = arith.constant 0 : index
    %c24_177 = arith.constant 24 : index
    %582 = vector.load %arg11[%c0_176, %c24_177] : memref<32x32xf32, #tpu.memory_space<vmem>>, vector<8x8xf32>
    tpu.vector_store %arg11[%c0_176, %c24_177], %581 {strides = array<i32>} : memref<32x32xf32, #tpu.memory_space<vmem>>, vector<8x8xf32>,
    %583 = vector.extract_strided_slice %5 {offsets = [1, 0], sizes = [1, 8], strides = [1, 1]} : vector<4x8xf32> to vector<1x8xf32>
    %584 = vector.shape_cast %583 : vector<1x8xf32> to vector<1x8xf32>
    %585 = vector.broadcast %584 : vector<1x8xf32> to vector<8x8xf32>
    %586 = vector.extract_strided_slice %493 {offsets = [8, 0], sizes = [8, 8], strides = [1, 1]} : vector<32x32xf32> to vector<8x8xf32>
    %587 = arith.truncf %586 : vector<8x8xf32> to vector<8x8xbf16>
    %588 = vector.extract_strided_slice %494 {offsets = [8, 0], sizes = [8, 8], strides = [1, 1]} : vector<32x32xf32> to vector<8x8xf32>
    %589 = arith.truncf %588 : vector<8x8xf32> to vector<8x8xbf16>
    %590 = vector.extract_strided_slice %495 {offsets = [8, 0], sizes = [8, 8], strides = [1, 1]} : vector<32x32xf32> to vector<8x8xf32>
    %591 = arith.truncf %590 : vector<8x8xf32> to vector<8x8xbf16>
    "tpu.trace_start"() <{level = 10 : i32, message = "qd,kd->qk"}> : () -> ()
    %cst_178 = arith.constant dense<0.000000e+00> : vector<8x8xf32>
    %592 = tpu.matmul %587, %589, %cst_178 {dimension_numbers = #tpu.dot_dimension_numbers<[1], [1], [0], [0], [0, 0, 1, 0], [], []>} : vector<8x8xbf16>, vector<8x8xbf16>, vector<8x8xf32> -> vector<8x8xf32>
    "tpu.trace_stop"() : () -> ()
    %593 = arith.addf %592, %585 : vector<8x8xf32>
    %cst_179 = arith.constant dense<0xFF800000> : vector<8xf32>
    %594 = vector.multi_reduction <maximumf>, %593, %cst_179 [1] : vector<8x8xf32> to vector<8xf32>
    %595 = vector.shape_cast %594 : vector<8xf32> to vector<8x1xf32>
    %596 = vector.broadcast %595 : vector<8x1xf32> to vector<8x8xf32>
    %597 = arith.subf %593, %596 : vector<8x8xf32>
    %598 = math.exp %597 : vector<8x8xf32>
    %cst_180 = arith.constant dense<0.000000e+00> : vector<8xf32>
    %599 = vector.multi_reduction <add>, %598, %cst_180 [1] : vector<8x8xf32> to vector<8xf32>
    %600 = vector.shape_cast %599 : vector<8xf32> to vector<8x1xf32>
    %601 = arith.truncf %598 : vector<8x8xf32> to vector<8x8xbf16>
    %cst_181 = arith.constant dense<0.000000e+00> : vector<8x8xf32>
    %602 = tpu.matmul %601, %591, %cst_181 {dimension_numbers = #tpu.dot_dimension_numbers<[1], [0], [0], [1], [0, 0, 1, 1], [], []>} : vector<8x8xbf16>, vector<8x8xbf16>, vector<8x8xf32> -> vector<8x8xf32>
    %603 = tpu.reciprocal %600 {approx = true} : vector<8x1xf32> -> vector<8x1xf32>
    %604 = vector.broadcast %603 : vector<8x1xf32> to vector<8x8xf32>
    %605 = arith.mulf %602, %604 : vector<8x8xf32>
    %c8_182 = arith.constant 8 : index
    %c0_183 = arith.constant 0 : index
    %606 = vector.load %arg11[%c8_182, %c0_183] : memref<32x32xf32, #tpu.memory_space<vmem>>, vector<8x8xf32>
    tpu.vector_store %arg11[%c8_182, %c0_183], %605 {strides = array<i32>} : memref<32x32xf32, #tpu.memory_space<vmem>>, vector<8x8xf32>,
    %607 = vector.extract_strided_slice %493 {offsets = [8, 8], sizes = [8, 8], strides = [1, 1]} : vector<32x32xf32> to vector<8x8xf32>
    %608 = arith.truncf %607 : vector<8x8xf32> to vector<8x8xbf16>
    %609 = vector.extract_strided_slice %494 {offsets = [8, 8], sizes = [8, 8], strides = [1, 1]} : vector<32x32xf32> to vector<8x8xf32>
    %610 = arith.truncf %609 : vector<8x8xf32> to vector<8x8xbf16>
    %611 = vector.extract_strided_slice %495 {offsets = [8, 8], sizes = [8, 8], strides = [1, 1]} : vector<32x32xf32> to vector<8x8xf32>
    %612 = arith.truncf %611 : vector<8x8xf32> to vector<8x8xbf16>
    "tpu.trace_start"() <{level = 10 : i32, message = "qd,kd->qk"}> : () -> ()
    %cst_184 = arith.constant dense<0.000000e+00> : vector<8x8xf32>
    %613 = tpu.matmul %608, %610, %cst_184 {dimension_numbers = #tpu.dot_dimension_numbers<[1], [1], [0], [0], [0, 0, 1, 0], [], []>} : vector<8x8xbf16>, vector<8x8xbf16>, vector<8x8xf32> -> vector<8x8xf32>
    "tpu.trace_stop"() : () -> ()
    %614 = arith.addf %613, %585 : vector<8x8xf32>
    %cst_185 = arith.constant dense<0xFF800000> : vector<8xf32>
    %615 = vector.multi_reduction <maximumf>, %614, %cst_185 [1] : vector<8x8xf32> to vector<8xf32>
    %616 = vector.shape_cast %615 : vector<8xf32> to vector<8x1xf32>
    %617 = vector.broadcast %616 : vector<8x1xf32> to vector<8x8xf32>
    %618 = arith.subf %614, %617 : vector<8x8xf32>
    %619 = math.exp %618 : vector<8x8xf32>
    %cst_186 = arith.constant dense<0.000000e+00> : vector<8xf32>
    %620 = vector.multi_reduction <add>, %619, %cst_186 [1] : vector<8x8xf32> to vector<8xf32>
    %621 = vector.shape_cast %620 : vector<8xf32> to vector<8x1xf32>
    %622 = arith.truncf %619 : vector<8x8xf32> to vector<8x8xbf16>
    %cst_187 = arith.constant dense<0.000000e+00> : vector<8x8xf32>
    %623 = tpu.matmul %622, %612, %cst_187 {dimension_numbers = #tpu.dot_dimension_numbers<[1], [0], [0], [1], [0, 0, 1, 1], [], []>} : vector<8x8xbf16>, vector<8x8xbf16>, vector<8x8xf32> -> vector<8x8xf32>
    %624 = tpu.reciprocal %621 {approx = true} : vector<8x1xf32> -> vector<8x1xf32>
    %625 = vector.broadcast %624 : vector<8x1xf32> to vector<8x8xf32>
    %626 = arith.mulf %623, %625 : vector<8x8xf32>
    %c8_188 = arith.constant 8 : index
    %c8_189 = arith.constant 8 : index
    %627 = vector.load %arg11[%c8_188, %c8_189] : memref<32x32xf32, #tpu.memory_space<vmem>>, vector<8x8xf32>
    tpu.vector_store %arg11[%c8_188, %c8_189], %626 {strides = array<i32>} : memref<32x32xf32, #tpu.memory_space<vmem>>, vector<8x8xf32>,
    %628 = vector.extract_strided_slice %493 {offsets = [8, 16], sizes = [8, 8], strides = [1, 1]} : vector<32x32xf32> to vector<8x8xf32>
    %629 = arith.truncf %628 : vector<8x8xf32> to vector<8x8xbf16>
    %630 = vector.extract_strided_slice %494 {offsets = [8, 16], sizes = [8, 8], strides = [1, 1]} : vector<32x32xf32> to vector<8x8xf32>
    %631 = arith.truncf %630 : vector<8x8xf32> to vector<8x8xbf16>
    %632 = vector.extract_strided_slice %495 {offsets = [8, 16], sizes = [8, 8], strides = [1, 1]} : vector<32x32xf32> to vector<8x8xf32>
    %633 = arith.truncf %632 : vector<8x8xf32> to vector<8x8xbf16>
    "tpu.trace_start"() <{level = 10 : i32, message = "qd,kd->qk"}> : () -> ()
    %cst_190 = arith.constant dense<0.000000e+00> : vector<8x8xf32>
    %634 = tpu.matmul %629, %631, %cst_190 {dimension_numbers = #tpu.dot_dimension_numbers<[1], [1], [0], [0], [0, 0, 1, 0], [], []>} : vector<8x8xbf16>, vector<8x8xbf16>, vector<8x8xf32> -> vector<8x8xf32>
    "tpu.trace_stop"() : () -> ()
    %635 = arith.addf %634, %585 : vector<8x8xf32>
    %cst_191 = arith.constant dense<0xFF800000> : vector<8xf32>
    %636 = vector.multi_reduction <maximumf>, %635, %cst_191 [1] : vector<8x8xf32> to vector<8xf32>
    %637 = vector.shape_cast %636 : vector<8xf32> to vector<8x1xf32>
    %638 = vector.broadcast %637 : vector<8x1xf32> to vector<8x8xf32>
    %639 = arith.subf %635, %638 : vector<8x8xf32>
    %640 = math.exp %639 : vector<8x8xf32>
    %cst_192 = arith.constant dense<0.000000e+00> : vector<8xf32>
    %641 = vector.multi_reduction <add>, %640, %cst_192 [1] : vector<8x8xf32> to vector<8xf32>
    %642 = vector.shape_cast %641 : vector<8xf32> to vector<8x1xf32>
    %643 = arith.truncf %640 : vector<8x8xf32> to vector<8x8xbf16>
    %cst_193 = arith.constant dense<0.000000e+00> : vector<8x8xf32>
    %644 = tpu.matmul %643, %633, %cst_193 {dimension_numbers = #tpu.dot_dimension_numbers<[1], [0], [0], [1], [0, 0, 1, 1], [], []>} : vector<8x8xbf16>, vector<8x8xbf16>, vector<8x8xf32> -> vector<8x8xf32>
    %645 = tpu.reciprocal %642 {approx = true} : vector<8x1xf32> -> vector<8x1xf32>
    %646 = vector.broadcast %645 : vector<8x1xf32> to vector<8x8xf32>
    %647 = arith.mulf %644, %646 : vector<8x8xf32>
    %c8_194 = arith.constant 8 : index
    %c16_195 = arith.constant 16 : index
    %648 = vector.load %arg11[%c8_194, %c16_195] : memref<32x32xf32, #tpu.memory_space<vmem>>, vector<8x8xf32>
    tpu.vector_store %arg11[%c8_194, %c16_195], %647 {strides = array<i32>} : memref<32x32xf32, #tpu.memory_space<vmem>>, vector<8x8xf32>,
    %649 = vector.extract_strided_slice %493 {offsets = [8, 24], sizes = [8, 8], strides = [1, 1]} : vector<32x32xf32> to vector<8x8xf32>
    %650 = arith.truncf %649 : vector<8x8xf32> to vector<8x8xbf16>
    %651 = vector.extract_strided_slice %494 {offsets = [8, 24], sizes = [8, 8], strides = [1, 1]} : vector<32x32xf32> to vector<8x8xf32>
    %652 = arith.truncf %651 : vector<8x8xf32> to vector<8x8xbf16>
    %653 = vector.extract_strided_slice %495 {offsets = [8, 24], sizes = [8, 8], strides = [1, 1]} : vector<32x32xf32> to vector<8x8xf32>
    %654 = arith.truncf %653 : vector<8x8xf32> to vector<8x8xbf16>
    "tpu.trace_start"() <{level = 10 : i32, message = "qd,kd->qk"}> : () -> ()
    %cst_196 = arith.constant dense<0.000000e+00> : vector<8x8xf32>
    %655 = tpu.matmul %650, %652, %cst_196 {dimension_numbers = #tpu.dot_dimension_numbers<[1], [1], [0], [0], [0, 0, 1, 0], [], []>} : vector<8x8xbf16>, vector<8x8xbf16>, vector<8x8xf32> -> vector<8x8xf32>
    "tpu.trace_stop"() : () -> ()
    %656 = arith.addf %655, %585 : vector<8x8xf32>
    %cst_197 = arith.constant dense<0xFF800000> : vector<8xf32>
    %657 = vector.multi_reduction <maximumf>, %656, %cst_197 [1] : vector<8x8xf32> to vector<8xf32>
    %658 = vector.shape_cast %657 : vector<8xf32> to vector<8x1xf32>
    %659 = vector.broadcast %658 : vector<8x1xf32> to vector<8x8xf32>
    %660 = arith.subf %656, %659 : vector<8x8xf32>
    %661 = math.exp %660 : vector<8x8xf32>
    %cst_198 = arith.constant dense<0.000000e+00> : vector<8xf32>
    %662 = vector.multi_reduction <add>, %661, %cst_198 [1] : vector<8x8xf32> to vector<8xf32>
    %663 = vector.shape_cast %662 : vector<8xf32> to vector<8x1xf32>
    %664 = arith.truncf %661 : vector<8x8xf32> to vector<8x8xbf16>
    %cst_199 = arith.constant dense<0.000000e+00> : vector<8x8xf32>
    %665 = tpu.matmul %664, %654, %cst_199 {dimension_numbers = #tpu.dot_dimension_numbers<[1], [0], [0], [1], [0, 0, 1, 1], [], []>} : vector<8x8xbf16>, vector<8x8xbf16>, vector<8x8xf32> -> vector<8x8xf32>
    %666 = tpu.reciprocal %663 {approx = true} : vector<8x1xf32> -> vector<8x1xf32>
    %667 = vector.broadcast %666 : vector<8x1xf32> to vector<8x8xf32>
    %668 = arith.mulf %665, %667 : vector<8x8xf32>
    %c8_200 = arith.constant 8 : index
    %c24_201 = arith.constant 24 : index
    %669 = vector.load %arg11[%c8_200, %c24_201] : memref<32x32xf32, #tpu.memory_space<vmem>>, vector<8x8xf32>
    tpu.vector_store %arg11[%c8_200, %c24_201], %668 {strides = array<i32>} : memref<32x32xf32, #tpu.memory_space<vmem>>, vector<8x8xf32>,
    %670 = vector.extract_strided_slice %5 {offsets = [2, 0], sizes = [1, 8], strides = [1, 1]} : vector<4x8xf32> to vector<1x8xf32>
    %671 = vector.shape_cast %670 : vector<1x8xf32> to vector<1x8xf32>
    %672 = vector.broadcast %671 : vector<1x8xf32> to vector<8x8xf32>
    %673 = vector.extract_strided_slice %493 {offsets = [16, 0], sizes = [8, 8], strides = [1, 1]} : vector<32x32xf32> to vector<8x8xf32>
    %674 = arith.truncf %673 : vector<8x8xf32> to vector<8x8xbf16>
    %675 = vector.extract_strided_slice %494 {offsets = [16, 0], sizes = [8, 8], strides = [1, 1]} : vector<32x32xf32> to vector<8x8xf32>
    %676 = arith.truncf %675 : vector<8x8xf32> to vector<8x8xbf16>
    %677 = vector.extract_strided_slice %495 {offsets = [16, 0], sizes = [8, 8], strides = [1, 1]} : vector<32x32xf32> to vector<8x8xf32>
    %678 = arith.truncf %677 : vector<8x8xf32> to vector<8x8xbf16>
    "tpu.trace_start"() <{level = 10 : i32, message = "qd,kd->qk"}> : () -> ()
    %cst_202 = arith.constant dense<0.000000e+00> : vector<8x8xf32>
    %679 = tpu.matmul %674, %676, %cst_202 {dimension_numbers = #tpu.dot_dimension_numbers<[1], [1], [0], [0], [0, 0, 1, 0], [], []>} : vector<8x8xbf16>, vector<8x8xbf16>, vector<8x8xf32> -> vector<8x8xf32>
    "tpu.trace_stop"() : () -> ()
    %680 = arith.addf %679, %672 : vector<8x8xf32>
    %cst_203 = arith.constant dense<0xFF800000> : vector<8xf32>
    %681 = vector.multi_reduction <maximumf>, %680, %cst_203 [1] : vector<8x8xf32> to vector<8xf32>
    %682 = vector.shape_cast %681 : vector<8xf32> to vector<8x1xf32>
    %683 = vector.broadcast %682 : vector<8x1xf32> to vector<8x8xf32>
    %684 = arith.subf %680, %683 : vector<8x8xf32>
    %685 = math.exp %684 : vector<8x8xf32>
    %cst_204 = arith.constant dense<0.000000e+00> : vector<8xf32>
    %686 = vector.multi_reduction <add>, %685, %cst_204 [1] : vector<8x8xf32> to vector<8xf32>
    %687 = vector.shape_cast %686 : vector<8xf32> to vector<8x1xf32>
    %688 = arith.truncf %685 : vector<8x8xf32> to vector<8x8xbf16>
    %cst_205 = arith.constant dense<0.000000e+00> : vector<8x8xf32>
    %689 = tpu.matmul %688, %678, %cst_205 {dimension_numbers = #tpu.dot_dimension_numbers<[1], [0], [0], [1], [0, 0, 1, 1], [], []>} : vector<8x8xbf16>, vector<8x8xbf16>, vector<8x8xf32> -> vector<8x8xf32>
    %690 = tpu.reciprocal %687 {approx = true} : vector<8x1xf32> -> vector<8x1xf32>
    %691 = vector.broadcast %690 : vector<8x1xf32> to vector<8x8xf32>
    %692 = arith.mulf %689, %691 : vector<8x8xf32>
    %c16_206 = arith.constant 16 : index
    %c0_207 = arith.constant 0 : index
    %693 = vector.load %arg11[%c16_206, %c0_207] : memref<32x32xf32, #tpu.memory_space<vmem>>, vector<8x8xf32>
    tpu.vector_store %arg11[%c16_206, %c0_207], %692 {strides = array<i32>} : memref<32x32xf32, #tpu.memory_space<vmem>>, vector<8x8xf32>,
    %694 = vector.extract_strided_slice %493 {offsets = [16, 8], sizes = [8, 8], strides = [1, 1]} : vector<32x32xf32> to vector<8x8xf32>
    %695 = arith.truncf %694 : vector<8x8xf32> to vector<8x8xbf16>
    %696 = vector.extract_strided_slice %494 {offsets = [16, 8], sizes = [8, 8], strides = [1, 1]} : vector<32x32xf32> to vector<8x8xf32>
    %697 = arith.truncf %696 : vector<8x8xf32> to vector<8x8xbf16>
    %698 = vector.extract_strided_slice %495 {offsets = [16, 8], sizes = [8, 8], strides = [1, 1]} : vector<32x32xf32> to vector<8x8xf32>
    %699 = arith.truncf %698 : vector<8x8xf32> to vector<8x8xbf16>
    "tpu.trace_start"() <{level = 10 : i32, message = "qd,kd->qk"}> : () -> ()
    %cst_208 = arith.constant dense<0.000000e+00> : vector<8x8xf32>
    %700 = tpu.matmul %695, %697, %cst_208 {dimension_numbers = #tpu.dot_dimension_numbers<[1], [1], [0], [0], [0, 0, 1, 0], [], []>} : vector<8x8xbf16>, vector<8x8xbf16>, vector<8x8xf32> -> vector<8x8xf32>
    "tpu.trace_stop"() : () -> ()
    %701 = arith.addf %700, %672 : vector<8x8xf32>
    %cst_209 = arith.constant dense<0xFF800000> : vector<8xf32>
    %702 = vector.multi_reduction <maximumf>, %701, %cst_209 [1] : vector<8x8xf32> to vector<8xf32>
    %703 = vector.shape_cast %702 : vector<8xf32> to vector<8x1xf32>
    %704 = vector.broadcast %703 : vector<8x1xf32> to vector<8x8xf32>
    %705 = arith.subf %701, %704 : vector<8x8xf32>
    %706 = math.exp %705 : vector<8x8xf32>
    %cst_210 = arith.constant dense<0.000000e+00> : vector<8xf32>
    %707 = vector.multi_reduction <add>, %706, %cst_210 [1] : vector<8x8xf32> to vector<8xf32>
    %708 = vector.shape_cast %707 : vector<8xf32> to vector<8x1xf32>
    %709 = arith.truncf %706 : vector<8x8xf32> to vector<8x8xbf16>
    %cst_211 = arith.constant dense<0.000000e+00> : vector<8x8xf32>
    %710 = tpu.matmul %709, %699, %cst_211 {dimension_numbers = #tpu.dot_dimension_numbers<[1], [0], [0], [1], [0, 0, 1, 1], [], []>} : vector<8x8xbf16>, vector<8x8xbf16>, vector<8x8xf32> -> vector<8x8xf32>
    %711 = tpu.reciprocal %708 {approx = true} : vector<8x1xf32> -> vector<8x1xf32>
    %712 = vector.broadcast %711 : vector<8x1xf32> to vector<8x8xf32>
    %713 = arith.mulf %710, %712 : vector<8x8xf32>
    %c16_212 = arith.constant 16 : index
    %c8_213 = arith.constant 8 : index
    %714 = vector.load %arg11[%c16_212, %c8_213] : memref<32x32xf32, #tpu.memory_space<vmem>>, vector<8x8xf32>
    tpu.vector_store %arg11[%c16_212, %c8_213], %713 {strides = array<i32>} : memref<32x32xf32, #tpu.memory_space<vmem>>, vector<8x8xf32>,
    %715 = vector.extract_strided_slice %493 {offsets = [16, 16], sizes = [8, 8], strides = [1, 1]} : vector<32x32xf32> to vector<8x8xf32>
    %716 = arith.truncf %715 : vector<8x8xf32> to vector<8x8xbf16>
    %717 = vector.extract_strided_slice %494 {offsets = [16, 16], sizes = [8, 8], strides = [1, 1]} : vector<32x32xf32> to vector<8x8xf32>
    %718 = arith.truncf %717 : vector<8x8xf32> to vector<8x8xbf16>
    %719 = vector.extract_strided_slice %495 {offsets = [16, 16], sizes = [8, 8], strides = [1, 1]} : vector<32x32xf32> to vector<8x8xf32>
    %720 = arith.truncf %719 : vector<8x8xf32> to vector<8x8xbf16>
    "tpu.trace_start"() <{level = 10 : i32, message = "qd,kd->qk"}> : () -> ()
    %cst_214 = arith.constant dense<0.000000e+00> : vector<8x8xf32>
    %721 = tpu.matmul %716, %718, %cst_214 {dimension_numbers = #tpu.dot_dimension_numbers<[1], [1], [0], [0], [0, 0, 1, 0], [], []>} : vector<8x8xbf16>, vector<8x8xbf16>, vector<8x8xf32> -> vector<8x8xf32>
    "tpu.trace_stop"() : () -> ()
    %722 = arith.addf %721, %672 : vector<8x8xf32>
    %cst_215 = arith.constant dense<0xFF800000> : vector<8xf32>
    %723 = vector.multi_reduction <maximumf>, %722, %cst_215 [1] : vector<8x8xf32> to vector<8xf32>
    %724 = vector.shape_cast %723 : vector<8xf32> to vector<8x1xf32>
    %725 = vector.broadcast %724 : vector<8x1xf32> to vector<8x8xf32>
    %726 = arith.subf %722, %725 : vector<8x8xf32>
    %727 = math.exp %726 : vector<8x8xf32>
    %cst_216 = arith.constant dense<0.000000e+00> : vector<8xf32>
    %728 = vector.multi_reduction <add>, %727, %cst_216 [1] : vector<8x8xf32> to vector<8xf32>
    %729 = vector.shape_cast %728 : vector<8xf32> to vector<8x1xf32>
    %730 = arith.truncf %727 : vector<8x8xf32> to vector<8x8xbf16>
    %cst_217 = arith.constant dense<0.000000e+00> : vector<8x8xf32>
    %731 = tpu.matmul %730, %720, %cst_217 {dimension_numbers = #tpu.dot_dimension_numbers<[1], [0], [0], [1], [0, 0, 1, 1], [], []>} : vector<8x8xbf16>, vector<8x8xbf16>, vector<8x8xf32> -> vector<8x8xf32>
    %732 = tpu.reciprocal %729 {approx = true} : vector<8x1xf32> -> vector<8x1xf32>
    %733 = vector.broadcast %732 : vector<8x1xf32> to vector<8x8xf32>
    %734 = arith.mulf %731, %733 : vector<8x8xf32>
    %c16_218 = arith.constant 16 : index
    %c16_219 = arith.constant 16 : index
    %735 = vector.load %arg11[%c16_218, %c16_219] : memref<32x32xf32, #tpu.memory_space<vmem>>, vector<8x8xf32>
    tpu.vector_store %arg11[%c16_218, %c16_219], %734 {strides = array<i32>} : memref<32x32xf32, #tpu.memory_space<vmem>>, vector<8x8xf32>,
    %736 = vector.extract_strided_slice %493 {offsets = [16, 24], sizes = [8, 8], strides = [1, 1]} : vector<32x32xf32> to vector<8x8xf32>
    %737 = arith.truncf %736 : vector<8x8xf32> to vector<8x8xbf16>
    %738 = vector.extract_strided_slice %494 {offsets = [16, 24], sizes = [8, 8], strides = [1, 1]} : vector<32x32xf32> to vector<8x8xf32>
    %739 = arith.truncf %738 : vector<8x8xf32> to vector<8x8xbf16>
    %740 = vector.extract_strided_slice %495 {offsets = [16, 24], sizes = [8, 8], strides = [1, 1]} : vector<32x32xf32> to vector<8x8xf32>
    %741 = arith.truncf %740 : vector<8x8xf32> to vector<8x8xbf16>
    "tpu.trace_start"() <{level = 10 : i32, message = "qd,kd->qk"}> : () -> ()
    %cst_220 = arith.constant dense<0.000000e+00> : vector<8x8xf32>
    %742 = tpu.matmul %737, %739, %cst_220 {dimension_numbers = #tpu.dot_dimension_numbers<[1], [1], [0], [0], [0, 0, 1, 0], [], []>} : vector<8x8xbf16>, vector<8x8xbf16>, vector<8x8xf32> -> vector<8x8xf32>
    "tpu.trace_stop"() : () -> ()
    %743 = arith.addf %742, %672 : vector<8x8xf32>
    %cst_221 = arith.constant dense<0xFF800000> : vector<8xf32>
    %744 = vector.multi_reduction <maximumf>, %743, %cst_221 [1] : vector<8x8xf32> to vector<8xf32>
    %745 = vector.shape_cast %744 : vector<8xf32> to vector<8x1xf32>
    %746 = vector.broadcast %745 : vector<8x1xf32> to vector<8x8xf32>
    %747 = arith.subf %743, %746 : vector<8x8xf32>
    %748 = math.exp %747 : vector<8x8xf32>
    %cst_222 = arith.constant dense<0.000000e+00> : vector<8xf32>
    %749 = vector.multi_reduction <add>, %748, %cst_222 [1] : vector<8x8xf32> to vector<8xf32>
    %750 = vector.shape_cast %749 : vector<8xf32> to vector<8x1xf32>
    %751 = arith.truncf %748 : vector<8x8xf32> to vector<8x8xbf16>
    %cst_223 = arith.constant dense<0.000000e+00> : vector<8x8xf32>
    %752 = tpu.matmul %751, %741, %cst_223 {dimension_numbers = #tpu.dot_dimension_numbers<[1], [0], [0], [1], [0, 0, 1, 1], [], []>} : vector<8x8xbf16>, vector<8x8xbf16>, vector<8x8xf32> -> vector<8x8xf32>
    %753 = tpu.reciprocal %750 {approx = true} : vector<8x1xf32> -> vector<8x1xf32>
    %754 = vector.broadcast %753 : vector<8x1xf32> to vector<8x8xf32>
    %755 = arith.mulf %752, %754 : vector<8x8xf32>
    %c16_224 = arith.constant 16 : index
    %c24_225 = arith.constant 24 : index
    %756 = vector.load %arg11[%c16_224, %c24_225] : memref<32x32xf32, #tpu.memory_space<vmem>>, vector<8x8xf32>
    tpu.vector_store %arg11[%c16_224, %c24_225], %755 {strides = array<i32>} : memref<32x32xf32, #tpu.memory_space<vmem>>, vector<8x8xf32>,
    %757 = vector.extract_strided_slice %5 {offsets = [3, 0], sizes = [1, 8], strides = [1, 1]} : vector<4x8xf32> to vector<1x8xf32>
    %758 = vector.shape_cast %757 : vector<1x8xf32> to vector<1x8xf32>
    %759 = vector.broadcast %758 : vector<1x8xf32> to vector<8x8xf32>
    %760 = vector.extract_strided_slice %493 {offsets = [24, 0], sizes = [8, 8], strides = [1, 1]} : vector<32x32xf32> to vector<8x8xf32>
    %761 = arith.truncf %760 : vector<8x8xf32> to vector<8x8xbf16>
    %762 = vector.extract_strided_slice %494 {offsets = [24, 0], sizes = [8, 8], strides = [1, 1]} : vector<32x32xf32> to vector<8x8xf32>
    %763 = arith.truncf %762 : vector<8x8xf32> to vector<8x8xbf16>
    %764 = vector.extract_strided_slice %495 {offsets = [24, 0], sizes = [8, 8], strides = [1, 1]} : vector<32x32xf32> to vector<8x8xf32>
    %765 = arith.truncf %764 : vector<8x8xf32> to vector<8x8xbf16>
    "tpu.trace_start"() <{level = 10 : i32, message = "qd,kd->qk"}> : () -> ()
    %cst_226 = arith.constant dense<0.000000e+00> : vector<8x8xf32>
    %766 = tpu.matmul %761, %763, %cst_226 {dimension_numbers = #tpu.dot_dimension_numbers<[1], [1], [0], [0], [0, 0, 1, 0], [], []>} : vector<8x8xbf16>, vector<8x8xbf16>, vector<8x8xf32> -> vector<8x8xf32>
    "tpu.trace_stop"() : () -> ()
    %767 = arith.addf %766, %759 : vector<8x8xf32>
    %cst_227 = arith.constant dense<0xFF800000> : vector<8xf32>
    %768 = vector.multi_reduction <maximumf>, %767, %cst_227 [1] : vector<8x8xf32> to vector<8xf32>
    %769 = vector.shape_cast %768 : vector<8xf32> to vector<8x1xf32>
    %770 = vector.broadcast %769 : vector<8x1xf32> to vector<8x8xf32>
    %771 = arith.subf %767, %770 : vector<8x8xf32>
    %772 = math.exp %771 : vector<8x8xf32>
    %cst_228 = arith.constant dense<0.000000e+00> : vector<8xf32>
    %773 = vector.multi_reduction <add>, %772, %cst_228 [1] : vector<8x8xf32> to vector<8xf32>
    %774 = vector.shape_cast %773 : vector<8xf32> to vector<8x1xf32>
    %775 = arith.truncf %772 : vector<8x8xf32> to vector<8x8xbf16>
    %cst_229 = arith.constant dense<0.000000e+00> : vector<8x8xf32>
    %776 = tpu.matmul %775, %765, %cst_229 {dimension_numbers = #tpu.dot_dimension_numbers<[1], [0], [0], [1], [0, 0, 1, 1], [], []>} : vector<8x8xbf16>, vector<8x8xbf16>, vector<8x8xf32> -> vector<8x8xf32>
    %777 = tpu.reciprocal %774 {approx = true} : vector<8x1xf32> -> vector<8x1xf32>
    %778 = vector.broadcast %777 : vector<8x1xf32> to vector<8x8xf32>
    %779 = arith.mulf %776, %778 : vector<8x8xf32>
    %c24_230 = arith.constant 24 : index
    %c0_231 = arith.constant 0 : index
    %780 = vector.load %arg11[%c24_230, %c0_231] : memref<32x32xf32, #tpu.memory_space<vmem>>, vector<8x8xf32>
    tpu.vector_store %arg11[%c24_230, %c0_231], %779 {strides = array<i32>} : memref<32x32xf32, #tpu.memory_space<vmem>>, vector<8x8xf32>,
    %781 = vector.extract_strided_slice %493 {offsets = [24, 8], sizes = [8, 8], strides = [1, 1]} : vector<32x32xf32> to vector<8x8xf32>
    %782 = arith.truncf %781 : vector<8x8xf32> to vector<8x8xbf16>
    %783 = vector.extract_strided_slice %494 {offsets = [24, 8], sizes = [8, 8], strides = [1, 1]} : vector<32x32xf32> to vector<8x8xf32>
    %784 = arith.truncf %783 : vector<8x8xf32> to vector<8x8xbf16>
    %785 = vector.extract_strided_slice %495 {offsets = [24, 8], sizes = [8, 8], strides = [1, 1]} : vector<32x32xf32> to vector<8x8xf32>
    %786 = arith.truncf %785 : vector<8x8xf32> to vector<8x8xbf16>
    "tpu.trace_start"() <{level = 10 : i32, message = "qd,kd->qk"}> : () -> ()
    %cst_232 = arith.constant dense<0.000000e+00> : vector<8x8xf32>
    %787 = tpu.matmul %782, %784, %cst_232 {dimension_numbers = #tpu.dot_dimension_numbers<[1], [1], [0], [0], [0, 0, 1, 0], [], []>} : vector<8x8xbf16>, vector<8x8xbf16>, vector<8x8xf32> -> vector<8x8xf32>
    "tpu.trace_stop"() : () -> ()
    %788 = arith.addf %787, %759 : vector<8x8xf32>
    %cst_233 = arith.constant dense<0xFF800000> : vector<8xf32>
    %789 = vector.multi_reduction <maximumf>, %788, %cst_233 [1] : vector<8x8xf32> to vector<8xf32>
    %790 = vector.shape_cast %789 : vector<8xf32> to vector<8x1xf32>
    %791 = vector.broadcast %790 : vector<8x1xf32> to vector<8x8xf32>
    %792 = arith.subf %788, %791 : vector<8x8xf32>
    %793 = math.exp %792 : vector<8x8xf32>
    %cst_234 = arith.constant dense<0.000000e+00> : vector<8xf32>
    %794 = vector.multi_reduction <add>, %793, %cst_234 [1] : vector<8x8xf32> to vector<8xf32>
    %795 = vector.shape_cast %794 : vector<8xf32> to vector<8x1xf32>
    %796 = arith.truncf %793 : vector<8x8xf32> to vector<8x8xbf16>
    %cst_235 = arith.constant dense<0.000000e+00> : vector<8x8xf32>
    %797 = tpu.matmul %796, %786, %cst_235 {dimension_numbers = #tpu.dot_dimension_numbers<[1], [0], [0], [1], [0, 0, 1, 1], [], []>} : vector<8x8xbf16>, vector<8x8xbf16>, vector<8x8xf32> -> vector<8x8xf32>
    %798 = tpu.reciprocal %795 {approx = true} : vector<8x1xf32> -> vector<8x1xf32>
    %799 = vector.broadcast %798 : vector<8x1xf32> to vector<8x8xf32>
    %800 = arith.mulf %797, %799 : vector<8x8xf32>
    %c24_236 = arith.constant 24 : index
    %c8_237 = arith.constant 8 : index
    %801 = vector.load %arg11[%c24_236, %c8_237] : memref<32x32xf32, #tpu.memory_space<vmem>>, vector<8x8xf32>
    tpu.vector_store %arg11[%c24_236, %c8_237], %800 {strides = array<i32>} : memref<32x32xf32, #tpu.memory_space<vmem>>, vector<8x8xf32>,
    %802 = vector.extract_strided_slice %493 {offsets = [24, 16], sizes = [8, 8], strides = [1, 1]} : vector<32x32xf32> to vector<8x8xf32>
    %803 = arith.truncf %802 : vector<8x8xf32> to vector<8x8xbf16>
    %804 = vector.extract_strided_slice %494 {offsets = [24, 16], sizes = [8, 8], strides = [1, 1]} : vector<32x32xf32> to vector<8x8xf32>
    %805 = arith.truncf %804 : vector<8x8xf32> to vector<8x8xbf16>
    %806 = vector.extract_strided_slice %495 {offsets = [24, 16], sizes = [8, 8], strides = [1, 1]} : vector<32x32xf32> to vector<8x8xf32>
    %807 = arith.truncf %806 : vector<8x8xf32> to vector<8x8xbf16>
    "tpu.trace_start"() <{level = 10 : i32, message = "qd,kd->qk"}> : () -> ()
    %cst_238 = arith.constant dense<0.000000e+00> : vector<8x8xf32>
    %808 = tpu.matmul %803, %805, %cst_238 {dimension_numbers = #tpu.dot_dimension_numbers<[1], [1], [0], [0], [0, 0, 1, 0], [], []>} : vector<8x8xbf16>, vector<8x8xbf16>, vector<8x8xf32> -> vector<8x8xf32>
    "tpu.trace_stop"() : () -> ()
    %809 = arith.addf %808, %759 : vector<8x8xf32>
    %cst_239 = arith.constant dense<0xFF800000> : vector<8xf32>
    %810 = vector.multi_reduction <maximumf>, %809, %cst_239 [1] : vector<8x8xf32> to vector<8xf32>
    %811 = vector.shape_cast %810 : vector<8xf32> to vector<8x1xf32>
    %812 = vector.broadcast %811 : vector<8x1xf32> to vector<8x8xf32>
    %813 = arith.subf %809, %812 : vector<8x8xf32>
    %814 = math.exp %813 : vector<8x8xf32>
    %cst_240 = arith.constant dense<0.000000e+00> : vector<8xf32>
    %815 = vector.multi_reduction <add>, %814, %cst_240 [1] : vector<8x8xf32> to vector<8xf32>
    %816 = vector.shape_cast %815 : vector<8xf32> to vector<8x1xf32>
    %817 = arith.truncf %814 : vector<8x8xf32> to vector<8x8xbf16>
    %cst_241 = arith.constant dense<0.000000e+00> : vector<8x8xf32>
    %818 = tpu.matmul %817, %807, %cst_241 {dimension_numbers = #tpu.dot_dimension_numbers<[1], [0], [0], [1], [0, 0, 1, 1], [], []>} : vector<8x8xbf16>, vector<8x8xbf16>, vector<8x8xf32> -> vector<8x8xf32>
    %819 = tpu.reciprocal %816 {approx = true} : vector<8x1xf32> -> vector<8x1xf32>
    %820 = vector.broadcast %819 : vector<8x1xf32> to vector<8x8xf32>
    %821 = arith.mulf %818, %820 : vector<8x8xf32>
    %c24_242 = arith.constant 24 : index
    %c16_243 = arith.constant 16 : index
    %822 = vector.load %arg11[%c24_242, %c16_243] : memref<32x32xf32, #tpu.memory_space<vmem>>, vector<8x8xf32>
    tpu.vector_store %arg11[%c24_242, %c16_243], %821 {strides = array<i32>} : memref<32x32xf32, #tpu.memory_space<vmem>>, vector<8x8xf32>,
    %823 = vector.extract_strided_slice %493 {offsets = [24, 24], sizes = [8, 8], strides = [1, 1]} : vector<32x32xf32> to vector<8x8xf32>
    %824 = arith.truncf %823 : vector<8x8xf32> to vector<8x8xbf16>
    %825 = vector.extract_strided_slice %494 {offsets = [24, 24], sizes = [8, 8], strides = [1, 1]} : vector<32x32xf32> to vector<8x8xf32>
    %826 = arith.truncf %825 : vector<8x8xf32> to vector<8x8xbf16>
    %827 = vector.extract_strided_slice %495 {offsets = [24, 24], sizes = [8, 8], strides = [1, 1]} : vector<32x32xf32> to vector<8x8xf32>
    %828 = arith.truncf %827 : vector<8x8xf32> to vector<8x8xbf16>
    "tpu.trace_start"() <{level = 10 : i32, message = "qd,kd->qk"}> : () -> ()
    %cst_244 = arith.constant dense<0.000000e+00> : vector<8x8xf32>
    %829 = tpu.matmul %824, %826, %cst_244 {dimension_numbers = #tpu.dot_dimension_numbers<[1], [1], [0], [0], [0, 0, 1, 0], [], []>} : vector<8x8xbf16>, vector<8x8xbf16>, vector<8x8xf32> -> vector<8x8xf32>
    "tpu.trace_stop"() : () -> ()
    %830 = arith.addf %829, %759 : vector<8x8xf32>
    %cst_245 = arith.constant dense<0xFF800000> : vector<8xf32>
    %831 = vector.multi_reduction <maximumf>, %830, %cst_245 [1] : vector<8x8xf32> to vector<8xf32>
    %832 = vector.shape_cast %831 : vector<8xf32> to vector<8x1xf32>
    %833 = vector.broadcast %832 : vector<8x1xf32> to vector<8x8xf32>
    %834 = arith.subf %830, %833 : vector<8x8xf32>
    %835 = math.exp %834 : vector<8x8xf32>
    %cst_246 = arith.constant dense<0.000000e+00> : vector<8xf32>
    %836 = vector.multi_reduction <add>, %835, %cst_246 [1] : vector<8x8xf32> to vector<8xf32>
    %837 = vector.shape_cast %836 : vector<8xf32> to vector<8x1xf32>
    %838 = arith.truncf %835 : vector<8x8xf32> to vector<8x8xbf16>
    %cst_247 = arith.constant dense<0.000000e+00> : vector<8x8xf32>
    %839 = tpu.matmul %838, %828, %cst_247 {dimension_numbers = #tpu.dot_dimension_numbers<[1], [0], [0], [1], [0, 0, 1, 1], [], []>} : vector<8x8xbf16>, vector<8x8xbf16>, vector<8x8xf32> -> vector<8x8xf32>
    %840 = tpu.reciprocal %837 {approx = true} : vector<8x1xf32> -> vector<8x1xf32>
    %841 = vector.broadcast %840 : vector<8x1xf32> to vector<8x8xf32>
    %842 = arith.mulf %839, %841 : vector<8x8xf32>
    %c24_248 = arith.constant 24 : index
    %c24_249 = arith.constant 24 : index
    %843 = vector.load %arg11[%c24_248, %c24_249] : memref<32x32xf32, #tpu.memory_space<vmem>>, vector<8x8xf32>
    tpu.vector_store %arg11[%c24_248, %c24_249], %842 {strides = array<i32>} : memref<32x32xf32, #tpu.memory_space<vmem>>, vector<8x8xf32>,
    %c0_250 = arith.constant 0 : index
    %c0_251 = arith.constant 0 : index
    %844 = vector.load %arg11[%c0_250, %c0_251] : memref<32x32xf32, #tpu.memory_space<vmem>>, vector<32x32xf32>
    %845 = arith.truncf %844 : vector<32x32xf32> to vector<32x32xbf16>
    %cst_252 = arith.constant dense<0.000000e+00> : vector<32x32xf32>
    %846 = tpu.matmul %845, %474, %cst_252 {dimension_numbers = #tpu.dot_dimension_numbers<[1], [0], [0], [1], [0, 0, 1, 1], [], []>} : vector<32x32xbf16>, vector<32x32xbf16>, vector<32x32xf32> -> vector<32x32xf32>
    %847 = vector.broadcast %482 : vector<1x32xf32> to vector<32x32xf32>
    %848 = arith.addf %846, %847 : vector<32x32xf32>
    %849 = arith.addf %848, %470 : vector<32x32xf32>
    %cst_253 = arith.constant dense<0.000000e+00> : vector<32xf32>
    %850 = vector.multi_reduction <add>, %849, %cst_253 [1] : vector<32x32xf32> to vector<32xf32>
    %851 = vector.shape_cast %850 : vector<32xf32> to vector<32x1xf32>
    %cst_254 = arith.constant 3.200000e+01 : f32
    %852 = vector.broadcast %cst_254 : f32 to vector<32x1xf32>
    %853 = arith.divf %851, %852 : vector<32x1xf32>
    %854 = vector.broadcast %853 : vector<32x1xf32> to vector<32x32xf32>
    %855 = arith.subf %849, %854 : vector<32x32xf32>
    %856 = arith.mulf %855, %855 : vector<32x32xf32>
    %cst_255 = arith.constant dense<0.000000e+00> : vector<32xf32>
    %857 = vector.multi_reduction <add>, %856, %cst_255 [1] : vector<32x32xf32> to vector<32xf32>
    %858 = vector.shape_cast %857 : vector<32xf32> to vector<32x1xf32>
    %cst_256 = arith.constant 3.200000e+01 : f32
    %859 = vector.broadcast %cst_256 : f32 to vector<32x1xf32>
    %860 = arith.divf %858, %859 : vector<32x1xf32>
    %cst_257 = arith.constant 9.99999996E-13 : f32
    %861 = vector.broadcast %cst_257 : f32 to vector<32x1xf32>
    %862 = arith.addf %860, %861 : vector<32x1xf32>
    %863 = math.rsqrt %862 : vector<32x1xf32>
    %864 = vector.broadcast %863 : vector<32x1xf32> to vector<32x32xf32>
    %865 = arith.mulf %855, %864 : vector<32x32xf32>
    %866 = vector.broadcast %483 : vector<1x32xf32> to vector<32x32xf32>
    %867 = arith.mulf %865, %866 : vector<32x32xf32>
    %868 = vector.broadcast %484 : vector<1x32xf32> to vector<32x32xf32>
    %869 = arith.addf %867, %868 : vector<32x32xf32>
    %870 = arith.truncf %869 : vector<32x32xf32> to vector<32x32xbf16>
    %cst_258 = arith.constant dense<0.000000e+00> : vector<32x64xf32>
    %871 = tpu.matmul %870, %476, %cst_258 {dimension_numbers = #tpu.dot_dimension_numbers<[1], [0], [0], [1], [0, 0, 1, 1], [], []>} : vector<32x32xbf16>, vector<32x64xbf16>, vector<32x64xf32> -> vector<32x64xf32>
    %872 = vector.broadcast %485 : vector<1x64xf32> to vector<32x64xf32>
    %873 = arith.addf %871, %872 : vector<32x64xf32>
    %cst_259 = arith.constant 5.000000e-01 : f32
    %874 = vector.broadcast %cst_259 : f32 to vector<32x64xf32>
    %875 = arith.mulf %874, %873 : vector<32x64xf32>
    %cst_260 = arith.constant 4.471500e-02 : f32
    %876 = vector.broadcast %cst_260 : f32 to vector<32x64xf32>
    %877 = arith.mulf %876, %873 : vector<32x64xf32>
    %878 = arith.mulf %877, %873 : vector<32x64xf32>
    %879 = arith.mulf %878, %873 : vector<32x64xf32>
    %880 = arith.addf %873, %879 : vector<32x64xf32>
    %cst_261 = arith.constant 0.797884583 : f32
    %881 = vector.broadcast %cst_261 : f32 to vector<32x64xf32>
    %882 = arith.mulf %881, %880 : vector<32x64xf32>
    %883 = math.tanh %882 : vector<32x64xf32>
    %cst_262 = arith.constant 1.000000e+00 : f32
    %884 = vector.broadcast %cst_262 : f32 to vector<32x64xf32>
    %885 = arith.addf %884, %883 : vector<32x64xf32>
    %886 = arith.mulf %875, %885 : vector<32x64xf32>
    %887 = arith.truncf %886 : vector<32x64xf32> to vector<32x64xbf16>
    %cst_263 = arith.constant dense<0.000000e+00> : vector<32x32xf32>
    %888 = tpu.matmul %887, %478, %cst_263 {dimension_numbers = #tpu.dot_dimension_numbers<[1], [0], [0], [1], [0, 0, 1, 1], [], []>} : vector<32x64xbf16>, vector<64x32xbf16>, vector<32x32xf32> -> vector<32x32xf32>
    %889 = vector.broadcast %486 : vector<1x32xf32> to vector<32x32xf32>
    %890 = arith.addf %888, %889 : vector<32x32xf32>
    %891 = arith.addf %890, %869 : vector<32x32xf32>
    %cst_264 = arith.constant dense<0.000000e+00> : vector<32xf32>
    %892 = vector.multi_reduction <add>, %891, %cst_264 [1] : vector<32x32xf32> to vector<32xf32>
    %893 = vector.shape_cast %892 : vector<32xf32> to vector<32x1xf32>
    %cst_265 = arith.constant 3.200000e+01 : f32
    %894 = vector.broadcast %cst_265 : f32 to vector<32x1xf32>
    %895 = arith.divf %893, %894 : vector<32x1xf32>
    %896 = vector.broadcast %895 : vector<32x1xf32> to vector<32x32xf32>
    %897 = arith.subf %891, %896 : vector<32x32xf32>
    %898 = arith.mulf %897, %897 : vector<32x32xf32>
    %cst_266 = arith.constant dense<0.000000e+00> : vector<32xf32>
    %899 = vector.multi_reduction <add>, %898, %cst_266 [1] : vector<32x32xf32> to vector<32xf32>
    %900 = vector.shape_cast %899 : vector<32xf32> to vector<32x1xf32>
    %cst_267 = arith.constant 3.200000e+01 : f32
    %901 = vector.broadcast %cst_267 : f32 to vector<32x1xf32>
    %902 = arith.divf %900, %901 : vector<32x1xf32>
    %cst_268 = arith.constant 9.99999996E-13 : f32
    %903 = vector.broadcast %cst_268 : f32 to vector<32x1xf32>
    %904 = arith.addf %902, %903 : vector<32x1xf32>
    %905 = math.rsqrt %904 : vector<32x1xf32>
    %906 = vector.broadcast %905 : vector<32x1xf32> to vector<32x32xf32>
    %907 = arith.mulf %897, %906 : vector<32x32xf32>
    %908 = vector.broadcast %487 : vector<1x32xf32> to vector<32x32xf32>
    %909 = arith.mulf %907, %908 : vector<32x32xf32>
    %910 = vector.broadcast %488 : vector<1x32xf32> to vector<32x32xf32>
    %911 = arith.addf %909, %910 : vector<32x32xf32>
    %912 = vector.extract_strided_slice %911 {offsets = [0, 0], sizes = [1, 32], strides = [1, 1]} : vector<32x32xf32> to vector<1x32xf32>
    %913 = vector.extract_strided_slice %911 {offsets = [8, 0], sizes = [1, 32], strides = [1, 1]} : vector<32x32xf32> to vector<1x32xf32>
    %914 = vector.extract_strided_slice %911 {offsets = [16, 0], sizes = [1, 32], strides = [1, 1]} : vector<32x32xf32> to vector<1x32xf32>
    %915 = vector.extract_strided_slice %911 {offsets = [24, 0], sizes = [1, 32], strides = [1, 1]} : vector<32x32xf32> to vector<1x32xf32>
    %916 = tpu.concatenate %912, %913, %914, %915 in 0 : vector<1x32xf32>, vector<1x32xf32>, vector<1x32xf32>, vector<1x32xf32> -> vector<4x32xf32>
    %917 = arith.truncf %916 : vector<4x32xf32> to vector<4x32xbf16>
    %c0_269 = arith.constant 0 : index
    %c0_270 = arith.constant 0 : index
    %918 = vector.load %arg7[%c0_269, %c0_270] : memref<32x32xbf16, #tpu.memory_space<vmem>>, vector<32x32xbf16>
    %cst_271 = arith.constant dense<0.000000e+00> : vector<4x32xf32>
    %919 = tpu.matmul %917, %918, %cst_271 {dimension_numbers = #tpu.dot_dimension_numbers<[1], [0], [0], [1], [0, 0, 1, 1], [], []>} : vector<4x32xbf16>, vector<32x32xbf16>, vector<4x32xf32> -> vector<4x32xf32>
    %920 = vector.broadcast %9 : vector<1x32xf32> to vector<4x32xf32>
    %921 = arith.addf %919, %920 : vector<4x32xf32>
    %922 = math.tanh %921 : vector<4x32xf32>
    %923 = vector.extract_strided_slice %922 {offsets = [0, 0], sizes = [2, 32], strides = [1, 1]} : vector<4x32xf32> to vector<2x32xf32>
    %c0_272 = arith.constant 0 : index
    %c0_273 = arith.constant 0 : index
    %924 = vector.load %arg10[%c0_272, %c0_273] : memref<2x64xf32, #tpu.memory_space<vmem>>, vector<2x32xf32>
    tpu.vector_store %arg10[%c0_272, %c0_273], %923 {strides = array<i32>} : memref<2x64xf32, #tpu.memory_space<vmem>>, vector<2x32xf32>,
    %925 = vector.extract_strided_slice %922 {offsets = [2, 0], sizes = [2, 32], strides = [1, 1]} : vector<4x32xf32> to vector<2x32xf32>
    %c0_274 = arith.constant 0 : index
    %c32 = arith.constant 32 : index
    %926 = vector.load %arg10[%c0_274, %c32] : memref<2x64xf32, #tpu.memory_space<vmem>>, vector<2x32xf32>
    tpu.vector_store %arg10[%c0_274, %c32], %925 {strides = array<i32>} : memref<2x64xf32, #tpu.memory_space<vmem>>, vector<2x32xf32>,
    return
  }
  func.func @transform_0(%arg0: i32) -> (i32, i32) {
    %c0_i32 = arith.constant 0 : i32
    %c0_i32_0 = arith.constant 0 : i32
    %c0_i32_1 = arith.constant 0 : i32
    return %c0_i32, %c0_i32_0 : i32, i32
  }
  func.func @transform_1(%arg0: i32) -> (i32, i32) {
    %c0_i32 = arith.constant 0 : i32
    %c0_i32_0 = arith.constant 0 : i32
    %c0_i32_1 = arith.constant 0 : i32
    return %c0_i32, %c0_i32_0 : i32, i32
  }
  func.func @transform_2(%arg0: i32) -> (i32, i32, i32) {
    %c0_i32 = arith.constant 0 : i32
    %c0_i32_0 = arith.constant 0 : i32
    %c0_i32_1 = arith.constant 0 : i32
    %c0_i32_2 = arith.constant 0 : i32
    return %c0_i32, %c0_i32_0, %c0_i32_1 : i32, i32, i32
  }
  func.func @transform_3(%arg0: i32) -> (i32, i32, i32) {
    %c0_i32 = arith.constant 0 : i32
    %c0_i32_0 = arith.constant 0 : i32
    %c0_i32_1 = arith.constant 0 : i32
    %c0_i32_2 = arith.constant 0 : i32
    return %c0_i32, %c0_i32_0, %c0_i32_1 : i32, i32, i32
  }
  func.func @transform_4(%arg0: i32) -> (i32, i32, i32) {
    %c0_i32 = arith.constant 0 : i32
    %c0_i32_0 = arith.constant 0 : i32
    %c0_i32_1 = arith.constant 0 : i32
    %c0_i32_2 = arith.constant 0 : i32
    return %c0_i32, %c0_i32_0, %c0_i32_1 : i32, i32, i32
  }
  func.func @transform_5(%arg0: i32) -> (i32, i32, i32) {
    %c0_i32 = arith.constant 0 : i32
    %c0_i32_0 = arith.constant 0 : i32
    %c0_i32_1 = arith.constant 0 : i32
    %c0_i32_2 = arith.constant 0 : i32
    return %c0_i32, %c0_i32_0, %c0_i32_1 : i32, i32, i32
  }
  func.func @transform_6(%arg0: i32) -> (i32, i32) {
    %c0_i32 = arith.constant 0 : i32
    %c0_i32_0 = arith.constant 0 : i32
    %c0_i32_1 = arith.constant 0 : i32
    return %c0_i32, %c0_i32_0 : i32, i32
  }
  func.func @transform_7(%arg0: i32) -> (i32, i32, i32) {
    %c0_i32 = arith.constant 0 : i32
    %c0_i32_0 = arith.constant 0 : i32
    %c0_i32_1 = arith.constant 0 : i32
    %c0_i32_2 = arith.constant 0 : i32
    return %c0_i32, %c0_i32_0, %c0_i32_1 : i32, i32, i32
  }
  func.func @transform_8(%arg0: i32) -> (i32, i32) {
    %c0_i32 = arith.constant 0 : i32
    %c0_i32_0 = arith.constant 0 : i32
    %c0_i32_1 = arith.constant 0 : i32
    return %c0_i32, %c0_i32_0 : i32, i32
  }
  func.func @transform_9(%arg0: i32) -> (i32, i32) {
    %c0_i32 = arith.constant 0 : i32
    %c0_i32_0 = arith.constant 0 : i32
    %c0_i32_1 = arith.constant 0 : i32
    return %c0_i32, %c0_i32_0 : i32, i32
  }
}

</mosaic_0001>

<llo_original>
// kernel: custom_bert_forward.1
$region0: #{custom_bert_forward.1}
  #allocation0 [shape = 'u32[]', space=smem, size = 0x4, offset = 0x4, fixed_abs, tag = 'smem constant byte address 0x4 - core index']
  #allocation1 [shape = 'u32[144,128]{1,0:T(1,128)}', space=vmem, size = 0x12000, scoped, tag = 'internal scratch']
  #allocation2 [shape = 'f32[32,32]{1,0:T(8,128)}', space=vmem, size = 0x4000, scoped, tag = 'scratch operand']
  %s0 = inlined_call_operand.vmem [shape: f32[32,32], index: 0, kind: input, shape index: {}]
  %s1 = inlined_call_operand.vmem [shape: f32[4,8], index: 1, kind: input, shape index: {}]
  %s2 = inlined_call_operand.vmem [shape: bf16[2,32,96], index: 2, kind: input, shape index: {}]
  %s3 = inlined_call_operand.vmem [shape: bf16[2,32,32], index: 3, kind: input, shape index: {}]
  %s4 = inlined_call_operand.vmem [shape: bf16[2,32,64], index: 4, kind: input, shape index: {}]
  %s5 = inlined_call_operand.vmem [shape: bf16[2,64,32], index: 5, kind: input, shape index: {}]
  %s6 = inlined_call_operand.vmem [shape: bf16[32,32], index: 6, kind: input, shape index: {}]
  %s7 = inlined_call_operand.vmem [shape: f32[2,8,96], index: 7, kind: input, shape index: {}]
  %s8 = inlined_call_operand.vmem [shape: f32[3,32], index: 8, kind: input, shape index: {}]
  %s9 = inlined_call_operand.hbm [shape: f32[2,64], index: 9, kind: output, shape index: {}]
  %s10 = sld [smem:[#allocation0]]
  $region46: #{custom_bert_forward.1} parent=0
    _
  %s12 = ssub.s32 1, %s10
  %s13 = scalar_select 0, %s12, %s10
  $region1: #{custom_bert_forward.1} parent=0
    #allocation3 [shape = 'u8[1024]{0}', space=vmem, size = 0x400, scoped, tag = 'output window, operand 0, single buffered']
    #allocation4 [shape = 's32[1]{0}', space=sflag, size = 0x4, scoped, tag = 'scoped memory for custom_bert_forward.1']
    %14 = vsyncpa [#allocation4], 0
    // Predicated region
    $region2: #{custom_bert_forward.1} parent=1 // pred_check
      _
    $region3: #{custom_bert_forward.1} parent=1 // pred_check_branch
      %16 = sbr.rel (0) target = $region5
    $region4: #{custom_bert_forward.1} parent=1 // pred_region
      _
    $region5: #{custom_bert_forward.1} parent=1 // pred_fallthru
      _
    // Predicated region
    $region6: #{custom_bert_forward.1} parent=1 // pred_check
      _
    $region7: #{custom_bert_forward.1} parent=1 // pred_check_branch
      %18 = sbr.rel (0) target = $region9
    $region8: #{custom_bert_forward.1} parent=1 // pred_region
      _
    $region9: #{custom_bert_forward.1} parent=1 // pred_fallthru
      _
    // Predicated region
    $region10: #{custom_bert_forward.1} parent=1 // pred_check
      _
    $region11: #{custom_bert_forward.1} parent=1 // pred_check_branch
      %20 = sbr.rel (0) target = $region13
    $region12: #{custom_bert_forward.1} parent=1 // pred_region
      _
    $region13: #{custom_bert_forward.1} parent=1 // pred_fallthru
      _
    // Predicated region
    $region14: #{custom_bert_forward.1} parent=1 // pred_check
      _
    $region15: #{custom_bert_forward.1} parent=1 // pred_check_branch
      %22 = sbr.rel (0) target = $region17
    $region16: #{custom_bert_forward.1} parent=1 // pred_region
      _
    $region17: #{custom_bert_forward.1} parent=1 // pred_fallthru
      _
    // Predicated region
    $region18: #{custom_bert_forward.1} parent=1 // pred_check
      _
    $region19: #{custom_bert_forward.1} parent=1 // pred_check_branch
      %24 = sbr.rel (0) target = $region21
    $region20: #{custom_bert_forward.1} parent=1 // pred_region
      _
    $region21: #{custom_bert_forward.1} parent=1 // pred_fallthru
      _
    // Predicated region
    $region22: #{custom_bert_forward.1} parent=1 // pred_check
      _
    $region23: #{custom_bert_forward.1} parent=1 // pred_check_branch
      %26 = sbr.rel (0) target = $region25
    $region24: #{custom_bert_forward.1} parent=1 // pred_region
      _
    $region25: #{custom_bert_forward.1} parent=1 // pred_fallthru
      _
    // Predicated region
    $region26: #{custom_bert_forward.1} parent=1 // pred_check
      _
    $region27: #{custom_bert_forward.1} parent=1 // pred_check_branch
      %28 = sbr.rel (0) target = $region29
    $region28: #{custom_bert_forward.1} parent=1 // pred_region
      _
    $region29: #{custom_bert_forward.1} parent=1 // pred_fallthru
      _
    // Predicated region
    $region30: #{custom_bert_forward.1} parent=1 // pred_check
      _
    $region31: #{custom_bert_forward.1} parent=1 // pred_check_branch
      %30 = sbr.rel (0) target = $region33
    $region32: #{custom_bert_forward.1} parent=1 // pred_region
      _
    $region33: #{custom_bert_forward.1} parent=1 // pred_fallthru
      _
    // Predicated region
    $region34: #{custom_bert_forward.1} parent=1 // pred_check
      _
    $region35: #{custom_bert_forward.1} parent=1 // pred_check_branch
      %32 = sbr.rel (0) target = $region37
    $region36: #{custom_bert_forward.1} parent=1 // pred_region
      _
    $region37: #{custom_bert_forward.1} parent=1 // pred_fallthru
      _
    %v34 = vld [vmem:[%s0] sm:$0xff]
    %v35 = vld [vmem:[%s0 + $0x8] sm:$0xff]
    %v36 = vld [vmem:[%s0 + $0x10] sm:$0xff]
    %v37 = vld [vmem:[%s0 + $0x18] sm:$0xff]
    %v38 = vld [vmem:[%s1] sm:$0xf]
    %v39 = vsub.f32 1.0, %v38
    %v40 = vmul.f32 %v39, -10000.0
    %v41 = vld [vmem:[%s8] sm:$0x7]
    %vm42 = vcmask 261120
    %v43 = vsel %vm42, %v34, 0.0
    %44 = vadd.xlane.f32.xlu0 %v43
    %v45 = vpop.xlane.xlu0 %44
    %v46 = vsel %vm42, %v35, 0.0
    %47 = vadd.xlane.f32.xlu0 %v46
    %v48 = vpop.xlane.xlu0 %47
    %v49 = vsel %vm42, %v36, 0.0
    %50 = vadd.xlane.f32.xlu0 %v49
    %v51 = vpop.xlane.xlu0 %50
    %v52 = vsel %vm42, %v37, 0.0
    %53 = vadd.xlane.f32.xlu0 %v52
    %v54 = vpop.xlane.xlu0 %53
    %v55 = vrcp.pop 32.0
    %v56 = vmul.f32 %v45, %v55
    %v57 = vmul.f32 %v48, %v55
    %v58 = vmul.f32 %v51, %v55
    %v59 = vmul.f32 %v54, %v55
    %v60 = vsub.f32 %v34, %v56
    %v61 = vsub.f32 %v35, %v57
    %v62 = vsub.f32 %v36, %v58
    %v63 = vsub.f32 %v37, %v59
    %v64 = vmul.f32 %v60, %v60
    %v65 = vmul.f32 %v61, %v61
    %v66 = vmul.f32 %v62, %v62
    %v67 = vmul.f32 %v63, %v63
    %v68 = vsel %vm42, %v64, 0.0
    %69 = vadd.xlane.f32.xlu0 %v68
    %v70 = vpop.xlane.xlu0 %69
    %v71 = vsel %vm42, %v65, 0.0
    %72 = vadd.xlane.f32.xlu0 %v71
    %v73 = vpop.xlane.xlu0 %72
    %v74 = vsel %vm42, %v66, 0.0
    %75 = vadd.xlane.f32.xlu0 %v74
    %v76 = vpop.xlane.xlu0 %75
    %v77 = vsel %vm42, %v67, 0.0
    %78 = vadd.xlane.f32.xlu0 %v77
    %v79 = vpop.xlane.xlu0 %78
    %v80 = vmul.f32 %v70, %v55
    %v81 = vmul.f32 %v73, %v55
    %v82 = vmul.f32 %v76, %v55
    %v83 = vmul.f32 %v79, %v55
    %v84 = vadd.f32 %v80, 1e-12
    %v85 = vadd.f32 %v81, 1e-12
    %v86 = vadd.f32 %v82, 1e-12
    %v87 = vadd.f32 %v83, 1e-12
    %v88 = vrsqrt.pop %v84
    %v89 = vrsqrt.pop %v85
    %v90 = vrsqrt.pop %v86
    %v91 = vrsqrt.pop %v87
    %v92 = vmul.f32 %v60, %v88
    %v93 = vmul.f32 %v61, %v89
    %v94 = vmul.f32 %v62, %v90
    %v95 = vmul.f32 %v63, %v91
    %v96 = vlaneseq
    %v97 = vshrl.u32 %v96, 7
    %v98 = vsub.s32 0, %v97
    %v99 = vrot.slane %v41, %v98
    %v100 = vmul.f32 %v92, %v99
    %v101 = vmul.f32 %v93, %v99
    %v102 = vmul.f32 %v94, %v99
    %v103 = vmul.f32 %v95, %v99
    %v104 = vlaneseq
    %v105 = vshrl.u32 %v104, 7
    %v106 = vsub.s32 1, %v105
    %v107 = vrot.slane %v41, %v106
    %v108 = vadd.f32 %v100, %v107
    %v109 = vadd.f32 %v101, %v107
    %v110 = vadd.f32 %v102, %v107
    %v111 = vadd.f32 %v103, %v107
    %v112 = vld [vmem:[%s2] sm:$0xf]
    %v113 = vld [vmem:[%s2 + $0x4] sm:$0xf]
    %v114 = vld [vmem:[%s2 + $0x8] sm:$0xf]
    %v115 = vld [vmem:[%s2 + $0xc] sm:$0xf]
    %v116 = vld [vmem:[%s3] sm:$0xf]
    %v117 = vld [vmem:[%s3 + $0x4] sm:$0xf]
    %v118 = vld [vmem:[%s3 + $0x8] sm:$0xf]
    %v119 = vld [vmem:[%s3 + $0xc] sm:$0xf]
    %v120 = vld [vmem:[%s4] sm:$0xf]
    %v121 = vld [vmem:[%s4 + $0x4] sm:$0xf]
    %v122 = vld [vmem:[%s4 + $0x8] sm:$0xf]
    %v123 = vld [vmem:[%s4 + $0xc] sm:$0xf]
    %v124 = vld [vmem:[%s5] sm:$0xf]
    %v125 = vld [vmem:[%s5 + $0x4] sm:$0xf]
    %v126 = vld [vmem:[%s5 + $0x8] sm:$0xf]
    %v127 = vld [vmem:[%s5 + $0xc] sm:$0xf]
    %v128 = vld [vmem:[%s5 + $0x10] sm:$0xf]
    %v129 = vld [vmem:[%s5 + $0x14] sm:$0xf]
    %v130 = vld [vmem:[%s5 + $0x18] sm:$0xf]
    %v131 = vld [vmem:[%s5 + $0x1c] sm:$0xf]
    %v132 = vld [vmem:[%s7] sm:$0xff]
    %v133 = vpack.c.bf16 %v109, %v108
    %v134 = vpack.c.bf16 %v111, %v110
    %v135 = vlaneseq
    %v136 = vshrl.u32 %v135, 7
    %v137 = vsub.s32 0, %v136
    %v138 = vrot.slane %v132, %v137
    %v143 = vunpack.c.l.b16 %v112
    %v144 = vunpack.c.l.b16 %v113
    %v145 = vunpack.c.l.b16 %v114
    %v146 = vunpack.c.l.b16 %v115
    %v147 = vpack.c.b16 %v144, %v143
    %v148 = vpack.c.b16 %v146, %v145
    %v152 = vsel %vm42, %v133, 0
    %v155 = vsel %vm42, %v134, 0
    %157 = vmatprep.subr.bf16.mxu0 0
    %158 = vmatpush1.bf16.msra.mxu0 %v147
    %159 = vmatprep.subr.bf16.mxu0 0
    %160 = vmatpush1.bf16.msra.mxu0 %v148
    %161 = vmatprep.subr.bf16.mxu0 0
    %162 = vmatpush1.bf16.msra.mxu0 0
    %163 = vmatprep.subr.bf16.mxu0 0
    %164 = vmatpush1.bf16.msra.mxu0 0
    %165 = vmatprep.subr.bf16.mxu0 0
    %166 = vmatpush1.bf16.msra.mxu0 0
    %167 = vmatprep.subr.bf16.mxu0 0
    %168 = vmatpush1.bf16.msra.mxu0 0
    %169 = vmatprep.subr.bf16.mxu0 0
    %170 = vmatpush1.bf16.msra.mxu0 0
    %171 = vmatprep.subr.bf16.mxu0 0
    %172 = vmatpush1.bf16.msra.mxu0 0
    %173 = vmatprep.subr.bf16.mxu0 0
    %174 = vmatpush1.bf16.msra.mxu0 0
    %175 = vmatprep.subr.bf16.mxu0 0
    %176 = vmatpush1.bf16.msra.mxu0 0
    %177 = vmatprep.subr.bf16.mxu0 0
    %178 = vmatpush1.bf16.msra.mxu0 0
    %179 = vmatprep.subr.bf16.mxu0 0
    %180 = vmatpush1.bf16.msra.mxu0 0
    %181 = vmatprep.subr.bf16.mxu0 0
    %182 = vmatpush1.bf16.msra.mxu0 0
    %183 = vmatprep.subr.bf16.mxu0 0
    %184 = vmatpush1.bf16.msra.mxu0 0
    %185 = vmatprep.subr.bf16.mxu0 0
    %186 = vmatpush1.bf16.msra.mxu0 0
    %187 = vmatprep.subr.bf16.mxu0 0
    %188 = vmatpush1.bf16.msra.mxu0 0
    %189 = vmatprep.mubr.bf16.mxu0 0
    %190 = vmatmul.mubr.bf16.gmra.mrb[0].mxu0 %v152
    %v191 = vpop.f32.mrb[0].mxu0
    %v192 = vadd.f32 %v138, %v191
    %v193 = vpop.f32.mrb[0].mxu0
    %v194 = vpop.f32.mrb[0].mxu0
    %v195 = vadd.f32 %v138, %v194
    %v196 = vpop.f32.mrb[0].mxu0
    %197 = vmatprep.mubr.bf16.mxu0 0
    %198 = vmatmul.mubr.bf16.gmra.mrb[0].mxu0 %v155
    %v199 = vpop.f32.mrb[0].mxu0
    %v200 = vadd.f32 %v138, %v199
    %v201 = vpop.f32.mrb[0].mxu0
    %v202 = vpop.f32.mrb[0].mxu0
    %v203 = vadd.f32 %v138, %v202
    %v204 = vpop.f32.mrb[0].mxu0
    %205 = vdwg.mxu0
    %v206 = vlaneseq
    %v207 = vshrl.u32 %v206, 7
    %v208 = vsub.s32 0, %v207
    %v209 = vrot.slane %v40, %v208
    %v210 = vpack.c.bf16 %v192, %v192
    %212 = vrot.lane.b32.xlu0 %v210, 96
    %v213 = vpop.permute.xlu0 %212
    %vm214 = vcmask 64512
    %v216 = vsel %vm214, %v210, 0
    %v219 = vsel %vm214, %v213, 0
    %221 = vmatprep.subr.bf16.mxu0 0
    %222 = vmatpush1.bf16.xpose.msra.mxu0 %v219
    %223 = vmatprep.subr.bf16.mxu0 0
    %224 = vmatpush1.bf16.xpose.msra.mxu0 0
    %225 = vmatprep.subr.bf16.mxu0 0
    %226 = vmatpush1.bf16.xpose.msra.mxu0 0
    %227 = vmatprep.subr.bf16.mxu0 0
    %228 = vmatpush1.bf16.xpose.msra.mxu0 0
    %229 = vmatprep.subr.bf16.mxu0 0
    %230 = vmatpush1.bf16.xpose.msra.mxu0 0
    %231 = vmatprep.subr.bf16.mxu0 0
    %232 = vmatpush1.bf16.xpose.msra.mxu0 0
    %233 = vmatprep.subr.bf16.mxu0 0
    %234 = vmatpush1.bf16.xpose.msra.mxu0 0
    %235 = vmatprep.subr.bf16.mxu0 0
    %236 = vmatpush1.bf16.xpose.msra.mxu0 0
    %237 = vmatprep.subr.bf16.mxu0 0
    %238 = vmatpush1.bf16.xpose.msra.mxu0 0
    %239 = vmatprep.subr.bf16.mxu0 0
    %240 = vmatpush1.bf16.xpose.msra.mxu0 0
    %241 = vmatprep.subr.bf16.mxu0 0
    %242 = vmatpush1.bf16.xpose.msra.mxu0 0
    %243 = vmatprep.subr.bf16.mxu0 0
    %244 = vmatpush1.bf16.xpose.msra.mxu0 0
    %245 = vmatprep.subr.bf16.mxu0 0
    %246 = vmatpush1.bf16.xpose.msra.mxu0 0
    %247 = vmatprep.subr.bf16.mxu0 0
    %248 = vmatpush1.bf16.xpose.msra.mxu0 0
    %249 = vmatprep.subr.bf16.mxu0 0
    %250 = vmatpush1.bf16.xpose.msra.mxu0 0
    %251 = vmatprep.subr.bf16.mxu0 0
    %252 = vmatpush1.bf16.xpose.msra.mxu0 0
    %253 = vmatprep.mubr.bf16.mxu0 0
    %254 = vmatmul.mubr.bf16.gmra.mrb[0].mxu0 %v216
    %v255 = vpop.f32.mrb[0].mxu0
    %v256 = vadd.f32 %v209, %v255
    %v257 = vpop.f32.mrb[0].mxu0
    %v258 = vpop.f32.mrb[0].mxu0
    %v259 = vpop.f32.mrb[0].mxu0
    %260 = vdwg.mxu0
    %v261 = vsel %vm214, %v256, -inf
    %262 = vmax.xlane.f32.xlu0 %v261
    %v263 = vpop.xlane.xlu0 %262
    %v264 = vsub.f32 %v256, %v263
    %v265 = vmul.f32 %v264, 1.442695
    %v266 = vpow.pop %v265
    %v267 = vsel %vm214, %v266, 0.0
    %268 = vadd.xlane.f32.xlu0 %v267
    %v269 = vpop.xlane.xlu0 %268
    %v270 = vpack.c.bf16 %v266, %v266
    %271 = vrot.lane.b32.xlu0 %v210, 64
    %v272 = vpop.permute.xlu0 %271
    %v274 = vsel %vm214, %v270, 0
    %vm276 = vcmask 1043456
    %v278 = vsel %vm276, %v272, 0
    %280 = vmatprep.subr.bf16.mxu0 0
    %281 = vmatpush1.bf16.msra.mxu0 %v278
    %282 = vmatprep.subr.bf16.mxu0 0
    %283 = vmatpush1.bf16.msra.mxu0 0
    %284 = vmatprep.subr.bf16.mxu0 0
    %285 = vmatpush1.bf16.msra.mxu0 0
    %286 = vmatprep.subr.bf16.mxu0 0
    %287 = vmatpush1.bf16.msra.mxu0 0
    %288 = vmatprep.subr.bf16.mxu0 0
    %289 = vmatpush1.bf16.msra.mxu0 0
    %290 = vmatprep.subr.bf16.mxu0 0
    %291 = vmatpush1.bf16.msra.mxu0 0
    %292 = vmatprep.subr.bf16.mxu0 0
    %293 = vmatpush1.bf16.msra.mxu0 0
    %294 = vmatprep.subr.bf16.mxu0 0
    %295 = vmatpush1.bf16.msra.mxu0 0
    %296 = vmatprep.subr.bf16.mxu0 0
    %297 = vmatpush1.bf16.msra.mxu0 0
    %298 = vmatprep.subr.bf16.mxu0 0
    %299 = vmatpush1.bf16.msra.mxu0 0
    %300 = vmatprep.subr.bf16.mxu0 0
    %301 = vmatpush1.bf16.msra.mxu0 0
    %302 = vmatprep.subr.bf16.mxu0 0
    %303 = vmatpush1.bf16.msra.mxu0 0
    %304 = vmatprep.subr.bf16.mxu0 0
    %305 = vmatpush1.bf16.msra.mxu0 0
    %306 = vmatprep.subr.bf16.mxu0 0
    %307 = vmatpush1.bf16.msra.mxu0 0
    %308 = vmatprep.subr.bf16.mxu0 0
    %309 = vmatpush1.bf16.msra.mxu0 0
    %310 = vmatprep.subr.bf16.mxu0 0
    %311 = vmatpush1.bf16.msra.mxu0 0
    %312 = vmatprep.mubr.bf16.mxu0 0
    %313 = vmatmul.mubr.bf16.gmra.mrb[0].mxu0 %v274
    %v314 = vpop.f32.mrb[0].mxu0
    %v315 = vadd.f32 0.0, %v314
    %v316 = vpop.f32.mrb[0].mxu0
    %v317 = vpop.f32.mrb[0].mxu0
    %v318 = vpop.f32.mrb[0].mxu0
    %319 = vdwg.mxu0
    %v320 = vrcp.pop %v269
    %v321 = vmul.f32 %v315, %v320
    %322 = vst.msk [vmem:[#allocation2] sm:$0xff] %vm214, %v321
    %323 = vrot.lane.b32.xlu0 %v210, 120
    %v324 = vpop.permute.xlu0 %323
    %325 = vrot.lane.b32.xlu0 %v210, 88
    %v326 = vpop.permute.xlu0 %325
    %v328 = vsel %vm214, %v324, 0
    %v331 = vsel %vm214, %v326, 0
    %333 = vmatprep.subr.bf16.mxu0 0
    %334 = vmatpush1.bf16.xpose.msra.mxu0 %v331
    %335 = vmatprep.subr.bf16.mxu0 0
    %336 = vmatpush1.bf16.xpose.msra.mxu0 0
    %337 = vmatprep.subr.bf16.mxu0 0
    %338 = vmatpush1.bf16.xpose.msra.mxu0 0
    %339 = vmatprep.subr.bf16.mxu0 0
    %340 = vmatpush1.bf16.xpose.msra.mxu0 0
    %341 = vmatprep.subr.bf16.mxu0 0
    %342 = vmatpush1.bf16.xpose.msra.mxu0 0
    %343 = vmatprep.subr.bf16.mxu0 0
    %344 = vmatpush1.bf16.xpose.msra.mxu0 0
    %345 = vmatprep.subr.bf16.mxu0 0
    %346 = vmatpush1.bf16.xpose.msra.mxu0 0
    %347 = vmatprep.subr.bf16.mxu0 0
    %348 = vmatpush1.bf16.xpose.msra.mxu0 0
    %349 = vmatprep.subr.bf16.mxu0 0
    %350 = vmatpush1.bf16.xpose.msra.mxu0 0
    %351 = vmatprep.subr.bf16.mxu0 0
    %352 = vmatpush1.bf16.xpose.msra.mxu0 0
    %353 = vmatprep.subr.bf16.mxu0 0
    %354 = vmatpush1.bf16.xpose.msra.mxu0 0
    %355 = vmatprep.subr.bf16.mxu0 0
    %356 = vmatpush1.bf16.xpose.msra.mxu0 0
    %357 = vmatprep.subr.bf16.mxu0 0
    %358 = vmatpush1.bf16.xpose.msra.mxu0 0
    %359 = vmatprep.subr.bf16.mxu0 0
    %360 = vmatpush1.bf16.xpose.msra.mxu0 0
    %361 = vmatprep.subr.bf16.mxu0 0
    %362 = vmatpush1.bf16.xpose.msra.mxu0 0
    %363 = vmatprep.subr.bf16.mxu0 0
    %364 = vmatpush1.bf16.xpose.msra.mxu0 0
    %365 = vmatprep.mubr.bf16.mxu0 0
    %366 = vmatmul.mubr.bf16.gmra.mrb[0].mxu0 %v328
    %v367 = vpop.f32.mrb[0].mxu0
    %v368 = vadd.f32 %v209, %v367
    %v369 = vpop.f32.mrb[0].mxu0
    %v370 = vpop.f32.mrb[0].mxu0
    %v371 = vpop.f32.mrb[0].mxu0
    %372 = vdwg.mxu0
    %v373 = vsel %vm214, %v368, -inf
    %374 = vmax.xlane.f32.xlu0 %v373
    %v375 = vpop.xlane.xlu0 %374
    %v376 = vsub.f32 %v368, %v375
    %v377 = vmul.f32 %v376, 1.442695
    %v378 = vpow.pop %v377
    %v379 = vsel %vm214, %v378, 0.0
    %380 = vadd.xlane.f32.xlu0 %v379
    %v381 = vpop.xlane.xlu0 %380
    %v382 = vpack.c.bf16 %v378, %v378
    %383 = vrot.lane.b32.xlu0 %v210, 56
    %v384 = vpop.permute.xlu0 %383
    %v386 = vsel %vm214, %v382, 0
    %v389 = vsel %vm276, %v384, 0
    %391 = vmatprep.subr.bf16.mxu0 0
    %392 = vmatpush1.bf16.msra.mxu0 %v389
    %393 = vmatprep.subr.bf16.mxu0 0
    %394 = vmatpush1.bf16.msra.mxu0 0
    %395 = vmatprep.subr.bf16.mxu0 0
    %396 = vmatpush1.bf16.msra.mxu0 0
    %397 = vmatprep.subr.bf16.mxu0 0
    %398 = vmatpush1.bf16.msra.mxu0 0
    %399 = vmatprep.subr.bf16.mxu0 0
    %400 = vmatpush1.bf16.msra.mxu0 0
    %401 = vmatprep.subr.bf16.mxu0 0
    %402 = vmatpush1.bf16.msra.mxu0 0
    %403 = vmatprep.subr.bf16.mxu0 0
    %404 = vmatpush1.bf16.msra.mxu0 0
    %405 = vmatprep.subr.bf16.mxu0 0
    %406 = vmatpush1.bf16.msra.mxu0 0
    %407 = vmatprep.subr.bf16.mxu0 0
    %408 = vmatpush1.bf16.msra.mxu0 0
    %409 = vmatprep.subr.bf16.mxu0 0
    %410 = vmatpush1.bf16.msra.mxu0 0
    %411 = vmatprep.subr.bf16.mxu0 0
    %412 = vmatpush1.bf16.msra.mxu0 0
    %413 = vmatprep.subr.bf16.mxu0 0
    %414 = vmatpush1.bf16.msra.mxu0 0
    %415 = vmatprep.subr.bf16.mxu0 0
    %416 = vmatpush1.bf16.msra.mxu0 0
    %417 = vmatprep.subr.bf16.mxu0 0
    %418 = vmatpush1.bf16.msra.mxu0 0
    %419 = vmatprep.subr.bf16.mxu0 0
    %420 = vmatpush1.bf16.msra.mxu0 0
    %421 = vmatprep.subr.bf16.mxu0 0
    %422 = vmatpush1.bf16.msra.mxu0 0
    %423 = vmatprep.mubr.bf16.mxu0 0
    %424 = vmatmul.mubr.bf16.gmra.mrb[0].mxu0 %v386
    %v425 = vpop.f32.mrb[0].mxu0
    %v426 = vadd.f32 0.0, %v425
    %v427 = vpop.f32.mrb[0].mxu0
    %v428 = vpop.f32.mrb[0].mxu0
    %v429 = vpop.f32.mrb[0].mxu0
    %430 = vdwg.mxu0
    %v431 = vrcp.pop %v381
    %v432 = vmul.f32 %v426, %v431
    %434 = vrot.lane.b32.xlu0 %v432, 8
    %v435 = vpop.permute.xlu0 %434
    %vm437 = vcmask 130112
    %438 = vst.msk [vmem:[#allocation2] sm:$0xff] %vm437, %v435
    %439 = vrot.lane.b32.xlu0 %v210, 112
    %v440 = vpop.permute.xlu0 %439
    %441 = vrot.lane.b32.xlu0 %v210, 80
    %v442 = vpop.permute.xlu0 %441
    %v444 = vsel %vm214, %v440, 0
    %v447 = vsel %vm214, %v442, 0
    %449 = vmatprep.subr.bf16.mxu0 0
    %450 = vmatpush1.bf16.xpose.msra.mxu0 %v447
    %451 = vmatprep.subr.bf16.mxu0 0
    %452 = vmatpush1.bf16.xpose.msra.mxu0 0
    %453 = vmatprep.subr.bf16.mxu0 0
    %454 = vmatpush1.bf16.xpose.msra.mxu0 0
    %455 = vmatprep.subr.bf16.mxu0 0
    %456 = vmatpush1.bf16.xpose.msra.mxu0 0
    %457 = vmatprep.subr.bf16.mxu0 0
    %458 = vmatpush1.bf16.xpose.msra.mxu0 0
    %459 = vmatprep.subr.bf16.mxu0 0
    %460 = vmatpush1.bf16.xpose.msra.mxu0 0
    %461 = vmatprep.subr.bf16.mxu0 0
    %462 = vmatpush1.bf16.xpose.msra.mxu0 0
    %463 = vmatprep.subr.bf16.mxu0 0
    %464 = vmatpush1.bf16.xpose.msra.mxu0 0
    %465 = vmatprep.subr.bf16.mxu0 0
    %466 = vmatpush1.bf16.xpose.msra.mxu0 0
    %467 = vmatprep.subr.bf16.mxu0 0
    %468 = vmatpush1.bf16.xpose.msra.mxu0 0
    %469 = vmatprep.subr.bf16.mxu0 0
    %470 = vmatpush1.bf16.xpose.msra.mxu0 0
    %471 = vmatprep.subr.bf16.mxu0 0
    %472 = vmatpush1.bf16.xpose.msra.mxu0 0
    %473 = vmatprep.subr.bf16.mxu0 0
    %474 = vmatpush1.bf16.xpose.msra.mxu0 0
    %475 = vmatprep.subr.bf16.mxu0 0
    %476 = vmatpush1.bf16.xpose.msra.mxu0 0
    %477 = vmatprep.subr.bf16.mxu0 0
    %478 = vmatpush1.bf16.xpose.msra.mxu0 0
    %479 = vmatprep.subr.bf16.mxu0 0
    %480 = vmatpush1.bf16.xpose.msra.mxu0 0
    %481 = vmatprep.mubr.bf16.mxu0 0
    %482 = vmatmul.mubr.bf16.gmra.mrb[0].mxu0 %v444
    %v483 = vpop.f32.mrb[0].mxu0
    %v484 = vadd.f32 %v209, %v483
    %v485 = vpop.f32.mrb[0].mxu0
    %v486 = vpop.f32.mrb[0].mxu0
    %v487 = vpop.f32.mrb[0].mxu0
    %488 = vdwg.mxu0
    %v489 = vsel %vm214, %v484, -inf
    %490 = vmax.xlane.f32.xlu0 %v489
    %v491 = vpop.xlane.xlu0 %490
    %v492 = vsub.f32 %v484, %v491
    %v493 = vmul.f32 %v492, 1.442695
    %v494 = vpow.pop %v493
    %v495 = vsel %vm214, %v494, 0.0
    %496 = vadd.xlane.f32.xlu0 %v495
    %v497 = vpop.xlane.xlu0 %496
    %v498 = vpack.c.bf16 %v494, %v494
    %499 = vrot.lane.b32.xlu0 %v210, 48
    %v500 = vpop.permute.xlu0 %499
    %v502 = vsel %vm214, %v498, 0
    %v505 = vsel %vm276, %v500, 0
    %507 = vmatprep.subr.bf16.mxu0 0
    %508 = vmatpush1.bf16.msra.mxu0 %v505
    %509 = vmatprep.subr.bf16.mxu0 0
    %510 = vmatpush1.bf16.msra.mxu0 0
    %511 = vmatprep.subr.bf16.mxu0 0
    %512 = vmatpush1.bf16.msra.mxu0 0
    %513 = vmatprep.subr.bf16.mxu0 0
    %514 = vmatpush1.bf16.msra.mxu0 0
    %515 = vmatprep.subr.bf16.mxu0 0
    %516 = vmatpush1.bf16.msra.mxu0 0
    %517 = vmatprep.subr.bf16.mxu0 0
    %518 = vmatpush1.bf16.msra.mxu0 0
    %519 = vmatprep.subr.bf16.mxu0 0
    %520 = vmatpush1.bf16.msra.mxu0 0
    %521 = vmatprep.subr.bf16.mxu0 0
    %522 = vmatpush1.bf16.msra.mxu0 0
    %523 = vmatprep.subr.bf16.mxu0 0
    %524 = vmatpush1.bf16.msra.mxu0 0
    %525 = vmatprep.subr.bf16.mxu0 0
    %526 = vmatpush1.bf16.msra.mxu0 0
    %527 = vmatprep.subr.bf16.mxu0 0
    %528 = vmatpush1.bf16.msra.mxu0 0
    %529 = vmatprep.subr.bf16.mxu0 0
    %530 = vmatpush1.bf16.msra.mxu0 0
    %531 = vmatprep.subr.bf16.mxu0 0
    %532 = vmatpush1.bf16.msra.mxu0 0
    %533 = vmatprep.subr.bf16.mxu0 0
    %534 = vmatpush1.bf16.msra.mxu0 0
    %535 = vmatprep.subr.bf16.mxu0 0
    %536 = vmatpush1.bf16.msra.mxu0 0
    %537 = vmatprep.subr.bf16.mxu0 0
    %538 = vmatpush1.bf16.msra.mxu0 0
    %539 = vmatprep.mubr.bf16.mxu0 0
    %540 = vmatmul.mubr.bf16.gmra.mrb[0].mxu0 %v502
    %v541 = vpop.f32.mrb[0].mxu0
    %v542 = vadd.f32 0.0, %v541
    %v543 = vpop.f32.mrb[0].mxu0
    %v544 = vpop.f32.mrb[0].mxu0
    %v545 = vpop.f32.mrb[0].mxu0
    %546 = vdwg.mxu0
    %v547 = vrcp.pop %v497
    %v548 = vmul.f32 %v542, %v547
    %550 = vrot.lane.b32.xlu0 %v548, 16
    %v551 = vpop.permute.xlu0 %550
    %vm553 = vcmask 195712
    %554 = vst.msk [vmem:[#allocation2] sm:$0xff] %vm553, %v551
    %555 = vrot.lane.b32.xlu0 %v210, 104
    %v556 = vpop.permute.xlu0 %555
    %557 = vrot.lane.b32.xlu0 %v210, 72
    %v558 = vpop.permute.xlu0 %557
    %v560 = vsel %vm214, %v556, 0
    %v563 = vsel %vm214, %v558, 0
    %565 = vmatprep.subr.bf16.mxu0 0
    %566 = vmatpush1.bf16.xpose.msra.mxu0 %v563
    %567 = vmatprep.subr.bf16.mxu0 0
    %568 = vmatpush1.bf16.xpose.msra.mxu0 0
    %569 = vmatprep.subr.bf16.mxu0 0
    %570 = vmatpush1.bf16.xpose.msra.mxu0 0
    %571 = vmatprep.subr.bf16.mxu0 0
    %572 = vmatpush1.bf16.xpose.msra.mxu0 0
    %573 = vmatprep.subr.bf16.mxu0 0
    %574 = vmatpush1.bf16.xpose.msra.mxu0 0
    %575 = vmatprep.subr.bf16.mxu0 0
    %576 = vmatpush1.bf16.xpose.msra.mxu0 0
    %577 = vmatprep.subr.bf16.mxu0 0
    %578 = vmatpush1.bf16.xpose.msra.mxu0 0
    %579 = vmatprep.subr.bf16.mxu0 0
    %580 = vmatpush1.bf16.xpose.msra.mxu0 0
    %581 = vmatprep.subr.bf16.mxu0 0
    %582 = vmatpush1.bf16.xpose.msra.mxu0 0
    %583 = vmatprep.subr.bf16.mxu0 0
    %584 = vmatpush1.bf16.xpose.msra.mxu0 0
    %585 = vmatprep.subr.bf16.mxu0 0
    %586 = vmatpush1.bf16.xpose.msra.mxu0 0
    %587 = vmatprep.subr.bf16.mxu0 0
    %588 = vmatpush1.bf16.xpose.msra.mxu0 0
    %589 = vmatprep.subr.bf16.mxu0 0
    %590 = vmatpush1.bf16.xpose.msra.mxu0 0
    %591 = vmatprep.subr.bf16.mxu0 0
    %592 = vmatpush1.bf16.xpose.msra.mxu0 0
    %593 = vmatprep.subr.bf16.mxu0 0
    %594 = vmatpush1.bf16.xpose.msra.mxu0 0
    %595 = vmatprep.subr.bf16.mxu0 0
    %596 = vmatpush1.bf16.xpose.msra.mxu0 0
    %597 = vmatprep.mubr.bf16.mxu0 0
    %598 = vmatmul.mubr.bf16.gmra.mrb[0].mxu0 %v560
    %v599 = vpop.f32.mrb[0].mxu0
    %v600 = vadd.f32 %v209, %v599
    %v601 = vpop.f32.mrb[0].mxu0
    %v602 = vpop.f32.mrb[0].mxu0
    %v603 = vpop.f32.mrb[0].mxu0
    %604 = vdwg.mxu0
    %v605 = vsel %vm214, %v600, -inf
    %606 = vmax.xlane.f32.xlu0 %v605
    %v607 = vpop.xlane.xlu0 %606
    %v608 = vsub.f32 %v600, %v607
    %v609 = vmul.f32 %v608, 1.442695
    %v610 = vpow.pop %v609
    %v611 = vsel %vm214, %v610, 0.0
    %612 = vadd.xlane.f32.xlu0 %v611
    %v613 = vpop.xlane.xlu0 %612
    %v614 = vpack.c.bf16 %v610, %v610
    %615 = vrot.lane.b32.xlu0 %v210, 40
    %v616 = vpop.permute.xlu0 %615
    %v618 = vsel %vm214, %v614, 0
    %v621 = vsel %vm276, %v616, 0
    %623 = vmatprep.subr.bf16.mxu0 0
    %624 = vmatpush1.bf16.msra.mxu0 %v621
    %625 = vmatprep.subr.bf16.mxu0 0
    %626 = vmatpush1.bf16.msra.mxu0 0
    %627 = vmatprep.subr.bf16.mxu0 0
    %628 = vmatpush1.bf16.msra.mxu0 0
    %629 = vmatprep.subr.bf16.mxu0 0
    %630 = vmatpush1.bf16.msra.mxu0 0
    %631 = vmatprep.subr.bf16.mxu0 0
    %632 = vmatpush1.bf16.msra.mxu0 0
    %633 = vmatprep.subr.bf16.mxu0 0
    %634 = vmatpush1.bf16.msra.mxu0 0
    %635 = vmatprep.subr.bf16.mxu0 0
    %636 = vmatpush1.bf16.msra.mxu0 0
    %637 = vmatprep.subr.bf16.mxu0 0
    %638 = vmatpush1.bf16.msra.mxu0 0
    %639 = vmatprep.subr.bf16.mxu0 0
    %640 = vmatpush1.bf16.msra.mxu0 0
    %641 = vmatprep.subr.bf16.mxu0 0
    %642 = vmatpush1.bf16.msra.mxu0 0
    %643 = vmatprep.subr.bf16.mxu0 0
    %644 = vmatpush1.bf16.msra.mxu0 0
    %645 = vmatprep.subr.bf16.mxu0 0
    %646 = vmatpush1.bf16.msra.mxu0 0
    %647 = vmatprep.subr.bf16.mxu0 0
    %648 = vmatpush1.bf16.msra.mxu0 0
    %649 = vmatprep.subr.bf16.mxu0 0
    %650 = vmatpush1.bf16.msra.mxu0 0
    %651 = vmatprep.subr.bf16.mxu0 0
    %652 = vmatpush1.bf16.msra.mxu0 0
    %653 = vmatprep.subr.bf16.mxu0 0
    %654 = vmatpush1.bf16.msra.mxu0 0
    %655 = vmatprep.mubr.bf16.mxu0 0
    %656 = vmatmul.mubr.bf16.gmra.mrb[0].mxu0 %v618
    %v657 = vpop.f32.mrb[0].mxu0
    %v658 = vadd.f32 0.0, %v657
    %v659 = vpop.f32.mrb[0].mxu0
    %v660 = vpop.f32.mrb[0].mxu0
    %v661 = vpop.f32.mrb[0].mxu0
    %662 = vdwg.mxu0
    %v663 = vrcp.pop %v613
    %v664 = vmul.f32 %v658, %v663
    %666 = vrot.lane.b32.xlu0 %v664, 24
    %v667 = vpop.permute.xlu0 %666
    %vm669 = vcmask 261312
    %670 = vst.msk [vmem:[#allocation2] sm:$0xff] %vm669, %v667
    %v671 = vlaneseq
    %v672 = vshrl.u32 %v671, 7
    %v673 = vsub.s32 1, %v672
    %v674 = vrot.slane %v40, %v673
    %v675 = vpack.c.bf16 %v195, %v195
    %677 = vrot.lane.b32.xlu0 %v675, 96
    %v678 = vpop.permute.xlu0 %677
    %v680 = vsel %vm214, %v675, 0
    %v683 = vsel %vm214, %v678, 0
    %685 = vmatprep.subr.bf16.mxu0 0
    %686 = vmatpush1.bf16.xpose.msra.mxu0 %v683
    %687 = vmatprep.subr.bf16.mxu0 0
    %688 = vmatpush1.bf16.xpose.msra.mxu0 0
    %689 = vmatprep.subr.bf16.mxu0 0
    %690 = vmatpush1.bf16.xpose.msra.mxu0 0
    %691 = vmatprep.subr.bf16.mxu0 0
    %692 = vmatpush1.bf16.xpose.msra.mxu0 0
    %693 = vmatprep.subr.bf16.mxu0 0
    %694 = vmatpush1.bf16.xpose.msra.mxu0 0
    %695 = vmatprep.subr.bf16.mxu0 0
    %696 = vmatpush1.bf16.xpose.msra.mxu0 0
    %697 = vmatprep.subr.bf16.mxu0 0
    %698 = vmatpush1.bf16.xpose.msra.mxu0 0
    %699 = vmatprep.subr.bf16.mxu0 0
    %700 = vmatpush1.bf16.xpose.msra.mxu0 0
    %701 = vmatprep.subr.bf16.mxu0 0
    %702 = vmatpush1.bf16.xpose.msra.mxu0 0
    %703 = vmatprep.subr.bf16.mxu0 0
    %704 = vmatpush1.bf16.xpose.msra.mxu0 0
    %705 = vmatprep.subr.bf16.mxu0 0
    %706 = vmatpush1.bf16.xpose.msra.mxu0 0
    %707 = vmatprep.subr.bf16.mxu0 0
    %708 = vmatpush1.bf16.xpose.msra.mxu0 0
    %709 = vmatprep.subr.bf16.mxu0 0
    %710 = vmatpush1.bf16.xpose.msra.mxu0 0
    %711 = vmatprep.subr.bf16.mxu0 0
    %712 = vmatpush1.bf16.xpose.msra.mxu0 0
    %713 = vmatprep.subr.bf16.mxu0 0
    %714 = vmatpush1.bf16.xpose.msra.mxu0 0
    %715 = vmatprep.subr.bf16.mxu0 0
    %716 = vmatpush1.bf16.xpose.msra.mxu0 0
    %717 = vmatprep.mubr.bf16.mxu0 0
    %718 = vmatmul.mubr.bf16.gmra.mrb[0].mxu0 %v680
    %v719 = vpop.f32.mrb[0].mxu0
    %v720 = vadd.f32 %v674, %v719
    %v721 = vpop.f32.mrb[0].mxu0
    %v722 = vpop.f32.mrb[0].mxu0
    %v723 = vpop.f32.mrb[0].mxu0
    %724 = vdwg.mxu0
    %v725 = vsel %vm214, %v720, -inf
    %726 = vmax.xlane.f32.xlu0 %v725
    %v727 = vpop.xlane.xlu0 %726
    %v728 = vsub.f32 %v720, %v727
    %v729 = vmul.f32 %v728, 1.442695
    %v730 = vpow.pop %v729
    %v731 = vsel %vm214, %v730, 0.0
    %732 = vadd.xlane.f32.xlu0 %v731
    %v733 = vpop.xlane.xlu0 %732
    %v734 = vpack.c.bf16 %v730, %v730
    %735 = vrot.lane.b32.xlu0 %v675, 64
    %v736 = vpop.permute.xlu0 %735
    %v738 = vsel %vm214, %v734, 0
    %v741 = vsel %vm276, %v736, 0
    %743 = vmatprep.subr.bf16.mxu0 0
    %744 = vmatpush1.bf16.msra.mxu0 %v741
    %745 = vmatprep.subr.bf16.mxu0 0
    %746 = vmatpush1.bf16.msra.mxu0 0
    %747 = vmatprep.subr.bf16.mxu0 0
    %748 = vmatpush1.bf16.msra.mxu0 0
    %749 = vmatprep.subr.bf16.mxu0 0
    %750 = vmatpush1.bf16.msra.mxu0 0
    %751 = vmatprep.subr.bf16.mxu0 0
    %752 = vmatpush1.bf16.msra.mxu0 0
    %753 = vmatprep.subr.bf16.mxu0 0
    %754 = vmatpush1.bf16.msra.mxu0 0
    %755 = vmatprep.subr.bf16.mxu0 0
    %756 = vmatpush1.bf16.msra.mxu0 0
    %757 = vmatprep.subr.bf16.mxu0 0
    %758 = vmatpush1.bf16.msra.mxu0 0
    %759 = vmatprep.subr.bf16.mxu0 0
    %760 = vmatpush1.bf16.msra.mxu0 0
    %761 = vmatprep.subr.bf16.mxu0 0
    %762 = vmatpush1.bf16.msra.mxu0 0
    %763 = vmatprep.subr.bf16.mxu0 0
    %764 = vmatpush1.bf16.msra.mxu0 0
    %765 = vmatprep.subr.bf16.mxu0 0
    %766 = vmatpush1.bf16.msra.mxu0 0
    %767 = vmatprep.subr.bf16.mxu0 0
    %768 = vmatpush1.bf16.msra.mxu0 0
    %769 = vmatprep.subr.bf16.mxu0 0
    %770 = vmatpush1.bf16.msra.mxu0 0
    %771 = vmatprep.subr.bf16.mxu0 0
    %772 = vmatpush1.bf16.msra.mxu0 0
    %773 = vmatprep.subr.bf16.mxu0 0
    %774 = vmatpush1.bf16.msra.mxu0 0
    %775 = vmatprep.mubr.bf16.mxu0 0
    %776 = vmatmul.mubr.bf16.gmra.mrb[0].mxu0 %v738
    %v777 = vpop.f32.mrb[0].mxu0
    %v778 = vadd.f32 0.0, %v777
    %v779 = vpop.f32.mrb[0].mxu0
    %v780 = vpop.f32.mrb[0].mxu0
    %v781 = vpop.f32.mrb[0].mxu0
    %782 = vdwg.mxu0
    %v783 = vrcp.pop %v733
    %v784 = vmul.f32 %v778, %v783
    %785 = vst.msk [vmem:[#allocation2 + $0x8] sm:$0xff] %vm214, %v784
    %786 = vrot.lane.b32.xlu0 %v675, 120
    %v787 = vpop.permute.xlu0 %786
    %788 = vrot.lane.b32.xlu0 %v675, 88
    %v789 = vpop.permute.xlu0 %788
    %v791 = vsel %vm214, %v787, 0
    %v794 = vsel %vm214, %v789, 0
    %796 = vmatprep.subr.bf16.mxu0 0
    %797 = vmatpush1.bf16.xpose.msra.mxu0 %v794
    %798 = vmatprep.subr.bf16.mxu0 0
    %799 = vmatpush1.bf16.xpose.msra.mxu0 0
    %800 = vmatprep.subr.bf16.mxu0 0
    %801 = vmatpush1.bf16.xpose.msra.mxu0 0
    %802 = vmatprep.subr.bf16.mxu0 0
    %803 = vmatpush1.bf16.xpose.msra.mxu0 0
    %804 = vmatprep.subr.bf16.mxu0 0
    %805 = vmatpush1.bf16.xpose.msra.mxu0 0
    %806 = vmatprep.subr.bf16.mxu0 0
    %807 = vmatpush1.bf16.xpose.msra.mxu0 0
    %808 = vmatprep.subr.bf16.mxu0 0
    %809 = vmatpush1.bf16.xpose.msra.mxu0 0
    %810 = vmatprep.subr.bf16.mxu0 0
    %811 = vmatpush1.bf16.xpose.msra.mxu0 0
    %812 = vmatprep.subr.bf16.mxu0 0
    %813 = vmatpush1.bf16.xpose.msra.mxu0 0
    %814 = vmatprep.subr.bf16.mxu0 0
    %815 = vmatpush1.bf16.xpose.msra.mxu0 0
    %816 = vmatprep.subr.bf16.mxu0 0
    %817 = vmatpush1.bf16.xpose.msra.mxu0 0
    %818 = vmatprep.subr.bf16.mxu0 0
    %819 = vmatpush1.bf16.xpose.msra.mxu0 0
    %820 = vmatprep.subr.bf16.mxu0 0
    %821 = vmatpush1.bf16.xpose.msra.mxu0 0
    %822 = vmatprep.subr.bf16.mxu0 0
    %823 = vmatpush1.bf16.xpose.msra.mxu0 0
    %824 = vmatprep.subr.bf16.mxu0 0
    %825 = vmatpush1.bf16.xpose.msra.mxu0 0
    %826 = vmatprep.subr.bf16.mxu0 0
    %827 = vmatpush1.bf16.xpose.msra.mxu0 0
    %828 = vmatprep.mubr.bf16.mxu0 0
    %829 = vmatmul.mubr.bf16.gmra.mrb[0].mxu0 %v791
    %v830 = vpop.f32.mrb[0].mxu0
    %v831 = vadd.f32 %v674, %v830
    %v832 = vpop.f32.mrb[0].mxu0
    %v833 = vpop.f32.mrb[0].mxu0
    %v834 = vpop.f32.mrb[0].mxu0
    %835 = vdwg.mxu0
    %v836 = vsel %vm214, %v831, -inf
    %837 = vmax.xlane.f32.xlu0 %v836
    %v838 = vpop.xlane.xlu0 %837
    %v839 = vsub.f32 %v831, %v838
    %v840 = vmul.f32 %v839, 1.442695
    %v841 = vpow.pop %v840
    %v842 = vsel %vm214, %v841, 0.0
    %843 = vadd.xlane.f32.xlu0 %v842
    %v844 = vpop.xlane.xlu0 %843
    %v845 = vpack.c.bf16 %v841, %v841
    %846 = vrot.lane.b32.xlu0 %v675, 56
    %v847 = vpop.permute.xlu0 %846
    %v849 = vsel %vm214, %v845, 0
    %v852 = vsel %vm276, %v847, 0
    %854 = vmatprep.subr.bf16.mxu0 0
    %855 = vmatpush1.bf16.msra.mxu0 %v852
    %856 = vmatprep.subr.bf16.mxu0 0
    %857 = vmatpush1.bf16.msra.mxu0 0
    %858 = vmatprep.subr.bf16.mxu0 0
    %859 = vmatpush1.bf16.msra.mxu0 0
    %860 = vmatprep.subr.bf16.mxu0 0
    %861 = vmatpush1.bf16.msra.mxu0 0
    %862 = vmatprep.subr.bf16.mxu0 0
    %863 = vmatpush1.bf16.msra.mxu0 0
    %864 = vmatprep.subr.bf16.mxu0 0
    %865 = vmatpush1.bf16.msra.mxu0 0
    %866 = vmatprep.subr.bf16.mxu0 0
    %867 = vmatpush1.bf16.msra.mxu0 0
    %868 = vmatprep.subr.bf16.mxu0 0
    %869 = vmatpush1.bf16.msra.mxu0 0
    %870 = vmatprep.subr.bf16.mxu0 0
    %871 = vmatpush1.bf16.msra.mxu0 0
    %872 = vmatprep.subr.bf16.mxu0 0
    %873 = vmatpush1.bf16.msra.mxu0 0
    %874 = vmatprep.subr.bf16.mxu0 0
    %875 = vmatpush1.bf16.msra.mxu0 0
    %876 = vmatprep.subr.bf16.mxu0 0
    %877 = vmatpush1.bf16.msra.mxu0 0
    %878 = vmatprep.subr.bf16.mxu0 0
    %879 = vmatpush1.bf16.msra.mxu0 0
    %880 = vmatprep.subr.bf16.mxu0 0
    %881 = vmatpush1.bf16.msra.mxu0 0
    %882 = vmatprep.subr.bf16.mxu0 0
    %883 = vmatpush1.bf16.msra.mxu0 0
    %884 = vmatprep.subr.bf16.mxu0 0
    %885 = vmatpush1.bf16.msra.mxu0 0
    %886 = vmatprep.mubr.bf16.mxu0 0
    %887 = vmatmul.mubr.bf16.gmra.mrb[0].mxu0 %v849
    %v888 = vpop.f32.mrb[0].mxu0
    %v889 = vadd.f32 0.0, %v888
    %v890 = vpop.f32.mrb[0].mxu0
    %v891 = vpop.f32.mrb[0].mxu0
    %v892 = vpop.f32.mrb[0].mxu0
    %893 = vdwg.mxu0
    %v894 = vrcp.pop %v844
    %v895 = vmul.f32 %v889, %v894
    %897 = vrot.lane.b32.xlu0 %v895, 8
    %v898 = vpop.permute.xlu0 %897
    %900 = vst.msk [vmem:[#allocation2 + $0x8] sm:$0xff] %vm437, %v898
    %901 = vrot.lane.b32.xlu0 %v675, 112
    %v902 = vpop.permute.xlu0 %901
    %903 = vrot.lane.b32.xlu0 %v675, 80
    %v904 = vpop.permute.xlu0 %903
    %v906 = vsel %vm214, %v902, 0
    %v909 = vsel %vm214, %v904, 0
    %911 = vmatprep.subr.bf16.mxu0 0
    %912 = vmatpush1.bf16.xpose.msra.mxu0 %v909
    %913 = vmatprep.subr.bf16.mxu0 0
    %914 = vmatpush1.bf16.xpose.msra.mxu0 0
    %915 = vmatprep.subr.bf16.mxu0 0
    %916 = vmatpush1.bf16.xpose.msra.mxu0 0
    %917 = vmatprep.subr.bf16.mxu0 0
    %918 = vmatpush1.bf16.xpose.msra.mxu0 0
    %919 = vmatprep.subr.bf16.mxu0 0
    %920 = vmatpush1.bf16.xpose.msra.mxu0 0
    %921 = vmatprep.subr.bf16.mxu0 0
    %922 = vmatpush1.bf16.xpose.msra.mxu0 0
    %923 = vmatprep.subr.bf16.mxu0 0
    %924 = vmatpush1.bf16.xpose.msra.mxu0 0
    %925 = vmatprep.subr.bf16.mxu0 0
    %926 = vmatpush1.bf16.xpose.msra.mxu0 0
    %927 = vmatprep.subr.bf16.mxu0 0
    %928 = vmatpush1.bf16.xpose.msra.mxu0 0
    %929 = vmatprep.subr.bf16.mxu0 0
    %930 = vmatpush1.bf16.xpose.msra.mxu0 0
    %931 = vmatprep.subr.bf16.mxu0 0
    %932 = vmatpush1.bf16.xpose.msra.mxu0 0
    %933 = vmatprep.subr.bf16.mxu0 0
    %934 = vmatpush1.bf16.xpose.msra.mxu0 0
    %935 = vmatprep.subr.bf16.mxu0 0
    %936 = vmatpush1.bf16.xpose.msra.mxu0 0
    %937 = vmatprep.subr.bf16.mxu0 0
    %938 = vmatpush1.bf16.xpose.msra.mxu0 0
    %939 = vmatprep.subr.bf16.mxu0 0
    %940 = vmatpush1.bf16.xpose.msra.mxu0 0
    %941 = vmatprep.subr.bf16.mxu0 0
    %942 = vmatpush1.bf16.xpose.msra.mxu0 0
    %943 = vmatprep.mubr.bf16.mxu0 0
    %944 = vmatmul.mubr.bf16.gmra.mrb[0].mxu0 %v906
    %v945 = vpop.f32.mrb[0].mxu0
    %v946 = vadd.f32 %v674, %v945
    %v947 = vpop.f32.mrb[0].mxu0
    %v948 = vpop.f32.mrb[0].mxu0
    %v949 = vpop.f32.mrb[0].mxu0
    %950 = vdwg.mxu0
    %v951 = vsel %vm214, %v946, -inf
    %952 = vmax.xlane.f32.xlu0 %v951
    %v953 = vpop.xlane.xlu0 %952
    %v954 = vsub.f32 %v946, %v953
    %v955 = vmul.f32 %v954, 1.442695
    %v956 = vpow.pop %v955
    %v957 = vsel %vm214, %v956, 0.0
    %958 = vadd.xlane.f32.xlu0 %v957
    %v959 = vpop.xlane.xlu0 %958
    %v960 = vpack.c.bf16 %v956, %v956
    %961 = vrot.lane.b32.xlu0 %v675, 48
    %v962 = vpop.permute.xlu0 %961
    %v964 = vsel %vm214, %v960, 0
    %v967 = vsel %vm276, %v962, 0
    %969 = vmatprep.subr.bf16.mxu0 0
    %970 = vmatpush1.bf16.msra.mxu0 %v967
    %971 = vmatprep.subr.bf16.mxu0 0
    %972 = vmatpush1.bf16.msra.mxu0 0
    %973 = vmatprep.subr.bf16.mxu0 0
    %974 = vmatpush1.bf16.msra.mxu0 0
    %975 = vmatprep.subr.bf16.mxu0 0
    %976 = vmatpush1.bf16.msra.mxu0 0
    %977 = vmatprep.subr.bf16.mxu0 0
    %978 = vmatpush1.bf16.msra.mxu0 0
    %979 = vmatprep.subr.bf16.mxu0 0
    %980 = vmatpush1.bf16.msra.mxu0 0
    %981 = vmatprep.subr.bf16.mxu0 0
    %982 = vmatpush1.bf16.msra.mxu0 0
    %983 = vmatprep.subr.bf16.mxu0 0
    %984 = vmatpush1.bf16.msra.mxu0 0
    %985 = vmatprep.subr.bf16.mxu0 0
    %986 = vmatpush1.bf16.msra.mxu0 0
    %987 = vmatprep.subr.bf16.mxu0 0
    %988 = vmatpush1.bf16.msra.mxu0 0
    %989 = vmatprep.subr.bf16.mxu0 0
    %990 = vmatpush1.bf16.msra.mxu0 0
    %991 = vmatprep.subr.bf16.mxu0 0
    %992 = vmatpush1.bf16.msra.mxu0 0
    %993 = vmatprep.subr.bf16.mxu0 0
    %994 = vmatpush1.bf16.msra.mxu0 0
    %995 = vmatprep.subr.bf16.mxu0 0
    %996 = vmatpush1.bf16.msra.mxu0 0
    %997 = vmatprep.subr.bf16.mxu0 0
    %998 = vmatpush1.bf16.msra.mxu0 0
    %999 = vmatprep.subr.bf16.mxu0 0
    %1000 = vmatpush1.bf16.msra.mxu0 0
    %1001 = vmatprep.mubr.bf16.mxu0 0
    %1002 = vmatmul.mubr.bf16.gmra.mrb[0].mxu0 %v964
    %v1003 = vpop.f32.mrb[0].mxu0
    %v1004 = vadd.f32 0.0, %v1003
    %v1005 = vpop.f32.mrb[0].mxu0
    %v1006 = vpop.f32.mrb[0].mxu0
    %v1007 = vpop.f32.mrb[0].mxu0
    %1008 = vdwg.mxu0
    %v1009 = vrcp.pop %v959
    %v1010 = vmul.f32 %v1004, %v1009
    %1012 = vrot.lane.b32.xlu0 %v1010, 16
    %v1013 = vpop.permute.xlu0 %1012
    %1015 = vst.msk [vmem:[#allocation2 + $0x8] sm:$0xff] %vm553, %v1013
    %1016 = vrot.lane.b32.xlu0 %v675, 104
    %v1017 = vpop.permute.xlu0 %1016
    %1018 = vrot.lane.b32.xlu0 %v675, 72
    %v1019 = vpop.permute.xlu0 %1018
    %v1021 = vsel %vm214, %v1017, 0
    %v1024 = vsel %vm214, %v1019, 0
    %1026 = vmatprep.subr.bf16.mxu0 0
    %1027 = vmatpush1.bf16.xpose.msra.mxu0 %v1024
    %1028 = vmatprep.subr.bf16.mxu0 0
    %1029 = vmatpush1.bf16.xpose.msra.mxu0 0
    %1030 = vmatprep.subr.bf16.mxu0 0
    %1031 = vmatpush1.bf16.xpose.msra.mxu0 0
    %1032 = vmatprep.subr.bf16.mxu0 0
    %1033 = vmatpush1.bf16.xpose.msra.mxu0 0
    %1034 = vmatprep.subr.bf16.mxu0 0
    %1035 = vmatpush1.bf16.xpose.msra.mxu0 0
    %1036 = vmatprep.subr.bf16.mxu0 0
    %1037 = vmatpush1.bf16.xpose.msra.mxu0 0
    %1038 = vmatprep.subr.bf16.mxu0 0
    %1039 = vmatpush1.bf16.xpose.msra.mxu0 0
    %1040 = vmatprep.subr.bf16.mxu0 0
    %1041 = vmatpush1.bf16.xpose.msra.mxu0 0
    %1042 = vmatprep.subr.bf16.mxu0 0
    %1043 = vmatpush1.bf16.xpose.msra.mxu0 0
    %1044 = vmatprep.subr.bf16.mxu0 0
    %1045 = vmatpush1.bf16.xpose.msra.mxu0 0
    %1046 = vmatprep.subr.bf16.mxu0 0
    %1047 = vmatpush1.bf16.xpose.msra.mxu0 0
    %1048 = vmatprep.subr.bf16.mxu0 0
    %1049 = vmatpush1.bf16.xpose.msra.mxu0 0
    %1050 = vmatprep.subr.bf16.mxu0 0
    %1051 = vmatpush1.bf16.xpose.msra.mxu0 0
    %1052 = vmatprep.subr.bf16.mxu0 0
    %1053 = vmatpush1.bf16.xpose.msra.mxu0 0
    %1054 = vmatprep.subr.bf16.mxu0 0
    %1055 = vmatpush1.bf16.xpose.msra.mxu0 0
    %1056 = vmatprep.subr.bf16.mxu0 0
    %1057 = vmatpush1.bf16.xpose.msra.mxu0 0
    %1058 = vmatprep.mubr.bf16.mxu0 0
    %1059 = vmatmul.mubr.bf16.gmra.mrb[0].mxu0 %v1021
    %v1060 = vpop.f32.mrb[0].mxu0
    %v1061 = vadd.f32 %v674, %v1060
    %v1062 = vpop.f32.mrb[0].mxu0
    %v1063 = vpop.f32.mrb[0].mxu0
    %v1064 = vpop.f32.mrb[0].mxu0
    %1065 = vdwg.mxu0
    %v1066 = vsel %vm214, %v1061, -inf
    %1067 = vmax.xlane.f32.xlu0 %v1066
    %v1068 = vpop.xlane.xlu0 %1067
    %v1069 = vsub.f32 %v1061, %v1068
    %v1070 = vmul.f32 %v1069, 1.442695
    %v1071 = vpow.pop %v1070
    %v1072 = vsel %vm214, %v1071, 0.0
    %1073 = vadd.xlane.f32.xlu0 %v1072
    %v1074 = vpop.xlane.xlu0 %1073
    %v1075 = vpack.c.bf16 %v1071, %v1071
    %1076 = vrot.lane.b32.xlu0 %v675, 40
    %v1077 = vpop.permute.xlu0 %1076
    %v1079 = vsel %vm214, %v1075, 0
    %v1082 = vsel %vm276, %v1077, 0
    %1084 = vmatprep.subr.bf16.mxu0 0
    %1085 = vmatpush1.bf16.msra.mxu0 %v1082
    %1086 = vmatprep.subr.bf16.mxu0 0
    %1087 = vmatpush1.bf16.msra.mxu0 0
    %1088 = vmatprep.subr.bf16.mxu0 0
    %1089 = vmatpush1.bf16.msra.mxu0 0
    %1090 = vmatprep.subr.bf16.mxu0 0
    %1091 = vmatpush1.bf16.msra.mxu0 0
    %1092 = vmatprep.subr.bf16.mxu0 0
    %1093 = vmatpush1.bf16.msra.mxu0 0
    %1094 = vmatprep.subr.bf16.mxu0 0
    %1095 = vmatpush1.bf16.msra.mxu0 0
    %1096 = vmatprep.subr.bf16.mxu0 0
    %1097 = vmatpush1.bf16.msra.mxu0 0
    %1098 = vmatprep.subr.bf16.mxu0 0
    %1099 = vmatpush1.bf16.msra.mxu0 0
    %1100 = vmatprep.subr.bf16.mxu0 0
    %1101 = vmatpush1.bf16.msra.mxu0 0
    %1102 = vmatprep.subr.bf16.mxu0 0
    %1103 = vmatpush1.bf16.msra.mxu0 0
    %1104 = vmatprep.subr.bf16.mxu0 0
    %1105 = vmatpush1.bf16.msra.mxu0 0
    %1106 = vmatprep.subr.bf16.mxu0 0
    %1107 = vmatpush1.bf16.msra.mxu0 0
    %1108 = vmatprep.subr.bf16.mxu0 0
    %1109 = vmatpush1.bf16.msra.mxu0 0
    %1110 = vmatprep.subr.bf16.mxu0 0
    %1111 = vmatpush1.bf16.msra.mxu0 0
    %1112 = vmatprep.subr.bf16.mxu0 0
    %1113 = vmatpush1.bf16.msra.mxu0 0
    %1114 = vmatprep.subr.bf16.mxu0 0
    %1115 = vmatpush1.bf16.msra.mxu0 0
    %1116 = vmatprep.mubr.bf16.mxu0 0
    %1117 = vmatmul.mubr.bf16.gmra.mrb[0].mxu0 %v1079
    %v1118 = vpop.f32.mrb[0].mxu0
    %v1119 = vadd.f32 0.0, %v1118
    %v1120 = vpop.f32.mrb[0].mxu0
    %v1121 = vpop.f32.mrb[0].mxu0
    %v1122 = vpop.f32.mrb[0].mxu0
    %1123 = vdwg.mxu0
    %v1124 = vrcp.pop %v1074
    %v1125 = vmul.f32 %v1119, %v1124
    %1127 = vrot.lane.b32.xlu0 %v1125, 24
    %v1128 = vpop.permute.xlu0 %1127
    %1130 = vst.msk [vmem:[#allocation2 + $0x8] sm:$0xff] %vm669, %v1128
    %v1131 = vlaneseq
    %v1132 = vshrl.u32 %v1131, 7
    %v1133 = vsub.s32 2, %v1132
    %v1134 = vrot.slane %v40, %v1133
    %v1135 = vpack.c.bf16 %v200, %v200
    %1137 = vrot.lane.b32.xlu0 %v1135, 96
    %v1138 = vpop.permute.xlu0 %1137
    %v1140 = vsel %vm214, %v1135, 0
    %v1143 = vsel %vm214, %v1138, 0
    %1145 = vmatprep.subr.bf16.mxu0 0
    %1146 = vmatpush1.bf16.xpose.msra.mxu0 %v1143
    %1147 = vmatprep.subr.bf16.mxu0 0
    %1148 = vmatpush1.bf16.xpose.msra.mxu0 0
    %1149 = vmatprep.subr.bf16.mxu0 0
    %1150 = vmatpush1.bf16.xpose.msra.mxu0 0
    %1151 = vmatprep.subr.bf16.mxu0 0
    %1152 = vmatpush1.bf16.xpose.msra.mxu0 0
    %1153 = vmatprep.subr.bf16.mxu0 0
    %1154 = vmatpush1.bf16.xpose.msra.mxu0 0
    %1155 = vmatprep.subr.bf16.mxu0 0
    %1156 = vmatpush1.bf16.xpose.msra.mxu0 0
    %1157 = vmatprep.subr.bf16.mxu0 0
    %1158 = vmatpush1.bf16.xpose.msra.mxu0 0
    %1159 = vmatprep.subr.bf16.mxu0 0
    %1160 = vmatpush1.bf16.xpose.msra.mxu0 0
    %1161 = vmatprep.subr.bf16.mxu0 0
    %1162 = vmatpush1.bf16.xpose.msra.mxu0 0
    %1163 = vmatprep.subr.bf16.mxu0 0
    %1164 = vmatpush1.bf16.xpose.msra.mxu0 0
    %1165 = vmatprep.subr.bf16.mxu0 0
    %1166 = vmatpush1.bf16.xpose.msra.mxu0 0
    %1167 = vmatprep.subr.bf16.mxu0 0
    %1168 = vmatpush1.bf16.xpose.msra.mxu0 0
    %1169 = vmatprep.subr.bf16.mxu0 0
    %1170 = vmatpush1.bf16.xpose.msra.mxu0 0
    %1171 = vmatprep.subr.bf16.mxu0 0
    %1172 = vmatpush1.bf16.xpose.msra.mxu0 0
    %1173 = vmatprep.subr.bf16.mxu0 0
    %1174 = vmatpush1.bf16.xpose.msra.mxu0 0
    %1175 = vmatprep.subr.bf16.mxu0 0
    %1176 = vmatpush1.bf16.xpose.msra.mxu0 0
    %1177 = vmatprep.mubr.bf16.mxu0 0
    %1178 = vmatmul.mubr.bf16.gmra.mrb[0].mxu0 %v1140
    %v1179 = vpop.f32.mrb[0].mxu0
    %v1180 = vadd.f32 %v1134, %v1179
    %v1181 = vpop.f32.mrb[0].mxu0
    %v1182 = vpop.f32.mrb[0].mxu0
    %v1183 = vpop.f32.mrb[0].mxu0
    %1184 = vdwg.mxu0
    %v1185 = vsel %vm214, %v1180, -inf
    %1186 = vmax.xlane.f32.xlu0 %v1185
    %v1187 = vpop.xlane.xlu0 %1186
    %v1188 = vsub.f32 %v1180, %v1187
    %v1189 = vmul.f32 %v1188, 1.442695
    %v1190 = vpow.pop %v1189
    %v1191 = vsel %vm214, %v1190, 0.0
    %1192 = vadd.xlane.f32.xlu0 %v1191
    %v1193 = vpop.xlane.xlu0 %1192
    %v1194 = vpack.c.bf16 %v1190, %v1190
    %1195 = vrot.lane.b32.xlu0 %v1135, 64
    %v1196 = vpop.permute.xlu0 %1195
    %v1198 = vsel %vm214, %v1194, 0
    %v1201 = vsel %vm276, %v1196, 0
    %1203 = vmatprep.subr.bf16.mxu0 0
    %1204 = vmatpush1.bf16.msra.mxu0 %v1201
    %1205 = vmatprep.subr.bf16.mxu0 0
    %1206 = vmatpush1.bf16.msra.mxu0 0
    %1207 = vmatprep.subr.bf16.mxu0 0
    %1208 = vmatpush1.bf16.msra.mxu0 0
    %1209 = vmatprep.subr.bf16.mxu0 0
    %1210 = vmatpush1.bf16.msra.mxu0 0
    %1211 = vmatprep.subr.bf16.mxu0 0
    %1212 = vmatpush1.bf16.msra.mxu0 0
    %1213 = vmatprep.subr.bf16.mxu0 0
    %1214 = vmatpush1.bf16.msra.mxu0 0
    %1215 = vmatprep.subr.bf16.mxu0 0
    %1216 = vmatpush1.bf16.msra.mxu0 0
    %1217 = vmatprep.subr.bf16.mxu0 0
    %1218 = vmatpush1.bf16.msra.mxu0 0
    %1219 = vmatprep.subr.bf16.mxu0 0
    %1220 = vmatpush1.bf16.msra.mxu0 0
    %1221 = vmatprep.subr.bf16.mxu0 0
    %1222 = vmatpush1.bf16.msra.mxu0 0
    %1223 = vmatprep.subr.bf16.mxu0 0
    %1224 = vmatpush1.bf16.msra.mxu0 0
    %1225 = vmatprep.subr.bf16.mxu0 0
    %1226 = vmatpush1.bf16.msra.mxu0 0
    %1227 = vmatprep.subr.bf16.mxu0 0
    %1228 = vmatpush1.bf16.msra.mxu0 0
    %1229 = vmatprep.subr.bf16.mxu0 0
    %1230 = vmatpush1.bf16.msra.mxu0 0
    %1231 = vmatprep.subr.bf16.mxu0 0
    %1232 = vmatpush1.bf16.msra.mxu0 0
    %1233 = vmatprep.subr.bf16.mxu0 0
    %1234 = vmatpush1.bf16.msra.mxu0 0
    %1235 = vmatprep.mubr.bf16.mxu0 0
    %1236 = vmatmul.mubr.bf16.gmra.mrb[0].mxu0 %v1198
    %v1237 = vpop.f32.mrb[0].mxu0
    %v1238 = vadd.f32 0.0, %v1237
    %v1239 = vpop.f32.mrb[0].mxu0
    %v1240 = vpop.f32.mrb[0].mxu0
    %v1241 = vpop.f32.mrb[0].mxu0
    %1242 = vdwg.mxu0
    %v1243 = vrcp.pop %v1193
    %v1244 = vmul.f32 %v1238, %v1243
    %1245 = vst.msk [vmem:[#allocation2 + $0x10] sm:$0xff] %vm214, %v1244
    %1246 = vrot.lane.b32.xlu0 %v1135, 120
    %v1247 = vpop.permute.xlu0 %1246
    %1248 = vrot.lane.b32.xlu0 %v1135, 88
    %v1249 = vpop.permute.xlu0 %1248
    %v1251 = vsel %vm214, %v1247, 0
    %v1254 = vsel %vm214, %v1249, 0
    %1256 = vmatprep.subr.bf16.mxu0 0
    %1257 = vmatpush1.bf16.xpose.msra.mxu0 %v1254
    %1258 = vmatprep.subr.bf16.mxu0 0
    %1259 = vmatpush1.bf16.xpose.msra.mxu0 0
    %1260 = vmatprep.subr.bf16.mxu0 0
    %1261 = vmatpush1.bf16.xpose.msra.mxu0 0
    %1262 = vmatprep.subr.bf16.mxu0 0
    %1263 = vmatpush1.bf16.xpose.msra.mxu0 0
    %1264 = vmatprep.subr.bf16.mxu0 0
    %1265 = vmatpush1.bf16.xpose.msra.mxu0 0
    %1266 = vmatprep.subr.bf16.mxu0 0
    %1267 = vmatpush1.bf16.xpose.msra.mxu0 0
    %1268 = vmatprep.subr.bf16.mxu0 0
    %1269 = vmatpush1.bf16.xpose.msra.mxu0 0
    %1270 = vmatprep.subr.bf16.mxu0 0
    %1271 = vmatpush1.bf16.xpose.msra.mxu0 0
    %1272 = vmatprep.subr.bf16.mxu0 0
    %1273 = vmatpush1.bf16.xpose.msra.mxu0 0
    %1274 = vmatprep.subr.bf16.mxu0 0
    %1275 = vmatpush1.bf16.xpose.msra.mxu0 0
    %1276 = vmatprep.subr.bf16.mxu0 0
    %1277 = vmatpush1.bf16.xpose.msra.mxu0 0
    %1278 = vmatprep.subr.bf16.mxu0 0
    %1279 = vmatpush1.bf16.xpose.msra.mxu0 0
    %1280 = vmatprep.subr.bf16.mxu0 0
    %1281 = vmatpush1.bf16.xpose.msra.mxu0 0
    %1282 = vmatprep.subr.bf16.mxu0 0
    %1283 = vmatpush1.bf16.xpose.msra.mxu0 0
    %1284 = vmatprep.subr.bf16.mxu0 0
    %1285 = vmatpush1.bf16.xpose.msra.mxu0 0
    %1286 = vmatprep.subr.bf16.mxu0 0
    %1287 = vmatpush1.bf16.xpose.msra.mxu0 0
    %1288 = vmatprep.mubr.bf16.mxu0 0
    %1289 = vmatmul.mubr.bf16.gmra.mrb[0].mxu0 %v1251
    %v1290 = vpop.f32.mrb[0].mxu0
    %v1291 = vadd.f32 %v1134, %v1290
    %v1292 = vpop.f32.mrb[0].mxu0
    %v1293 = vpop.f32.mrb[0].mxu0
    %v1294 = vpop.f32.mrb[0].mxu0
    %1295 = vdwg.mxu0
    %v1296 = vsel %vm214, %v1291, -inf
    %1297 = vmax.xlane.f32.xlu0 %v1296
    %v1298 = vpop.xlane.xlu0 %1297
    %v1299 = vsub.f32 %v1291, %v1298
    %v1300 = vmul.f32 %v1299, 1.442695
    %v1301 = vpow.pop %v1300
    %v1302 = vsel %vm214, %v1301, 0.0
    %1303 = vadd.xlane.f32.xlu0 %v1302
    %v1304 = vpop.xlane.xlu0 %1303
    %v1305 = vpack.c.bf16 %v1301, %v1301
    %1306 = vrot.lane.b32.xlu0 %v1135, 56
    %v1307 = vpop.permute.xlu0 %1306
    %v1309 = vsel %vm214, %v1305, 0
    %v1312 = vsel %vm276, %v1307, 0
    %1314 = vmatprep.subr.bf16.mxu0 0
    %1315 = vmatpush1.bf16.msra.mxu0 %v1312
    %1316 = vmatprep.subr.bf16.mxu0 0
    %1317 = vmatpush1.bf16.msra.mxu0 0
    %1318 = vmatprep.subr.bf16.mxu0 0
    %1319 = vmatpush1.bf16.msra.mxu0 0
    %1320 = vmatprep.subr.bf16.mxu0 0
    %1321 = vmatpush1.bf16.msra.mxu0 0
    %1322 = vmatprep.subr.bf16.mxu0 0
    %1323 = vmatpush1.bf16.msra.mxu0 0
    %1324 = vmatprep.subr.bf16.mxu0 0
    %1325 = vmatpush1.bf16.msra.mxu0 0
    %1326 = vmatprep.subr.bf16.mxu0 0
    %1327 = vmatpush1.bf16.msra.mxu0 0
    %1328 = vmatprep.subr.bf16.mxu0 0
    %1329 = vmatpush1.bf16.msra.mxu0 0
    %1330 = vmatprep.subr.bf16.mxu0 0
    %1331 = vmatpush1.bf16.msra.mxu0 0
    %1332 = vmatprep.subr.bf16.mxu0 0
    %1333 = vmatpush1.bf16.msra.mxu0 0
    %1334 = vmatprep.subr.bf16.mxu0 0
    %1335 = vmatpush1.bf16.msra.mxu0 0
    %1336 = vmatprep.subr.bf16.mxu0 0
    %1337 = vmatpush1.bf16.msra.mxu0 0
    %1338 = vmatprep.subr.bf16.mxu0 0
    %1339 = vmatpush1.bf16.msra.mxu0 0
    %1340 = vmatprep.subr.bf16.mxu0 0
    %1341 = vmatpush1.bf16.msra.mxu0 0
    %1342 = vmatprep.subr.bf16.mxu0 0
    %1343 = vmatpush1.bf16.msra.mxu0 0
    %1344 = vmatprep.subr.bf16.mxu0 0
    %1345 = vmatpush1.bf16.msra.mxu0 0
    %1346 = vmatprep.mubr.bf16.mxu0 0
    %1347 = vmatmul.mubr.bf16.gmra.mrb[0].mxu0 %v1309
    %v1348 = vpop.f32.mrb[0].mxu0
    %v1349 = vadd.f32 0.0, %v1348
    %v1350 = vpop.f32.mrb[0].mxu0
    %v1351 = vpop.f32.mrb[0].mxu0
    %v1352 = vpop.f32.mrb[0].mxu0
    %1353 = vdwg.mxu0
    %v1354 = vrcp.pop %v1304
    %v1355 = vmul.f32 %v1349, %v1354
    %1357 = vrot.lane.b32.xlu0 %v1355, 8
    %v1358 = vpop.permute.xlu0 %1357
    %1360 = vst.msk [vmem:[#allocation2 + $0x10] sm:$0xff] %vm437, %v1358
    %1361 = vrot.lane.b32.xlu0 %v1135, 112
    %v1362 = vpop.permute.xlu0 %1361
    %1363 = vrot.lane.b32.xlu0 %v1135, 80
    %v1364 = vpop.permute.xlu0 %1363
    %v1366 = vsel %vm214, %v1362, 0
    %v1369 = vsel %vm214, %v1364, 0
    %1371 = vmatprep.subr.bf16.mxu0 0
    %1372 = vmatpush1.bf16.xpose.msra.mxu0 %v1369
    %1373 = vmatprep.subr.bf16.mxu0 0
    %1374 = vmatpush1.bf16.xpose.msra.mxu0 0
    %1375 = vmatprep.subr.bf16.mxu0 0
    %1376 = vmatpush1.bf16.xpose.msra.mxu0 0
    %1377 = vmatprep.subr.bf16.mxu0 0
    %1378 = vmatpush1.bf16.xpose.msra.mxu0 0
    %1379 = vmatprep.subr.bf16.mxu0 0
    %1380 = vmatpush1.bf16.xpose.msra.mxu0 0
    %1381 = vmatprep.subr.bf16.mxu0 0
    %1382 = vmatpush1.bf16.xpose.msra.mxu0 0
    %1383 = vmatprep.subr.bf16.mxu0 0
    %1384 = vmatpush1.bf16.xpose.msra.mxu0 0
    %1385 = vmatprep.subr.bf16.mxu0 0
    %1386 = vmatpush1.bf16.xpose.msra.mxu0 0
    %1387 = vmatprep.subr.bf16.mxu0 0
    %1388 = vmatpush1.bf16.xpose.msra.mxu0 0
    %1389 = vmatprep.subr.bf16.mxu0 0
    %1390 = vmatpush1.bf16.xpose.msra.mxu0 0
    %1391 = vmatprep.subr.bf16.mxu0 0
    %1392 = vmatpush1.bf16.xpose.msra.mxu0 0
    %1393 = vmatprep.subr.bf16.mxu0 0
    %1394 = vmatpush1.bf16.xpose.msra.mxu0 0
    %1395 = vmatprep.subr.bf16.mxu0 0
    %1396 = vmatpush1.bf16.xpose.msra.mxu0 0
    %1397 = vmatprep.subr.bf16.mxu0 0
    %1398 = vmatpush1.bf16.xpose.msra.mxu0 0
    %1399 = vmatprep.subr.bf16.mxu0 0
    %1400 = vmatpush1.bf16.xpose.msra.mxu0 0
    %1401 = vmatprep.subr.bf16.mxu0 0
    %1402 = vmatpush1.bf16.xpose.msra.mxu0 0
    %1403 = vmatprep.mubr.bf16.mxu0 0
    %1404 = vmatmul.mubr.bf16.gmra.mrb[0].mxu0 %v1366
    %v1405 = vpop.f32.mrb[0].mxu0
    %v1406 = vadd.f32 %v1134, %v1405
    %v1407 = vpop.f32.mrb[0].mxu0
    %v1408 = vpop.f32.mrb[0].mxu0
    %v1409 = vpop.f32.mrb[0].mxu0
    %1410 = vdwg.mxu0
    %v1411 = vsel %vm214, %v1406, -inf
    %1412 = vmax.xlane.f32.xlu0 %v1411
    %v1413 = vpop.xlane.xlu0 %1412
    %v1414 = vsub.f32 %v1406, %v1413
    %v1415 = vmul.f32 %v1414, 1.442695
    %v1416 = vpow.pop %v1415
    %v1417 = vsel %vm214, %v1416, 0.0
    %1418 = vadd.xlane.f32.xlu0 %v1417
    %v1419 = vpop.xlane.xlu0 %1418
    %v1420 = vpack.c.bf16 %v1416, %v1416
    %1421 = vrot.lane.b32.xlu0 %v1135, 48
    %v1422 = vpop.permute.xlu0 %1421
    %v1424 = vsel %vm214, %v1420, 0
    %v1427 = vsel %vm276, %v1422, 0
    %1429 = vmatprep.subr.bf16.mxu0 0
    %1430 = vmatpush1.bf16.msra.mxu0 %v1427
    %1431 = vmatprep.subr.bf16.mxu0 0
    %1432 = vmatpush1.bf16.msra.mxu0 0
    %1433 = vmatprep.subr.bf16.mxu0 0
    %1434 = vmatpush1.bf16.msra.mxu0 0
    %1435 = vmatprep.subr.bf16.mxu0 0
    %1436 = vmatpush1.bf16.msra.mxu0 0
    %1437 = vmatprep.subr.bf16.mxu0 0
    %1438 = vmatpush1.bf16.msra.mxu0 0
    %1439 = vmatprep.subr.bf16.mxu0 0
    %1440 = vmatpush1.bf16.msra.mxu0 0
    %1441 = vmatprep.subr.bf16.mxu0 0
    %1442 = vmatpush1.bf16.msra.mxu0 0
    %1443 = vmatprep.subr.bf16.mxu0 0
    %1444 = vmatpush1.bf16.msra.mxu0 0
    %1445 = vmatprep.subr.bf16.mxu0 0
    %1446 = vmatpush1.bf16.msra.mxu0 0
    %1447 = vmatprep.subr.bf16.mxu0 0
    %1448 = vmatpush1.bf16.msra.mxu0 0
    %1449 = vmatprep.subr.bf16.mxu0 0
    %1450 = vmatpush1.bf16.msra.mxu0 0
    %1451 = vmatprep.subr.bf16.mxu0 0
    %1452 = vmatpush1.bf16.msra.mxu0 0
    %1453 = vmatprep.subr.bf16.mxu0 0
    %1454 = vmatpush1.bf16.msra.mxu0 0
    %1455 = vmatprep.subr.bf16.mxu0 0
    %1456 = vmatpush1.bf16.msra.mxu0 0
    %1457 = vmatprep.subr.bf16.mxu0 0
    %1458 = vmatpush1.bf16.msra.mxu0 0
    %1459 = vmatprep.subr.bf16.mxu0 0
    %1460 = vmatpush1.bf16.msra.mxu0 0
    %1461 = vmatprep.mubr.bf16.mxu0 0
    %1462 = vmatmul.mubr.bf16.gmra.mrb[0].mxu0 %v1424
    %v1463 = vpop.f32.mrb[0].mxu0
    %v1464 = vadd.f32 0.0, %v1463
    %v1465 = vpop.f32.mrb[0].mxu0
    %v1466 = vpop.f32.mrb[0].mxu0
    %v1467 = vpop.f32.mrb[0].mxu0
    %1468 = vdwg.mxu0
    %v1469 = vrcp.pop %v1419
    %v1470 = vmul.f32 %v1464, %v1469
    %1472 = vrot.lane.b32.xlu0 %v1470, 16
    %v1473 = vpop.permute.xlu0 %1472
    %1475 = vst.msk [vmem:[#allocation2 + $0x10] sm:$0xff] %vm553, %v1473
    %1476 = vrot.lane.b32.xlu0 %v1135, 104
    %v1477 = vpop.permute.xlu0 %1476
    %1478 = vrot.lane.b32.xlu0 %v1135, 72
    %v1479 = vpop.permute.xlu0 %1478
    %v1481 = vsel %vm214, %v1477, 0
    %v1484 = vsel %vm214, %v1479, 0
    %1486 = vmatprep.subr.bf16.mxu0 0
    %1487 = vmatpush1.bf16.xpose.msra.mxu0 %v1484
    %1488 = vmatprep.subr.bf16.mxu0 0
    %1489 = vmatpush1.bf16.xpose.msra.mxu0 0
    %1490 = vmatprep.subr.bf16.mxu0 0
    %1491 = vmatpush1.bf16.xpose.msra.mxu0 0
    %1492 = vmatprep.subr.bf16.mxu0 0
    %1493 = vmatpush1.bf16.xpose.msra.mxu0 0
    %1494 = vmatprep.subr.bf16.mxu0 0
    %1495 = vmatpush1.bf16.xpose.msra.mxu0 0
    %1496 = vmatprep.subr.bf16.mxu0 0
    %1497 = vmatpush1.bf16.xpose.msra.mxu0 0
    %1498 = vmatprep.subr.bf16.mxu0 0
    %1499 = vmatpush1.bf16.xpose.msra.mxu0 0
    %1500 = vmatprep.subr.bf16.mxu0 0
    %1501 = vmatpush1.bf16.xpose.msra.mxu0 0
    %1502 = vmatprep.subr.bf16.mxu0 0
    %1503 = vmatpush1.bf16.xpose.msra.mxu0 0
    %1504 = vmatprep.subr.bf16.mxu0 0
    %1505 = vmatpush1.bf16.xpose.msra.mxu0 0
    %1506 = vmatprep.subr.bf16.mxu0 0
    %1507 = vmatpush1.bf16.xpose.msra.mxu0 0
    %1508 = vmatprep.subr.bf16.mxu0 0
    %1509 = vmatpush1.bf16.xpose.msra.mxu0 0
    %1510 = vmatprep.subr.bf16.mxu0 0
    %1511 = vmatpush1.bf16.xpose.msra.mxu0 0
    %1512 = vmatprep.subr.bf16.mxu0 0
    %1513 = vmatpush1.bf16.xpose.msra.mxu0 0
    %1514 = vmatprep.subr.bf16.mxu0 0
    %1515 = vmatpush1.bf16.xpose.msra.mxu0 0
    %1516 = vmatprep.subr.bf16.mxu0 0
    %1517 = vmatpush1.bf16.xpose.msra.mxu0 0
    %1518 = vmatprep.mubr.bf16.mxu0 0
    %1519 = vmatmul.mubr.bf16.gmra.mrb[0].mxu0 %v1481
    %v1520 = vpop.f32.mrb[0].mxu0
    %v1521 = vadd.f32 %v1134, %v1520
    %v1522 = vpop.f32.mrb[0].mxu0
    %v1523 = vpop.f32.mrb[0].mxu0
    %v1524 = vpop.f32.mrb[0].mxu0
    %1525 = vdwg.mxu0
    %v1526 = vsel %vm214, %v1521, -inf
    %1527 = vmax.xlane.f32.xlu0 %v1526
    %v1528 = vpop.xlane.xlu0 %1527
    %v1529 = vsub.f32 %v1521, %v1528
    %v1530 = vmul.f32 %v1529, 1.442695
    %v1531 = vpow.pop %v1530
    %v1532 = vsel %vm214, %v1531, 0.0
    %1533 = vadd.xlane.f32.xlu0 %v1532
    %v1534 = vpop.xlane.xlu0 %1533
    %v1535 = vpack.c.bf16 %v1531, %v1531
    %1536 = vrot.lane.b32.xlu0 %v1135, 40
    %v1537 = vpop.permute.xlu0 %1536
    %v1539 = vsel %vm214, %v1535, 0
    %v1542 = vsel %vm276, %v1537, 0
    %1544 = vmatprep.subr.bf16.mxu0 0
    %1545 = vmatpush1.bf16.msra.mxu0 %v1542
    %1546 = vmatprep.subr.bf16.mxu0 0
    %1547 = vmatpush1.bf16.msra.mxu0 0
    %1548 = vmatprep.subr.bf16.mxu0 0
    %1549 = vmatpush1.bf16.msra.mxu0 0
    %1550 = vmatprep.subr.bf16.mxu0 0
    %1551 = vmatpush1.bf16.msra.mxu0 0
    %1552 = vmatprep.subr.bf16.mxu0 0
    %1553 = vmatpush1.bf16.msra.mxu0 0
    %1554 = vmatprep.subr.bf16.mxu0 0
    %1555 = vmatpush1.bf16.msra.mxu0 0
    %1556 = vmatprep.subr.bf16.mxu0 0
    %1557 = vmatpush1.bf16.msra.mxu0 0
    %1558 = vmatprep.subr.bf16.mxu0 0
    %1559 = vmatpush1.bf16.msra.mxu0 0
    %1560 = vmatprep.subr.bf16.mxu0 0
    %1561 = vmatpush1.bf16.msra.mxu0 0
    %1562 = vmatprep.subr.bf16.mxu0 0
    %1563 = vmatpush1.bf16.msra.mxu0 0
    %1564 = vmatprep.subr.bf16.mxu0 0
    %1565 = vmatpush1.bf16.msra.mxu0 0
    %1566 = vmatprep.subr.bf16.mxu0 0
    %1567 = vmatpush1.bf16.msra.mxu0 0
    %1568 = vmatprep.subr.bf16.mxu0 0
    %1569 = vmatpush1.bf16.msra.mxu0 0
    %1570 = vmatprep.subr.bf16.mxu0 0
    %1571 = vmatpush1.bf16.msra.mxu0 0
    %1572 = vmatprep.subr.bf16.mxu0 0
    %1573 = vmatpush1.bf16.msra.mxu0 0
    %1574 = vmatprep.subr.bf16.mxu0 0
    %1575 = vmatpush1.bf16.msra.mxu0 0
    %1576 = vmatprep.mubr.bf16.mxu0 0
    %1577 = vmatmul.mubr.bf16.gmra.mrb[0].mxu0 %v1539
    %v1578 = vpop.f32.mrb[0].mxu0
    %v1579 = vadd.f32 0.0, %v1578
    %v1580 = vpop.f32.mrb[0].mxu0
    %v1581 = vpop.f32.mrb[0].mxu0
    %v1582 = vpop.f32.mrb[0].mxu0
    %1583 = vdwg.mxu0
    %v1584 = vrcp.pop %v1534
    %v1585 = vmul.f32 %v1579, %v1584
    %1587 = vrot.lane.b32.xlu0 %v1585, 24
    %v1588 = vpop.permute.xlu0 %1587
    %1590 = vst.msk [vmem:[#allocation2 + $0x10] sm:$0xff] %vm669, %v1588
    %v1591 = vlaneseq
    %v1592 = vshrl.u32 %v1591, 7
    %v1593 = vsub.s32 3, %v1592
    %v1594 = vrot.slane %v40, %v1593
    %v1595 = vpack.c.bf16 %v203, %v203
    %1597 = vrot.lane.b32.xlu0 %v1595, 96
    %v1598 = vpop.permute.xlu0 %1597
    %v1600 = vsel %vm214, %v1595, 0
    %v1603 = vsel %vm214, %v1598, 0
    %1605 = vmatprep.subr.bf16.mxu0 0
    %1606 = vmatpush1.bf16.xpose.msra.mxu0 %v1603
    %1607 = vmatprep.subr.bf16.mxu0 0
    %1608 = vmatpush1.bf16.xpose.msra.mxu0 0
    %1609 = vmatprep.subr.bf16.mxu0 0
    %1610 = vmatpush1.bf16.xpose.msra.mxu0 0
    %1611 = vmatprep.subr.bf16.mxu0 0
    %1612 = vmatpush1.bf16.xpose.msra.mxu0 0
    %1613 = vmatprep.subr.bf16.mxu0 0
    %1614 = vmatpush1.bf16.xpose.msra.mxu0 0
    %1615 = vmatprep.subr.bf16.mxu0 0
    %1616 = vmatpush1.bf16.xpose.msra.mxu0 0
    %1617 = vmatprep.subr.bf16.mxu0 0
    %1618 = vmatpush1.bf16.xpose.msra.mxu0 0
    %1619 = vmatprep.subr.bf16.mxu0 0
    %1620 = vmatpush1.bf16.xpose.msra.mxu0 0
    %1621 = vmatprep.subr.bf16.mxu0 0
    %1622 = vmatpush1.bf16.xpose.msra.mxu0 0
    %1623 = vmatprep.subr.bf16.mxu0 0
    %1624 = vmatpush1.bf16.xpose.msra.mxu0 0
    %1625 = vmatprep.subr.bf16.mxu0 0
    %1626 = vmatpush1.bf16.xpose.msra.mxu0 0
    %1627 = vmatprep.subr.bf16.mxu0 0
    %1628 = vmatpush1.bf16.xpose.msra.mxu0 0
    %1629 = vmatprep.subr.bf16.mxu0 0
    %1630 = vmatpush1.bf16.xpose.msra.mxu0 0
    %1631 = vmatprep.subr.bf16.mxu0 0
    %1632 = vmatpush1.bf16.xpose.msra.mxu0 0
    %1633 = vmatprep.subr.bf16.mxu0 0
    %1634 = vmatpush1.bf16.xpose.msra.mxu0 0
    %1635 = vmatprep.subr.bf16.mxu0 0
    %1636 = vmatpush1.bf16.xpose.msra.mxu0 0
    %1637 = vmatprep.mubr.bf16.mxu0 0
    %1638 = vmatmul.mubr.bf16.gmra.mrb[0].mxu0 %v1600
    %v1639 = vpop.f32.mrb[0].mxu0
    %v1640 = vadd.f32 %v1594, %v1639
    %v1641 = vpop.f32.mrb[0].mxu0
    %v1642 = vpop.f32.mrb[0].mxu0
    %v1643 = vpop.f32.mrb[0].mxu0
    %1644 = vdwg.mxu0
    %v1645 = vsel %vm214, %v1640, -inf
    %1646 = vmax.xlane.f32.xlu0 %v1645
    %v1647 = vpop.xlane.xlu0 %1646
    %v1648 = vsub.f32 %v1640, %v1647
    %v1649 = vmul.f32 %v1648, 1.442695
    %v1650 = vpow.pop %v1649
    %v1651 = vsel %vm214, %v1650, 0.0
    %1652 = vadd.xlane.f32.xlu0 %v1651
    %v1653 = vpop.xlane.xlu0 %1652
    %v1654 = vpack.c.bf16 %v1650, %v1650
    %1655 = vrot.lane.b32.xlu0 %v1595, 64
    %v1656 = vpop.permute.xlu0 %1655
    %v1658 = vsel %vm214, %v1654, 0
    %v1661 = vsel %vm276, %v1656, 0
    %1663 = vmatprep.subr.bf16.mxu0 0
    %1664 = vmatpush1.bf16.msra.mxu0 %v1661
    %1665 = vmatprep.subr.bf16.mxu0 0
    %1666 = vmatpush1.bf16.msra.mxu0 0
    %1667 = vmatprep.subr.bf16.mxu0 0
    %1668 = vmatpush1.bf16.msra.mxu0 0
    %1669 = vmatprep.subr.bf16.mxu0 0
    %1670 = vmatpush1.bf16.msra.mxu0 0
    %1671 = vmatprep.subr.bf16.mxu0 0
    %1672 = vmatpush1.bf16.msra.mxu0 0
    %1673 = vmatprep.subr.bf16.mxu0 0
    %1674 = vmatpush1.bf16.msra.mxu0 0
    %1675 = vmatprep.subr.bf16.mxu0 0
    %1676 = vmatpush1.bf16.msra.mxu0 0
    %1677 = vmatprep.subr.bf16.mxu0 0
    %1678 = vmatpush1.bf16.msra.mxu0 0
    %1679 = vmatprep.subr.bf16.mxu0 0
    %1680 = vmatpush1.bf16.msra.mxu0 0
    %1681 = vmatprep.subr.bf16.mxu0 0
    %1682 = vmatpush1.bf16.msra.mxu0 0
    %1683 = vmatprep.subr.bf16.mxu0 0
    %1684 = vmatpush1.bf16.msra.mxu0 0
    %1685 = vmatprep.subr.bf16.mxu0 0
    %1686 = vmatpush1.bf16.msra.mxu0 0
    %1687 = vmatprep.subr.bf16.mxu0 0
    %1688 = vmatpush1.bf16.msra.mxu0 0
    %1689 = vmatprep.subr.bf16.mxu0 0
    %1690 = vmatpush1.bf16.msra.mxu0 0
    %1691 = vmatprep.subr.bf16.mxu0 0
    %1692 = vmatpush1.bf16.msra.mxu0 0
    %1693 = vmatprep.subr.bf16.mxu0 0
    %1694 = vmatpush1.bf16.msra.mxu0 0
    %1695 = vmatprep.mubr.bf16.mxu0 0
    %1696 = vmatmul.mubr.bf16.gmra.mrb[0].mxu0 %v1658
    %v1697 = vpop.f32.mrb[0].mxu0
    %v1698 = vadd.f32 0.0, %v1697
    %v1699 = vpop.f32.mrb[0].mxu0
    %v1700 = vpop.f32.mrb[0].mxu0
    %v1701 = vpop.f32.mrb[0].mxu0
    %1702 = vdwg.mxu0
    %v1703 = vrcp.pop %v1653
    %v1704 = vmul.f32 %v1698, %v1703
    %1705 = vst.msk [vmem:[#allocation2 + $0x18] sm:$0xff] %vm214, %v1704
    %1706 = vrot.lane.b32.xlu0 %v1595, 120
    %v1707 = vpop.permute.xlu0 %1706
    %1708 = vrot.lane.b32.xlu0 %v1595, 88
    %v1709 = vpop.permute.xlu0 %1708
    %v1711 = vsel %vm214, %v1707, 0
    %v1714 = vsel %vm214, %v1709, 0
    %1716 = vmatprep.subr.bf16.mxu0 0
    %1717 = vmatpush1.bf16.xpose.msra.mxu0 %v1714
    %1718 = vmatprep.subr.bf16.mxu0 0
    %1719 = vmatpush1.bf16.xpose.msra.mxu0 0
    %1720 = vmatprep.subr.bf16.mxu0 0
    %1721 = vmatpush1.bf16.xpose.msra.mxu0 0
    %1722 = vmatprep.subr.bf16.mxu0 0
    %1723 = vmatpush1.bf16.xpose.msra.mxu0 0
    %1724 = vmatprep.subr.bf16.mxu0 0
    %1725 = vmatpush1.bf16.xpose.msra.mxu0 0
    %1726 = vmatprep.subr.bf16.mxu0 0
    %1727 = vmatpush1.bf16.xpose.msra.mxu0 0
    %1728 = vmatprep.subr.bf16.mxu0 0
    %1729 = vmatpush1.bf16.xpose.msra.mxu0 0
    %1730 = vmatprep.subr.bf16.mxu0 0
    %1731 = vmatpush1.bf16.xpose.msra.mxu0 0
    %1732 = vmatprep.subr.bf16.mxu0 0
    %1733 = vmatpush1.bf16.xpose.msra.mxu0 0
    %1734 = vmatprep.subr.bf16.mxu0 0
    %1735 = vmatpush1.bf16.xpose.msra.mxu0 0
    %1736 = vmatprep.subr.bf16.mxu0 0
    %1737 = vmatpush1.bf16.xpose.msra.mxu0 0
    %1738 = vmatprep.subr.bf16.mxu0 0
    %1739 = vmatpush1.bf16.xpose.msra.mxu0 0
    %1740 = vmatprep.subr.bf16.mxu0 0
    %1741 = vmatpush1.bf16.xpose.msra.mxu0 0
    %1742 = vmatprep.subr.bf16.mxu0 0
    %1743 = vmatpush1.bf16.xpose.msra.mxu0 0
    %1744 = vmatprep.subr.bf16.mxu0 0
    %1745 = vmatpush1.bf16.xpose.msra.mxu0 0
    %1746 = vmatprep.subr.bf16.mxu0 0
    %1747 = vmatpush1.bf16.xpose.msra.mxu0 0
    %1748 = vmatprep.mubr.bf16.mxu0 0
    %1749 = vmatmul.mubr.bf16.gmra.mrb[0].mxu0 %v1711
    %v1750 = vpop.f32.mrb[0].mxu0
    %v1751 = vadd.f32 %v1594, %v1750
    %v1752 = vpop.f32.mrb[0].mxu0
    %v1753 = vpop.f32.mrb[0].mxu0
    %v1754 = vpop.f32.mrb[0].mxu0
    %1755 = vdwg.mxu0
    %v1756 = vsel %vm214, %v1751, -inf
    %1757 = vmax.xlane.f32.xlu0 %v1756
    %v1758 = vpop.xlane.xlu0 %1757
    %v1759 = vsub.f32 %v1751, %v1758
    %v1760 = vmul.f32 %v1759, 1.442695
    %v1761 = vpow.pop %v1760
    %v1762 = vsel %vm214, %v1761, 0.0
    %1763 = vadd.xlane.f32.xlu0 %v1762
    %v1764 = vpop.xlane.xlu0 %1763
    %v1765 = vpack.c.bf16 %v1761, %v1761
    %1766 = vrot.lane.b32.xlu0 %v1595, 56
    %v1767 = vpop.permute.xlu0 %1766
    %v1769 = vsel %vm214, %v1765, 0
    %v1772 = vsel %vm276, %v1767, 0
    %1774 = vmatprep.subr.bf16.mxu0 0
    %1775 = vmatpush1.bf16.msra.mxu0 %v1772
    %1776 = vmatprep.subr.bf16.mxu0 0
    %1777 = vmatpush1.bf16.msra.mxu0 0
    %1778 = vmatprep.subr.bf16.mxu0 0
    %1779 = vmatpush1.bf16.msra.mxu0 0
    %1780 = vmatprep.subr.bf16.mxu0 0
    %1781 = vmatpush1.bf16.msra.mxu0 0
    %1782 = vmatprep.subr.bf16.mxu0 0
    %1783 = vmatpush1.bf16.msra.mxu0 0
    %1784 = vmatprep.subr.bf16.mxu0 0
    %1785 = vmatpush1.bf16.msra.mxu0 0
    %1786 = vmatprep.subr.bf16.mxu0 0
    %1787 = vmatpush1.bf16.msra.mxu0 0
    %1788 = vmatprep.subr.bf16.mxu0 0
    %1789 = vmatpush1.bf16.msra.mxu0 0
    %1790 = vmatprep.subr.bf16.mxu0 0
    %1791 = vmatpush1.bf16.msra.mxu0 0
    %1792 = vmatprep.subr.bf16.mxu0 0
    %1793 = vmatpush1.bf16.msra.mxu0 0
    %1794 = vmatprep.subr.bf16.mxu0 0
    %1795 = vmatpush1.bf16.msra.mxu0 0
    %1796 = vmatprep.subr.bf16.mxu0 0
    %1797 = vmatpush1.bf16.msra.mxu0 0
    %1798 = vmatprep.subr.bf16.mxu0 0
    %1799 = vmatpush1.bf16.msra.mxu0 0
    %1800 = vmatprep.subr.bf16.mxu0 0
    %1801 = vmatpush1.bf16.msra.mxu0 0
    %1802 = vmatprep.subr.bf16.mxu0 0
    %1803 = vmatpush1.bf16.msra.mxu0 0
    %1804 = vmatprep.subr.bf16.mxu0 0
    %1805 = vmatpush1.bf16.msra.mxu0 0
    %1806 = vmatprep.mubr.bf16.mxu0 0
    %1807 = vmatmul.mubr.bf16.gmra.mrb[0].mxu0 %v1769
    %v1808 = vpop.f32.mrb[0].mxu0
    %v1809 = vadd.f32 0.0, %v1808
    %v1810 = vpop.f32.mrb[0].mxu0
    %v1811 = vpop.f32.mrb[0].mxu0
    %v1812 = vpop.f32.mrb[0].mxu0
    %1813 = vdwg.mxu0
    %v1814 = vrcp.pop %v1764
    %v1815 = vmul.f32 %v1809, %v1814
    %1817 = vrot.lane.b32.xlu0 %v1815, 8
    %v1818 = vpop.permute.xlu0 %1817
    %1820 = vst.msk [vmem:[#allocation2 + $0x18] sm:$0xff] %vm437, %v1818
    %1821 = vrot.lane.b32.xlu0 %v1595, 112
    %v1822 = vpop.permute.xlu0 %1821
    %1823 = vrot.lane.b32.xlu0 %v1595, 80
    %v1824 = vpop.permute.xlu0 %1823
    %v1826 = vsel %vm214, %v1822, 0
    %v1829 = vsel %vm214, %v1824, 0
    %1831 = vmatprep.subr.bf16.mxu0 0
    %1832 = vmatpush1.bf16.xpose.msra.mxu0 %v1829
    %1833 = vmatprep.subr.bf16.mxu0 0
    %1834 = vmatpush1.bf16.xpose.msra.mxu0 0
    %1835 = vmatprep.subr.bf16.mxu0 0
    %1836 = vmatpush1.bf16.xpose.msra.mxu0 0
    %1837 = vmatprep.subr.bf16.mxu0 0
    %1838 = vmatpush1.bf16.xpose.msra.mxu0 0
    %1839 = vmatprep.subr.bf16.mxu0 0
    %1840 = vmatpush1.bf16.xpose.msra.mxu0 0
    %1841 = vmatprep.subr.bf16.mxu0 0
    %1842 = vmatpush1.bf16.xpose.msra.mxu0 0
    %1843 = vmatprep.subr.bf16.mxu0 0
    %1844 = vmatpush1.bf16.xpose.msra.mxu0 0
    %1845 = vmatprep.subr.bf16.mxu0 0
    %1846 = vmatpush1.bf16.xpose.msra.mxu0 0
    %1847 = vmatprep.subr.bf16.mxu0 0
    %1848 = vmatpush1.bf16.xpose.msra.mxu0 0
    %1849 = vmatprep.subr.bf16.mxu0 0
    %1850 = vmatpush1.bf16.xpose.msra.mxu0 0
    %1851 = vmatprep.subr.bf16.mxu0 0
    %1852 = vmatpush1.bf16.xpose.msra.mxu0 0
    %1853 = vmatprep.subr.bf16.mxu0 0
    %1854 = vmatpush1.bf16.xpose.msra.mxu0 0
    %1855 = vmatprep.subr.bf16.mxu0 0
    %1856 = vmatpush1.bf16.xpose.msra.mxu0 0
    %1857 = vmatprep.subr.bf16.mxu0 0
    %1858 = vmatpush1.bf16.xpose.msra.mxu0 0
    %1859 = vmatprep.subr.bf16.mxu0 0
    %1860 = vmatpush1.bf16.xpose.msra.mxu0 0
    %1861 = vmatprep.subr.bf16.mxu0 0
    %1862 = vmatpush1.bf16.xpose.msra.mxu0 0
    %1863 = vmatprep.mubr.bf16.mxu0 0
    %1864 = vmatmul.mubr.bf16.gmra.mrb[0].mxu0 %v1826
    %v1865 = vpop.f32.mrb[0].mxu0
    %v1866 = vadd.f32 %v1594, %v1865
    %v1867 = vpop.f32.mrb[0].mxu0
    %v1868 = vpop.f32.mrb[0].mxu0
    %v1869 = vpop.f32.mrb[0].mxu0
    %1870 = vdwg.mxu0
    %v1871 = vsel %vm214, %v1866, -inf
    %1872 = vmax.xlane.f32.xlu0 %v1871
    %v1873 = vpop.xlane.xlu0 %1872
    %v1874 = vsub.f32 %v1866, %v1873
    %v1875 = vmul.f32 %v1874, 1.442695
    %v1876 = vpow.pop %v1875
    %v1877 = vsel %vm214, %v1876, 0.0
    %1878 = vadd.xlane.f32.xlu0 %v1877
    %v1879 = vpop.xlane.xlu0 %1878
    %v1880 = vpack.c.bf16 %v1876, %v1876
    %1881 = vrot.lane.b32.xlu0 %v1595, 48
    %v1882 = vpop.permute.xlu0 %1881
    %v1884 = vsel %vm214, %v1880, 0
    %v1887 = vsel %vm276, %v1882, 0
    %1889 = vmatprep.subr.bf16.mxu0 0
    %1890 = vmatpush1.bf16.msra.mxu0 %v1887
    %1891 = vmatprep.subr.bf16.mxu0 0
    %1892 = vmatpush1.bf16.msra.mxu0 0
    %1893 = vmatprep.subr.bf16.mxu0 0
    %1894 = vmatpush1.bf16.msra.mxu0 0
    %1895 = vmatprep.subr.bf16.mxu0 0
    %1896 = vmatpush1.bf16.msra.mxu0 0
    %1897 = vmatprep.subr.bf16.mxu0 0
    %1898 = vmatpush1.bf16.msra.mxu0 0
    %1899 = vmatprep.subr.bf16.mxu0 0
    %1900 = vmatpush1.bf16.msra.mxu0 0
    %1901 = vmatprep.subr.bf16.mxu0 0
    %1902 = vmatpush1.bf16.msra.mxu0 0
    %1903 = vmatprep.subr.bf16.mxu0 0
    %1904 = vmatpush1.bf16.msra.mxu0 0
    %1905 = vmatprep.subr.bf16.mxu0 0
    %1906 = vmatpush1.bf16.msra.mxu0 0
    %1907 = vmatprep.subr.bf16.mxu0 0
    %1908 = vmatpush1.bf16.msra.mxu0 0
    %1909 = vmatprep.subr.bf16.mxu0 0
    %1910 = vmatpush1.bf16.msra.mxu0 0
    %1911 = vmatprep.subr.bf16.mxu0 0
    %1912 = vmatpush1.bf16.msra.mxu0 0
    %1913 = vmatprep.subr.bf16.mxu0 0
    %1914 = vmatpush1.bf16.msra.mxu0 0
    %1915 = vmatprep.subr.bf16.mxu0 0
    %1916 = vmatpush1.bf16.msra.mxu0 0
    %1917 = vmatprep.subr.bf16.mxu0 0
    %1918 = vmatpush1.bf16.msra.mxu0 0
    %1919 = vmatprep.subr.bf16.mxu0 0
    %1920 = vmatpush1.bf16.msra.mxu0 0
    %1921 = vmatprep.mubr.bf16.mxu0 0
    %1922 = vmatmul.mubr.bf16.gmra.mrb[0].mxu0 %v1884
    %v1923 = vpop.f32.mrb[0].mxu0
    %v1924 = vadd.f32 0.0, %v1923
    %v1925 = vpop.f32.mrb[0].mxu0
    %v1926 = vpop.f32.mrb[0].mxu0
    %v1927 = vpop.f32.mrb[0].mxu0
    %1928 = vdwg.mxu0
    %v1929 = vrcp.pop %v1879
    %v1930 = vmul.f32 %v1924, %v1929
    %1932 = vrot.lane.b32.xlu0 %v1930, 16
    %v1933 = vpop.permute.xlu0 %1932
    %1935 = vst.msk [vmem:[#allocation2 + $0x18] sm:$0xff] %vm553, %v1933
    %1936 = vrot.lane.b32.xlu0 %v1595, 104
    %v1937 = vpop.permute.xlu0 %1936
    %1938 = vrot.lane.b32.xlu0 %v1595, 72
    %v1939 = vpop.permute.xlu0 %1938
    %v1941 = vsel %vm214, %v1937, 0
    %v1944 = vsel %vm214, %v1939, 0
    %1946 = vmatprep.subr.bf16.mxu0 0
    %1947 = vmatpush1.bf16.xpose.msra.mxu0 %v1944
    %1948 = vmatprep.subr.bf16.mxu0 0
    %1949 = vmatpush1.bf16.xpose.msra.mxu0 0
    %1950 = vmatprep.subr.bf16.mxu0 0
    %1951 = vmatpush1.bf16.xpose.msra.mxu0 0
    %1952 = vmatprep.subr.bf16.mxu0 0
    %1953 = vmatpush1.bf16.xpose.msra.mxu0 0
    %1954 = vmatprep.subr.bf16.mxu0 0
    %1955 = vmatpush1.bf16.xpose.msra.mxu0 0
    %1956 = vmatprep.subr.bf16.mxu0 0
    %1957 = vmatpush1.bf16.xpose.msra.mxu0 0
    %1958 = vmatprep.subr.bf16.mxu0 0
    %1959 = vmatpush1.bf16.xpose.msra.mxu0 0
    %1960 = vmatprep.subr.bf16.mxu0 0
    %1961 = vmatpush1.bf16.xpose.msra.mxu0 0
    %1962 = vmatprep.subr.bf16.mxu0 0
    %1963 = vmatpush1.bf16.xpose.msra.mxu0 0
    %1964 = vmatprep.subr.bf16.mxu0 0
    %1965 = vmatpush1.bf16.xpose.msra.mxu0 0
    %1966 = vmatprep.subr.bf16.mxu0 0
    %1967 = vmatpush1.bf16.xpose.msra.mxu0 0
    %1968 = vmatprep.subr.bf16.mxu0 0
    %1969 = vmatpush1.bf16.xpose.msra.mxu0 0
    %1970 = vmatprep.subr.bf16.mxu0 0
    %1971 = vmatpush1.bf16.xpose.msra.mxu0 0
    %1972 = vmatprep.subr.bf16.mxu0 0
    %1973 = vmatpush1.bf16.xpose.msra.mxu0 0
    %1974 = vmatprep.subr.bf16.mxu0 0
    %1975 = vmatpush1.bf16.xpose.msra.mxu0 0
    %1976 = vmatprep.subr.bf16.mxu0 0
    %1977 = vmatpush1.bf16.xpose.msra.mxu0 0
    %1978 = vmatprep.mubr.bf16.mxu0 0
    %1979 = vmatmul.mubr.bf16.gmra.mrb[0].mxu0 %v1941
    %v1980 = vpop.f32.mrb[0].mxu0
    %v1981 = vadd.f32 %v1594, %v1980
    %v1982 = vpop.f32.mrb[0].mxu0
    %v1983 = vpop.f32.mrb[0].mxu0
    %v1984 = vpop.f32.mrb[0].mxu0
    %1985 = vdwg.mxu0
    %v1986 = vsel %vm214, %v1981, -inf
    %1987 = vmax.xlane.f32.xlu0 %v1986
    %v1988 = vpop.xlane.xlu0 %1987
    %v1989 = vsub.f32 %v1981, %v1988
    %v1990 = vmul.f32 %v1989, 1.442695
    %v1991 = vpow.pop %v1990
    %v1992 = vsel %vm214, %v1991, 0.0
    %1993 = vadd.xlane.f32.xlu0 %v1992
    %v1994 = vpop.xlane.xlu0 %1993
    %v1995 = vpack.c.bf16 %v1991, %v1991
    %1996 = vrot.lane.b32.xlu0 %v1595, 40
    %v1997 = vpop.permute.xlu0 %1996
    %v1999 = vsel %vm214, %v1995, 0
    %v2002 = vsel %vm276, %v1997, 0
    %2004 = vmatprep.subr.bf16.mxu0 0
    %2005 = vmatpush1.bf16.msra.mxu0 %v2002
    %2006 = vmatprep.subr.bf16.mxu0 0
    %2007 = vmatpush1.bf16.msra.mxu0 0
    %2008 = vmatprep.subr.bf16.mxu0 0
    %2009 = vmatpush1.bf16.msra.mxu0 0
    %2010 = vmatprep.subr.bf16.mxu0 0
    %2011 = vmatpush1.bf16.msra.mxu0 0
    %2012 = vmatprep.subr.bf16.mxu0 0
    %2013 = vmatpush1.bf16.msra.mxu0 0
    %2014 = vmatprep.subr.bf16.mxu0 0
    %2015 = vmatpush1.bf16.msra.mxu0 0
    %2016 = vmatprep.subr.bf16.mxu0 0
    %2017 = vmatpush1.bf16.msra.mxu0 0
    %2018 = vmatprep.subr.bf16.mxu0 0
    %2019 = vmatpush1.bf16.msra.mxu0 0
    %2020 = vmatprep.subr.bf16.mxu0 0
    %2021 = vmatpush1.bf16.msra.mxu0 0
    %2022 = vmatprep.subr.bf16.mxu0 0
    %2023 = vmatpush1.bf16.msra.mxu0 0
    %2024 = vmatprep.subr.bf16.mxu0 0
    %2025 = vmatpush1.bf16.msra.mxu0 0
    %2026 = vmatprep.subr.bf16.mxu0 0
    %2027 = vmatpush1.bf16.msra.mxu0 0
    %2028 = vmatprep.subr.bf16.mxu0 0
    %2029 = vmatpush1.bf16.msra.mxu0 0
    %2030 = vmatprep.subr.bf16.mxu0 0
    %2031 = vmatpush1.bf16.msra.mxu0 0
    %2032 = vmatprep.subr.bf16.mxu0 0
    %2033 = vmatpush1.bf16.msra.mxu0 0
    %2034 = vmatprep.subr.bf16.mxu0 0
    %2035 = vmatpush1.bf16.msra.mxu0 0
    %2036 = vmatprep.mubr.bf16.mxu0 0
    %2037 = vmatmul.mubr.bf16.gmra.mrb[0].mxu0 %v1999
    %v2038 = vpop.f32.mrb[0].mxu0
    %v2039 = vadd.f32 0.0, %v2038
    %v2040 = vpop.f32.mrb[0].mxu0
    %v2041 = vpop.f32.mrb[0].mxu0
    %v2042 = vpop.f32.mrb[0].mxu0
    %2043 = vdwg.mxu0
    %v2044 = vrcp.pop %v1994
    %v2045 = vmul.f32 %v2039, %v2044
    %2047 = vrot.lane.b32.xlu0 %v2045, 24
    %v2048 = vpop.permute.xlu0 %2047
    %2050 = vst.msk [vmem:[#allocation2 + $0x18] sm:$0xff] %vm669, %v2048
    %v2051 = vld [vmem:[#allocation2] sm:$0xff]
    %v2052 = vld [vmem:[#allocation2 + $0x8] sm:$0xff]
    %v2053 = vld [vmem:[#allocation2 + $0x10] sm:$0xff]
    %v2054 = vld [vmem:[#allocation2 + $0x18] sm:$0xff]
    %v2055 = vpack.c.bf16 %v2052, %v2051
    %v2056 = vpack.c.bf16 %v2054, %v2053
    %v2057 = vlaneseq
    %v2058 = vshrl.u32 %v2057, 7
    %v2059 = vsub.s32 1, %v2058
    %v2060 = vrot.slane %v132, %v2059
    %v2065 = vunpack.c.l.b16 %v116
    %v2066 = vunpack.c.l.b16 %v117
    %v2067 = vunpack.c.l.b16 %v118
    %v2068 = vunpack.c.l.b16 %v119
    %v2069 = vpack.c.b16 %v2066, %v2065
    %v2070 = vpack.c.b16 %v2068, %v2067
    %v2074 = vsel %vm42, %v2055, 0
    %v2077 = vsel %vm42, %v2056, 0
    %2079 = vmatprep.subr.bf16.mxu0 0
    %2080 = vmatpush1.bf16.msra.mxu0 %v2069
    %2081 = vmatprep.subr.bf16.mxu0 0
    %2082 = vmatpush1.bf16.msra.mxu0 %v2070
    %2083 = vmatprep.subr.bf16.mxu0 0
    %2084 = vmatpush1.bf16.msra.mxu0 0
    %2085 = vmatprep.subr.bf16.mxu0 0
    %2086 = vmatpush1.bf16.msra.mxu0 0
    %2087 = vmatprep.subr.bf16.mxu0 0
    %2088 = vmatpush1.bf16.msra.mxu0 0
    %2089 = vmatprep.subr.bf16.mxu0 0
    %2090 = vmatpush1.bf16.msra.mxu0 0
    %2091 = vmatprep.subr.bf16.mxu0 0
    %2092 = vmatpush1.bf16.msra.mxu0 0
    %2093 = vmatprep.subr.bf16.mxu0 0
    %2094 = vmatpush1.bf16.msra.mxu0 0
    %2095 = vmatprep.subr.bf16.mxu0 0
    %2096 = vmatpush1.bf16.msra.mxu0 0
    %2097 = vmatprep.subr.bf16.mxu0 0
    %2098 = vmatpush1.bf16.msra.mxu0 0
    %2099 = vmatprep.subr.bf16.mxu0 0
    %2100 = vmatpush1.bf16.msra.mxu0 0
    %2101 = vmatprep.subr.bf16.mxu0 0
    %2102 = vmatpush1.bf16.msra.mxu0 0
    %2103 = vmatprep.subr.bf16.mxu0 0
    %2104 = vmatpush1.bf16.msra.mxu0 0
    %2105 = vmatprep.subr.bf16.mxu0 0
    %2106 = vmatpush1.bf16.msra.mxu0 0
    %2107 = vmatprep.subr.bf16.mxu0 0
    %2108 = vmatpush1.bf16.msra.mxu0 0
    %2109 = vmatprep.subr.bf16.mxu0 0
    %2110 = vmatpush1.bf16.msra.mxu0 0
    %2111 = vmatprep.mubr.bf16.mxu0 0
    %2112 = vmatmul.mubr.bf16.gmra.mrb[0].mxu0 %v2074
    %v2113 = vpop.f32.mrb[0].mxu0
    %v2114 = vadd.f32 %v2060, %v2113
    %v2115 = vpop.f32.mrb[0].mxu0
    %v2116 = vpop.f32.mrb[0].mxu0
    %v2117 = vadd.f32 %v2060, %v2116
    %v2118 = vpop.f32.mrb[0].mxu0
    %2119 = vmatprep.mubr.bf16.mxu0 0
    %2120 = vmatmul.mubr.bf16.gmra.mrb[0].mxu0 %v2077
    %v2121 = vpop.f32.mrb[0].mxu0
    %v2122 = vadd.f32 %v2060, %v2121
    %v2123 = vpop.f32.mrb[0].mxu0
    %v2124 = vpop.f32.mrb[0].mxu0
    %v2125 = vadd.f32 %v2060, %v2124
    %v2126 = vpop.f32.mrb[0].mxu0
    %2127 = vdwg.mxu0
    %v2128 = vadd.f32 %v2114, %v108
    %v2129 = vadd.f32 %v2117, %v109
    %v2130 = vadd.f32 %v2122, %v110
    %v2131 = vadd.f32 %v2125, %v111
    %v2132 = vsel %vm42, %v2128, 0.0
    %2133 = vadd.xlane.f32.xlu0 %v2132
    %v2134 = vpop.xlane.xlu0 %2133
    %v2135 = vsel %vm42, %v2129, 0.0
    %2136 = vadd.xlane.f32.xlu0 %v2135
    %v2137 = vpop.xlane.xlu0 %2136
    %v2138 = vsel %vm42, %v2130, 0.0
    %2139 = vadd.xlane.f32.xlu0 %v2138
    %v2140 = vpop.xlane.xlu0 %2139
    %v2141 = vsel %vm42, %v2131, 0.0
    %2142 = vadd.xlane.f32.xlu0 %v2141
    %v2143 = vpop.xlane.xlu0 %2142
    %v2144 = vmul.f32 %v2134, %v55
    %v2145 = vmul.f32 %v2137, %v55
    %v2146 = vmul.f32 %v2140, %v55
    %v2147 = vmul.f32 %v2143, %v55
    %v2148 = vsub.f32 %v2128, %v2144
    %v2149 = vsub.f32 %v2129, %v2145
    %v2150 = vsub.f32 %v2130, %v2146
    %v2151 = vsub.f32 %v2131, %v2147
    %v2152 = vmul.f32 %v2148, %v2148
    %v2153 = vmul.f32 %v2149, %v2149
    %v2154 = vmul.f32 %v2150, %v2150
    %v2155 = vmul.f32 %v2151, %v2151
    %v2156 = vsel %vm42, %v2152, 0.0
    %2157 = vadd.xlane.f32.xlu0 %v2156
    %v2158 = vpop.xlane.xlu0 %2157
    %v2159 = vsel %vm42, %v2153, 0.0
    %2160 = vadd.xlane.f32.xlu0 %v2159
    %v2161 = vpop.xlane.xlu0 %2160
    %v2162 = vsel %vm42, %v2154, 0.0
    %2163 = vadd.xlane.f32.xlu0 %v2162
    %v2164 = vpop.xlane.xlu0 %2163
    %v2165 = vsel %vm42, %v2155, 0.0
    %2166 = vadd.xlane.f32.xlu0 %v2165
    %v2167 = vpop.xlane.xlu0 %2166
    %v2168 = vmul.f32 %v2158, %v55
    %v2169 = vmul.f32 %v2161, %v55
    %v2170 = vmul.f32 %v2164, %v55
    %v2171 = vmul.f32 %v2167, %v55
    %v2172 = vadd.f32 %v2168, 1e-12
    %v2173 = vadd.f32 %v2169, 1e-12
    %v2174 = vadd.f32 %v2170, 1e-12
    %v2175 = vadd.f32 %v2171, 1e-12
    %v2176 = vrsqrt.pop %v2172
    %v2177 = vrsqrt.pop %v2173
    %v2178 = vrsqrt.pop %v2174
    %v2179 = vrsqrt.pop %v2175
    %v2180 = vmul.f32 %v2148, %v2176
    %v2181 = vmul.f32 %v2149, %v2177
    %v2182 = vmul.f32 %v2150, %v2178
    %v2183 = vmul.f32 %v2151, %v2179
    %v2184 = vlaneseq
    %v2185 = vshrl.u32 %v2184, 7
    %v2186 = vsub.s32 2, %v2185
    %v2187 = vrot.slane %v132, %v2186
    %v2188 = vmul.f32 %v2180, %v2187
    %v2189 = vmul.f32 %v2181, %v2187
    %v2190 = vmul.f32 %v2182, %v2187
    %v2191 = vmul.f32 %v2183, %v2187
    %v2192 = vlaneseq
    %v2193 = vshrl.u32 %v2192, 7
    %v2194 = vsub.s32 3, %v2193
    %v2195 = vrot.slane %v132, %v2194
    %v2196 = vadd.f32 %v2188, %v2195
    %v2197 = vadd.f32 %v2189, %v2195
    %v2198 = vadd.f32 %v2190, %v2195
    %v2199 = vadd.f32 %v2191, %v2195
    %v2200 = vpack.c.bf16 %v2197, %v2196
    %v2201 = vpack.c.bf16 %v2199, %v2198
    %v2202 = vlaneseq
    %v2203 = vshrl.u32 %v2202, 7
    %v2204 = vsub.s32 4, %v2203
    %v2205 = vrot.slane %v132, %v2204
    %v2210 = vunpack.c.l.b16 %v120
    %v2211 = vunpack.c.l.b16 %v121
    %v2212 = vunpack.c.l.b16 %v122
    %v2213 = vunpack.c.l.b16 %v123
    %v2214 = vpack.c.b16 %v2211, %v2210
    %v2215 = vpack.c.b16 %v2213, %v2212
    %v2219 = vsel %vm42, %v2200, 0
    %v2222 = vsel %vm42, %v2201, 0
    %2224 = vmatprep.subr.bf16.mxu0 0
    %2225 = vmatpush1.bf16.msra.mxu0 %v2214
    %2226 = vmatprep.subr.bf16.mxu0 0
    %2227 = vmatpush1.bf16.msra.mxu0 %v2215
    %2228 = vmatprep.subr.bf16.mxu0 0
    %2229 = vmatpush1.bf16.msra.mxu0 0
    %2230 = vmatprep.subr.bf16.mxu0 0
    %2231 = vmatpush1.bf16.msra.mxu0 0
    %2232 = vmatprep.subr.bf16.mxu0 0
    %2233 = vmatpush1.bf16.msra.mxu0 0
    %2234 = vmatprep.subr.bf16.mxu0 0
    %2235 = vmatpush1.bf16.msra.mxu0 0
    %2236 = vmatprep.subr.bf16.mxu0 0
    %2237 = vmatpush1.bf16.msra.mxu0 0
    %2238 = vmatprep.subr.bf16.mxu0 0
    %2239 = vmatpush1.bf16.msra.mxu0 0
    %2240 = vmatprep.subr.bf16.mxu0 0
    %2241 = vmatpush1.bf16.msra.mxu0 0
    %2242 = vmatprep.subr.bf16.mxu0 0
    %2243 = vmatpush1.bf16.msra.mxu0 0
    %2244 = vmatprep.subr.bf16.mxu0 0
    %2245 = vmatpush1.bf16.msra.mxu0 0
    %2246 = vmatprep.subr.bf16.mxu0 0
    %2247 = vmatpush1.bf16.msra.mxu0 0
    %2248 = vmatprep.subr.bf16.mxu0 0
    %2249 = vmatpush1.bf16.msra.mxu0 0
    %2250 = vmatprep.subr.bf16.mxu0 0
    %2251 = vmatpush1.bf16.msra.mxu0 0
    %2252 = vmatprep.subr.bf16.mxu0 0
    %2253 = vmatpush1.bf16.msra.mxu0 0
    %2254 = vmatprep.subr.bf16.mxu0 0
    %2255 = vmatpush1.bf16.msra.mxu0 0
    %2256 = vmatprep.mubr.bf16.mxu0 0
    %2257 = vmatmul.mubr.bf16.gmra.mrb[0].mxu0 %v2219
    %v2258 = vpop.f32.mrb[0].mxu0
    %v2259 = vadd.f32 %v2205, %v2258
    %v2260 = vpop.f32.mrb[0].mxu0
    %v2261 = vpop.f32.mrb[0].mxu0
    %v2262 = vadd.f32 %v2205, %v2261
    %v2263 = vpop.f32.mrb[0].mxu0
    %2264 = vmatprep.mubr.bf16.mxu0 0
    %2265 = vmatmul.mubr.bf16.gmra.mrb[0].mxu0 %v2222
    %v2266 = vpop.f32.mrb[0].mxu0
    %v2267 = vadd.f32 %v2205, %v2266
    %v2268 = vpop.f32.mrb[0].mxu0
    %v2269 = vpop.f32.mrb[0].mxu0
    %v2270 = vadd.f32 %v2205, %v2269
    %v2271 = vpop.f32.mrb[0].mxu0
    %2272 = vdwg.mxu0
    %v2273 = vmul.f32 %v2259, 0.5
    %v2274 = vmul.f32 %v2262, 0.5
    %v2275 = vmul.f32 %v2267, 0.5
    %v2276 = vmul.f32 %v2270, 0.5
    %v2277 = vmul.f32 %v2259, 0.044715
    %v2278 = vmul.f32 %v2262, 0.044715
    %v2279 = vmul.f32 %v2267, 0.044715
    %v2280 = vmul.f32 %v2270, 0.044715
    %v2281 = vmul.f32 %v2277, %v2259
    %v2282 = vmul.f32 %v2278, %v2262
    %v2283 = vmul.f32 %v2279, %v2267
    %v2284 = vmul.f32 %v2280, %v2270
    %v2285 = vmul.f32 %v2281, %v2259
    %v2286 = vmul.f32 %v2282, %v2262
    %v2287 = vmul.f32 %v2283, %v2267
    %v2288 = vmul.f32 %v2284, %v2270
    %v2289 = vadd.f32 %v2259, %v2285
    %v2290 = vadd.f32 %v2262, %v2286
    %v2291 = vadd.f32 %v2267, %v2287
    %v2292 = vadd.f32 %v2270, %v2288
    %v2293 = vmul.f32 %v2289, 0.7978846
    %v2294 = vmul.f32 %v2290, 0.7978846
    %v2295 = vmul.f32 %v2291, 0.7978846
    %v2296 = vmul.f32 %v2292, 0.7978846
    %v2297 = vtanh.pop %v2293
    %v2298 = vtanh.pop %v2294
    %v2299 = vtanh.pop %v2295
    %v2300 = vtanh.pop %v2296
    %v2301 = vadd.f32 %v2297, 1.0
    %v2302 = vadd.f32 %v2298, 1.0
    %v2303 = vadd.f32 %v2299, 1.0
    %v2304 = vadd.f32 %v2300, 1.0
    %v2305 = vmul.f32 %v2273, %v2301
    %v2306 = vmul.f32 %v2274, %v2302
    %v2307 = vmul.f32 %v2275, %v2303
    %v2308 = vmul.f32 %v2276, %v2304
    %v2309 = vpack.c.bf16 %v2306, %v2305
    %v2310 = vpack.c.bf16 %v2308, %v2307
    %v2311 = vlaneseq
    %v2312 = vshrl.u32 %v2311, 7
    %v2313 = vsub.s32 5, %v2312
    %v2314 = vrot.slane %v132, %v2313
    %v2323 = vunpack.c.l.b16 %v124
    %v2324 = vunpack.c.l.b16 %v125
    %v2325 = vunpack.c.l.b16 %v126
    %v2326 = vunpack.c.l.b16 %v127
    %v2327 = vunpack.c.l.b16 %v128
    %v2328 = vunpack.c.l.b16 %v129
    %v2329 = vunpack.c.l.b16 %v130
    %v2330 = vunpack.c.l.b16 %v131
    %v2331 = vpack.c.b16 %v2324, %v2323
    %v2332 = vpack.c.b16 %v2326, %v2325
    %v2333 = vpack.c.b16 %v2328, %v2327
    %v2334 = vpack.c.b16 %v2330, %v2329
    %vm2339 = vcmask 523264
    %v2341 = vsel %vm2339, %v2309, 0
    %v2344 = vsel %vm2339, %v2310, 0
    %2346 = vmatprep.subr.bf16.mxu0 0
    %2347 = vmatpush1.bf16.msra.mxu0 %v2331
    %2348 = vmatprep.subr.bf16.mxu0 0
    %2349 = vmatpush1.bf16.msra.mxu0 %v2332
    %2350 = vmatprep.subr.bf16.mxu0 0
    %2351 = vmatpush1.bf16.msra.mxu0 %v2333
    %2352 = vmatprep.subr.bf16.mxu0 0
    %2353 = vmatpush1.bf16.msra.mxu0 %v2334
    %2354 = vmatprep.subr.bf16.mxu0 0
    %2355 = vmatpush1.bf16.msra.mxu0 0
    %2356 = vmatprep.subr.bf16.mxu0 0
    %2357 = vmatpush1.bf16.msra.mxu0 0
    %2358 = vmatprep.subr.bf16.mxu0 0
    %2359 = vmatpush1.bf16.msra.mxu0 0
    %2360 = vmatprep.subr.bf16.mxu0 0
    %2361 = vmatpush1.bf16.msra.mxu0 0
    %2362 = vmatprep.subr.bf16.mxu0 0
    %2363 = vmatpush1.bf16.msra.mxu0 0
    %2364 = vmatprep.subr.bf16.mxu0 0
    %2365 = vmatpush1.bf16.msra.mxu0 0
    %2366 = vmatprep.subr.bf16.mxu0 0
    %2367 = vmatpush1.bf16.msra.mxu0 0
    %2368 = vmatprep.subr.bf16.mxu0 0
    %2369 = vmatpush1.bf16.msra.mxu0 0
    %2370 = vmatprep.subr.bf16.mxu0 0
    %2371 = vmatpush1.bf16.msra.mxu0 0
    %2372 = vmatprep.subr.bf16.mxu0 0
    %2373 = vmatpush1.bf16.msra.mxu0 0
    %2374 = vmatprep.subr.bf16.mxu0 0
    %2375 = vmatpush1.bf16.msra.mxu0 0
    %2376 = vmatprep.subr.bf16.mxu0 0
    %2377 = vmatpush1.bf16.msra.mxu0 0
    %2378 = vmatprep.mubr.bf16.mxu0 0
    %2379 = vmatmul.mubr.bf16.gmra.mrb[0].mxu0 %v2341
    %v2380 = vpop.f32.mrb[0].mxu0
    %v2381 = vadd.f32 %v2314, %v2380
    %v2382 = vpop.f32.mrb[0].mxu0
    %v2383 = vpop.f32.mrb[0].mxu0
    %v2384 = vadd.f32 %v2314, %v2383
    %v2385 = vpop.f32.mrb[0].mxu0
    %2386 = vmatprep.mubr.bf16.mxu0 0
    %2387 = vmatmul.mubr.bf16.gmra.mrb[0].mxu0 %v2344
    %v2388 = vpop.f32.mrb[0].mxu0
    %v2389 = vadd.f32 %v2314, %v2388
    %v2390 = vpop.f32.mrb[0].mxu0
    %v2391 = vpop.f32.mrb[0].mxu0
    %v2392 = vadd.f32 %v2314, %v2391
    %v2393 = vpop.f32.mrb[0].mxu0
    %2394 = vdwg.mxu0
    %v2395 = vadd.f32 %v2381, %v2196
    %v2396 = vadd.f32 %v2384, %v2197
    %v2397 = vadd.f32 %v2389, %v2198
    %v2398 = vadd.f32 %v2392, %v2199
    %v2399 = vsel %vm42, %v2395, 0.0
    %2400 = vadd.xlane.f32.xlu0 %v2399
    %v2401 = vpop.xlane.xlu0 %2400
    %v2402 = vsel %vm42, %v2396, 0.0
    %2403 = vadd.xlane.f32.xlu0 %v2402
    %v2404 = vpop.xlane.xlu0 %2403
    %v2405 = vsel %vm42, %v2397, 0.0
    %2406 = vadd.xlane.f32.xlu0 %v2405
    %v2407 = vpop.xlane.xlu0 %2406
    %v2408 = vsel %vm42, %v2398, 0.0
    %2409 = vadd.xlane.f32.xlu0 %v2408
    %v2410 = vpop.xlane.xlu0 %2409
    %v2411 = vmul.f32 %v2401, %v55
    %v2412 = vmul.f32 %v2404, %v55
    %v2413 = vmul.f32 %v2407, %v55
    %v2414 = vmul.f32 %v2410, %v55
    %v2415 = vsub.f32 %v2395, %v2411
    %v2416 = vsub.f32 %v2396, %v2412
    %v2417 = vsub.f32 %v2397, %v2413
    %v2418 = vsub.f32 %v2398, %v2414
    %v2419 = vmul.f32 %v2415, %v2415
    %v2420 = vmul.f32 %v2416, %v2416
    %v2421 = vmul.f32 %v2417, %v2417
    %v2422 = vmul.f32 %v2418, %v2418
    %v2423 = vsel %vm42, %v2419, 0.0
    %2424 = vadd.xlane.f32.xlu0 %v2423
    %v2425 = vpop.xlane.xlu0 %2424
    %v2426 = vsel %vm42, %v2420, 0.0
    %2427 = vadd.xlane.f32.xlu0 %v2426
    %v2428 = vpop.xlane.xlu0 %2427
    %v2429 = vsel %vm42, %v2421, 0.0
    %2430 = vadd.xlane.f32.xlu0 %v2429
    %v2431 = vpop.xlane.xlu0 %2430
    %v2432 = vsel %vm42, %v2422, 0.0
    %2433 = vadd.xlane.f32.xlu0 %v2432
    %v2434 = vpop.xlane.xlu0 %2433
    %v2435 = vmul.f32 %v2425, %v55
    %v2436 = vmul.f32 %v2428, %v55
    %v2437 = vmul.f32 %v2431, %v55
    %v2438 = vmul.f32 %v2434, %v55
    %v2439 = vadd.f32 %v2435, 1e-12
    %v2440 = vadd.f32 %v2436, 1e-12
    %v2441 = vadd.f32 %v2437, 1e-12
    %v2442 = vadd.f32 %v2438, 1e-12
    %v2443 = vrsqrt.pop %v2439
    %v2444 = vrsqrt.pop %v2440
    %v2445 = vrsqrt.pop %v2441
    %v2446 = vrsqrt.pop %v2442
    %v2447 = vmul.f32 %v2415, %v2443
    %v2448 = vmul.f32 %v2416, %v2444
    %v2449 = vmul.f32 %v2417, %v2445
    %v2450 = vmul.f32 %v2418, %v2446
    %v2451 = vlaneseq
    %v2452 = vshrl.u32 %v2451, 7
    %v2453 = vsub.s32 6, %v2452
    %v2454 = vrot.slane %v132, %v2453
    %v2455 = vmul.f32 %v2447, %v2454
    %v2456 = vmul.f32 %v2448, %v2454
    %v2457 = vmul.f32 %v2449, %v2454
    %v2458 = vmul.f32 %v2450, %v2454
    %v2459 = vlaneseq
    %v2460 = vshrl.u32 %v2459, 7
    %v2461 = vsub.s32 7, %v2460
    %v2462 = vrot.slane %v132, %v2461
    %v2463 = vadd.f32 %v2455, %v2462
    %v2464 = vadd.f32 %v2456, %v2462
    %v2465 = vadd.f32 %v2457, %v2462
    %v2466 = vadd.f32 %v2458, %v2462
    %s2467 = scalar_lea.vmem %s2, 16
    %v2468 = vld [vmem:[%s2467] sm:$0xf]
    %v2469 = vld [vmem:[%s2467 + $0x4] sm:$0xf]
    %v2470 = vld [vmem:[%s2467 + $0x8] sm:$0xf]
    %v2471 = vld [vmem:[%s2467 + $0xc] sm:$0xf]
    %s2472 = scalar_lea.vmem %s3, 16
    %v2473 = vld [vmem:[%s2472] sm:$0xf]
    %v2474 = vld [vmem:[%s2472 + $0x4] sm:$0xf]
    %v2475 = vld [vmem:[%s2472 + $0x8] sm:$0xf]
    %v2476 = vld [vmem:[%s2472 + $0xc] sm:$0xf]
    %s2477 = scalar_lea.vmem %s4, 16
    %v2478 = vld [vmem:[%s2477] sm:$0xf]
    %v2479 = vld [vmem:[%s2477 + $0x4] sm:$0xf]
    %v2480 = vld [vmem:[%s2477 + $0x8] sm:$0xf]
    %v2481 = vld [vmem:[%s2477 + $0xc] sm:$0xf]
    %s2482 = scalar_lea.vmem %s5, 32
    %v2483 = vld [vmem:[%s2482] sm:$0xf]
    %v2484 = vld [vmem:[%s2482 + $0x4] sm:$0xf]
    %v2485 = vld [vmem:[%s2482 + $0x8] sm:$0xf]
    %v2486 = vld [vmem:[%s2482 + $0xc] sm:$0xf]
    %v2487 = vld [vmem:[%s2482 + $0x10] sm:$0xf]
    %v2488 = vld [vmem:[%s2482 + $0x14] sm:$0xf]
    %v2489 = vld [vmem:[%s2482 + $0x18] sm:$0xf]
    %v2490 = vld [vmem:[%s2482 + $0x1c] sm:$0xf]
    %s2491 = scalar_lea.vmem %s7, 8
    %v2492 = vld [vmem:[%s2491] sm:$0xff]
    %v2493 = vpack.c.bf16 %v2464, %v2463
    %v2494 = vpack.c.bf16 %v2466, %v2465
    %v2495 = vlaneseq
    %v2496 = vshrl.u32 %v2495, 7
    %v2497 = vsub.s32 0, %v2496
    %v2498 = vrot.slane %v2492, %v2497
    %v2503 = vunpack.c.l.b16 %v2468
    %v2504 = vunpack.c.l.b16 %v2469
    %v2505 = vunpack.c.l.b16 %v2470
    %v2506 = vunpack.c.l.b16 %v2471
    %v2507 = vpack.c.b16 %v2504, %v2503
    %v2508 = vpack.c.b16 %v2506, %v2505
    %v2512 = vsel %vm42, %v2493, 0
    %v2515 = vsel %vm42, %v2494, 0
    %2517 = vmatprep.subr.bf16.mxu0 0
    %2518 = vmatpush1.bf16.msra.mxu0 %v2507
    %2519 = vmatprep.subr.bf16.mxu0 0
    %2520 = vmatpush1.bf16.msra.mxu0 %v2508
    %2521 = vmatprep.subr.bf16.mxu0 0
    %2522 = vmatpush1.bf16.msra.mxu0 0
    %2523 = vmatprep.subr.bf16.mxu0 0
    %2524 = vmatpush1.bf16.msra.mxu0 0
    %2525 = vmatprep.subr.bf16.mxu0 0
    %2526 = vmatpush1.bf16.msra.mxu0 0
    %2527 = vmatprep.subr.bf16.mxu0 0
    %2528 = vmatpush1.bf16.msra.mxu0 0
    %2529 = vmatprep.subr.bf16.mxu0 0
    %2530 = vmatpush1.bf16.msra.mxu0 0
    %2531 = vmatprep.subr.bf16.mxu0 0
    %2532 = vmatpush1.bf16.msra.mxu0 0
    %2533 = vmatprep.subr.bf16.mxu0 0
    %2534 = vmatpush1.bf16.msra.mxu0 0
    %2535 = vmatprep.subr.bf16.mxu0 0
    %2536 = vmatpush1.bf16.msra.mxu0 0
    %2537 = vmatprep.subr.bf16.mxu0 0
    %2538 = vmatpush1.bf16.msra.mxu0 0
    %2539 = vmatprep.subr.bf16.mxu0 0
    %2540 = vmatpush1.bf16.msra.mxu0 0
    %2541 = vmatprep.subr.bf16.mxu0 0
    %2542 = vmatpush1.bf16.msra.mxu0 0
    %2543 = vmatprep.subr.bf16.mxu0 0
    %2544 = vmatpush1.bf16.msra.mxu0 0
    %2545 = vmatprep.subr.bf16.mxu0 0
    %2546 = vmatpush1.bf16.msra.mxu0 0
    %2547 = vmatprep.subr.bf16.mxu0 0
    %2548 = vmatpush1.bf16.msra.mxu0 0
    %2549 = vmatprep.mubr.bf16.mxu0 0
    %2550 = vmatmul.mubr.bf16.gmra.mrb[0].mxu0 %v2512
    %v2551 = vpop.f32.mrb[0].mxu0
    %v2552 = vadd.f32 %v2498, %v2551
    %v2553 = vpop.f32.mrb[0].mxu0
    %v2554 = vpop.f32.mrb[0].mxu0
    %v2555 = vadd.f32 %v2498, %v2554
    %v2556 = vpop.f32.mrb[0].mxu0
    %2557 = vmatprep.mubr.bf16.mxu0 0
    %2558 = vmatmul.mubr.bf16.gmra.mrb[0].mxu0 %v2515
    %v2559 = vpop.f32.mrb[0].mxu0
    %v2560 = vadd.f32 %v2498, %v2559
    %v2561 = vpop.f32.mrb[0].mxu0
    %v2562 = vpop.f32.mrb[0].mxu0
    %v2563 = vadd.f32 %v2498, %v2562
    %v2564 = vpop.f32.mrb[0].mxu0
    %2565 = vdwg.mxu0
    %v2566 = vpack.c.bf16 %v2552, %v2552
    %2568 = vrot.lane.b32.xlu0 %v2566, 96
    %v2569 = vpop.permute.xlu0 %2568
    %v2571 = vsel %vm214, %v2566, 0
    %v2574 = vsel %vm214, %v2569, 0
    %2576 = vmatprep.subr.bf16.mxu0 0
    %2577 = vmatpush1.bf16.xpose.msra.mxu0 %v2574
    %2578 = vmatprep.subr.bf16.mxu0 0
    %2579 = vmatpush1.bf16.xpose.msra.mxu0 0
    %2580 = vmatprep.subr.bf16.mxu0 0
    %2581 = vmatpush1.bf16.xpose.msra.mxu0 0
    %2582 = vmatprep.subr.bf16.mxu0 0
    %2583 = vmatpush1.bf16.xpose.msra.mxu0 0
    %2584 = vmatprep.subr.bf16.mxu0 0
    %2585 = vmatpush1.bf16.xpose.msra.mxu0 0
    %2586 = vmatprep.subr.bf16.mxu0 0
    %2587 = vmatpush1.bf16.xpose.msra.mxu0 0
    %2588 = vmatprep.subr.bf16.mxu0 0
    %2589 = vmatpush1.bf16.xpose.msra.mxu0 0
    %2590 = vmatprep.subr.bf16.mxu0 0
    %2591 = vmatpush1.bf16.xpose.msra.mxu0 0
    %2592 = vmatprep.subr.bf16.mxu0 0
    %2593 = vmatpush1.bf16.xpose.msra.mxu0 0
    %2594 = vmatprep.subr.bf16.mxu0 0
    %2595 = vmatpush1.bf16.xpose.msra.mxu0 0
    %2596 = vmatprep.subr.bf16.mxu0 0
    %2597 = vmatpush1.bf16.xpose.msra.mxu0 0
    %2598 = vmatprep.subr.bf16.mxu0 0
    %2599 = vmatpush1.bf16.xpose.msra.mxu0 0
    %2600 = vmatprep.subr.bf16.mxu0 0
    %2601 = vmatpush1.bf16.xpose.msra.mxu0 0
    %2602 = vmatprep.subr.bf16.mxu0 0
    %2603 = vmatpush1.bf16.xpose.msra.mxu0 0
    %2604 = vmatprep.subr.bf16.mxu0 0
    %2605 = vmatpush1.bf16.xpose.msra.mxu0 0
    %2606 = vmatprep.subr.bf16.mxu0 0
    %2607 = vmatpush1.bf16.xpose.msra.mxu0 0
    %2608 = vmatprep.mubr.bf16.mxu0 0
    %2609 = vmatmul.mubr.bf16.gmra.mrb[0].mxu0 %v2571
    %v2610 = vpop.f32.mrb[0].mxu0
    %v2611 = vadd.f32 %v209, %v2610
    %v2612 = vpop.f32.mrb[0].mxu0
    %v2613 = vpop.f32.mrb[0].mxu0
    %v2614 = vpop.f32.mrb[0].mxu0
    %2615 = vdwg.mxu0
    %v2616 = vsel %vm214, %v2611, -inf
    %2617 = vmax.xlane.f32.xlu0 %v2616
    %v2618 = vpop.xlane.xlu0 %2617
    %v2619 = vsub.f32 %v2611, %v2618
    %v2620 = vmul.f32 %v2619, 1.442695
    %v2621 = vpow.pop %v2620
    %v2622 = vsel %vm214, %v2621, 0.0
    %2623 = vadd.xlane.f32.xlu0 %v2622
    %v2624 = vpop.xlane.xlu0 %2623
    %v2625 = vpack.c.bf16 %v2621, %v2621
    %2626 = vrot.lane.b32.xlu0 %v2566, 64
    %v2627 = vpop.permute.xlu0 %2626
    %v2629 = vsel %vm214, %v2625, 0
    %v2632 = vsel %vm276, %v2627, 0
    %2634 = vmatprep.subr.bf16.mxu0 0
    %2635 = vmatpush1.bf16.msra.mxu0 %v2632
    %2636 = vmatprep.subr.bf16.mxu0 0
    %2637 = vmatpush1.bf16.msra.mxu0 0
    %2638 = vmatprep.subr.bf16.mxu0 0
    %2639 = vmatpush1.bf16.msra.mxu0 0
    %2640 = vmatprep.subr.bf16.mxu0 0
    %2641 = vmatpush1.bf16.msra.mxu0 0
    %2642 = vmatprep.subr.bf16.mxu0 0
    %2643 = vmatpush1.bf16.msra.mxu0 0
    %2644 = vmatprep.subr.bf16.mxu0 0
    %2645 = vmatpush1.bf16.msra.mxu0 0
    %2646 = vmatprep.subr.bf16.mxu0 0
    %2647 = vmatpush1.bf16.msra.mxu0 0
    %2648 = vmatprep.subr.bf16.mxu0 0
    %2649 = vmatpush1.bf16.msra.mxu0 0
    %2650 = vmatprep.subr.bf16.mxu0 0
    %2651 = vmatpush1.bf16.msra.mxu0 0
    %2652 = vmatprep.subr.bf16.mxu0 0
    %2653 = vmatpush1.bf16.msra.mxu0 0
    %2654 = vmatprep.subr.bf16.mxu0 0
    %2655 = vmatpush1.bf16.msra.mxu0 0
    %2656 = vmatprep.subr.bf16.mxu0 0
    %2657 = vmatpush1.bf16.msra.mxu0 0
    %2658 = vmatprep.subr.bf16.mxu0 0
    %2659 = vmatpush1.bf16.msra.mxu0 0
    %2660 = vmatprep.subr.bf16.mxu0 0
    %2661 = vmatpush1.bf16.msra.mxu0 0
    %2662 = vmatprep.subr.bf16.mxu0 0
    %2663 = vmatpush1.bf16.msra.mxu0 0
    %2664 = vmatprep.subr.bf16.mxu0 0
    %2665 = vmatpush1.bf16.msra.mxu0 0
    %2666 = vmatprep.mubr.bf16.mxu0 0
    %2667 = vmatmul.mubr.bf16.gmra.mrb[0].mxu0 %v2629
    %v2668 = vpop.f32.mrb[0].mxu0
    %v2669 = vadd.f32 0.0, %v2668
    %v2670 = vpop.f32.mrb[0].mxu0
    %v2671 = vpop.f32.mrb[0].mxu0
    %v2672 = vpop.f32.mrb[0].mxu0
    %2673 = vdwg.mxu0
    %v2674 = vrcp.pop %v2624
    %v2675 = vmul.f32 %v2669, %v2674
    %2676 = vst.msk [vmem:[#allocation2] sm:$0xff] %vm214, %v2675
    %2677 = vrot.lane.b32.xlu0 %v2566, 120
    %v2678 = vpop.permute.xlu0 %2677
    %2679 = vrot.lane.b32.xlu0 %v2566, 88
    %v2680 = vpop.permute.xlu0 %2679
    %v2682 = vsel %vm214, %v2678, 0
    %v2685 = vsel %vm214, %v2680, 0
    %2687 = vmatprep.subr.bf16.mxu0 0
    %2688 = vmatpush1.bf16.xpose.msra.mxu0 %v2685
    %2689 = vmatprep.subr.bf16.mxu0 0
    %2690 = vmatpush1.bf16.xpose.msra.mxu0 0
    %2691 = vmatprep.subr.bf16.mxu0 0
    %2692 = vmatpush1.bf16.xpose.msra.mxu0 0
    %2693 = vmatprep.subr.bf16.mxu0 0
    %2694 = vmatpush1.bf16.xpose.msra.mxu0 0
    %2695 = vmatprep.subr.bf16.mxu0 0
    %2696 = vmatpush1.bf16.xpose.msra.mxu0 0
    %2697 = vmatprep.subr.bf16.mxu0 0
    %2698 = vmatpush1.bf16.xpose.msra.mxu0 0
    %2699 = vmatprep.subr.bf16.mxu0 0
    %2700 = vmatpush1.bf16.xpose.msra.mxu0 0
    %2701 = vmatprep.subr.bf16.mxu0 0
    %2702 = vmatpush1.bf16.xpose.msra.mxu0 0
    %2703 = vmatprep.subr.bf16.mxu0 0
    %2704 = vmatpush1.bf16.xpose.msra.mxu0 0
    %2705 = vmatprep.subr.bf16.mxu0 0
    %2706 = vmatpush1.bf16.xpose.msra.mxu0 0
    %2707 = vmatprep.subr.bf16.mxu0 0
    %2708 = vmatpush1.bf16.xpose.msra.mxu0 0
    %2709 = vmatprep.subr.bf16.mxu0 0
    %2710 = vmatpush1.bf16.xpose.msra.mxu0 0
    %2711 = vmatprep.subr.bf16.mxu0 0
    %2712 = vmatpush1.bf16.xpose.msra.mxu0 0
    %2713 = vmatprep.subr.bf16.mxu0 0
    %2714 = vmatpush1.bf16.xpose.msra.mxu0 0
    %2715 = vmatprep.subr.bf16.mxu0 0
    %2716 = vmatpush1.bf16.xpose.msra.mxu0 0
    %2717 = vmatprep.subr.bf16.mxu0 0
    %2718 = vmatpush1.bf16.xpose.msra.mxu0 0
    %2719 = vmatprep.mubr.bf16.mxu0 0
    %2720 = vmatmul.mubr.bf16.gmra.mrb[0].mxu0 %v2682
    %v2721 = vpop.f32.mrb[0].mxu0
    %v2722 = vadd.f32 %v209, %v2721
    %v2723 = vpop.f32.mrb[0].mxu0
    %v2724 = vpop.f32.mrb[0].mxu0
    %v2725 = vpop.f32.mrb[0].mxu0
    %2726 = vdwg.mxu0
    %v2727 = vsel %vm214, %v2722, -inf
    %2728 = vmax.xlane.f32.xlu0 %v2727
    %v2729 = vpop.xlane.xlu0 %2728
    %v2730 = vsub.f32 %v2722, %v2729
    %v2731 = vmul.f32 %v2730, 1.442695
    %v2732 = vpow.pop %v2731
    %v2733 = vsel %vm214, %v2732, 0.0
    %2734 = vadd.xlane.f32.xlu0 %v2733
    %v2735 = vpop.xlane.xlu0 %2734
    %v2736 = vpack.c.bf16 %v2732, %v2732
    %2737 = vrot.lane.b32.xlu0 %v2566, 56
    %v2738 = vpop.permute.xlu0 %2737
    %v2740 = vsel %vm214, %v2736, 0
    %v2743 = vsel %vm276, %v2738, 0
    %2745 = vmatprep.subr.bf16.mxu0 0
    %2746 = vmatpush1.bf16.msra.mxu0 %v2743
    %2747 = vmatprep.subr.bf16.mxu0 0
    %2748 = vmatpush1.bf16.msra.mxu0 0
    %2749 = vmatprep.subr.bf16.mxu0 0
    %2750 = vmatpush1.bf16.msra.mxu0 0
    %2751 = vmatprep.subr.bf16.mxu0 0
    %2752 = vmatpush1.bf16.msra.mxu0 0
    %2753 = vmatprep.subr.bf16.mxu0 0
    %2754 = vmatpush1.bf16.msra.mxu0 0
    %2755 = vmatprep.subr.bf16.mxu0 0
    %2756 = vmatpush1.bf16.msra.mxu0 0
    %2757 = vmatprep.subr.bf16.mxu0 0
    %2758 = vmatpush1.bf16.msra.mxu0 0
    %2759 = vmatprep.subr.bf16.mxu0 0
    %2760 = vmatpush1.bf16.msra.mxu0 0
    %2761 = vmatprep.subr.bf16.mxu0 0
    %2762 = vmatpush1.bf16.msra.mxu0 0
    %2763 = vmatprep.subr.bf16.mxu0 0
    %2764 = vmatpush1.bf16.msra.mxu0 0
    %2765 = vmatprep.subr.bf16.mxu0 0
    %2766 = vmatpush1.bf16.msra.mxu0 0
    %2767 = vmatprep.subr.bf16.mxu0 0
    %2768 = vmatpush1.bf16.msra.mxu0 0
    %2769 = vmatprep.subr.bf16.mxu0 0
    %2770 = vmatpush1.bf16.msra.mxu0 0
    %2771 = vmatprep.subr.bf16.mxu0 0
    %2772 = vmatpush1.bf16.msra.mxu0 0
    %2773 = vmatprep.subr.bf16.mxu0 0
    %2774 = vmatpush1.bf16.msra.mxu0 0
    %2775 = vmatprep.subr.bf16.mxu0 0
    %2776 = vmatpush1.bf16.msra.mxu0 0
    %2777 = vmatprep.mubr.bf16.mxu0 0
    %2778 = vmatmul.mubr.bf16.gmra.mrb[0].mxu0 %v2740
    %v2779 = vpop.f32.mrb[0].mxu0
    %v2780 = vadd.f32 0.0, %v2779
    %v2781 = vpop.f32.mrb[0].mxu0
    %v2782 = vpop.f32.mrb[0].mxu0
    %v2783 = vpop.f32.mrb[0].mxu0
    %2784 = vdwg.mxu0
    %v2785 = vrcp.pop %v2735
    %v2786 = vmul.f32 %v2780, %v2785
    %2788 = vrot.lane.b32.xlu0 %v2786, 8
    %v2789 = vpop.permute.xlu0 %2788
    %2791 = vst.msk [vmem:[#allocation2] sm:$0xff] %vm437, %v2789
    %2792 = vrot.lane.b32.xlu0 %v2566, 112
    %v2793 = vpop.permute.xlu0 %2792
    %2794 = vrot.lane.b32.xlu0 %v2566, 80
    %v2795 = vpop.permute.xlu0 %2794
    %v2797 = vsel %vm214, %v2793, 0
    %v2800 = vsel %vm214, %v2795, 0
    %2802 = vmatprep.subr.bf16.mxu0 0
    %2803 = vmatpush1.bf16.xpose.msra.mxu0 %v2800
    %2804 = vmatprep.subr.bf16.mxu0 0
    %2805 = vmatpush1.bf16.xpose.msra.mxu0 0
    %2806 = vmatprep.subr.bf16.mxu0 0
    %2807 = vmatpush1.bf16.xpose.msra.mxu0 0
    %2808 = vmatprep.subr.bf16.mxu0 0
    %2809 = vmatpush1.bf16.xpose.msra.mxu0 0
    %2810 = vmatprep.subr.bf16.mxu0 0
    %2811 = vmatpush1.bf16.xpose.msra.mxu0 0
    %2812 = vmatprep.subr.bf16.mxu0 0
    %2813 = vmatpush1.bf16.xpose.msra.mxu0 0
    %2814 = vmatprep.subr.bf16.mxu0 0
    %2815 = vmatpush1.bf16.xpose.msra.mxu0 0
    %2816 = vmatprep.subr.bf16.mxu0 0
    %2817 = vmatpush1.bf16.xpose.msra.mxu0 0
    %2818 = vmatprep.subr.bf16.mxu0 0
    %2819 = vmatpush1.bf16.xpose.msra.mxu0 0
    %2820 = vmatprep.subr.bf16.mxu0 0
    %2821 = vmatpush1.bf16.xpose.msra.mxu0 0
    %2822 = vmatprep.subr.bf16.mxu0 0
    %2823 = vmatpush1.bf16.xpose.msra.mxu0 0
    %2824 = vmatprep.subr.bf16.mxu0 0
    %2825 = vmatpush1.bf16.xpose.msra.mxu0 0
    %2826 = vmatprep.subr.bf16.mxu0 0
    %2827 = vmatpush1.bf16.xpose.msra.mxu0 0
    %2828 = vmatprep.subr.bf16.mxu0 0
    %2829 = vmatpush1.bf16.xpose.msra.mxu0 0
    %2830 = vmatprep.subr.bf16.mxu0 0
    %2831 = vmatpush1.bf16.xpose.msra.mxu0 0
    %2832 = vmatprep.subr.bf16.mxu0 0
    %2833 = vmatpush1.bf16.xpose.msra.mxu0 0
    %2834 = vmatprep.mubr.bf16.mxu0 0
    %2835 = vmatmul.mubr.bf16.gmra.mrb[0].mxu0 %v2797
    %v2836 = vpop.f32.mrb[0].mxu0
    %v2837 = vadd.f32 %v209, %v2836
    %v2838 = vpop.f32.mrb[0].mxu0
    %v2839 = vpop.f32.mrb[0].mxu0
    %v2840 = vpop.f32.mrb[0].mxu0
    %2841 = vdwg.mxu0
    %v2842 = vsel %vm214, %v2837, -inf
    %2843 = vmax.xlane.f32.xlu0 %v2842
    %v2844 = vpop.xlane.xlu0 %2843
    %v2845 = vsub.f32 %v2837, %v2844
    %v2846 = vmul.f32 %v2845, 1.442695
    %v2847 = vpow.pop %v2846
    %v2848 = vsel %vm214, %v2847, 0.0
    %2849 = vadd.xlane.f32.xlu0 %v2848
    %v2850 = vpop.xlane.xlu0 %2849
    %v2851 = vpack.c.bf16 %v2847, %v2847
    %2852 = vrot.lane.b32.xlu0 %v2566, 48
    %v2853 = vpop.permute.xlu0 %2852
    %v2855 = vsel %vm214, %v2851, 0
    %v2858 = vsel %vm276, %v2853, 0
    %2860 = vmatprep.subr.bf16.mxu0 0
    %2861 = vmatpush1.bf16.msra.mxu0 %v2858
    %2862 = vmatprep.subr.bf16.mxu0 0
    %2863 = vmatpush1.bf16.msra.mxu0 0
    %2864 = vmatprep.subr.bf16.mxu0 0
    %2865 = vmatpush1.bf16.msra.mxu0 0
    %2866 = vmatprep.subr.bf16.mxu0 0
    %2867 = vmatpush1.bf16.msra.mxu0 0
    %2868 = vmatprep.subr.bf16.mxu0 0
    %2869 = vmatpush1.bf16.msra.mxu0 0
    %2870 = vmatprep.subr.bf16.mxu0 0
    %2871 = vmatpush1.bf16.msra.mxu0 0
    %2872 = vmatprep.subr.bf16.mxu0 0
    %2873 = vmatpush1.bf16.msra.mxu0 0
    %2874 = vmatprep.subr.bf16.mxu0 0
    %2875 = vmatpush1.bf16.msra.mxu0 0
    %2876 = vmatprep.subr.bf16.mxu0 0
    %2877 = vmatpush1.bf16.msra.mxu0 0
    %2878 = vmatprep.subr.bf16.mxu0 0
    %2879 = vmatpush1.bf16.msra.mxu0 0
    %2880 = vmatprep.subr.bf16.mxu0 0
    %2881 = vmatpush1.bf16.msra.mxu0 0
    %2882 = vmatprep.subr.bf16.mxu0 0
    %2883 = vmatpush1.bf16.msra.mxu0 0
    %2884 = vmatprep.subr.bf16.mxu0 0
    %2885 = vmatpush1.bf16.msra.mxu0 0
    %2886 = vmatprep.subr.bf16.mxu0 0
    %2887 = vmatpush1.bf16.msra.mxu0 0
    %2888 = vmatprep.subr.bf16.mxu0 0
    %2889 = vmatpush1.bf16.msra.mxu0 0
    %2890 = vmatprep.subr.bf16.mxu0 0
    %2891 = vmatpush1.bf16.msra.mxu0 0
    %2892 = vmatprep.mubr.bf16.mxu0 0
    %2893 = vmatmul.mubr.bf16.gmra.mrb[0].mxu0 %v2855
    %v2894 = vpop.f32.mrb[0].mxu0
    %v2895 = vadd.f32 0.0, %v2894
    %v2896 = vpop.f32.mrb[0].mxu0
    %v2897 = vpop.f32.mrb[0].mxu0
    %v2898 = vpop.f32.mrb[0].mxu0
    %2899 = vdwg.mxu0
    %v2900 = vrcp.pop %v2850
    %v2901 = vmul.f32 %v2895, %v2900
    %2903 = vrot.lane.b32.xlu0 %v2901, 16
    %v2904 = vpop.permute.xlu0 %2903
    %2906 = vst.msk [vmem:[#allocation2] sm:$0xff] %vm553, %v2904
    %2907 = vrot.lane.b32.xlu0 %v2566, 104
    %v2908 = vpop.permute.xlu0 %2907
    %2909 = vrot.lane.b32.xlu0 %v2566, 72
    %v2910 = vpop.permute.xlu0 %2909
    %v2912 = vsel %vm214, %v2908, 0
    %v2915 = vsel %vm214, %v2910, 0
    %2917 = vmatprep.subr.bf16.mxu0 0
    %2918 = vmatpush1.bf16.xpose.msra.mxu0 %v2915
    %2919 = vmatprep.subr.bf16.mxu0 0
    %2920 = vmatpush1.bf16.xpose.msra.mxu0 0
    %2921 = vmatprep.subr.bf16.mxu0 0
    %2922 = vmatpush1.bf16.xpose.msra.mxu0 0
    %2923 = vmatprep.subr.bf16.mxu0 0
    %2924 = vmatpush1.bf16.xpose.msra.mxu0 0
    %2925 = vmatprep.subr.bf16.mxu0 0
    %2926 = vmatpush1.bf16.xpose.msra.mxu0 0
    %2927 = vmatprep.subr.bf16.mxu0 0
    %2928 = vmatpush1.bf16.xpose.msra.mxu0 0
    %2929 = vmatprep.subr.bf16.mxu0 0
    %2930 = vmatpush1.bf16.xpose.msra.mxu0 0
    %2931 = vmatprep.subr.bf16.mxu0 0
    %2932 = vmatpush1.bf16.xpose.msra.mxu0 0
    %2933 = vmatprep.subr.bf16.mxu0 0
    %2934 = vmatpush1.bf16.xpose.msra.mxu0 0
    %2935 = vmatprep.subr.bf16.mxu0 0
    %2936 = vmatpush1.bf16.xpose.msra.mxu0 0
    %2937 = vmatprep.subr.bf16.mxu0 0
    %2938 = vmatpush1.bf16.xpose.msra.mxu0 0
    %2939 = vmatprep.subr.bf16.mxu0 0
    %2940 = vmatpush1.bf16.xpose.msra.mxu0 0
    %2941 = vmatprep.subr.bf16.mxu0 0
    %2942 = vmatpush1.bf16.xpose.msra.mxu0 0
    %2943 = vmatprep.subr.bf16.mxu0 0
    %2944 = vmatpush1.bf16.xpose.msra.mxu0 0
    %2945 = vmatprep.subr.bf16.mxu0 0
    %2946 = vmatpush1.bf16.xpose.msra.mxu0 0
    %2947 = vmatprep.subr.bf16.mxu0 0
    %2948 = vmatpush1.bf16.xpose.msra.mxu0 0
    %2949 = vmatprep.mubr.bf16.mxu0 0
    %2950 = vmatmul.mubr.bf16.gmra.mrb[0].mxu0 %v2912
    %v2951 = vpop.f32.mrb[0].mxu0
    %v2952 = vadd.f32 %v209, %v2951
    %v2953 = vpop.f32.mrb[0].mxu0
    %v2954 = vpop.f32.mrb[0].mxu0
    %v2955 = vpop.f32.mrb[0].mxu0
    %2956 = vdwg.mxu0
    %v2957 = vsel %vm214, %v2952, -inf
    %2958 = vmax.xlane.f32.xlu0 %v2957
    %v2959 = vpop.xlane.xlu0 %2958
    %v2960 = vsub.f32 %v2952, %v2959
    %v2961 = vmul.f32 %v2960, 1.442695
    %v2962 = vpow.pop %v2961
    %v2963 = vsel %vm214, %v2962, 0.0
    %2964 = vadd.xlane.f32.xlu0 %v2963
    %v2965 = vpop.xlane.xlu0 %2964
    %v2966 = vpack.c.bf16 %v2962, %v2962
    %2967 = vrot.lane.b32.xlu0 %v2566, 40
    %v2968 = vpop.permute.xlu0 %2967
    %v2970 = vsel %vm214, %v2966, 0
    %v2973 = vsel %vm276, %v2968, 0
    %2975 = vmatprep.subr.bf16.mxu0 0
    %2976 = vmatpush1.bf16.msra.mxu0 %v2973
    %2977 = vmatprep.subr.bf16.mxu0 0
    %2978 = vmatpush1.bf16.msra.mxu0 0
    %2979 = vmatprep.subr.bf16.mxu0 0
    %2980 = vmatpush1.bf16.msra.mxu0 0
    %2981 = vmatprep.subr.bf16.mxu0 0
    %2982 = vmatpush1.bf16.msra.mxu0 0
    %2983 = vmatprep.subr.bf16.mxu0 0
    %2984 = vmatpush1.bf16.msra.mxu0 0
    %2985 = vmatprep.subr.bf16.mxu0 0
    %2986 = vmatpush1.bf16.msra.mxu0 0
    %2987 = vmatprep.subr.bf16.mxu0 0
    %2988 = vmatpush1.bf16.msra.mxu0 0
    %2989 = vmatprep.subr.bf16.mxu0 0
    %2990 = vmatpush1.bf16.msra.mxu0 0
    %2991 = vmatprep.subr.bf16.mxu0 0
    %2992 = vmatpush1.bf16.msra.mxu0 0
    %2993 = vmatprep.subr.bf16.mxu0 0
    %2994 = vmatpush1.bf16.msra.mxu0 0
    %2995 = vmatprep.subr.bf16.mxu0 0
    %2996 = vmatpush1.bf16.msra.mxu0 0
    %2997 = vmatprep.subr.bf16.mxu0 0
    %2998 = vmatpush1.bf16.msra.mxu0 0
    %2999 = vmatprep.subr.bf16.mxu0 0
    %3000 = vmatpush1.bf16.msra.mxu0 0
    %3001 = vmatprep.subr.bf16.mxu0 0
    %3002 = vmatpush1.bf16.msra.mxu0 0
    %3003 = vmatprep.subr.bf16.mxu0 0
    %3004 = vmatpush1.bf16.msra.mxu0 0
    %3005 = vmatprep.subr.bf16.mxu0 0
    %3006 = vmatpush1.bf16.msra.mxu0 0
    %3007 = vmatprep.mubr.bf16.mxu0 0
    %3008 = vmatmul.mubr.bf16.gmra.mrb[0].mxu0 %v2970
    %v3009 = vpop.f32.mrb[0].mxu0
    %v3010 = vadd.f32 0.0, %v3009
    %v3011 = vpop.f32.mrb[0].mxu0
    %v3012 = vpop.f32.mrb[0].mxu0
    %v3013 = vpop.f32.mrb[0].mxu0
    %3014 = vdwg.mxu0
    %v3015 = vrcp.pop %v2965
    %v3016 = vmul.f32 %v3010, %v3015
    %3018 = vrot.lane.b32.xlu0 %v3016, 24
    %v3019 = vpop.permute.xlu0 %3018
    %3021 = vst.msk [vmem:[#allocation2] sm:$0xff] %vm669, %v3019
    %v3022 = vpack.c.bf16 %v2555, %v2555
    %3024 = vrot.lane.b32.xlu0 %v3022, 96
    %v3025 = vpop.permute.xlu0 %3024
    %v3027 = vsel %vm214, %v3022, 0
    %v3030 = vsel %vm214, %v3025, 0
    %3032 = vmatprep.subr.bf16.mxu0 0
    %3033 = vmatpush1.bf16.xpose.msra.mxu0 %v3030
    %3034 = vmatprep.subr.bf16.mxu0 0
    %3035 = vmatpush1.bf16.xpose.msra.mxu0 0
    %3036 = vmatprep.subr.bf16.mxu0 0
    %3037 = vmatpush1.bf16.xpose.msra.mxu0 0
    %3038 = vmatprep.subr.bf16.mxu0 0
    %3039 = vmatpush1.bf16.xpose.msra.mxu0 0
    %3040 = vmatprep.subr.bf16.mxu0 0
    %3041 = vmatpush1.bf16.xpose.msra.mxu0 0
    %3042 = vmatprep.subr.bf16.mxu0 0
    %3043 = vmatpush1.bf16.xpose.msra.mxu0 0
    %3044 = vmatprep.subr.bf16.mxu0 0
    %3045 = vmatpush1.bf16.xpose.msra.mxu0 0
    %3046 = vmatprep.subr.bf16.mxu0 0
    %3047 = vmatpush1.bf16.xpose.msra.mxu0 0
    %3048 = vmatprep.subr.bf16.mxu0 0
    %3049 = vmatpush1.bf16.xpose.msra.mxu0 0
    %3050 = vmatprep.subr.bf16.mxu0 0
    %3051 = vmatpush1.bf16.xpose.msra.mxu0 0
    %3052 = vmatprep.subr.bf16.mxu0 0
    %3053 = vmatpush1.bf16.xpose.msra.mxu0 0
    %3054 = vmatprep.subr.bf16.mxu0 0
    %3055 = vmatpush1.bf16.xpose.msra.mxu0 0
    %3056 = vmatprep.subr.bf16.mxu0 0
    %3057 = vmatpush1.bf16.xpose.msra.mxu0 0
    %3058 = vmatprep.subr.bf16.mxu0 0
    %3059 = vmatpush1.bf16.xpose.msra.mxu0 0
    %3060 = vmatprep.subr.bf16.mxu0 0
    %3061 = vmatpush1.bf16.xpose.msra.mxu0 0
    %3062 = vmatprep.subr.bf16.mxu0 0
    %3063 = vmatpush1.bf16.xpose.msra.mxu0 0
    %3064 = vmatprep.mubr.bf16.mxu0 0
    %3065 = vmatmul.mubr.bf16.gmra.mrb[0].mxu0 %v3027
    %v3066 = vpop.f32.mrb[0].mxu0
    %v3067 = vadd.f32 %v674, %v3066
    %v3068 = vpop.f32.mrb[0].mxu0
    %v3069 = vpop.f32.mrb[0].mxu0
    %v3070 = vpop.f32.mrb[0].mxu0
    %3071 = vdwg.mxu0
    %v3072 = vsel %vm214, %v3067, -inf
    %3073 = vmax.xlane.f32.xlu0 %v3072
    %v3074 = vpop.xlane.xlu0 %3073
    %v3075 = vsub.f32 %v3067, %v3074
    %v3076 = vmul.f32 %v3075, 1.442695
    %v3077 = vpow.pop %v3076
    %v3078 = vsel %vm214, %v3077, 0.0
    %3079 = vadd.xlane.f32.xlu0 %v3078
    %v3080 = vpop.xlane.xlu0 %3079
    %v3081 = vpack.c.bf16 %v3077, %v3077
    %3082 = vrot.lane.b32.xlu0 %v3022, 64
    %v3083 = vpop.permute.xlu0 %3082
    %v3085 = vsel %vm214, %v3081, 0
    %v3088 = vsel %vm276, %v3083, 0
    %3090 = vmatprep.subr.bf16.mxu0 0
    %3091 = vmatpush1.bf16.msra.mxu0 %v3088
    %3092 = vmatprep.subr.bf16.mxu0 0
    %3093 = vmatpush1.bf16.msra.mxu0 0
    %3094 = vmatprep.subr.bf16.mxu0 0
    %3095 = vmatpush1.bf16.msra.mxu0 0
    %3096 = vmatprep.subr.bf16.mxu0 0
    %3097 = vmatpush1.bf16.msra.mxu0 0
    %3098 = vmatprep.subr.bf16.mxu0 0
    %3099 = vmatpush1.bf16.msra.mxu0 0
    %3100 = vmatprep.subr.bf16.mxu0 0
    %3101 = vmatpush1.bf16.msra.mxu0 0
    %3102 = vmatprep.subr.bf16.mxu0 0
    %3103 = vmatpush1.bf16.msra.mxu0 0
    %3104 = vmatprep.subr.bf16.mxu0 0
    %3105 = vmatpush1.bf16.msra.mxu0 0
    %3106 = vmatprep.subr.bf16.mxu0 0
    %3107 = vmatpush1.bf16.msra.mxu0 0
    %3108 = vmatprep.subr.bf16.mxu0 0
    %3109 = vmatpush1.bf16.msra.mxu0 0
    %3110 = vmatprep.subr.bf16.mxu0 0
    %3111 = vmatpush1.bf16.msra.mxu0 0
    %3112 = vmatprep.subr.bf16.mxu0 0
    %3113 = vmatpush1.bf16.msra.mxu0 0
    %3114 = vmatprep.subr.bf16.mxu0 0
    %3115 = vmatpush1.bf16.msra.mxu0 0
    %3116 = vmatprep.subr.bf16.mxu0 0
    %3117 = vmatpush1.bf16.msra.mxu0 0
    %3118 = vmatprep.subr.bf16.mxu0 0
    %3119 = vmatpush1.bf16.msra.mxu0 0
    %3120 = vmatprep.subr.bf16.mxu0 0
    %3121 = vmatpush1.bf16.msra.mxu0 0
    %3122 = vmatprep.mubr.bf16.mxu0 0
    %3123 = vmatmul.mubr.bf16.gmra.mrb[0].mxu0 %v3085
    %v3124 = vpop.f32.mrb[0].mxu0
    %v3125 = vadd.f32 0.0, %v3124
    %v3126 = vpop.f32.mrb[0].mxu0
    %v3127 = vpop.f32.mrb[0].mxu0
    %v3128 = vpop.f32.mrb[0].mxu0
    %3129 = vdwg.mxu0
    %v3130 = vrcp.pop %v3080
    %v3131 = vmul.f32 %v3125, %v3130
    %3132 = vst.msk [vmem:[#allocation2 + $0x8] sm:$0xff] %vm214, %v3131
    %3133 = vrot.lane.b32.xlu0 %v3022, 120
    %v3134 = vpop.permute.xlu0 %3133
    %3135 = vrot.lane.b32.xlu0 %v3022, 88
    %v3136 = vpop.permute.xlu0 %3135
    %v3138 = vsel %vm214, %v3134, 0
    %v3141 = vsel %vm214, %v3136, 0
    %3143 = vmatprep.subr.bf16.mxu0 0
    %3144 = vmatpush1.bf16.xpose.msra.mxu0 %v3141
    %3145 = vmatprep.subr.bf16.mxu0 0
    %3146 = vmatpush1.bf16.xpose.msra.mxu0 0
    %3147 = vmatprep.subr.bf16.mxu0 0
    %3148 = vmatpush1.bf16.xpose.msra.mxu0 0
    %3149 = vmatprep.subr.bf16.mxu0 0
    %3150 = vmatpush1.bf16.xpose.msra.mxu0 0
    %3151 = vmatprep.subr.bf16.mxu0 0
    %3152 = vmatpush1.bf16.xpose.msra.mxu0 0
    %3153 = vmatprep.subr.bf16.mxu0 0
    %3154 = vmatpush1.bf16.xpose.msra.mxu0 0
    %3155 = vmatprep.subr.bf16.mxu0 0
    %3156 = vmatpush1.bf16.xpose.msra.mxu0 0
    %3157 = vmatprep.subr.bf16.mxu0 0
    %3158 = vmatpush1.bf16.xpose.msra.mxu0 0
    %3159 = vmatprep.subr.bf16.mxu0 0
    %3160 = vmatpush1.bf16.xpose.msra.mxu0 0
    %3161 = vmatprep.subr.bf16.mxu0 0
    %3162 = vmatpush1.bf16.xpose.msra.mxu0 0
    %3163 = vmatprep.subr.bf16.mxu0 0
    %3164 = vmatpush1.bf16.xpose.msra.mxu0 0
    %3165 = vmatprep.subr.bf16.mxu0 0
    %3166 = vmatpush1.bf16.xpose.msra.mxu0 0
    %3167 = vmatprep.subr.bf16.mxu0 0
    %3168 = vmatpush1.bf16.xpose.msra.mxu0 0
    %3169 = vmatprep.subr.bf16.mxu0 0
    %3170 = vmatpush1.bf16.xpose.msra.mxu0 0
    %3171 = vmatprep.subr.bf16.mxu0 0
    %3172 = vmatpush1.bf16.xpose.msra.mxu0 0
    %3173 = vmatprep.subr.bf16.mxu0 0
    %3174 = vmatpush1.bf16.xpose.msra.mxu0 0
    %3175 = vmatprep.mubr.bf16.mxu0 0
    %3176 = vmatmul.mubr.bf16.gmra.mrb[0].mxu0 %v3138
    %v3177 = vpop.f32.mrb[0].mxu0
    %v3178 = vadd.f32 %v674, %v3177
    %v3179 = vpop.f32.mrb[0].mxu0
    %v3180 = vpop.f32.mrb[0].mxu0
    %v3181 = vpop.f32.mrb[0].mxu0
    %3182 = vdwg.mxu0
    %v3183 = vsel %vm214, %v3178, -inf
    %3184 = vmax.xlane.f32.xlu0 %v3183
    %v3185 = vpop.xlane.xlu0 %3184
    %v3186 = vsub.f32 %v3178, %v3185
    %v3187 = vmul.f32 %v3186, 1.442695
    %v3188 = vpow.pop %v3187
    %v3189 = vsel %vm214, %v3188, 0.0
    %3190 = vadd.xlane.f32.xlu0 %v3189
    %v3191 = vpop.xlane.xlu0 %3190
    %v3192 = vpack.c.bf16 %v3188, %v3188
    %3193 = vrot.lane.b32.xlu0 %v3022, 56
    %v3194 = vpop.permute.xlu0 %3193
    %v3196 = vsel %vm214, %v3192, 0
    %v3199 = vsel %vm276, %v3194, 0
    %3201 = vmatprep.subr.bf16.mxu0 0
    %3202 = vmatpush1.bf16.msra.mxu0 %v3199
    %3203 = vmatprep.subr.bf16.mxu0 0
    %3204 = vmatpush1.bf16.msra.mxu0 0
    %3205 = vmatprep.subr.bf16.mxu0 0
    %3206 = vmatpush1.bf16.msra.mxu0 0
    %3207 = vmatprep.subr.bf16.mxu0 0
    %3208 = vmatpush1.bf16.msra.mxu0 0
    %3209 = vmatprep.subr.bf16.mxu0 0
    %3210 = vmatpush1.bf16.msra.mxu0 0
    %3211 = vmatprep.subr.bf16.mxu0 0
    %3212 = vmatpush1.bf16.msra.mxu0 0
    %3213 = vmatprep.subr.bf16.mxu0 0
    %3214 = vmatpush1.bf16.msra.mxu0 0
    %3215 = vmatprep.subr.bf16.mxu0 0
    %3216 = vmatpush1.bf16.msra.mxu0 0
    %3217 = vmatprep.subr.bf16.mxu0 0
    %3218 = vmatpush1.bf16.msra.mxu0 0
    %3219 = vmatprep.subr.bf16.mxu0 0
    %3220 = vmatpush1.bf16.msra.mxu0 0
    %3221 = vmatprep.subr.bf16.mxu0 0
    %3222 = vmatpush1.bf16.msra.mxu0 0
    %3223 = vmatprep.subr.bf16.mxu0 0
    %3224 = vmatpush1.bf16.msra.mxu0 0
    %3225 = vmatprep.subr.bf16.mxu0 0
    %3226 = vmatpush1.bf16.msra.mxu0 0
    %3227 = vmatprep.subr.bf16.mxu0 0
    %3228 = vmatpush1.bf16.msra.mxu0 0
    %3229 = vmatprep.subr.bf16.mxu0 0
    %3230 = vmatpush1.bf16.msra.mxu0 0
    %3231 = vmatprep.subr.bf16.mxu0 0
    %3232 = vmatpush1.bf16.msra.mxu0 0
    %3233 = vmatprep.mubr.bf16.mxu0 0
    %3234 = vmatmul.mubr.bf16.gmra.mrb[0].mxu0 %v3196
    %v3235 = vpop.f32.mrb[0].mxu0
    %v3236 = vadd.f32 0.0, %v3235
    %v3237 = vpop.f32.mrb[0].mxu0
    %v3238 = vpop.f32.mrb[0].mxu0
    %v3239 = vpop.f32.mrb[0].mxu0
    %3240 = vdwg.mxu0
    %v3241 = vrcp.pop %v3191
    %v3242 = vmul.f32 %v3236, %v3241
    %3244 = vrot.lane.b32.xlu0 %v3242, 8
    %v3245 = vpop.permute.xlu0 %3244
    %3247 = vst.msk [vmem:[#allocation2 + $0x8] sm:$0xff] %vm437, %v3245
    %3248 = vrot.lane.b32.xlu0 %v3022, 112
    %v3249 = vpop.permute.xlu0 %3248
    %3250 = vrot.lane.b32.xlu0 %v3022, 80
    %v3251 = vpop.permute.xlu0 %3250
    %v3253 = vsel %vm214, %v3249, 0
    %v3256 = vsel %vm214, %v3251, 0
    %3258 = vmatprep.subr.bf16.mxu0 0
    %3259 = vmatpush1.bf16.xpose.msra.mxu0 %v3256
    %3260 = vmatprep.subr.bf16.mxu0 0
    %3261 = vmatpush1.bf16.xpose.msra.mxu0 0
    %3262 = vmatprep.subr.bf16.mxu0 0
    %3263 = vmatpush1.bf16.xpose.msra.mxu0 0
    %3264 = vmatprep.subr.bf16.mxu0 0
    %3265 = vmatpush1.bf16.xpose.msra.mxu0 0
    %3266 = vmatprep.subr.bf16.mxu0 0
    %3267 = vmatpush1.bf16.xpose.msra.mxu0 0
    %3268 = vmatprep.subr.bf16.mxu0 0
    %3269 = vmatpush1.bf16.xpose.msra.mxu0 0
    %3270 = vmatprep.subr.bf16.mxu0 0
    %3271 = vmatpush1.bf16.xpose.msra.mxu0 0
    %3272 = vmatprep.subr.bf16.mxu0 0
    %3273 = vmatpush1.bf16.xpose.msra.mxu0 0
    %3274 = vmatprep.subr.bf16.mxu0 0
    %3275 = vmatpush1.bf16.xpose.msra.mxu0 0
    %3276 = vmatprep.subr.bf16.mxu0 0
    %3277 = vmatpush1.bf16.xpose.msra.mxu0 0
    %3278 = vmatprep.subr.bf16.mxu0 0
    %3279 = vmatpush1.bf16.xpose.msra.mxu0 0
    %3280 = vmatprep.subr.bf16.mxu0 0
    %3281 = vmatpush1.bf16.xpose.msra.mxu0 0
    %3282 = vmatprep.subr.bf16.mxu0 0
    %3283 = vmatpush1.bf16.xpose.msra.mxu0 0
    %3284 = vmatprep.subr.bf16.mxu0 0
    %3285 = vmatpush1.bf16.xpose.msra.mxu0 0
    %3286 = vmatprep.subr.bf16.mxu0 0
    %3287 = vmatpush1.bf16.xpose.msra.mxu0 0
    %3288 = vmatprep.subr.bf16.mxu0 0
    %3289 = vmatpush1.bf16.xpose.msra.mxu0 0
    %3290 = vmatprep.mubr.bf16.mxu0 0
    %3291 = vmatmul.mubr.bf16.gmra.mrb[0].mxu0 %v3253
    %v3292 = vpop.f32.mrb[0].mxu0
    %v3293 = vadd.f32 %v674, %v3292
    %v3294 = vpop.f32.mrb[0].mxu0
    %v3295 = vpop.f32.mrb[0].mxu0
    %v3296 = vpop.f32.mrb[0].mxu0
    %3297 = vdwg.mxu0
    %v3298 = vsel %vm214, %v3293, -inf
    %3299 = vmax.xlane.f32.xlu0 %v3298
    %v3300 = vpop.xlane.xlu0 %3299
    %v3301 = vsub.f32 %v3293, %v3300
    %v3302 = vmul.f32 %v3301, 1.442695
    %v3303 = vpow.pop %v3302
    %v3304 = vsel %vm214, %v3303, 0.0
    %3305 = vadd.xlane.f32.xlu0 %v3304
    %v3306 = vpop.xlane.xlu0 %3305
    %v3307 = vpack.c.bf16 %v3303, %v3303
    %3308 = vrot.lane.b32.xlu0 %v3022, 48
    %v3309 = vpop.permute.xlu0 %3308
    %v3311 = vsel %vm214, %v3307, 0
    %v3314 = vsel %vm276, %v3309, 0
    %3316 = vmatprep.subr.bf16.mxu0 0
    %3317 = vmatpush1.bf16.msra.mxu0 %v3314
    %3318 = vmatprep.subr.bf16.mxu0 0
    %3319 = vmatpush1.bf16.msra.mxu0 0
    %3320 = vmatprep.subr.bf16.mxu0 0
    %3321 = vmatpush1.bf16.msra.mxu0 0
    %3322 = vmatprep.subr.bf16.mxu0 0
    %3323 = vmatpush1.bf16.msra.mxu0 0
    %3324 = vmatprep.subr.bf16.mxu0 0
    %3325 = vmatpush1.bf16.msra.mxu0 0
    %3326 = vmatprep.subr.bf16.mxu0 0
    %3327 = vmatpush1.bf16.msra.mxu0 0
    %3328 = vmatprep.subr.bf16.mxu0 0
    %3329 = vmatpush1.bf16.msra.mxu0 0
    %3330 = vmatprep.subr.bf16.mxu0 0
    %3331 = vmatpush1.bf16.msra.mxu0 0
    %3332 = vmatprep.subr.bf16.mxu0 0
    %3333 = vmatpush1.bf16.msra.mxu0 0
    %3334 = vmatprep.subr.bf16.mxu0 0
    %3335 = vmatpush1.bf16.msra.mxu0 0
    %3336 = vmatprep.subr.bf16.mxu0 0
    %3337 = vmatpush1.bf16.msra.mxu0 0
    %3338 = vmatprep.subr.bf16.mxu0 0
    %3339 = vmatpush1.bf16.msra.mxu0 0
    %3340 = vmatprep.subr.bf16.mxu0 0
    %3341 = vmatpush1.bf16.msra.mxu0 0
    %3342 = vmatprep.subr.bf16.mxu0 0
    %3343 = vmatpush1.bf16.msra.mxu0 0
    %3344 = vmatprep.subr.bf16.mxu0 0
    %3345 = vmatpush1.bf16.msra.mxu0 0
    %3346 = vmatprep.subr.bf16.mxu0 0
    %3347 = vmatpush1.bf16.msra.mxu0 0
    %3348 = vmatprep.mubr.bf16.mxu0 0
    %3349 = vmatmul.mubr.bf16.gmra.mrb[0].mxu0 %v3311
    %v3350 = vpop.f32.mrb[0].mxu0
    %v3351 = vadd.f32 0.0, %v3350
    %v3352 = vpop.f32.mrb[0].mxu0
    %v3353 = vpop.f32.mrb[0].mxu0
    %v3354 = vpop.f32.mrb[0].mxu0
    %3355 = vdwg.mxu0
    %v3356 = vrcp.pop %v3306
    %v3357 = vmul.f32 %v3351, %v3356
    %3359 = vrot.lane.b32.xlu0 %v3357, 16
    %v3360 = vpop.permute.xlu0 %3359
    %3362 = vst.msk [vmem:[#allocation2 + $0x8] sm:$0xff] %vm553, %v3360
    %3363 = vrot.lane.b32.xlu0 %v3022, 104
    %v3364 = vpop.permute.xlu0 %3363
    %3365 = vrot.lane.b32.xlu0 %v3022, 72
    %v3366 = vpop.permute.xlu0 %3365
    %v3368 = vsel %vm214, %v3364, 0
    %v3371 = vsel %vm214, %v3366, 0
    %3373 = vmatprep.subr.bf16.mxu0 0
    %3374 = vmatpush1.bf16.xpose.msra.mxu0 %v3371
    %3375 = vmatprep.subr.bf16.mxu0 0
    %3376 = vmatpush1.bf16.xpose.msra.mxu0 0
    %3377 = vmatprep.subr.bf16.mxu0 0
    %3378 = vmatpush1.bf16.xpose.msra.mxu0 0
    %3379 = vmatprep.subr.bf16.mxu0 0
    %3380 = vmatpush1.bf16.xpose.msra.mxu0 0
    %3381 = vmatprep.subr.bf16.mxu0 0
    %3382 = vmatpush1.bf16.xpose.msra.mxu0 0
    %3383 = vmatprep.subr.bf16.mxu0 0
    %3384 = vmatpush1.bf16.xpose.msra.mxu0 0
    %3385 = vmatprep.subr.bf16.mxu0 0
    %3386 = vmatpush1.bf16.xpose.msra.mxu0 0
    %3387 = vmatprep.subr.bf16.mxu0 0
    %3388 = vmatpush1.bf16.xpose.msra.mxu0 0
    %3389 = vmatprep.subr.bf16.mxu0 0
    %3390 = vmatpush1.bf16.xpose.msra.mxu0 0
    %3391 = vmatprep.subr.bf16.mxu0 0
    %3392 = vmatpush1.bf16.xpose.msra.mxu0 0
    %3393 = vmatprep.subr.bf16.mxu0 0
    %3394 = vmatpush1.bf16.xpose.msra.mxu0 0
    %3395 = vmatprep.subr.bf16.mxu0 0
    %3396 = vmatpush1.bf16.xpose.msra.mxu0 0
    %3397 = vmatprep.subr.bf16.mxu0 0
    %3398 = vmatpush1.bf16.xpose.msra.mxu0 0
    %3399 = vmatprep.subr.bf16.mxu0 0
    %3400 = vmatpush1.bf16.xpose.msra.mxu0 0
    %3401 = vmatprep.subr.bf16.mxu0 0
    %3402 = vmatpush1.bf16.xpose.msra.mxu0 0
    %3403 = vmatprep.subr.bf16.mxu0 0
    %3404 = vmatpush1.bf16.xpose.msra.mxu0 0
    %3405 = vmatprep.mubr.bf16.mxu0 0
    %3406 = vmatmul.mubr.bf16.gmra.mrb[0].mxu0 %v3368
    %v3407 = vpop.f32.mrb[0].mxu0
    %v3408 = vadd.f32 %v674, %v3407
    %v3409 = vpop.f32.mrb[0].mxu0
    %v3410 = vpop.f32.mrb[0].mxu0
    %v3411 = vpop.f32.mrb[0].mxu0
    %3412 = vdwg.mxu0
    %v3413 = vsel %vm214, %v3408, -inf
    %3414 = vmax.xlane.f32.xlu0 %v3413
    %v3415 = vpop.xlane.xlu0 %3414
    %v3416 = vsub.f32 %v3408, %v3415
    %v3417 = vmul.f32 %v3416, 1.442695
    %v3418 = vpow.pop %v3417
    %v3419 = vsel %vm214, %v3418, 0.0
    %3420 = vadd.xlane.f32.xlu0 %v3419
    %v3421 = vpop.xlane.xlu0 %3420
    %v3422 = vpack.c.bf16 %v3418, %v3418
    %3423 = vrot.lane.b32.xlu0 %v3022, 40
    %v3424 = vpop.permute.xlu0 %3423
    %v3426 = vsel %vm214, %v3422, 0
    %v3429 = vsel %vm276, %v3424, 0
    %3431 = vmatprep.subr.bf16.mxu0 0
    %3432 = vmatpush1.bf16.msra.mxu0 %v3429
    %3433 = vmatprep.subr.bf16.mxu0 0
    %3434 = vmatpush1.bf16.msra.mxu0 0
    %3435 = vmatprep.subr.bf16.mxu0 0
    %3436 = vmatpush1.bf16.msra.mxu0 0
    %3437 = vmatprep.subr.bf16.mxu0 0
    %3438 = vmatpush1.bf16.msra.mxu0 0
    %3439 = vmatprep.subr.bf16.mxu0 0
    %3440 = vmatpush1.bf16.msra.mxu0 0
    %3441 = vmatprep.subr.bf16.mxu0 0
    %3442 = vmatpush1.bf16.msra.mxu0 0
    %3443 = vmatprep.subr.bf16.mxu0 0
    %3444 = vmatpush1.bf16.msra.mxu0 0
    %3445 = vmatprep.subr.bf16.mxu0 0
    %3446 = vmatpush1.bf16.msra.mxu0 0
    %3447 = vmatprep.subr.bf16.mxu0 0
    %3448 = vmatpush1.bf16.msra.mxu0 0
    %3449 = vmatprep.subr.bf16.mxu0 0
    %3450 = vmatpush1.bf16.msra.mxu0 0
    %3451 = vmatprep.subr.bf16.mxu0 0
    %3452 = vmatpush1.bf16.msra.mxu0 0
    %3453 = vmatprep.subr.bf16.mxu0 0
    %3454 = vmatpush1.bf16.msra.mxu0 0
    %3455 = vmatprep.subr.bf16.mxu0 0
    %3456 = vmatpush1.bf16.msra.mxu0 0
    %3457 = vmatprep.subr.bf16.mxu0 0
    %3458 = vmatpush1.bf16.msra.mxu0 0
    %3459 = vmatprep.subr.bf16.mxu0 0
    %3460 = vmatpush1.bf16.msra.mxu0 0
    %3461 = vmatprep.subr.bf16.mxu0 0
    %3462 = vmatpush1.bf16.msra.mxu0 0
    %3463 = vmatprep.mubr.bf16.mxu0 0
    %3464 = vmatmul.mubr.bf16.gmra.mrb[0].mxu0 %v3426
    %v3465 = vpop.f32.mrb[0].mxu0
    %v3466 = vadd.f32 0.0, %v3465
    %v3467 = vpop.f32.mrb[0].mxu0
    %v3468 = vpop.f32.mrb[0].mxu0
    %v3469 = vpop.f32.mrb[0].mxu0
    %3470 = vdwg.mxu0
    %v3471 = vrcp.pop %v3421
    %v3472 = vmul.f32 %v3466, %v3471
    %3474 = vrot.lane.b32.xlu0 %v3472, 24
    %v3475 = vpop.permute.xlu0 %3474
    %3477 = vst.msk [vmem:[#allocation2 + $0x8] sm:$0xff] %vm669, %v3475
    %v3478 = vpack.c.bf16 %v2560, %v2560
    %3480 = vrot.lane.b32.xlu0 %v3478, 96
    %v3481 = vpop.permute.xlu0 %3480
    %v3483 = vsel %vm214, %v3478, 0
    %v3486 = vsel %vm214, %v3481, 0
    %3488 = vmatprep.subr.bf16.mxu0 0
    %3489 = vmatpush1.bf16.xpose.msra.mxu0 %v3486
    %3490 = vmatprep.subr.bf16.mxu0 0
    %3491 = vmatpush1.bf16.xpose.msra.mxu0 0
    %3492 = vmatprep.subr.bf16.mxu0 0
    %3493 = vmatpush1.bf16.xpose.msra.mxu0 0
    %3494 = vmatprep.subr.bf16.mxu0 0
    %3495 = vmatpush1.bf16.xpose.msra.mxu0 0
    %3496 = vmatprep.subr.bf16.mxu0 0
    %3497 = vmatpush1.bf16.xpose.msra.mxu0 0
    %3498 = vmatprep.subr.bf16.mxu0 0
    %3499 = vmatpush1.bf16.xpose.msra.mxu0 0
    %3500 = vmatprep.subr.bf16.mxu0 0
    %3501 = vmatpush1.bf16.xpose.msra.mxu0 0
    %3502 = vmatprep.subr.bf16.mxu0 0
    %3503 = vmatpush1.bf16.xpose.msra.mxu0 0
    %3504 = vmatprep.subr.bf16.mxu0 0
    %3505 = vmatpush1.bf16.xpose.msra.mxu0 0
    %3506 = vmatprep.subr.bf16.mxu0 0
    %3507 = vmatpush1.bf16.xpose.msra.mxu0 0
    %3508 = vmatprep.subr.bf16.mxu0 0
    %3509 = vmatpush1.bf16.xpose.msra.mxu0 0
    %3510 = vmatprep.subr.bf16.mxu0 0
    %3511 = vmatpush1.bf16.xpose.msra.mxu0 0
    %3512 = vmatprep.subr.bf16.mxu0 0
    %3513 = vmatpush1.bf16.xpose.msra.mxu0 0
    %3514 = vmatprep.subr.bf16.mxu0 0
    %3515 = vmatpush1.bf16.xpose.msra.mxu0 0
    %3516 = vmatprep.subr.bf16.mxu0 0
    %3517 = vmatpush1.bf16.xpose.msra.mxu0 0
    %3518 = vmatprep.subr.bf16.mxu0 0
    %3519 = vmatpush1.bf16.xpose.msra.mxu0 0
    %3520 = vmatprep.mubr.bf16.mxu0 0
    %3521 = vmatmul.mubr.bf16.gmra.mrb[0].mxu0 %v3483
    %v3522 = vpop.f32.mrb[0].mxu0
    %v3523 = vadd.f32 %v1134, %v3522
    %v3524 = vpop.f32.mrb[0].mxu0
    %v3525 = vpop.f32.mrb[0].mxu0
    %v3526 = vpop.f32.mrb[0].mxu0
    %3527 = vdwg.mxu0
    %v3528 = vsel %vm214, %v3523, -inf
    %3529 = vmax.xlane.f32.xlu0 %v3528
    %v3530 = vpop.xlane.xlu0 %3529
    %v3531 = vsub.f32 %v3523, %v3530
    %v3532 = vmul.f32 %v3531, 1.442695
    %v3533 = vpow.pop %v3532
    %v3534 = vsel %vm214, %v3533, 0.0
    %3535 = vadd.xlane.f32.xlu0 %v3534
    %v3536 = vpop.xlane.xlu0 %3535
    %v3537 = vpack.c.bf16 %v3533, %v3533
    %3538 = vrot.lane.b32.xlu0 %v3478, 64
    %v3539 = vpop.permute.xlu0 %3538
    %v3541 = vsel %vm214, %v3537, 0
    %v3544 = vsel %vm276, %v3539, 0
    %3546 = vmatprep.subr.bf16.mxu0 0
    %3547 = vmatpush1.bf16.msra.mxu0 %v3544
    %3548 = vmatprep.subr.bf16.mxu0 0
    %3549 = vmatpush1.bf16.msra.mxu0 0
    %3550 = vmatprep.subr.bf16.mxu0 0
    %3551 = vmatpush1.bf16.msra.mxu0 0
    %3552 = vmatprep.subr.bf16.mxu0 0
    %3553 = vmatpush1.bf16.msra.mxu0 0
    %3554 = vmatprep.subr.bf16.mxu0 0
    %3555 = vmatpush1.bf16.msra.mxu0 0
    %3556 = vmatprep.subr.bf16.mxu0 0
    %3557 = vmatpush1.bf16.msra.mxu0 0
    %3558 = vmatprep.subr.bf16.mxu0 0
    %3559 = vmatpush1.bf16.msra.mxu0 0
    %3560 = vmatprep.subr.bf16.mxu0 0
    %3561 = vmatpush1.bf16.msra.mxu0 0
    %3562 = vmatprep.subr.bf16.mxu0 0
    %3563 = vmatpush1.bf16.msra.mxu0 0
    %3564 = vmatprep.subr.bf16.mxu0 0
    %3565 = vmatpush1.bf16.msra.mxu0 0
    %3566 = vmatprep.subr.bf16.mxu0 0
    %3567 = vmatpush1.bf16.msra.mxu0 0
    %3568 = vmatprep.subr.bf16.mxu0 0
    %3569 = vmatpush1.bf16.msra.mxu0 0
    %3570 = vmatprep.subr.bf16.mxu0 0
    %3571 = vmatpush1.bf16.msra.mxu0 0
    %3572 = vmatprep.subr.bf16.mxu0 0
    %3573 = vmatpush1.bf16.msra.mxu0 0
    %3574 = vmatprep.subr.bf16.mxu0 0
    %3575 = vmatpush1.bf16.msra.mxu0 0
    %3576 = vmatprep.subr.bf16.mxu0 0
    %3577 = vmatpush1.bf16.msra.mxu0 0
    %3578 = vmatprep.mubr.bf16.mxu0 0
    %3579 = vmatmul.mubr.bf16.gmra.mrb[0].mxu0 %v3541
    %v3580 = vpop.f32.mrb[0].mxu0
    %v3581 = vadd.f32 0.0, %v3580
    %v3582 = vpop.f32.mrb[0].mxu0
    %v3583 = vpop.f32.mrb[0].mxu0
    %v3584 = vpop.f32.mrb[0].mxu0
    %3585 = vdwg.mxu0
    %v3586 = vrcp.pop %v3536
    %v3587 = vmul.f32 %v3581, %v3586
    %3588 = vst.msk [vmem:[#allocation2 + $0x10] sm:$0xff] %vm214, %v3587
    %3589 = vrot.lane.b32.xlu0 %v3478, 120
    %v3590 = vpop.permute.xlu0 %3589
    %3591 = vrot.lane.b32.xlu0 %v3478, 88
    %v3592 = vpop.permute.xlu0 %3591
    %v3594 = vsel %vm214, %v3590, 0
    %v3597 = vsel %vm214, %v3592, 0
    %3599 = vmatprep.subr.bf16.mxu0 0
    %3600 = vmatpush1.bf16.xpose.msra.mxu0 %v3597
    %3601 = vmatprep.subr.bf16.mxu0 0
    %3602 = vmatpush1.bf16.xpose.msra.mxu0 0
    %3603 = vmatprep.subr.bf16.mxu0 0
    %3604 = vmatpush1.bf16.xpose.msra.mxu0 0
    %3605 = vmatprep.subr.bf16.mxu0 0
    %3606 = vmatpush1.bf16.xpose.msra.mxu0 0
    %3607 = vmatprep.subr.bf16.mxu0 0
    %3608 = vmatpush1.bf16.xpose.msra.mxu0 0
    %3609 = vmatprep.subr.bf16.mxu0 0
    %3610 = vmatpush1.bf16.xpose.msra.mxu0 0
    %3611 = vmatprep.subr.bf16.mxu0 0
    %3612 = vmatpush1.bf16.xpose.msra.mxu0 0
    %3613 = vmatprep.subr.bf16.mxu0 0
    %3614 = vmatpush1.bf16.xpose.msra.mxu0 0
    %3615 = vmatprep.subr.bf16.mxu0 0
    %3616 = vmatpush1.bf16.xpose.msra.mxu0 0
    %3617 = vmatprep.subr.bf16.mxu0 0
    %3618 = vmatpush1.bf16.xpose.msra.mxu0 0
    %3619 = vmatprep.subr.bf16.mxu0 0
    %3620 = vmatpush1.bf16.xpose.msra.mxu0 0
    %3621 = vmatprep.subr.bf16.mxu0 0
    %3622 = vmatpush1.bf16.xpose.msra.mxu0 0
    %3623 = vmatprep.subr.bf16.mxu0 0
    %3624 = vmatpush1.bf16.xpose.msra.mxu0 0
    %3625 = vmatprep.subr.bf16.mxu0 0
    %3626 = vmatpush1.bf16.xpose.msra.mxu0 0
    %3627 = vmatprep.subr.bf16.mxu0 0
    %3628 = vmatpush1.bf16.xpose.msra.mxu0 0
    %3629 = vmatprep.subr.bf16.mxu0 0
    %3630 = vmatpush1.bf16.xpose.msra.mxu0 0
    %3631 = vmatprep.mubr.bf16.mxu0 0
    %3632 = vmatmul.mubr.bf16.gmra.mrb[0].mxu0 %v3594
    %v3633 = vpop.f32.mrb[0].mxu0
    %v3634 = vadd.f32 %v1134, %v3633
    %v3635 = vpop.f32.mrb[0].mxu0
    %v3636 = vpop.f32.mrb[0].mxu0
    %v3637 = vpop.f32.mrb[0].mxu0
    %3638 = vdwg.mxu0
    %v3639 = vsel %vm214, %v3634, -inf
    %3640 = vmax.xlane.f32.xlu0 %v3639
    %v3641 = vpop.xlane.xlu0 %3640
    %v3642 = vsub.f32 %v3634, %v3641
    %v3643 = vmul.f32 %v3642, 1.442695
    %v3644 = vpow.pop %v3643
    %v3645 = vsel %vm214, %v3644, 0.0
    %3646 = vadd.xlane.f32.xlu0 %v3645
    %v3647 = vpop.xlane.xlu0 %3646
    %v3648 = vpack.c.bf16 %v3644, %v3644
    %3649 = vrot.lane.b32.xlu0 %v3478, 56
    %v3650 = vpop.permute.xlu0 %3649
    %v3652 = vsel %vm214, %v3648, 0
    %v3655 = vsel %vm276, %v3650, 0
    %3657 = vmatprep.subr.bf16.mxu0 0
    %3658 = vmatpush1.bf16.msra.mxu0 %v3655
    %3659 = vmatprep.subr.bf16.mxu0 0
    %3660 = vmatpush1.bf16.msra.mxu0 0
    %3661 = vmatprep.subr.bf16.mxu0 0
    %3662 = vmatpush1.bf16.msra.mxu0 0
    %3663 = vmatprep.subr.bf16.mxu0 0
    %3664 = vmatpush1.bf16.msra.mxu0 0
    %3665 = vmatprep.subr.bf16.mxu0 0
    %3666 = vmatpush1.bf16.msra.mxu0 0
    %3667 = vmatprep.subr.bf16.mxu0 0
    %3668 = vmatpush1.bf16.msra.mxu0 0
    %3669 = vmatprep.subr.bf16.mxu0 0
    %3670 = vmatpush1.bf16.msra.mxu0 0
    %3671 = vmatprep.subr.bf16.mxu0 0
    %3672 = vmatpush1.bf16.msra.mxu0 0
    %3673 = vmatprep.subr.bf16.mxu0 0
    %3674 = vmatpush1.bf16.msra.mxu0 0
    %3675 = vmatprep.subr.bf16.mxu0 0
    %3676 = vmatpush1.bf16.msra.mxu0 0
    %3677 = vmatprep.subr.bf16.mxu0 0
    %3678 = vmatpush1.bf16.msra.mxu0 0
    %3679 = vmatprep.subr.bf16.mxu0 0
    %3680 = vmatpush1.bf16.msra.mxu0 0
    %3681 = vmatprep.subr.bf16.mxu0 0
    %3682 = vmatpush1.bf16.msra.mxu0 0
    %3683 = vmatprep.subr.bf16.mxu0 0
    %3684 = vmatpush1.bf16.msra.mxu0 0
    %3685 = vmatprep.subr.bf16.mxu0 0
    %3686 = vmatpush1.bf16.msra.mxu0 0
    %3687 = vmatprep.subr.bf16.mxu0 0
    %3688 = vmatpush1.bf16.msra.mxu0 0
    %3689 = vmatprep.mubr.bf16.mxu0 0
    %3690 = vmatmul.mubr.bf16.gmra.mrb[0].mxu0 %v3652
    %v3691 = vpop.f32.mrb[0].mxu0
    %v3692 = vadd.f32 0.0, %v3691
    %v3693 = vpop.f32.mrb[0].mxu0
    %v3694 = vpop.f32.mrb[0].mxu0
    %v3695 = vpop.f32.mrb[0].mxu0
    %3696 = vdwg.mxu0
    %v3697 = vrcp.pop %v3647
    %v3698 = vmul.f32 %v3692, %v3697
    %3700 = vrot.lane.b32.xlu0 %v3698, 8
    %v3701 = vpop.permute.xlu0 %3700
    %3703 = vst.msk [vmem:[#allocation2 + $0x10] sm:$0xff] %vm437, %v3701
    %3704 = vrot.lane.b32.xlu0 %v3478, 112
    %v3705 = vpop.permute.xlu0 %3704
    %3706 = vrot.lane.b32.xlu0 %v3478, 80
    %v3707 = vpop.permute.xlu0 %3706
    %v3709 = vsel %vm214, %v3705, 0
    %v3712 = vsel %vm214, %v3707, 0
    %3714 = vmatprep.subr.bf16.mxu0 0
    %3715 = vmatpush1.bf16.xpose.msra.mxu0 %v3712
    %3716 = vmatprep.subr.bf16.mxu0 0
    %3717 = vmatpush1.bf16.xpose.msra.mxu0 0
    %3718 = vmatprep.subr.bf16.mxu0 0
    %3719 = vmatpush1.bf16.xpose.msra.mxu0 0
    %3720 = vmatprep.subr.bf16.mxu0 0
    %3721 = vmatpush1.bf16.xpose.msra.mxu0 0
    %3722 = vmatprep.subr.bf16.mxu0 0
    %3723 = vmatpush1.bf16.xpose.msra.mxu0 0
    %3724 = vmatprep.subr.bf16.mxu0 0
    %3725 = vmatpush1.bf16.xpose.msra.mxu0 0
    %3726 = vmatprep.subr.bf16.mxu0 0
    %3727 = vmatpush1.bf16.xpose.msra.mxu0 0
    %3728 = vmatprep.subr.bf16.mxu0 0
    %3729 = vmatpush1.bf16.xpose.msra.mxu0 0
    %3730 = vmatprep.subr.bf16.mxu0 0
    %3731 = vmatpush1.bf16.xpose.msra.mxu0 0
    %3732 = vmatprep.subr.bf16.mxu0 0
    %3733 = vmatpush1.bf16.xpose.msra.mxu0 0
    %3734 = vmatprep.subr.bf16.mxu0 0
    %3735 = vmatpush1.bf16.xpose.msra.mxu0 0
    %3736 = vmatprep.subr.bf16.mxu0 0
    %3737 = vmatpush1.bf16.xpose.msra.mxu0 0
    %3738 = vmatprep.subr.bf16.mxu0 0
    %3739 = vmatpush1.bf16.xpose.msra.mxu0 0
    %3740 = vmatprep.subr.bf16.mxu0 0
    %3741 = vmatpush1.bf16.xpose.msra.mxu0 0
    %3742 = vmatprep.subr.bf16.mxu0 0
    %3743 = vmatpush1.bf16.xpose.msra.mxu0 0
    %3744 = vmatprep.subr.bf16.mxu0 0
    %3745 = vmatpush1.bf16.xpose.msra.mxu0 0
    %3746 = vmatprep.mubr.bf16.mxu0 0
    %3747 = vmatmul.mubr.bf16.gmra.mrb[0].mxu0 %v3709
    %v3748 = vpop.f32.mrb[0].mxu0
    %v3749 = vadd.f32 %v1134, %v3748
    %v3750 = vpop.f32.mrb[0].mxu0
    %v3751 = vpop.f32.mrb[0].mxu0
    %v3752 = vpop.f32.mrb[0].mxu0
    %3753 = vdwg.mxu0
    %v3754 = vsel %vm214, %v3749, -inf
    %3755 = vmax.xlane.f32.xlu0 %v3754
    %v3756 = vpop.xlane.xlu0 %3755
    %v3757 = vsub.f32 %v3749, %v3756
    %v3758 = vmul.f32 %v3757, 1.442695
    %v3759 = vpow.pop %v3758
    %v3760 = vsel %vm214, %v3759, 0.0
    %3761 = vadd.xlane.f32.xlu0 %v3760
    %v3762 = vpop.xlane.xlu0 %3761
    %v3763 = vpack.c.bf16 %v3759, %v3759
    %3764 = vrot.lane.b32.xlu0 %v3478, 48
    %v3765 = vpop.permute.xlu0 %3764
    %v3767 = vsel %vm214, %v3763, 0
    %v3770 = vsel %vm276, %v3765, 0
    %3772 = vmatprep.subr.bf16.mxu0 0
    %3773 = vmatpush1.bf16.msra.mxu0 %v3770
    %3774 = vmatprep.subr.bf16.mxu0 0
    %3775 = vmatpush1.bf16.msra.mxu0 0
    %3776 = vmatprep.subr.bf16.mxu0 0
    %3777 = vmatpush1.bf16.msra.mxu0 0
    %3778 = vmatprep.subr.bf16.mxu0 0
    %3779 = vmatpush1.bf16.msra.mxu0 0
    %3780 = vmatprep.subr.bf16.mxu0 0
    %3781 = vmatpush1.bf16.msra.mxu0 0
    %3782 = vmatprep.subr.bf16.mxu0 0
    %3783 = vmatpush1.bf16.msra.mxu0 0
    %3784 = vmatprep.subr.bf16.mxu0 0
    %3785 = vmatpush1.bf16.msra.mxu0 0
    %3786 = vmatprep.subr.bf16.mxu0 0
    %3787 = vmatpush1.bf16.msra.mxu0 0
    %3788 = vmatprep.subr.bf16.mxu0 0
    %3789 = vmatpush1.bf16.msra.mxu0 0
    %3790 = vmatprep.subr.bf16.mxu0 0
    %3791 = vmatpush1.bf16.msra.mxu0 0
    %3792 = vmatprep.subr.bf16.mxu0 0
    %3793 = vmatpush1.bf16.msra.mxu0 0
    %3794 = vmatprep.subr.bf16.mxu0 0
    %3795 = vmatpush1.bf16.msra.mxu0 0
    %3796 = vmatprep.subr.bf16.mxu0 0
    %3797 = vmatpush1.bf16.msra.mxu0 0
    %3798 = vmatprep.subr.bf16.mxu0 0
    %3799 = vmatpush1.bf16.msra.mxu0 0
    %3800 = vmatprep.subr.bf16.mxu0 0
    %3801 = vmatpush1.bf16.msra.mxu0 0
    %3802 = vmatprep.subr.bf16.mxu0 0
    %3803 = vmatpush1.bf16.msra.mxu0 0
    %3804 = vmatprep.mubr.bf16.mxu0 0
    %3805 = vmatmul.mubr.bf16.gmra.mrb[0].mxu0 %v3767
    %v3806 = vpop.f32.mrb[0].mxu0
    %v3807 = vadd.f32 0.0, %v3806
    %v3808 = vpop.f32.mrb[0].mxu0
    %v3809 = vpop.f32.mrb[0].mxu0
    %v3810 = vpop.f32.mrb[0].mxu0
    %3811 = vdwg.mxu0
    %v3812 = vrcp.pop %v3762
    %v3813 = vmul.f32 %v3807, %v3812
    %3815 = vrot.lane.b32.xlu0 %v3813, 16
    %v3816 = vpop.permute.xlu0 %3815
    %3818 = vst.msk [vmem:[#allocation2 + $0x10] sm:$0xff] %vm553, %v3816
    %3819 = vrot.lane.b32.xlu0 %v3478, 104
    %v3820 = vpop.permute.xlu0 %3819
    %3821 = vrot.lane.b32.xlu0 %v3478, 72
    %v3822 = vpop.permute.xlu0 %3821
    %v3824 = vsel %vm214, %v3820, 0
    %v3827 = vsel %vm214, %v3822, 0
    %3829 = vmatprep.subr.bf16.mxu0 0
    %3830 = vmatpush1.bf16.xpose.msra.mxu0 %v3827
    %3831 = vmatprep.subr.bf16.mxu0 0
    %3832 = vmatpush1.bf16.xpose.msra.mxu0 0
    %3833 = vmatprep.subr.bf16.mxu0 0
    %3834 = vmatpush1.bf16.xpose.msra.mxu0 0
    %3835 = vmatprep.subr.bf16.mxu0 0
    %3836 = vmatpush1.bf16.xpose.msra.mxu0 0
    %3837 = vmatprep.subr.bf16.mxu0 0
    %3838 = vmatpush1.bf16.xpose.msra.mxu0 0
    %3839 = vmatprep.subr.bf16.mxu0 0
    %3840 = vmatpush1.bf16.xpose.msra.mxu0 0
    %3841 = vmatprep.subr.bf16.mxu0 0
    %3842 = vmatpush1.bf16.xpose.msra.mxu0 0
    %3843 = vmatprep.subr.bf16.mxu0 0
    %3844 = vmatpush1.bf16.xpose.msra.mxu0 0
    %3845 = vmatprep.subr.bf16.mxu0 0
    %3846 = vmatpush1.bf16.xpose.msra.mxu0 0
    %3847 = vmatprep.subr.bf16.mxu0 0
    %3848 = vmatpush1.bf16.xpose.msra.mxu0 0
    %3849 = vmatprep.subr.bf16.mxu0 0
    %3850 = vmatpush1.bf16.xpose.msra.mxu0 0
    %3851 = vmatprep.subr.bf16.mxu0 0
    %3852 = vmatpush1.bf16.xpose.msra.mxu0 0
    %3853 = vmatprep.subr.bf16.mxu0 0
    %3854 = vmatpush1.bf16.xpose.msra.mxu0 0
    %3855 = vmatprep.subr.bf16.mxu0 0
    %3856 = vmatpush1.bf16.xpose.msra.mxu0 0
    %3857 = vmatprep.subr.bf16.mxu0 0
    %3858 = vmatpush1.bf16.xpose.msra.mxu0 0
    %3859 = vmatprep.subr.bf16.mxu0 0
    %3860 = vmatpush1.bf16.xpose.msra.mxu0 0
    %3861 = vmatprep.mubr.bf16.mxu0 0
    %3862 = vmatmul.mubr.bf16.gmra.mrb[0].mxu0 %v3824
    %v3863 = vpop.f32.mrb[0].mxu0
    %v3864 = vadd.f32 %v1134, %v3863
    %v3865 = vpop.f32.mrb[0].mxu0
    %v3866 = vpop.f32.mrb[0].mxu0
    %v3867 = vpop.f32.mrb[0].mxu0
    %3868 = vdwg.mxu0
    %v3869 = vsel %vm214, %v3864, -inf
    %3870 = vmax.xlane.f32.xlu0 %v3869
    %v3871 = vpop.xlane.xlu0 %3870
    %v3872 = vsub.f32 %v3864, %v3871
    %v3873 = vmul.f32 %v3872, 1.442695
    %v3874 = vpow.pop %v3873
    %v3875 = vsel %vm214, %v3874, 0.0
    %3876 = vadd.xlane.f32.xlu0 %v3875
    %v3877 = vpop.xlane.xlu0 %3876
    %v3878 = vpack.c.bf16 %v3874, %v3874
    %3879 = vrot.lane.b32.xlu0 %v3478, 40
    %v3880 = vpop.permute.xlu0 %3879
    %v3882 = vsel %vm214, %v3878, 0
    %v3885 = vsel %vm276, %v3880, 0
    %3887 = vmatprep.subr.bf16.mxu0 0
    %3888 = vmatpush1.bf16.msra.mxu0 %v3885
    %3889 = vmatprep.subr.bf16.mxu0 0
    %3890 = vmatpush1.bf16.msra.mxu0 0
    %3891 = vmatprep.subr.bf16.mxu0 0
    %3892 = vmatpush1.bf16.msra.mxu0 0
    %3893 = vmatprep.subr.bf16.mxu0 0
    %3894 = vmatpush1.bf16.msra.mxu0 0
    %3895 = vmatprep.subr.bf16.mxu0 0
    %3896 = vmatpush1.bf16.msra.mxu0 0
    %3897 = vmatprep.subr.bf16.mxu0 0
    %3898 = vmatpush1.bf16.msra.mxu0 0
    %3899 = vmatprep.subr.bf16.mxu0 0
    %3900 = vmatpush1.bf16.msra.mxu0 0
    %3901 = vmatprep.subr.bf16.mxu0 0
    %3902 = vmatpush1.bf16.msra.mxu0 0
    %3903 = vmatprep.subr.bf16.mxu0 0
    %3904 = vmatpush1.bf16.msra.mxu0 0
    %3905 = vmatprep.subr.bf16.mxu0 0
    %3906 = vmatpush1.bf16.msra.mxu0 0
    %3907 = vmatprep.subr.bf16.mxu0 0
    %3908 = vmatpush1.bf16.msra.mxu0 0
    %3909 = vmatprep.subr.bf16.mxu0 0
    %3910 = vmatpush1.bf16.msra.mxu0 0
    %3911 = vmatprep.subr.bf16.mxu0 0
    %3912 = vmatpush1.bf16.msra.mxu0 0
    %3913 = vmatprep.subr.bf16.mxu0 0
    %3914 = vmatpush1.bf16.msra.mxu0 0
    %3915 = vmatprep.subr.bf16.mxu0 0
    %3916 = vmatpush1.bf16.msra.mxu0 0
    %3917 = vmatprep.subr.bf16.mxu0 0
    %3918 = vmatpush1.bf16.msra.mxu0 0
    %3919 = vmatprep.mubr.bf16.mxu0 0
    %3920 = vmatmul.mubr.bf16.gmra.mrb[0].mxu0 %v3882
    %v3921 = vpop.f32.mrb[0].mxu0
    %v3922 = vadd.f32 0.0, %v3921
    %v3923 = vpop.f32.mrb[0].mxu0
    %v3924 = vpop.f32.mrb[0].mxu0
    %v3925 = vpop.f32.mrb[0].mxu0
    %3926 = vdwg.mxu0
    %v3927 = vrcp.pop %v3877
    %v3928 = vmul.f32 %v3922, %v3927
    %3930 = vrot.lane.b32.xlu0 %v3928, 24
    %v3931 = vpop.permute.xlu0 %3930
    %3933 = vst.msk [vmem:[#allocation2 + $0x10] sm:$0xff] %vm669, %v3931
    %v3934 = vpack.c.bf16 %v2563, %v2563
    %3936 = vrot.lane.b32.xlu0 %v3934, 96
    %v3937 = vpop.permute.xlu0 %3936
    %v3939 = vsel %vm214, %v3934, 0
    %v3942 = vsel %vm214, %v3937, 0
    %3944 = vmatprep.subr.bf16.mxu0 0
    %3945 = vmatpush1.bf16.xpose.msra.mxu0 %v3942
    %3946 = vmatprep.subr.bf16.mxu0 0
    %3947 = vmatpush1.bf16.xpose.msra.mxu0 0
    %3948 = vmatprep.subr.bf16.mxu0 0
    %3949 = vmatpush1.bf16.xpose.msra.mxu0 0
    %3950 = vmatprep.subr.bf16.mxu0 0
    %3951 = vmatpush1.bf16.xpose.msra.mxu0 0
    %3952 = vmatprep.subr.bf16.mxu0 0
    %3953 = vmatpush1.bf16.xpose.msra.mxu0 0
    %3954 = vmatprep.subr.bf16.mxu0 0
    %3955 = vmatpush1.bf16.xpose.msra.mxu0 0
    %3956 = vmatprep.subr.bf16.mxu0 0
    %3957 = vmatpush1.bf16.xpose.msra.mxu0 0
    %3958 = vmatprep.subr.bf16.mxu0 0
    %3959 = vmatpush1.bf16.xpose.msra.mxu0 0
    %3960 = vmatprep.subr.bf16.mxu0 0
    %3961 = vmatpush1.bf16.xpose.msra.mxu0 0
    %3962 = vmatprep.subr.bf16.mxu0 0
    %3963 = vmatpush1.bf16.xpose.msra.mxu0 0
    %3964 = vmatprep.subr.bf16.mxu0 0
    %3965 = vmatpush1.bf16.xpose.msra.mxu0 0
    %3966 = vmatprep.subr.bf16.mxu0 0
    %3967 = vmatpush1.bf16.xpose.msra.mxu0 0
    %3968 = vmatprep.subr.bf16.mxu0 0
    %3969 = vmatpush1.bf16.xpose.msra.mxu0 0
    %3970 = vmatprep.subr.bf16.mxu0 0
    %3971 = vmatpush1.bf16.xpose.msra.mxu0 0
    %3972 = vmatprep.subr.bf16.mxu0 0
    %3973 = vmatpush1.bf16.xpose.msra.mxu0 0
    %3974 = vmatprep.subr.bf16.mxu0 0
    %3975 = vmatpush1.bf16.xpose.msra.mxu0 0
    %3976 = vmatprep.mubr.bf16.mxu0 0
    %3977 = vmatmul.mubr.bf16.gmra.mrb[0].mxu0 %v3939
    %v3978 = vpop.f32.mrb[0].mxu0
    %v3979 = vadd.f32 %v1594, %v3978
    %v3980 = vpop.f32.mrb[0].mxu0
    %v3981 = vpop.f32.mrb[0].mxu0
    %v3982 = vpop.f32.mrb[0].mxu0
    %3983 = vdwg.mxu0
    %v3984 = vsel %vm214, %v3979, -inf
    %3985 = vmax.xlane.f32.xlu0 %v3984
    %v3986 = vpop.xlane.xlu0 %3985
    %v3987 = vsub.f32 %v3979, %v3986
    %v3988 = vmul.f32 %v3987, 1.442695
    %v3989 = vpow.pop %v3988
    %v3990 = vsel %vm214, %v3989, 0.0
    %3991 = vadd.xlane.f32.xlu0 %v3990
    %v3992 = vpop.xlane.xlu0 %3991
    %v3993 = vpack.c.bf16 %v3989, %v3989
    %3994 = vrot.lane.b32.xlu0 %v3934, 64
    %v3995 = vpop.permute.xlu0 %3994
    %v3997 = vsel %vm214, %v3993, 0
    %v4000 = vsel %vm276, %v3995, 0
    %4002 = vmatprep.subr.bf16.mxu0 0
    %4003 = vmatpush1.bf16.msra.mxu0 %v4000
    %4004 = vmatprep.subr.bf16.mxu0 0
    %4005 = vmatpush1.bf16.msra.mxu0 0
    %4006 = vmatprep.subr.bf16.mxu0 0
    %4007 = vmatpush1.bf16.msra.mxu0 0
    %4008 = vmatprep.subr.bf16.mxu0 0
    %4009 = vmatpush1.bf16.msra.mxu0 0
    %4010 = vmatprep.subr.bf16.mxu0 0
    %4011 = vmatpush1.bf16.msra.mxu0 0
    %4012 = vmatprep.subr.bf16.mxu0 0
    %4013 = vmatpush1.bf16.msra.mxu0 0
    %4014 = vmatprep.subr.bf16.mxu0 0
    %4015 = vmatpush1.bf16.msra.mxu0 0
    %4016 = vmatprep.subr.bf16.mxu0 0
    %4017 = vmatpush1.bf16.msra.mxu0 0
    %4018 = vmatprep.subr.bf16.mxu0 0
    %4019 = vmatpush1.bf16.msra.mxu0 0
    %4020 = vmatprep.subr.bf16.mxu0 0
    %4021 = vmatpush1.bf16.msra.mxu0 0
    %4022 = vmatprep.subr.bf16.mxu0 0
    %4023 = vmatpush1.bf16.msra.mxu0 0
    %4024 = vmatprep.subr.bf16.mxu0 0
    %4025 = vmatpush1.bf16.msra.mxu0 0
    %4026 = vmatprep.subr.bf16.mxu0 0
    %4027 = vmatpush1.bf16.msra.mxu0 0
    %4028 = vmatprep.subr.bf16.mxu0 0
    %4029 = vmatpush1.bf16.msra.mxu0 0
    %4030 = vmatprep.subr.bf16.mxu0 0
    %4031 = vmatpush1.bf16.msra.mxu0 0
    %4032 = vmatprep.subr.bf16.mxu0 0
    %4033 = vmatpush1.bf16.msra.mxu0 0
    %4034 = vmatprep.mubr.bf16.mxu0 0
    %4035 = vmatmul.mubr.bf16.gmra.mrb[0].mxu0 %v3997
    %v4036 = vpop.f32.mrb[0].mxu0
    %v4037 = vadd.f32 0.0, %v4036
    %v4038 = vpop.f32.mrb[0].mxu0
    %v4039 = vpop.f32.mrb[0].mxu0
    %v4040 = vpop.f32.mrb[0].mxu0
    %4041 = vdwg.mxu0
    %v4042 = vrcp.pop %v3992
    %v4043 = vmul.f32 %v4037, %v4042
    %4044 = vst.msk [vmem:[#allocation2 + $0x18] sm:$0xff] %vm214, %v4043
    %4045 = vrot.lane.b32.xlu0 %v3934, 120
    %v4046 = vpop.permute.xlu0 %4045
    %4047 = vrot.lane.b32.xlu0 %v3934, 88
    %v4048 = vpop.permute.xlu0 %4047
    %v4050 = vsel %vm214, %v4046, 0
    %v4053 = vsel %vm214, %v4048, 0
    %4055 = vmatprep.subr.bf16.mxu0 0
    %4056 = vmatpush1.bf16.xpose.msra.mxu0 %v4053
    %4057 = vmatprep.subr.bf16.mxu0 0
    %4058 = vmatpush1.bf16.xpose.msra.mxu0 0
    %4059 = vmatprep.subr.bf16.mxu0 0
    %4060 = vmatpush1.bf16.xpose.msra.mxu0 0
    %4061 = vmatprep.subr.bf16.mxu0 0
    %4062 = vmatpush1.bf16.xpose.msra.mxu0 0
    %4063 = vmatprep.subr.bf16.mxu0 0
    %4064 = vmatpush1.bf16.xpose.msra.mxu0 0
    %4065 = vmatprep.subr.bf16.mxu0 0
    %4066 = vmatpush1.bf16.xpose.msra.mxu0 0
    %4067 = vmatprep.subr.bf16.mxu0 0
    %4068 = vmatpush1.bf16.xpose.msra.mxu0 0
    %4069 = vmatprep.subr.bf16.mxu0 0
    %4070 = vmatpush1.bf16.xpose.msra.mxu0 0
    %4071 = vmatprep.subr.bf16.mxu0 0
    %4072 = vmatpush1.bf16.xpose.msra.mxu0 0
    %4073 = vmatprep.subr.bf16.mxu0 0
    %4074 = vmatpush1.bf16.xpose.msra.mxu0 0
    %4075 = vmatprep.subr.bf16.mxu0 0
    %4076 = vmatpush1.bf16.xpose.msra.mxu0 0
    %4077 = vmatprep.subr.bf16.mxu0 0
    %4078 = vmatpush1.bf16.xpose.msra.mxu0 0
    %4079 = vmatprep.subr.bf16.mxu0 0
    %4080 = vmatpush1.bf16.xpose.msra.mxu0 0
    %4081 = vmatprep.subr.bf16.mxu0 0
    %4082 = vmatpush1.bf16.xpose.msra.mxu0 0
    %4083 = vmatprep.subr.bf16.mxu0 0
    %4084 = vmatpush1.bf16.xpose.msra.mxu0 0
    %4085 = vmatprep.subr.bf16.mxu0 0
    %4086 = vmatpush1.bf16.xpose.msra.mxu0 0
    %4087 = vmatprep.mubr.bf16.mxu0 0
    %4088 = vmatmul.mubr.bf16.gmra.mrb[0].mxu0 %v4050
    %v4089 = vpop.f32.mrb[0].mxu0
    %v4090 = vadd.f32 %v1594, %v4089
    %v4091 = vpop.f32.mrb[0].mxu0
    %v4092 = vpop.f32.mrb[0].mxu0
    %v4093 = vpop.f32.mrb[0].mxu0
    %4094 = vdwg.mxu0
    %v4095 = vsel %vm214, %v4090, -inf
    %4096 = vmax.xlane.f32.xlu0 %v4095
    %v4097 = vpop.xlane.xlu0 %4096
    %v4098 = vsub.f32 %v4090, %v4097
    %v4099 = vmul.f32 %v4098, 1.442695
    %v4100 = vpow.pop %v4099
    %v4101 = vsel %vm214, %v4100, 0.0
    %4102 = vadd.xlane.f32.xlu0 %v4101
    %v4103 = vpop.xlane.xlu0 %4102
    %v4104 = vpack.c.bf16 %v4100, %v4100
    %4105 = vrot.lane.b32.xlu0 %v3934, 56
    %v4106 = vpop.permute.xlu0 %4105
    %v4108 = vsel %vm214, %v4104, 0
    %v4111 = vsel %vm276, %v4106, 0
    %4113 = vmatprep.subr.bf16.mxu0 0
    %4114 = vmatpush1.bf16.msra.mxu0 %v4111
    %4115 = vmatprep.subr.bf16.mxu0 0
    %4116 = vmatpush1.bf16.msra.mxu0 0
    %4117 = vmatprep.subr.bf16.mxu0 0
    %4118 = vmatpush1.bf16.msra.mxu0 0
    %4119 = vmatprep.subr.bf16.mxu0 0
    %4120 = vmatpush1.bf16.msra.mxu0 0
    %4121 = vmatprep.subr.bf16.mxu0 0
    %4122 = vmatpush1.bf16.msra.mxu0 0
    %4123 = vmatprep.subr.bf16.mxu0 0
    %4124 = vmatpush1.bf16.msra.mxu0 0
    %4125 = vmatprep.subr.bf16.mxu0 0
    %4126 = vmatpush1.bf16.msra.mxu0 0
    %4127 = vmatprep.subr.bf16.mxu0 0
    %4128 = vmatpush1.bf16.msra.mxu0 0
    %4129 = vmatprep.subr.bf16.mxu0 0
    %4130 = vmatpush1.bf16.msra.mxu0 0
    %4131 = vmatprep.subr.bf16.mxu0 0
    %4132 = vmatpush1.bf16.msra.mxu0 0
    %4133 = vmatprep.subr.bf16.mxu0 0
    %4134 = vmatpush1.bf16.msra.mxu0 0
    %4135 = vmatprep.subr.bf16.mxu0 0
    %4136 = vmatpush1.bf16.msra.mxu0 0
    %4137 = vmatprep.subr.bf16.mxu0 0
    %4138 = vmatpush1.bf16.msra.mxu0 0
    %4139 = vmatprep.subr.bf16.mxu0 0
    %4140 = vmatpush1.bf16.msra.mxu0 0
    %4141 = vmatprep.subr.bf16.mxu0 0
    %4142 = vmatpush1.bf16.msra.mxu0 0
    %4143 = vmatprep.subr.bf16.mxu0 0
    %4144 = vmatpush1.bf16.msra.mxu0 0
    %4145 = vmatprep.mubr.bf16.mxu0 0
    %4146 = vmatmul.mubr.bf16.gmra.mrb[0].mxu0 %v4108
    %v4147 = vpop.f32.mrb[0].mxu0
    %v4148 = vadd.f32 0.0, %v4147
    %v4149 = vpop.f32.mrb[0].mxu0
    %v4150 = vpop.f32.mrb[0].mxu0
    %v4151 = vpop.f32.mrb[0].mxu0
    %4152 = vdwg.mxu0
    %v4153 = vrcp.pop %v4103
    %v4154 = vmul.f32 %v4148, %v4153
    %4156 = vrot.lane.b32.xlu0 %v4154, 8
    %v4157 = vpop.permute.xlu0 %4156
    %4159 = vst.msk [vmem:[#allocation2 + $0x18] sm:$0xff] %vm437, %v4157
    %4160 = vrot.lane.b32.xlu0 %v3934, 112
    %v4161 = vpop.permute.xlu0 %4160
    %4162 = vrot.lane.b32.xlu0 %v3934, 80
    %v4163 = vpop.permute.xlu0 %4162
    %v4165 = vsel %vm214, %v4161, 0
    %v4168 = vsel %vm214, %v4163, 0
    %4170 = vmatprep.subr.bf16.mxu0 0
    %4171 = vmatpush1.bf16.xpose.msra.mxu0 %v4168
    %4172 = vmatprep.subr.bf16.mxu0 0
    %4173 = vmatpush1.bf16.xpose.msra.mxu0 0
    %4174 = vmatprep.subr.bf16.mxu0 0
    %4175 = vmatpush1.bf16.xpose.msra.mxu0 0
    %4176 = vmatprep.subr.bf16.mxu0 0
    %4177 = vmatpush1.bf16.xpose.msra.mxu0 0
    %4178 = vmatprep.subr.bf16.mxu0 0
    %4179 = vmatpush1.bf16.xpose.msra.mxu0 0
    %4180 = vmatprep.subr.bf16.mxu0 0
    %4181 = vmatpush1.bf16.xpose.msra.mxu0 0
    %4182 = vmatprep.subr.bf16.mxu0 0
    %4183 = vmatpush1.bf16.xpose.msra.mxu0 0
    %4184 = vmatprep.subr.bf16.mxu0 0
    %4185 = vmatpush1.bf16.xpose.msra.mxu0 0
    %4186 = vmatprep.subr.bf16.mxu0 0
    %4187 = vmatpush1.bf16.xpose.msra.mxu0 0
    %4188 = vmatprep.subr.bf16.mxu0 0
    %4189 = vmatpush1.bf16.xpose.msra.mxu0 0
    %4190 = vmatprep.subr.bf16.mxu0 0
    %4191 = vmatpush1.bf16.xpose.msra.mxu0 0
    %4192 = vmatprep.subr.bf16.mxu0 0
    %4193 = vmatpush1.bf16.xpose.msra.mxu0 0
    %4194 = vmatprep.subr.bf16.mxu0 0
    %4195 = vmatpush1.bf16.xpose.msra.mxu0 0
    %4196 = vmatprep.subr.bf16.mxu0 0
    %4197 = vmatpush1.bf16.xpose.msra.mxu0 0
    %4198 = vmatprep.subr.bf16.mxu0 0
    %4199 = vmatpush1.bf16.xpose.msra.mxu0 0
    %4200 = vmatprep.subr.bf16.mxu0 0
    %4201 = vmatpush1.bf16.xpose.msra.mxu0 0
    %4202 = vmatprep.mubr.bf16.mxu0 0
    %4203 = vmatmul.mubr.bf16.gmra.mrb[0].mxu0 %v4165
    %v4204 = vpop.f32.mrb[0].mxu0
    %v4205 = vadd.f32 %v1594, %v4204
    %v4206 = vpop.f32.mrb[0].mxu0
    %v4207 = vpop.f32.mrb[0].mxu0
    %v4208 = vpop.f32.mrb[0].mxu0
    %4209 = vdwg.mxu0
    %v4210 = vsel %vm214, %v4205, -inf
    %4211 = vmax.xlane.f32.xlu0 %v4210
    %v4212 = vpop.xlane.xlu0 %4211
    %v4213 = vsub.f32 %v4205, %v4212
    %v4214 = vmul.f32 %v4213, 1.442695
    %v4215 = vpow.pop %v4214
    %v4216 = vsel %vm214, %v4215, 0.0
    %4217 = vadd.xlane.f32.xlu0 %v4216
    %v4218 = vpop.xlane.xlu0 %4217
    %v4219 = vpack.c.bf16 %v4215, %v4215
    %4220 = vrot.lane.b32.xlu0 %v3934, 48
    %v4221 = vpop.permute.xlu0 %4220
    %v4223 = vsel %vm214, %v4219, 0
    %v4226 = vsel %vm276, %v4221, 0
    %4228 = vmatprep.subr.bf16.mxu0 0
    %4229 = vmatpush1.bf16.msra.mxu0 %v4226
    %4230 = vmatprep.subr.bf16.mxu0 0
    %4231 = vmatpush1.bf16.msra.mxu0 0
    %4232 = vmatprep.subr.bf16.mxu0 0
    %4233 = vmatpush1.bf16.msra.mxu0 0
    %4234 = vmatprep.subr.bf16.mxu0 0
    %4235 = vmatpush1.bf16.msra.mxu0 0
    %4236 = vmatprep.subr.bf16.mxu0 0
    %4237 = vmatpush1.bf16.msra.mxu0 0
    %4238 = vmatprep.subr.bf16.mxu0 0
    %4239 = vmatpush1.bf16.msra.mxu0 0
    %4240 = vmatprep.subr.bf16.mxu0 0
    %4241 = vmatpush1.bf16.msra.mxu0 0
    %4242 = vmatprep.subr.bf16.mxu0 0
    %4243 = vmatpush1.bf16.msra.mxu0 0
    %4244 = vmatprep.subr.bf16.mxu0 0
    %4245 = vmatpush1.bf16.msra.mxu0 0
    %4246 = vmatprep.subr.bf16.mxu0 0
    %4247 = vmatpush1.bf16.msra.mxu0 0
    %4248 = vmatprep.subr.bf16.mxu0 0
    %4249 = vmatpush1.bf16.msra.mxu0 0
    %4250 = vmatprep.subr.bf16.mxu0 0
    %4251 = vmatpush1.bf16.msra.mxu0 0
    %4252 = vmatprep.subr.bf16.mxu0 0
    %4253 = vmatpush1.bf16.msra.mxu0 0
    %4254 = vmatprep.subr.bf16.mxu0 0
    %4255 = vmatpush1.bf16.msra.mxu0 0
    %4256 = vmatprep.subr.bf16.mxu0 0
    %4257 = vmatpush1.bf16.msra.mxu0 0
    %4258 = vmatprep.subr.bf16.mxu0 0
    %4259 = vmatpush1.bf16.msra.mxu0 0
    %4260 = vmatprep.mubr.bf16.mxu0 0
    %4261 = vmatmul.mubr.bf16.gmra.mrb[0].mxu0 %v4223
    %v4262 = vpop.f32.mrb[0].mxu0
    %v4263 = vadd.f32 0.0, %v4262
    %v4264 = vpop.f32.mrb[0].mxu0
    %v4265 = vpop.f32.mrb[0].mxu0
    %v4266 = vpop.f32.mrb[0].mxu0
    %4267 = vdwg.mxu0
    %v4268 = vrcp.pop %v4218
    %v4269 = vmul.f32 %v4263, %v4268
    %4271 = vrot.lane.b32.xlu0 %v4269, 16
    %v4272 = vpop.permute.xlu0 %4271
    %4274 = vst.msk [vmem:[#allocation2 + $0x18] sm:$0xff] %vm553, %v4272
    %4275 = vrot.lane.b32.xlu0 %v3934, 104
    %v4276 = vpop.permute.xlu0 %4275
    %4277 = vrot.lane.b32.xlu0 %v3934, 72
    %v4278 = vpop.permute.xlu0 %4277
    %v4280 = vsel %vm214, %v4276, 0
    %v4283 = vsel %vm214, %v4278, 0
    %4285 = vmatprep.subr.bf16.mxu0 0
    %4286 = vmatpush1.bf16.xpose.msra.mxu0 %v4283
    %4287 = vmatprep.subr.bf16.mxu0 0
    %4288 = vmatpush1.bf16.xpose.msra.mxu0 0
    %4289 = vmatprep.subr.bf16.mxu0 0
    %4290 = vmatpush1.bf16.xpose.msra.mxu0 0
    %4291 = vmatprep.subr.bf16.mxu0 0
    %4292 = vmatpush1.bf16.xpose.msra.mxu0 0
    %4293 = vmatprep.subr.bf16.mxu0 0
    %4294 = vmatpush1.bf16.xpose.msra.mxu0 0
    %4295 = vmatprep.subr.bf16.mxu0 0
    %4296 = vmatpush1.bf16.xpose.msra.mxu0 0
    %4297 = vmatprep.subr.bf16.mxu0 0
    %4298 = vmatpush1.bf16.xpose.msra.mxu0 0
    %4299 = vmatprep.subr.bf16.mxu0 0
    %4300 = vmatpush1.bf16.xpose.msra.mxu0 0
    %4301 = vmatprep.subr.bf16.mxu0 0
    %4302 = vmatpush1.bf16.xpose.msra.mxu0 0
    %4303 = vmatprep.subr.bf16.mxu0 0
    %4304 = vmatpush1.bf16.xpose.msra.mxu0 0
    %4305 = vmatprep.subr.bf16.mxu0 0
    %4306 = vmatpush1.bf16.xpose.msra.mxu0 0
    %4307 = vmatprep.subr.bf16.mxu0 0
    %4308 = vmatpush1.bf16.xpose.msra.mxu0 0
    %4309 = vmatprep.subr.bf16.mxu0 0
    %4310 = vmatpush1.bf16.xpose.msra.mxu0 0
    %4311 = vmatprep.subr.bf16.mxu0 0
    %4312 = vmatpush1.bf16.xpose.msra.mxu0 0
    %4313 = vmatprep.subr.bf16.mxu0 0
    %4314 = vmatpush1.bf16.xpose.msra.mxu0 0
    %4315 = vmatprep.subr.bf16.mxu0 0
    %4316 = vmatpush1.bf16.xpose.msra.mxu0 0
    %4317 = vmatprep.mubr.bf16.mxu0 0
    %4318 = vmatmul.mubr.bf16.gmra.mrb[0].mxu0 %v4280
    %v4319 = vpop.f32.mrb[0].mxu0
    %v4320 = vadd.f32 %v1594, %v4319
    %v4321 = vpop.f32.mrb[0].mxu0
    %v4322 = vpop.f32.mrb[0].mxu0
    %v4323 = vpop.f32.mrb[0].mxu0
    %4324 = vdwg.mxu0
    %v4325 = vsel %vm214, %v4320, -inf
    %4326 = vmax.xlane.f32.xlu0 %v4325
    %v4327 = vpop.xlane.xlu0 %4326
    %v4328 = vsub.f32 %v4320, %v4327
    %v4329 = vmul.f32 %v4328, 1.442695
    %v4330 = vpow.pop %v4329
    %v4331 = vsel %vm214, %v4330, 0.0
    %4332 = vadd.xlane.f32.xlu0 %v4331
    %v4333 = vpop.xlane.xlu0 %4332
    %v4334 = vpack.c.bf16 %v4330, %v4330
    %4335 = vrot.lane.b32.xlu0 %v3934, 40
    %v4336 = vpop.permute.xlu0 %4335
    %v4338 = vsel %vm214, %v4334, 0
    %v4341 = vsel %vm276, %v4336, 0
    %4343 = vmatprep.subr.bf16.mxu0 0
    %4344 = vmatpush1.bf16.msra.mxu0 %v4341
    %4345 = vmatprep.subr.bf16.mxu0 0
    %4346 = vmatpush1.bf16.msra.mxu0 0
    %4347 = vmatprep.subr.bf16.mxu0 0
    %4348 = vmatpush1.bf16.msra.mxu0 0
    %4349 = vmatprep.subr.bf16.mxu0 0
    %4350 = vmatpush1.bf16.msra.mxu0 0
    %4351 = vmatprep.subr.bf16.mxu0 0
    %4352 = vmatpush1.bf16.msra.mxu0 0
    %4353 = vmatprep.subr.bf16.mxu0 0
    %4354 = vmatpush1.bf16.msra.mxu0 0
    %4355 = vmatprep.subr.bf16.mxu0 0
    %4356 = vmatpush1.bf16.msra.mxu0 0
    %4357 = vmatprep.subr.bf16.mxu0 0
    %4358 = vmatpush1.bf16.msra.mxu0 0
    %4359 = vmatprep.subr.bf16.mxu0 0
    %4360 = vmatpush1.bf16.msra.mxu0 0
    %4361 = vmatprep.subr.bf16.mxu0 0
    %4362 = vmatpush1.bf16.msra.mxu0 0
    %4363 = vmatprep.subr.bf16.mxu0 0
    %4364 = vmatpush1.bf16.msra.mxu0 0
    %4365 = vmatprep.subr.bf16.mxu0 0
    %4366 = vmatpush1.bf16.msra.mxu0 0
    %4367 = vmatprep.subr.bf16.mxu0 0
    %4368 = vmatpush1.bf16.msra.mxu0 0
    %4369 = vmatprep.subr.bf16.mxu0 0
    %4370 = vmatpush1.bf16.msra.mxu0 0
    %4371 = vmatprep.subr.bf16.mxu0 0
    %4372 = vmatpush1.bf16.msra.mxu0 0
    %4373 = vmatprep.subr.bf16.mxu0 0
    %4374 = vmatpush1.bf16.msra.mxu0 0
    %4375 = vmatprep.mubr.bf16.mxu0 0
    %4376 = vmatmul.mubr.bf16.gmra.mrb[0].mxu0 %v4338
    %v4377 = vpop.f32.mrb[0].mxu0
    %v4378 = vadd.f32 0.0, %v4377
    %v4379 = vpop.f32.mrb[0].mxu0
    %v4380 = vpop.f32.mrb[0].mxu0
    %v4381 = vpop.f32.mrb[0].mxu0
    %4382 = vdwg.mxu0
    %v4383 = vrcp.pop %v4333
    %v4384 = vmul.f32 %v4378, %v4383
    %4386 = vrot.lane.b32.xlu0 %v4384, 24
    %v4387 = vpop.permute.xlu0 %4386
    %4389 = vst.msk [vmem:[#allocation2 + $0x18] sm:$0xff] %vm669, %v4387
    %v4390 = vld [vmem:[#allocation2] sm:$0xff]
    %v4391 = vld [vmem:[#allocation2 + $0x8] sm:$0xff]
    %v4392 = vld [vmem:[#allocation2 + $0x10] sm:$0xff]
    %v4393 = vld [vmem:[#allocation2 + $0x18] sm:$0xff]
    %v4394 = vpack.c.bf16 %v4391, %v4390
    %v4395 = vpack.c.bf16 %v4393, %v4392
    %v4396 = vlaneseq
    %v4397 = vshrl.u32 %v4396, 7
    %v4398 = vsub.s32 1, %v4397
    %v4399 = vrot.slane %v2492, %v4398
    %v4404 = vunpack.c.l.b16 %v2473
    %v4405 = vunpack.c.l.b16 %v2474
    %v4406 = vunpack.c.l.b16 %v2475
    %v4407 = vunpack.c.l.b16 %v2476
    %v4408 = vpack.c.b16 %v4405, %v4404
    %v4409 = vpack.c.b16 %v4407, %v4406
    %v4413 = vsel %vm42, %v4394, 0
    %v4416 = vsel %vm42, %v4395, 0
    %4418 = vmatprep.subr.bf16.mxu0 0
    %4419 = vmatpush1.bf16.msra.mxu0 %v4408
    %4420 = vmatprep.subr.bf16.mxu0 0
    %4421 = vmatpush1.bf16.msra.mxu0 %v4409
    %4422 = vmatprep.subr.bf16.mxu0 0
    %4423 = vmatpush1.bf16.msra.mxu0 0
    %4424 = vmatprep.subr.bf16.mxu0 0
    %4425 = vmatpush1.bf16.msra.mxu0 0
    %4426 = vmatprep.subr.bf16.mxu0 0
    %4427 = vmatpush1.bf16.msra.mxu0 0
    %4428 = vmatprep.subr.bf16.mxu0 0
    %4429 = vmatpush1.bf16.msra.mxu0 0
    %4430 = vmatprep.subr.bf16.mxu0 0
    %4431 = vmatpush1.bf16.msra.mxu0 0
    %4432 = vmatprep.subr.bf16.mxu0 0
    %4433 = vmatpush1.bf16.msra.mxu0 0
    %4434 = vmatprep.subr.bf16.mxu0 0
    %4435 = vmatpush1.bf16.msra.mxu0 0
    %4436 = vmatprep.subr.bf16.mxu0 0
    %4437 = vmatpush1.bf16.msra.mxu0 0
    %4438 = vmatprep.subr.bf16.mxu0 0
    %4439 = vmatpush1.bf16.msra.mxu0 0
    %4440 = vmatprep.subr.bf16.mxu0 0
    %4441 = vmatpush1.bf16.msra.mxu0 0
    %4442 = vmatprep.subr.bf16.mxu0 0
    %4443 = vmatpush1.bf16.msra.mxu0 0
    %4444 = vmatprep.subr.bf16.mxu0 0
    %4445 = vmatpush1.bf16.msra.mxu0 0
    %4446 = vmatprep.subr.bf16.mxu0 0
    %4447 = vmatpush1.bf16.msra.mxu0 0
    %4448 = vmatprep.subr.bf16.mxu0 0
    %4449 = vmatpush1.bf16.msra.mxu0 0
    %4450 = vmatprep.mubr.bf16.mxu0 0
    %4451 = vmatmul.mubr.bf16.gmra.mrb[0].mxu0 %v4413
    %v4452 = vpop.f32.mrb[0].mxu0
    %v4453 = vadd.f32 %v4399, %v4452
    %v4454 = vpop.f32.mrb[0].mxu0
    %v4455 = vpop.f32.mrb[0].mxu0
    %v4456 = vadd.f32 %v4399, %v4455
    %v4457 = vpop.f32.mrb[0].mxu0
    %4458 = vmatprep.mubr.bf16.mxu0 0
    %4459 = vmatmul.mubr.bf16.gmra.mrb[0].mxu0 %v4416
    %v4460 = vpop.f32.mrb[0].mxu0
    %v4461 = vadd.f32 %v4399, %v4460
    %v4462 = vpop.f32.mrb[0].mxu0
    %v4463 = vpop.f32.mrb[0].mxu0
    %v4464 = vadd.f32 %v4399, %v4463
    %v4465 = vpop.f32.mrb[0].mxu0
    %4466 = vdwg.mxu0
    %v4467 = vadd.f32 %v4453, %v2463
    %v4468 = vadd.f32 %v4456, %v2464
    %v4469 = vadd.f32 %v4461, %v2465
    %v4470 = vadd.f32 %v4464, %v2466
    %v4471 = vsel %vm42, %v4467, 0.0
    %4472 = vadd.xlane.f32.xlu0 %v4471
    %v4473 = vpop.xlane.xlu0 %4472
    %v4474 = vsel %vm42, %v4468, 0.0
    %4475 = vadd.xlane.f32.xlu0 %v4474
    %v4476 = vpop.xlane.xlu0 %4475
    %v4477 = vsel %vm42, %v4469, 0.0
    %4478 = vadd.xlane.f32.xlu0 %v4477
    %v4479 = vpop.xlane.xlu0 %4478
    %v4480 = vsel %vm42, %v4470, 0.0
    %4481 = vadd.xlane.f32.xlu0 %v4480
    %v4482 = vpop.xlane.xlu0 %4481
    %v4483 = vmul.f32 %v4473, %v55
    %v4484 = vmul.f32 %v4476, %v55
    %v4485 = vmul.f32 %v4479, %v55
    %v4486 = vmul.f32 %v4482, %v55
    %v4487 = vsub.f32 %v4467, %v4483
    %v4488 = vsub.f32 %v4468, %v4484
    %v4489 = vsub.f32 %v4469, %v4485
    %v4490 = vsub.f32 %v4470, %v4486
    %v4491 = vmul.f32 %v4487, %v4487
    %v4492 = vmul.f32 %v4488, %v4488
    %v4493 = vmul.f32 %v4489, %v4489
    %v4494 = vmul.f32 %v4490, %v4490
    %v4495 = vsel %vm42, %v4491, 0.0
    %4496 = vadd.xlane.f32.xlu0 %v4495
    %v4497 = vpop.xlane.xlu0 %4496
    %v4498 = vsel %vm42, %v4492, 0.0
    %4499 = vadd.xlane.f32.xlu0 %v4498
    %v4500 = vpop.xlane.xlu0 %4499
    %v4501 = vsel %vm42, %v4493, 0.0
    %4502 = vadd.xlane.f32.xlu0 %v4501
    %v4503 = vpop.xlane.xlu0 %4502
    %v4504 = vsel %vm42, %v4494, 0.0
    %4505 = vadd.xlane.f32.xlu0 %v4504
    %v4506 = vpop.xlane.xlu0 %4505
    %v4507 = vmul.f32 %v4497, %v55
    %v4508 = vmul.f32 %v4500, %v55
    %v4509 = vmul.f32 %v4503, %v55
    %v4510 = vmul.f32 %v4506, %v55
    %v4511 = vadd.f32 %v4507, 1e-12
    %v4512 = vadd.f32 %v4508, 1e-12
    %v4513 = vadd.f32 %v4509, 1e-12
    %v4514 = vadd.f32 %v4510, 1e-12
    %v4515 = vrsqrt.pop %v4511
    %v4516 = vrsqrt.pop %v4512
    %v4517 = vrsqrt.pop %v4513
    %v4518 = vrsqrt.pop %v4514
    %v4519 = vmul.f32 %v4487, %v4515
    %v4520 = vmul.f32 %v4488, %v4516
    %v4521 = vmul.f32 %v4489, %v4517
    %v4522 = vmul.f32 %v4490, %v4518
    %v4523 = vlaneseq
    %v4524 = vshrl.u32 %v4523, 7
    %v4525 = vsub.s32 2, %v4524
    %v4526 = vrot.slane %v2492, %v4525
    %v4527 = vmul.f32 %v4519, %v4526
    %v4528 = vmul.f32 %v4520, %v4526
    %v4529 = vmul.f32 %v4521, %v4526
    %v4530 = vmul.f32 %v4522, %v4526
    %v4531 = vlaneseq
    %v4532 = vshrl.u32 %v4531, 7
    %v4533 = vsub.s32 3, %v4532
    %v4534 = vrot.slane %v2492, %v4533
    %v4535 = vadd.f32 %v4527, %v4534
    %v4536 = vadd.f32 %v4528, %v4534
    %v4537 = vadd.f32 %v4529, %v4534
    %v4538 = vadd.f32 %v4530, %v4534
    %v4539 = vpack.c.bf16 %v4536, %v4535
    %v4540 = vpack.c.bf16 %v4538, %v4537
    %v4541 = vlaneseq
    %v4542 = vshrl.u32 %v4541, 7
    %v4543 = vsub.s32 4, %v4542
    %v4544 = vrot.slane %v2492, %v4543
    %v4549 = vunpack.c.l.b16 %v2478
    %v4550 = vunpack.c.l.b16 %v2479
    %v4551 = vunpack.c.l.b16 %v2480
    %v4552 = vunpack.c.l.b16 %v2481
    %v4553 = vpack.c.b16 %v4550, %v4549
    %v4554 = vpack.c.b16 %v4552, %v4551
    %v4558 = vsel %vm42, %v4539, 0
    %v4561 = vsel %vm42, %v4540, 0
    %4563 = vmatprep.subr.bf16.mxu0 0
    %4564 = vmatpush1.bf16.msra.mxu0 %v4553
    %4565 = vmatprep.subr.bf16.mxu0 0
    %4566 = vmatpush1.bf16.msra.mxu0 %v4554
    %4567 = vmatprep.subr.bf16.mxu0 0
    %4568 = vmatpush1.bf16.msra.mxu0 0
    %4569 = vmatprep.subr.bf16.mxu0 0
    %4570 = vmatpush1.bf16.msra.mxu0 0
    %4571 = vmatprep.subr.bf16.mxu0 0
    %4572 = vmatpush1.bf16.msra.mxu0 0
    %4573 = vmatprep.subr.bf16.mxu0 0
    %4574 = vmatpush1.bf16.msra.mxu0 0
    %4575 = vmatprep.subr.bf16.mxu0 0
    %4576 = vmatpush1.bf16.msra.mxu0 0
    %4577 = vmatprep.subr.bf16.mxu0 0
    %4578 = vmatpush1.bf16.msra.mxu0 0
    %4579 = vmatprep.subr.bf16.mxu0 0
    %4580 = vmatpush1.bf16.msra.mxu0 0
    %4581 = vmatprep.subr.bf16.mxu0 0
    %4582 = vmatpush1.bf16.msra.mxu0 0
    %4583 = vmatprep.subr.bf16.mxu0 0
    %4584 = vmatpush1.bf16.msra.mxu0 0
    %4585 = vmatprep.subr.bf16.mxu0 0
    %4586 = vmatpush1.bf16.msra.mxu0 0
    %4587 = vmatprep.subr.bf16.mxu0 0
    %4588 = vmatpush1.bf16.msra.mxu0 0
    %4589 = vmatprep.subr.bf16.mxu0 0
    %4590 = vmatpush1.bf16.msra.mxu0 0
    %4591 = vmatprep.subr.bf16.mxu0 0
    %4592 = vmatpush1.bf16.msra.mxu0 0
    %4593 = vmatprep.subr.bf16.mxu0 0
    %4594 = vmatpush1.bf16.msra.mxu0 0
    %4595 = vmatprep.mubr.bf16.mxu0 0
    %4596 = vmatmul.mubr.bf16.gmra.mrb[0].mxu0 %v4558
    %v4597 = vpop.f32.mrb[0].mxu0
    %v4598 = vadd.f32 %v4544, %v4597
    %v4599 = vpop.f32.mrb[0].mxu0
    %v4600 = vpop.f32.mrb[0].mxu0
    %v4601 = vadd.f32 %v4544, %v4600
    %v4602 = vpop.f32.mrb[0].mxu0
    %4603 = vmatprep.mubr.bf16.mxu0 0
    %4604 = vmatmul.mubr.bf16.gmra.mrb[0].mxu0 %v4561
    %v4605 = vpop.f32.mrb[0].mxu0
    %v4606 = vadd.f32 %v4544, %v4605
    %v4607 = vpop.f32.mrb[0].mxu0
    %v4608 = vpop.f32.mrb[0].mxu0
    %v4609 = vadd.f32 %v4544, %v4608
    %v4610 = vpop.f32.mrb[0].mxu0
    %4611 = vdwg.mxu0
    %v4612 = vmul.f32 %v4598, 0.5
    %v4613 = vmul.f32 %v4601, 0.5
    %v4614 = vmul.f32 %v4606, 0.5
    %v4615 = vmul.f32 %v4609, 0.5
    %v4616 = vmul.f32 %v4598, 0.044715
    %v4617 = vmul.f32 %v4601, 0.044715
    %v4618 = vmul.f32 %v4606, 0.044715
    %v4619 = vmul.f32 %v4609, 0.044715
    %v4620 = vmul.f32 %v4616, %v4598
    %v4621 = vmul.f32 %v4617, %v4601
    %v4622 = vmul.f32 %v4618, %v4606
    %v4623 = vmul.f32 %v4619, %v4609
    %v4624 = vmul.f32 %v4620, %v4598
    %v4625 = vmul.f32 %v4621, %v4601
    %v4626 = vmul.f32 %v4622, %v4606
    %v4627 = vmul.f32 %v4623, %v4609
    %v4628 = vadd.f32 %v4598, %v4624
    %v4629 = vadd.f32 %v4601, %v4625
    %v4630 = vadd.f32 %v4606, %v4626
    %v4631 = vadd.f32 %v4609, %v4627
    %v4632 = vmul.f32 %v4628, 0.7978846
    %v4633 = vmul.f32 %v4629, 0.7978846
    %v4634 = vmul.f32 %v4630, 0.7978846
    %v4635 = vmul.f32 %v4631, 0.7978846
    %v4636 = vtanh.pop %v4632
    %v4637 = vtanh.pop %v4633
    %v4638 = vtanh.pop %v4634
    %v4639 = vtanh.pop %v4635
    %v4640 = vadd.f32 %v4636, 1.0
    %v4641 = vadd.f32 %v4637, 1.0
    %v4642 = vadd.f32 %v4638, 1.0
    %v4643 = vadd.f32 %v4639, 1.0
    %v4644 = vmul.f32 %v4612, %v4640
    %v4645 = vmul.f32 %v4613, %v4641
    %v4646 = vmul.f32 %v4614, %v4642
    %v4647 = vmul.f32 %v4615, %v4643
    %v4648 = vpack.c.bf16 %v4645, %v4644
    %v4649 = vpack.c.bf16 %v4647, %v4646
    %v4650 = vlaneseq
    %v4651 = vshrl.u32 %v4650, 7
    %v4652 = vsub.s32 5, %v4651
    %v4653 = vrot.slane %v2492, %v4652
    %v4662 = vunpack.c.l.b16 %v2483
    %v4663 = vunpack.c.l.b16 %v2484
    %v4664 = vunpack.c.l.b16 %v2485
    %v4665 = vunpack.c.l.b16 %v2486
    %v4666 = vunpack.c.l.b16 %v2487
    %v4667 = vunpack.c.l.b16 %v2488
    %v4668 = vunpack.c.l.b16 %v2489
    %v4669 = vunpack.c.l.b16 %v2490
    %v4670 = vpack.c.b16 %v4663, %v4662
    %v4671 = vpack.c.b16 %v4665, %v4664
    %v4672 = vpack.c.b16 %v4667, %v4666
    %v4673 = vpack.c.b16 %v4669, %v4668
    %v4679 = vsel %vm2339, %v4648, 0
    %v4682 = vsel %vm2339, %v4649, 0
    %4684 = vmatprep.subr.bf16.mxu0 0
    %4685 = vmatpush1.bf16.msra.mxu0 %v4670
    %4686 = vmatprep.subr.bf16.mxu0 0
    %4687 = vmatpush1.bf16.msra.mxu0 %v4671
    %4688 = vmatprep.subr.bf16.mxu0 0
    %4689 = vmatpush1.bf16.msra.mxu0 %v4672
    %4690 = vmatprep.subr.bf16.mxu0 0
    %4691 = vmatpush1.bf16.msra.mxu0 %v4673
    %4692 = vmatprep.subr.bf16.mxu0 0
    %4693 = vmatpush1.bf16.msra.mxu0 0
    %4694 = vmatprep.subr.bf16.mxu0 0
    %4695 = vmatpush1.bf16.msra.mxu0 0
    %4696 = vmatprep.subr.bf16.mxu0 0
    %4697 = vmatpush1.bf16.msra.mxu0 0
    %4698 = vmatprep.subr.bf16.mxu0 0
    %4699 = vmatpush1.bf16.msra.mxu0 0
    %4700 = vmatprep.subr.bf16.mxu0 0
    %4701 = vmatpush1.bf16.msra.mxu0 0
    %4702 = vmatprep.subr.bf16.mxu0 0
    %4703 = vmatpush1.bf16.msra.mxu0 0
    %4704 = vmatprep.subr.bf16.mxu0 0
    %4705 = vmatpush1.bf16.msra.mxu0 0
    %4706 = vmatprep.subr.bf16.mxu0 0
    %4707 = vmatpush1.bf16.msra.mxu0 0
    %4708 = vmatprep.subr.bf16.mxu0 0
    %4709 = vmatpush1.bf16.msra.mxu0 0
    %4710 = vmatprep.subr.bf16.mxu0 0
    %4711 = vmatpush1.bf16.msra.mxu0 0
    %4712 = vmatprep.subr.bf16.mxu0 0
    %4713 = vmatpush1.bf16.msra.mxu0 0
    %4714 = vmatprep.subr.bf16.mxu0 0
    %4715 = vmatpush1.bf16.msra.mxu0 0
    %4716 = vmatprep.mubr.bf16.mxu0 0
    %4717 = vmatmul.mubr.bf16.gmra.mrb[0].mxu0 %v4679
    %v4718 = vpop.f32.mrb[0].mxu0
    %v4719 = vadd.f32 %v4653, %v4718
    %v4720 = vpop.f32.mrb[0].mxu0
    %v4721 = vpop.f32.mrb[0].mxu0
    %v4722 = vadd.f32 %v4653, %v4721
    %v4723 = vpop.f32.mrb[0].mxu0
    %4724 = vmatprep.mubr.bf16.mxu0 0
    %4725 = vmatmul.mubr.bf16.gmra.mrb[0].mxu0 %v4682
    %v4726 = vpop.f32.mrb[0].mxu0
    %v4727 = vadd.f32 %v4653, %v4726
    %v4728 = vpop.f32.mrb[0].mxu0
    %v4729 = vpop.f32.mrb[0].mxu0
    %v4730 = vadd.f32 %v4653, %v4729
    %v4731 = vpop.f32.mrb[0].mxu0
    %4732 = vdwg.mxu0
    %v4733 = vadd.f32 %v4719, %v4535
    %v4734 = vadd.f32 %v4722, %v4536
    %v4735 = vadd.f32 %v4727, %v4537
    %v4736 = vadd.f32 %v4730, %v4538
    %v4737 = vsel %vm42, %v4733, 0.0
    %4738 = vadd.xlane.f32.xlu0 %v4737
    %v4739 = vpop.xlane.xlu0 %4738
    %v4740 = vsel %vm42, %v4734, 0.0
    %4741 = vadd.xlane.f32.xlu0 %v4740
    %v4742 = vpop.xlane.xlu0 %4741
    %v4743 = vsel %vm42, %v4735, 0.0
    %4744 = vadd.xlane.f32.xlu0 %v4743
    %v4745 = vpop.xlane.xlu0 %4744
    %v4746 = vsel %vm42, %v4736, 0.0
    %4747 = vadd.xlane.f32.xlu0 %v4746
    %v4748 = vpop.xlane.xlu0 %4747
    %v4749 = vmul.f32 %v4739, %v55
    %v4750 = vmul.f32 %v4742, %v55
    %v4751 = vmul.f32 %v4745, %v55
    %v4752 = vmul.f32 %v4748, %v55
    %v4753 = vsub.f32 %v4733, %v4749
    %v4754 = vsub.f32 %v4734, %v4750
    %v4755 = vsub.f32 %v4735, %v4751
    %v4756 = vsub.f32 %v4736, %v4752
    %v4757 = vmul.f32 %v4753, %v4753
    %v4758 = vmul.f32 %v4754, %v4754
    %v4759 = vmul.f32 %v4755, %v4755
    %v4760 = vmul.f32 %v4756, %v4756
    %v4761 = vsel %vm42, %v4757, 0.0
    %4762 = vadd.xlane.f32.xlu0 %v4761
    %v4763 = vpop.xlane.xlu0 %4762
    %v4764 = vsel %vm42, %v4758, 0.0
    %4765 = vadd.xlane.f32.xlu0 %v4764
    %v4766 = vpop.xlane.xlu0 %4765
    %v4767 = vsel %vm42, %v4759, 0.0
    %4768 = vadd.xlane.f32.xlu0 %v4767
    %v4769 = vpop.xlane.xlu0 %4768
    %v4770 = vsel %vm42, %v4760, 0.0
    %4771 = vadd.xlane.f32.xlu0 %v4770
    %v4772 = vpop.xlane.xlu0 %4771
    %v4773 = vmul.f32 %v4763, %v55
    %v4774 = vmul.f32 %v4766, %v55
    %v4775 = vmul.f32 %v4769, %v55
    %v4776 = vmul.f32 %v4772, %v55
    %v4777 = vadd.f32 %v4773, 1e-12
    %v4778 = vadd.f32 %v4774, 1e-12
    %v4779 = vadd.f32 %v4775, 1e-12
    %v4780 = vadd.f32 %v4776, 1e-12
    %v4781 = vrsqrt.pop %v4777
    %v4782 = vrsqrt.pop %v4778
    %v4783 = vrsqrt.pop %v4779
    %v4784 = vrsqrt.pop %v4780
    %v4785 = vmul.f32 %v4753, %v4781
    %v4786 = vmul.f32 %v4754, %v4782
    %v4787 = vmul.f32 %v4755, %v4783
    %v4788 = vmul.f32 %v4756, %v4784
    %v4789 = vlaneseq
    %v4790 = vshrl.u32 %v4789, 7
    %v4791 = vsub.s32 6, %v4790
    %v4792 = vrot.slane %v2492, %v4791
    %v4793 = vmul.f32 %v4785, %v4792
    %v4794 = vmul.f32 %v4786, %v4792
    %v4795 = vmul.f32 %v4787, %v4792
    %v4796 = vmul.f32 %v4788, %v4792
    %v4797 = vlaneseq
    %v4798 = vshrl.u32 %v4797, 7
    %v4799 = vsub.s32 7, %v4798
    %v4800 = vrot.slane %v2492, %v4799
    %v4801 = vadd.f32 %v4793, %v4800
    %v4802 = vadd.f32 %v4794, %v4800
    %v4803 = vadd.f32 %v4795, %v4800
    %v4804 = vadd.f32 %v4796, %v4800
    %v4806 = vrot.slane %v4802, 7
    %v4809 = vrot.slane %v4803, 6
    %v4812 = vrot.slane %v4804, 5
    %vm4814 = vcmask 1040384
    %v4815 = vsel %vm4814, %v4801, %v4806
    %vm4816 = vcmask 1041408
    %v4817 = vsel %vm4816, %v4815, %v4809
    %vm4818 = vcmask 1042432
    %v4819 = vsel %vm4818, %v4817, %v4812
    %v4820 = vpack.c.bf16 %v4819, %v4819
    %v4821 = vld [vmem:[%s6] sm:$0xf]
    %v4822 = vld [vmem:[%s6 + $0x4] sm:$0xf]
    %v4823 = vld [vmem:[%s6 + $0x8] sm:$0xf]
    %v4824 = vld [vmem:[%s6 + $0xc] sm:$0xf]
    %v4825 = vlaneseq
    %v4826 = vshrl.u32 %v4825, 7
    %v4827 = vsub.s32 2, %v4826
    %v4828 = vrot.slane %v41, %v4827
    %v4833 = vunpack.c.l.b16 %v4821
    %v4834 = vunpack.c.l.b16 %v4822
    %v4835 = vunpack.c.l.b16 %v4823
    %v4836 = vunpack.c.l.b16 %v4824
    %v4837 = vpack.c.b16 %v4834, %v4833
    %v4838 = vpack.c.b16 %v4836, %v4835
    %v4842 = vsel %vm42, %v4820, 0
    %4844 = vmatprep.subr.bf16.mxu0 0
    %4845 = vmatpush1.bf16.msra.mxu0 %v4837
    %4846 = vmatprep.subr.bf16.mxu0 0
    %4847 = vmatpush1.bf16.msra.mxu0 %v4838
    %4848 = vmatprep.subr.bf16.mxu0 0
    %4849 = vmatpush1.bf16.msra.mxu0 0
    %4850 = vmatprep.subr.bf16.mxu0 0
    %4851 = vmatpush1.bf16.msra.mxu0 0
    %4852 = vmatprep.subr.bf16.mxu0 0
    %4853 = vmatpush1.bf16.msra.mxu0 0
    %4854 = vmatprep.subr.bf16.mxu0 0
    %4855 = vmatpush1.bf16.msra.mxu0 0
    %4856 = vmatprep.subr.bf16.mxu0 0
    %4857 = vmatpush1.bf16.msra.mxu0 0
    %4858 = vmatprep.subr.bf16.mxu0 0
    %4859 = vmatpush1.bf16.msra.mxu0 0
    %4860 = vmatprep.subr.bf16.mxu0 0
    %4861 = vmatpush1.bf16.msra.mxu0 0
    %4862 = vmatprep.subr.bf16.mxu0 0
    %4863 = vmatpush1.bf16.msra.mxu0 0
    %4864 = vmatprep.subr.bf16.mxu0 0
    %4865 = vmatpush1.bf16.msra.mxu0 0
    %4866 = vmatprep.subr.bf16.mxu0 0
    %4867 = vmatpush1.bf16.msra.mxu0 0
    %4868 = vmatprep.subr.bf16.mxu0 0
    %4869 = vmatpush1.bf16.msra.mxu0 0
    %4870 = vmatprep.subr.bf16.mxu0 0
    %4871 = vmatpush1.bf16.msra.mxu0 0
    %4872 = vmatprep.subr.bf16.mxu0 0
    %4873 = vmatpush1.bf16.msra.mxu0 0
    %4874 = vmatprep.subr.bf16.mxu0 0
    %4875 = vmatpush1.bf16.msra.mxu0 0
    %4876 = vmatprep.mubr.bf16.mxu0 0
    %4877 = vmatmul.mubr.bf16.gmra.mrb[0].mxu0 %v4842
    %v4878 = vpop.f32.mrb[0].mxu0
    %v4879 = vadd.f32 %v4828, %v4878
    %v4880 = vpop.f32.mrb[0].mxu0
    %v4881 = vpop.f32.mrb[0].mxu0
    %v4882 = vpop.f32.mrb[0].mxu0
    %4883 = vdwg.mxu0
    %v4884 = vtanh.pop %v4879
    %vm4885 = vcmask 254976
    %4886 = vst.msk [vmem:[#allocation3] sm:$0x3] %vm4885, %v4884
    %4888 = vrot.lane.b32.xlu0 %v4884, 32
    %v4889 = vpop.permute.xlu0 %4888
    %vm4891 = vcmask 519426
    %4892 = vst.msk [vmem:[#allocation3 - $0x2] sm:$0xc] %vm4891, %v4889
    // Predicated region
    $region38: #{custom_bert_forward.1} parent=1 // pred_check
      _
    $region39: #{custom_bert_forward.1} parent=1 // pred_check_branch
      %4894 = sbr.rel (0) target = $region41
    $region40: #{custom_bert_forward.1} parent=1 // pred_region
      %s4896 = ssub.s32 32, 32
      %4897 = vsyncadd [#allocation4], %s4896
      %s4899 = sshll.u32 [#allocation3], 4
      %s4900 = int_to_ptr.vmem [resolvable:$true] %s4899
      %4902 = dma.vmem_to_hbm [thread:$0]  %s4900, 32, %s9, [#allocation4]
    $region41: #{custom_bert_forward.1} parent=1 // pred_fallthru
      _
    // Predicated region
    $region42: #{custom_bert_forward.1} parent=1 // pred_check
      _
    $region43: #{custom_bert_forward.1} parent=1 // pred_check_branch
      %4904 = sbr.rel (0) target = $region45
    $region44: #{custom_bert_forward.1} parent=1 // pred_region
      %4905 = dma.done [#allocation4], 32
    $region45: #{custom_bert_forward.1} parent=1 // pred_fallthru
      _
    %4906 = vsyncpa [#allocation4], 1

</llo_original>
